<compile_context>
chip_gen: v5e
topology: v5e:2x2
jax: 0.10.0
libtpu: 0.0.40
codegen_flags: <defaults>
</compile_context>

<pallas_src>
import functools
import math

import numpy as np
import jax
import jax.numpy as jnp
from jax.experimental import pallas as pl
from jax.experimental.pallas import tpu as pltpu  # noqa: F401  (TPU backend)

_LN_EPS = 1e-5


# ----------------------------------------------------------------------------
# In-kernel helpers
# ----------------------------------------------------------------------------
def _sigmoid(x):
    # Exact sigmoid on the EUP (tanh) with no VALU divide: sigma(x) = 0.5*(tanh(x/2)+1).
    return 0.5 * (jnp.tanh(0.5 * x) + 1.0)


def _encoder_block(x2, t_len, heads, eps, enc):
    """Post-norm nn.TransformerEncoderLayer (eval mode, ReLU, batch_first)
    applied to a flattened (bsz*t_len, D) slab.  `enc` = 12 weight refs."""
    (inw, inb, outw, outb, ln1g, ln1b, l1w, l1b, l2w, l2b, ln2g, ln2b) = enc
    M, D = x2.shape
    bsz = M // t_len
    dh = D // heads
    scale = 1.0 / math.sqrt(dh)

    # --- self-attention: QKV projection ---
    qkv = jnp.dot(x2, inw[...], preferred_element_type=jnp.float32) + inb[...]
    qkv3 = qkv.reshape(bsz, t_len, 3 * D)   # 8-aligned sublane split: no-op relayout

    head_out = []
    for h in range(heads):                   # heads is small & static
        q = qkv3[:, :, h * dh:(h + 1) * dh] * scale          # scale folded into q
        k = qkv3[:, :, D + h * dh:D + (h + 1) * dh]
        v = qkv3[:, :, 2 * D + h * dh:2 * D + (h + 1) * dh]
        s = jnp.einsum("btd,bsd->bts", q, k, preferred_element_type=jnp.float32)
        m = jnp.max(s, axis=-1, keepdims=True)
        p = jnp.exp(s - m)
        # exact reciprocal (EUP); approx=False for parity with the reference
        p = p * pl.reciprocal(jnp.sum(p, axis=-1, keepdims=True), approx=False)
        head_out.append(jnp.einsum("bts,bsd->btd", p, v,
                                   preferred_element_type=jnp.float32))

    # single (M, D) @ (D, D) out-projection instead of per-head accumulating dots
    o = jnp.concatenate(head_out, axis=-1).reshape(M, D)
    attn = jnp.dot(o, outw[...], preferred_element_type=jnp.float32) + outb[...]

    # --- residual + LayerNorm1 (f32) ---
    z = x2 + attn
    mu = jnp.mean(z, axis=-1, keepdims=True)
    var = jnp.mean((z - mu) ** 2, axis=-1, keepdims=True)
    x1 = (z - mu) * jax.lax.rsqrt(var + eps) * ln1g[...] + ln1b[...]

    # --- FFN: bf16 operands (weights pre-cast at init), f32 accumulation, ReLU ---
    h1 = jnp.dot(x1.astype(jnp.bfloat16), l1w[...],
                 preferred_element_type=jnp.float32) + l1b[...]
    h1 = jnp.maximum(h1, 0.0)
    ff = jnp.dot(h1.astype(jnp.bfloat16), l2w[...],
                 preferred_element_type=jnp.float32) + l2b[...]

    # --- residual + LayerNorm2 (f32) ---
    z2 = x1 + ff
    mu2 = jnp.mean(z2, axis=-1, keepdims=True)
    var2 = jnp.mean((z2 - mu2) ** 2, axis=-1, keepdims=True)
    return (z2 - mu2) * jax.lax.rsqrt(var2 + eps) * ln2g[...] + ln2b[...]


# ----------------------------------------------------------------------------
# Kernel 1: dense + PE + encoder layer for BOTH branches (full and batched cd)
# ----------------------------------------------------------------------------
def _branches_kernel(*refs, heads, t_len, eps):
    (x_ref, c_ref, pex_ref, pec_ref,
     dw_ref, db_ref, dcw_ref, dcb_ref) = refs[:8]
    full_enc = refs[8:20]
    cd_enc = refs[20:32]
    hfull_ref, r_ref = refs[32], refs[33]

    # full branch: x @ dense + b + PE -> encoder layer
    xd = (jnp.dot(x_ref[...], dw_ref[...], preferred_element_type=jnp.float32)
          + db_ref[...] + pex_ref[...])
    hfull_ref[...] = _encoder_block(xd, t_len, heads, eps, full_enc).astype(hfull_ref.dtype)

    # cd branch (all his_window context windows as one (W*B*T, .) slab)
    cd = (jnp.dot(c_ref[...], dcw_ref[...], preferred_element_type=jnp.float32)
          + dcb_ref[...] + pec_ref[...])
    r_ref[...] = _encoder_block(cd, t_len, heads, eps, cd_enc).astype(r_ref.dtype)


_ENC_KEYS = ("in_proj_w", "in_proj_b", "out_proj_w", "out_proj_b",
             "ln1_g", "ln1_b", "lin1_w", "lin1_b", "lin2_w", "lin2_b",
             "ln2_g", "ln2_b")


def _encoder_args(p):
    args = []
    for k in _ENC_KEYS:
        v = p[k]
        args.append(v if v.ndim == 2 else v.reshape(1, -1))
    return args


def run_branches(x2, c2, pe_x, pe_c, params, heads, t_len, eps=_LN_EPS):
    Mx = x2.shape[0]
    Mc = c2.shape[0]
    D = params["dense_w"].shape[1]
    return pl.pallas_call(
        functools.partial(_branches_kernel, heads=heads, t_len=t_len, eps=eps),
        out_shape=(jax.ShapeDtypeStruct((Mx, D), jnp.float32),
                   jax.ShapeDtypeStruct((Mc, D), jnp.float32)),
    )(x2, c2, pe_x, pe_c,
      params["dense_w"], params["dense_b"].reshape(1, -1),
      params["dense_c_w"], params["dense_c_b"].reshape(1, -1),
      *_encoder_args(params["full"]),
      *_encoder_args(params["cd"]))


# ----------------------------------------------------------------------------
# Kernel 2: GRU over his_window (gi hoisted) + residual add + block-diag fc
# ----------------------------------------------------------------------------
def _gru_fc_kernel(xall_ref, hfull_ref, wih_ref, whh_ref, bih_ref, bhh_ref,
                   fcw_ref, fcb_ref, o_ref):
    WB, H = xall_ref.shape
    Bsz = hfull_ref.shape[0]
    win = WB // Bsz

    # Input-to-hidden matmul for ALL window steps at once (off the serial chain).
    gi_all = (jnp.dot(xall_ref[...], wih_ref[...], preferred_element_type=jnp.float32)
              + bih_ref[...])
    whh = whh_ref[...]
    bhh = bhh_ref[...]

    # PyTorch GRU, gate order [r | z | n], h_0 = 0; static unroll over the
    # (small) his_window length.
    h = jnp.zeros((Bsz, H), jnp.float32)
    for w in range(win):
        gi = gi_all[w * Bsz:(w + 1) * Bsz, :]
        gh = jnp.dot(h, whh, preferred_element_type=jnp.float32) + bhh
        r = _sigmoid(gi[:, :H] + gh[:, :H])
        zg = _sigmoid(gi[:, H:2 * H] + gh[:, H:2 * H])
        n = jnp.tanh(gi[:, 2 * H:] + r * gh[:, 2 * H:])
        h = (1.0 - zg) * n + zg * h

    # (h_full + h_w) @ block-diag(fc_w) + fc_b  -> lane-dense (Bsz, T*N*N) store
    hw = hfull_ref[...] + h
    out = jnp.dot(hw, fcw_ref[...], preferred_element_type=jnp.float32) + fcb_ref[...]
    o_ref[...] = out.astype(o_ref.dtype)


def run_gru_fc(x_all, h_full_flat, params, fc_block, fc_b_flat):
    B = h_full_flat.shape[0]
    out_w = fc_block.shape[1]
    return pl.pallas_call(
        _gru_fc_kernel,
        out_shape=jax.ShapeDtypeStruct((B, out_w), jnp.float32),
    )(x_all, h_full_flat,
      params["gru_wih"], params["gru_whh"],
      params["gru_bih"].reshape(1, -1), params["gru_bhh"].reshape(1, -1),
      fc_block, fc_b_flat)


# ----------------------------------------------------------------------------
# Forward pass (reshape / transpose / tile / kron glue stays in XLA — free)
# ----------------------------------------------------------------------------
def meta_cdw_forward(x, c, params, *, heads, num_encoder_layers, his_window):
    assert num_encoder_layers >= 1
    B, T, N, _ = x.shape
    NN = N * N
    D = params["dense_w"].shape[1]
    W = his_window

    # NOTE: every iteration of the reference's num_encoder_layers loop recomputes
    # h = full_encoder(x) and h_w = GRU(cd_encoder(c)) from the SAME inputs and
    # weights and overwrites h, so the final result equals a single pass.  The
    # redundant loop is hoisted (exact per the reference's own semantics).

    x2 = x.reshape(B * T, NN)
    # c: (B, W, T, N, N) -> (W, B, T, N, N) -> (W*B*T, N*N): one batched slab.
    c2 = jnp.transpose(c, (1, 0, 2, 3, 4)).reshape(W * B * T, NN)
    pe = params["pe"][:T]                       # (T, D)
    pe_x = jnp.tile(pe, (B, 1))                 # (B*T, D)
    pe_c = jnp.tile(pe, (W * B, 1))             # (W*B*T, D)

    # Launch 1: dense(+PE) + encoder layer for both branches, fused.
    h_full, r = run_branches(x2, c2, pe_x, pe_c, params, heads, T)

    # Free XLA reshapes between launches (avoid lane-collapsing reshapes in-kernel).
    x_all = r.reshape(W * B, T * D)             # GRU input sequence, per-step flattened
    h_full_flat = h_full.reshape(B, T * D)

    # Per-token fc as one block-diagonal matmul -> 128-lane-dense final store,
    # fused into launch 2.
    fc_block = jnp.kron(jnp.eye(T, dtype=jnp.float32), params["fc_w"])   # (T*D, T*NN)
    fc_b_flat = jnp.tile(params["fc_b"], (T,)).reshape(1, T * NN)

    # Launch 2: GRU + residual + fc.
    out = run_gru_fc(x_all, h_full_flat, params, fc_block, fc_b_flat)    # (B, T*NN)
    return out.reshape(B, T, N, N)


# ----------------------------------------------------------------------------
# Deterministic synthetic parameter initialization (shapes from __init__)
# ----------------------------------------------------------------------------
def _pe_table(seq_length, d_model):
    pe = np.zeros((seq_length, d_model), dtype=np.float32)
    position = np.arange(seq_length, dtype=np.float32)[:, None]
    div_term = np.exp(np.arange(0, d_model, 2, dtype=np.float32)
                      * (-np.log(10000.0) / d_model))
    pe[:, 0::2] = np.sin(position * div_term)
    pe[:, 1::2] = np.cos(position * div_term)
    return jnp.asarray(pe)


def _init_encoder_params(key, d_model, dim_ff):
    ks = jax.random.split(key, 4)
    s = 0.05
    return dict(
        in_proj_w=jax.random.normal(ks[0], (d_model, 3 * d_model), jnp.float32) * s,
        in_proj_b=jnp.zeros((3 * d_model,), jnp.float32),
        out_proj_w=jax.random.normal(ks[1], (d_model, d_model), jnp.float32) * s,
        out_proj_b=jnp.zeros((d_model,), jnp.float32),
        # FFN weights pre-cast to bf16 at init (halved DMA, MXU-rate operands).
        lin1_w=(jax.random.normal(ks[2], (d_model, dim_ff), jnp.float32) * s
                ).astype(jnp.bfloat16),
        lin1_b=jnp.zeros((dim_ff,), jnp.float32),
        lin2_w=(jax.random.normal(ks[3], (dim_ff, d_model), jnp.float32) * s
                ).astype(jnp.bfloat16),
        lin2_b=jnp.zeros((d_model,), jnp.float32),
        ln1_g=jnp.ones((d_model,), jnp.float32),
        ln1_b=jnp.zeros((d_model,), jnp.float32),
        ln2_g=jnp.ones((d_model,), jnp.float32),
        ln2_b=jnp.zeros((d_model,), jnp.float32),
    )


def init_params(key, heads, d_model, in_seq_len, num_nodes, dim_ff=2048):
    nn2 = num_nodes * num_nodes
    gru_h = in_seq_len * d_model          # GRU input_size == hidden_size == T*D
    k = jax.random.split(key, 7)
    s = 0.05
    return dict(
        dense_w=jax.random.normal(k[0], (nn2, d_model), jnp.float32) * s,
        dense_b=jnp.zeros((d_model,), jnp.float32),
        dense_c_w=jax.random.normal(k[1], (nn2, d_model), jnp.float32) * s,
        dense_c_b=jnp.zeros((d_model,), jnp.float32),
        fc_w=jax.random.normal(k[2], (d_model, nn2), jnp.float32) * s,
        fc_b=jnp.zeros((nn2,), jnp.float32),
        full=_init_encoder_params(k[3], d_model, dim_ff),
        cd=_init_encoder_params(k[4], d_model, dim_ff),
        gru_wih=jax.random.normal(k[5], (gru_h, 3 * gru_h), jnp.float32) * s,
        gru_whh=jax.random.normal(k[6], (gru_h, 3 * gru_h), jnp.float32) * s,
        gru_bih=jnp.zeros((3 * gru_h,), jnp.float32),
        gru_bhh=jnp.zeros((3 * gru_h,), jnp.float32),
        pe=_pe_table(in_seq_len, d_model),
    )


# ----------------------------------------------------------------------------
if __name__ == "__main__":
    heads = 2
    d_model = 32
    in_seq_len = 8       # T
    num_nodes = 4        # N  -> features N*N = 16
    num_encoder_layers = 2
    his_window = 3       # W
    B = 2

    key = jax.random.PRNGKey(0)
    kx, kc, kp = jax.random.split(key, 3)
    x = jax.random.normal(kx, (B, in_seq_len, num_nodes, num_nodes), jnp.float32)
    c = jax.random.normal(kc, (B, his_window, in_seq_len, num_nodes, num_nodes),
                          jnp.float32)
    params = init_params(kp, heads, d_model, in_seq_len, num_nodes)

    fwd = jax.jit(functools.partial(meta_cdw_forward,
                                    heads=heads,
                                    num_encoder_layers=num_encoder_layers,
                                    his_window=his_window))
    out = fwd(x, c, params)
    jax.block_until_ready(out)

    assert out.shape == (B, in_seq_len, num_nodes, num_nodes)
    assert out.dtype == jnp.float32
    assert bool(jnp.all(jnp.isfinite(out)))
    print("KERNEL_OK")
</pallas_src>

<mosaic_0001>
module attributes {stable_mosaic.version = 11 : i64} {
  func.func @_branches_kernel(%arg0: memref<16x16xf32, #tpu.memory_space<vmem>>, %arg1: memref<48x16xf32, #tpu.memory_space<vmem>>, %arg2: memref<16x32xf32, #tpu.memory_space<vmem>>, %arg3: memref<48x32xf32, #tpu.memory_space<vmem>>, %arg4: memref<16x32xf32, #tpu.memory_space<vmem>>, %arg5: memref<1x32xf32, #tpu.memory_space<vmem>>, %arg6: memref<16x32xf32, #tpu.memory_space<vmem>>, %arg7: memref<1x32xf32, #tpu.memory_space<vmem>>, %arg8: memref<32x96xf32, #tpu.memory_space<vmem>>, %arg9: memref<1x96xf32, #tpu.memory_space<vmem>>, %arg10: memref<32x32xf32, #tpu.memory_space<vmem>>, %arg11: memref<1x32xf32, #tpu.memory_space<vmem>>, %arg12: memref<1x32xf32, #tpu.memory_space<vmem>>, %arg13: memref<1x32xf32, #tpu.memory_space<vmem>>, %arg14: memref<32x2048xbf16, #tpu.memory_space<vmem>>, %arg15: memref<1x2048xf32, #tpu.memory_space<vmem>>, %arg16: memref<2048x32xbf16, #tpu.memory_space<vmem>>, %arg17: memref<1x32xf32, #tpu.memory_space<vmem>>, %arg18: memref<1x32xf32, #tpu.memory_space<vmem>>, %arg19: memref<1x32xf32, #tpu.memory_space<vmem>>, %arg20: memref<32x96xf32, #tpu.memory_space<vmem>>, %arg21: memref<1x96xf32, #tpu.memory_space<vmem>>, %arg22: memref<32x32xf32, #tpu.memory_space<vmem>>, %arg23: memref<1x32xf32, #tpu.memory_space<vmem>>, %arg24: memref<1x32xf32, #tpu.memory_space<vmem>>, %arg25: memref<1x32xf32, #tpu.memory_space<vmem>>, %arg26: memref<32x2048xbf16, #tpu.memory_space<vmem>>, %arg27: memref<1x2048xf32, #tpu.memory_space<vmem>>, %arg28: memref<2048x32xbf16, #tpu.memory_space<vmem>>, %arg29: memref<1x32xf32, #tpu.memory_space<vmem>>, %arg30: memref<1x32xf32, #tpu.memory_space<vmem>>, %arg31: memref<1x32xf32, #tpu.memory_space<vmem>>, %arg32: memref<16x32xf32, #tpu.memory_space<vmem>>, %arg33: memref<48x32xf32, #tpu.memory_space<vmem>>) attributes {dimension_semantics = [], scalar_prefetch = 0 : i64, scratch_operands = 0 : i64, tpu.core_type = #tpu.core_type<tc>} {
    %c0 = arith.constant 0 : index
    %c0_0 = arith.constant 0 : index
    %0 = vector.load %arg0[%c0, %c0_0] : memref<16x16xf32, #tpu.memory_space<vmem>>, vector<16x16xf32>
    %c0_1 = arith.constant 0 : index
    %c0_2 = arith.constant 0 : index
    %1 = vector.load %arg4[%c0_1, %c0_2] : memref<16x32xf32, #tpu.memory_space<vmem>>, vector<16x32xf32>
    %cst = arith.constant dense<0.000000e+00> : vector<16x32xf32>
    %2 = tpu.matmul %0, %1, %cst {dimension_numbers = #tpu.dot_dimension_numbers<[1], [0], [0], [1], [0, 0, 1, 1], [], []>} : vector<16x16xf32>, vector<16x32xf32>, vector<16x32xf32> -> vector<16x32xf32>
    %c0_3 = arith.constant 0 : index
    %c0_4 = arith.constant 0 : index
    %3 = vector.load %arg5[%c0_3, %c0_4] : memref<1x32xf32, #tpu.memory_space<vmem>>, vector<1x32xf32>
    %4 = vector.broadcast %3 : vector<1x32xf32> to vector<16x32xf32>
    %5 = arith.addf %2, %4 : vector<16x32xf32>
    %c0_5 = arith.constant 0 : index
    %c0_6 = arith.constant 0 : index
    %6 = vector.load %arg2[%c0_5, %c0_6] : memref<16x32xf32, #tpu.memory_space<vmem>>, vector<16x32xf32>
    %7 = arith.addf %5, %6 : vector<16x32xf32>
    %c0_7 = arith.constant 0 : index
    %c0_8 = arith.constant 0 : index
    %8 = vector.load %arg8[%c0_7, %c0_8] : memref<32x96xf32, #tpu.memory_space<vmem>>, vector<32x96xf32>
    %cst_9 = arith.constant dense<0.000000e+00> : vector<16x96xf32>
    %9 = tpu.matmul %7, %8, %cst_9 {dimension_numbers = #tpu.dot_dimension_numbers<[1], [0], [0], [1], [0, 0, 1, 1], [], []>} : vector<16x32xf32>, vector<32x96xf32>, vector<16x96xf32> -> vector<16x96xf32>
    %c0_10 = arith.constant 0 : index
    %c0_11 = arith.constant 0 : index
    %10 = vector.load %arg9[%c0_10, %c0_11] : memref<1x96xf32, #tpu.memory_space<vmem>>, vector<1x96xf32>
    %11 = vector.broadcast %10 : vector<1x96xf32> to vector<16x96xf32>
    %12 = arith.addf %9, %11 : vector<16x96xf32>
    %13 = vector.shape_cast %12 : vector<16x96xf32> to vector<2x8x96xf32>
    %14 = vector.extract_strided_slice %13 {offsets = [0, 0, 0], sizes = [2, 8, 16], strides = [1, 1, 1]} : vector<2x8x96xf32> to vector<2x8x16xf32>
    %cst_12 = arith.constant 2.500000e-01 : f32
    %15 = vector.broadcast %cst_12 : f32 to vector<2x8x16xf32>
    %16 = arith.mulf %14, %15 : vector<2x8x16xf32>
    %17 = vector.extract_strided_slice %13 {offsets = [0, 0, 32], sizes = [2, 8, 16], strides = [1, 1, 1]} : vector<2x8x96xf32> to vector<2x8x16xf32>
    %18 = vector.extract_strided_slice %13 {offsets = [0, 0, 64], sizes = [2, 8, 16], strides = [1, 1, 1]} : vector<2x8x96xf32> to vector<2x8x16xf32>
    "tpu.trace_start"() <{level = 10 : i32, message = "btd,bsd->bts"}> : () -> ()
    %cst_13 = arith.constant dense<0.000000e+00> : vector<2x8x8xf32>
    %19 = tpu.matmul %16, %17, %cst_13 {dimension_numbers = #tpu.dot_dimension_numbers<[2], [2], [1], [1], [0, 0, 0, 1, 1, 1], [0], [0]>} : vector<2x8x16xf32>, vector<2x8x16xf32>, vector<2x8x8xf32> -> vector<2x8x8xf32>
    "tpu.trace_stop"() : () -> ()
    %cst_14 = arith.constant dense<0xFF800000> : vector<2x8xf32>
    %20 = vector.multi_reduction <maximumf>, %19, %cst_14 [2] : vector<2x8x8xf32> to vector<2x8xf32>
    %21 = vector.shape_cast %20 : vector<2x8xf32> to vector<2x8x1xf32>
    %22 = vector.broadcast %21 : vector<2x8x1xf32> to vector<2x8x8xf32>
    %23 = arith.subf %19, %22 : vector<2x8x8xf32>
    %24 = math.exp %23 : vector<2x8x8xf32>
    %cst_15 = arith.constant dense<0.000000e+00> : vector<2x8xf32>
    %25 = vector.multi_reduction <add>, %24, %cst_15 [2] : vector<2x8x8xf32> to vector<2x8xf32>
    %26 = vector.shape_cast %25 : vector<2x8xf32> to vector<2x8x1xf32>
    %27 = tpu.reciprocal %26 : vector<2x8x1xf32> -> vector<2x8x1xf32>
    %28 = vector.broadcast %27 : vector<2x8x1xf32> to vector<2x8x8xf32>
    %29 = arith.mulf %24, %28 : vector<2x8x8xf32>
    "tpu.trace_start"() <{level = 10 : i32, message = "bts,bsd->btd"}> : () -> ()
    %cst_16 = arith.constant dense<0.000000e+00> : vector<2x8x16xf32>
    %30 = tpu.matmul %29, %18, %cst_16 {dimension_numbers = #tpu.dot_dimension_numbers<[2], [1], [1], [2], [0, 0, 0, 1, 1, 2], [0], [0]>} : vector<2x8x8xf32>, vector<2x8x16xf32>, vector<2x8x16xf32> -> vector<2x8x16xf32>
    "tpu.trace_stop"() : () -> ()
    %31 = vector.extract_strided_slice %13 {offsets = [0, 0, 16], sizes = [2, 8, 16], strides = [1, 1, 1]} : vector<2x8x96xf32> to vector<2x8x16xf32>
    %cst_17 = arith.constant 2.500000e-01 : f32
    %32 = vector.broadcast %cst_17 : f32 to vector<2x8x16xf32>
    %33 = arith.mulf %31, %32 : vector<2x8x16xf32>
    %34 = vector.extract_strided_slice %13 {offsets = [0, 0, 48], sizes = [2, 8, 16], strides = [1, 1, 1]} : vector<2x8x96xf32> to vector<2x8x16xf32>
    %35 = vector.extract_strided_slice %13 {offsets = [0, 0, 80], sizes = [2, 8, 16], strides = [1, 1, 1]} : vector<2x8x96xf32> to vector<2x8x16xf32>
    "tpu.trace_start"() <{level = 10 : i32, message = "btd,bsd->bts"}> : () -> ()
    %cst_18 = arith.constant dense<0.000000e+00> : vector<2x8x8xf32>
    %36 = tpu.matmul %33, %34, %cst_18 {dimension_numbers = #tpu.dot_dimension_numbers<[2], [2], [1], [1], [0, 0, 0, 1, 1, 1], [0], [0]>} : vector<2x8x16xf32>, vector<2x8x16xf32>, vector<2x8x8xf32> -> vector<2x8x8xf32>
    "tpu.trace_stop"() : () -> ()
    %cst_19 = arith.constant dense<0xFF800000> : vector<2x8xf32>
    %37 = vector.multi_reduction <maximumf>, %36, %cst_19 [2] : vector<2x8x8xf32> to vector<2x8xf32>
    %38 = vector.shape_cast %37 : vector<2x8xf32> to vector<2x8x1xf32>
    %39 = vector.broadcast %38 : vector<2x8x1xf32> to vector<2x8x8xf32>
    %40 = arith.subf %36, %39 : vector<2x8x8xf32>
    %41 = math.exp %40 : vector<2x8x8xf32>
    %cst_20 = arith.constant dense<0.000000e+00> : vector<2x8xf32>
    %42 = vector.multi_reduction <add>, %41, %cst_20 [2] : vector<2x8x8xf32> to vector<2x8xf32>
    %43 = vector.shape_cast %42 : vector<2x8xf32> to vector<2x8x1xf32>
    %44 = tpu.reciprocal %43 : vector<2x8x1xf32> -> vector<2x8x1xf32>
    %45 = vector.broadcast %44 : vector<2x8x1xf32> to vector<2x8x8xf32>
    %46 = arith.mulf %41, %45 : vector<2x8x8xf32>
    "tpu.trace_start"() <{level = 10 : i32, message = "bts,bsd->btd"}> : () -> ()
    %cst_21 = arith.constant dense<0.000000e+00> : vector<2x8x16xf32>
    %47 = tpu.matmul %46, %35, %cst_21 {dimension_numbers = #tpu.dot_dimension_numbers<[2], [1], [1], [2], [0, 0, 0, 1, 1, 2], [0], [0]>} : vector<2x8x8xf32>, vector<2x8x16xf32>, vector<2x8x16xf32> -> vector<2x8x16xf32>
    "tpu.trace_stop"() : () -> ()
    %48 = tpu.concatenate %30, %47 in 2 : vector<2x8x16xf32>, vector<2x8x16xf32> -> vector<2x8x32xf32>
    %49 = vector.shape_cast %48 : vector<2x8x32xf32> to vector<16x32xf32>
    %c0_22 = arith.constant 0 : index
    %c0_23 = arith.constant 0 : index
    %50 = vector.load %arg10[%c0_22, %c0_23] : memref<32x32xf32, #tpu.memory_space<vmem>>, vector<32x32xf32>
    %cst_24 = arith.constant dense<0.000000e+00> : vector<16x32xf32>
    %51 = tpu.matmul %49, %50, %cst_24 {dimension_numbers = #tpu.dot_dimension_numbers<[1], [0], [0], [1], [0, 0, 1, 1], [], []>} : vector<16x32xf32>, vector<32x32xf32>, vector<16x32xf32> -> vector<16x32xf32>
    %c0_25 = arith.constant 0 : index
    %c0_26 = arith.constant 0 : index
    %52 = vector.load %arg11[%c0_25, %c0_26] : memref<1x32xf32, #tpu.memory_space<vmem>>, vector<1x32xf32>
    %53 = vector.broadcast %52 : vector<1x32xf32> to vector<16x32xf32>
    %54 = arith.addf %51, %53 : vector<16x32xf32>
    %55 = arith.addf %7, %54 : vector<16x32xf32>
    %cst_27 = arith.constant dense<0.000000e+00> : vector<16xf32>
    %56 = vector.multi_reduction <add>, %55, %cst_27 [1] : vector<16x32xf32> to vector<16xf32>
    %57 = vector.shape_cast %56 : vector<16xf32> to vector<16x1xf32>
    %cst_28 = arith.constant 3.200000e+01 : f32
    %58 = vector.broadcast %cst_28 : f32 to vector<16x1xf32>
    %59 = arith.divf %57, %58 : vector<16x1xf32>
    %60 = vector.broadcast %59 : vector<16x1xf32> to vector<16x32xf32>
    %61 = arith.subf %55, %60 : vector<16x32xf32>
    %62 = arith.mulf %61, %61 : vector<16x32xf32>
    %cst_29 = arith.constant dense<0.000000e+00> : vector<16xf32>
    %63 = vector.multi_reduction <add>, %62, %cst_29 [1] : vector<16x32xf32> to vector<16xf32>
    %64 = vector.shape_cast %63 : vector<16xf32> to vector<16x1xf32>
    %cst_30 = arith.constant 3.200000e+01 : f32
    %65 = vector.broadcast %cst_30 : f32 to vector<16x1xf32>
    %66 = arith.divf %64, %65 : vector<16x1xf32>
    %67 = vector.broadcast %59 : vector<16x1xf32> to vector<16x32xf32>
    %68 = arith.subf %55, %67 : vector<16x32xf32>
    %cst_31 = arith.constant 9.99999974E-6 : f32
    %69 = vector.broadcast %cst_31 : f32 to vector<16x1xf32>
    %70 = arith.addf %66, %69 : vector<16x1xf32>
    %71 = math.rsqrt %70 : vector<16x1xf32>
    %72 = vector.broadcast %71 : vector<16x1xf32> to vector<16x32xf32>
    %73 = arith.mulf %68, %72 : vector<16x32xf32>
    %c0_32 = arith.constant 0 : index
    %c0_33 = arith.constant 0 : index
    %74 = vector.load %arg12[%c0_32, %c0_33] : memref<1x32xf32, #tpu.memory_space<vmem>>, vector<1x32xf32>
    %75 = vector.broadcast %74 : vector<1x32xf32> to vector<16x32xf32>
    %76 = arith.mulf %73, %75 : vector<16x32xf32>
    %c0_34 = arith.constant 0 : index
    %c0_35 = arith.constant 0 : index
    %77 = vector.load %arg13[%c0_34, %c0_35] : memref<1x32xf32, #tpu.memory_space<vmem>>, vector<1x32xf32>
    %78 = vector.broadcast %77 : vector<1x32xf32> to vector<16x32xf32>
    %79 = arith.addf %76, %78 : vector<16x32xf32>
    %80 = arith.truncf %79 : vector<16x32xf32> to vector<16x32xbf16>
    %c0_36 = arith.constant 0 : index
    %c0_37 = arith.constant 0 : index
    %81 = vector.load %arg14[%c0_36, %c0_37] : memref<32x2048xbf16, #tpu.memory_space<vmem>>, vector<32x2048xbf16>
    %cst_38 = arith.constant dense<0.000000e+00> : vector<16x2048xf32>
    %82 = tpu.matmul %80, %81, %cst_38 {dimension_numbers = #tpu.dot_dimension_numbers<[1], [0], [0], [1], [0, 0, 1, 1], [], []>} : vector<16x32xbf16>, vector<32x2048xbf16>, vector<16x2048xf32> -> vector<16x2048xf32>
    %c0_39 = arith.constant 0 : index
    %c0_40 = arith.constant 0 : index
    %83 = vector.load %arg15[%c0_39, %c0_40] : memref<1x2048xf32, #tpu.memory_space<vmem>>, vector<1x2048xf32>
    %84 = vector.broadcast %83 : vector<1x2048xf32> to vector<16x2048xf32>
    %85 = arith.addf %82, %84 : vector<16x2048xf32>
    %cst_41 = arith.constant 0.000000e+00 : f32
    %86 = vector.broadcast %cst_41 : f32 to vector<16x2048xf32>
    %87 = arith.maximumf %85, %86 : vector<16x2048xf32>
    %88 = arith.truncf %87 : vector<16x2048xf32> to vector<16x2048xbf16>
    %c0_42 = arith.constant 0 : index
    %c0_43 = arith.constant 0 : index
    %89 = vector.load %arg16[%c0_42, %c0_43] : memref<2048x32xbf16, #tpu.memory_space<vmem>>, vector<2048x32xbf16>
    %cst_44 = arith.constant dense<0.000000e+00> : vector<16x32xf32>
    %90 = tpu.matmul %88, %89, %cst_44 {dimension_numbers = #tpu.dot_dimension_numbers<[1], [0], [0], [1], [0, 0, 1, 1], [], []>} : vector<16x2048xbf16>, vector<2048x32xbf16>, vector<16x32xf32> -> vector<16x32xf32>
    %c0_45 = arith.constant 0 : index
    %c0_46 = arith.constant 0 : index
    %91 = vector.load %arg17[%c0_45, %c0_46] : memref<1x32xf32, #tpu.memory_space<vmem>>, vector<1x32xf32>
    %92 = vector.broadcast %91 : vector<1x32xf32> to vector<16x32xf32>
    %93 = arith.addf %90, %92 : vector<16x32xf32>
    %94 = arith.addf %79, %93 : vector<16x32xf32>
    %cst_47 = arith.constant dense<0.000000e+00> : vector<16xf32>
    %95 = vector.multi_reduction <add>, %94, %cst_47 [1] : vector<16x32xf32> to vector<16xf32>
    %96 = vector.shape_cast %95 : vector<16xf32> to vector<16x1xf32>
    %cst_48 = arith.constant 3.200000e+01 : f32
    %97 = vector.broadcast %cst_48 : f32 to vector<16x1xf32>
    %98 = arith.divf %96, %97 : vector<16x1xf32>
    %99 = vector.broadcast %98 : vector<16x1xf32> to vector<16x32xf32>
    %100 = arith.subf %94, %99 : vector<16x32xf32>
    %101 = arith.mulf %100, %100 : vector<16x32xf32>
    %cst_49 = arith.constant dense<0.000000e+00> : vector<16xf32>
    %102 = vector.multi_reduction <add>, %101, %cst_49 [1] : vector<16x32xf32> to vector<16xf32>
    %103 = vector.shape_cast %102 : vector<16xf32> to vector<16x1xf32>
    %cst_50 = arith.constant 3.200000e+01 : f32
    %104 = vector.broadcast %cst_50 : f32 to vector<16x1xf32>
    %105 = arith.divf %103, %104 : vector<16x1xf32>
    %106 = vector.broadcast %98 : vector<16x1xf32> to vector<16x32xf32>
    %107 = arith.subf %94, %106 : vector<16x32xf32>
    %cst_51 = arith.constant 9.99999974E-6 : f32
    %108 = vector.broadcast %cst_51 : f32 to vector<16x1xf32>
    %109 = arith.addf %105, %108 : vector<16x1xf32>
    %110 = math.rsqrt %109 : vector<16x1xf32>
    %111 = vector.broadcast %110 : vector<16x1xf32> to vector<16x32xf32>
    %112 = arith.mulf %107, %111 : vector<16x32xf32>
    %c0_52 = arith.constant 0 : index
    %c0_53 = arith.constant 0 : index
    %113 = vector.load %arg18[%c0_52, %c0_53] : memref<1x32xf32, #tpu.memory_space<vmem>>, vector<1x32xf32>
    %114 = vector.broadcast %113 : vector<1x32xf32> to vector<16x32xf32>
    %115 = arith.mulf %112, %114 : vector<16x32xf32>
    %c0_54 = arith.constant 0 : index
    %c0_55 = arith.constant 0 : index
    %116 = vector.load %arg19[%c0_54, %c0_55] : memref<1x32xf32, #tpu.memory_space<vmem>>, vector<1x32xf32>
    %117 = vector.broadcast %116 : vector<1x32xf32> to vector<16x32xf32>
    %118 = arith.addf %115, %117 : vector<16x32xf32>
    %c0_56 = arith.constant 0 : index
    %c0_57 = arith.constant 0 : index
    %119 = vector.load %arg32[%c0_56, %c0_57] : memref<16x32xf32, #tpu.memory_space<vmem>>, vector<16x32xf32>
    tpu.vector_store %arg32[%c0_56, %c0_57], %118 {strides = array<i32>} : memref<16x32xf32, #tpu.memory_space<vmem>>, vector<16x32xf32>,
    %c0_58 = arith.constant 0 : index
    %c0_59 = arith.constant 0 : index
    %120 = vector.load %arg1[%c0_58, %c0_59] : memref<48x16xf32, #tpu.memory_space<vmem>>, vector<48x16xf32>
    %c0_60 = arith.constant 0 : index
    %c0_61 = arith.constant 0 : index
    %121 = vector.load %arg6[%c0_60, %c0_61] : memref<16x32xf32, #tpu.memory_space<vmem>>, vector<16x32xf32>
    %cst_62 = arith.constant dense<0.000000e+00> : vector<48x32xf32>
    %122 = tpu.matmul %120, %121, %cst_62 {dimension_numbers = #tpu.dot_dimension_numbers<[1], [0], [0], [1], [0, 0, 1, 1], [], []>} : vector<48x16xf32>, vector<16x32xf32>, vector<48x32xf32> -> vector<48x32xf32>
    %c0_63 = arith.constant 0 : index
    %c0_64 = arith.constant 0 : index
    %123 = vector.load %arg7[%c0_63, %c0_64] : memref<1x32xf32, #tpu.memory_space<vmem>>, vector<1x32xf32>
    %124 = vector.broadcast %123 : vector<1x32xf32> to vector<48x32xf32>
    %125 = arith.addf %122, %124 : vector<48x32xf32>
    %c0_65 = arith.constant 0 : index
    %c0_66 = arith.constant 0 : index
    %126 = vector.load %arg3[%c0_65, %c0_66] : memref<48x32xf32, #tpu.memory_space<vmem>>, vector<48x32xf32>
    %127 = arith.addf %125, %126 : vector<48x32xf32>
    %c0_67 = arith.constant 0 : index
    %c0_68 = arith.constant 0 : index
    %128 = vector.load %arg20[%c0_67, %c0_68] : memref<32x96xf32, #tpu.memory_space<vmem>>, vector<32x96xf32>
    %cst_69 = arith.constant dense<0.000000e+00> : vector<48x96xf32>
    %129 = tpu.matmul %127, %128, %cst_69 {dimension_numbers = #tpu.dot_dimension_numbers<[1], [0], [0], [1], [0, 0, 1, 1], [], []>} : vector<48x32xf32>, vector<32x96xf32>, vector<48x96xf32> -> vector<48x96xf32>
    %c0_70 = arith.constant 0 : index
    %c0_71 = arith.constant 0 : index
    %130 = vector.load %arg21[%c0_70, %c0_71] : memref<1x96xf32, #tpu.memory_space<vmem>>, vector<1x96xf32>
    %131 = vector.broadcast %130 : vector<1x96xf32> to vector<48x96xf32>
    %132 = arith.addf %129, %131 : vector<48x96xf32>
    %133 = vector.shape_cast %132 : vector<48x96xf32> to vector<6x8x96xf32>
    %134 = vector.extract_strided_slice %133 {offsets = [0, 0, 0], sizes = [6, 8, 16], strides = [1, 1, 1]} : vector<6x8x96xf32> to vector<6x8x16xf32>
    %cst_72 = arith.constant 2.500000e-01 : f32
    %135 = vector.broadcast %cst_72 : f32 to vector<6x8x16xf32>
    %136 = arith.mulf %134, %135 : vector<6x8x16xf32>
    %137 = vector.extract_strided_slice %133 {offsets = [0, 0, 32], sizes = [6, 8, 16], strides = [1, 1, 1]} : vector<6x8x96xf32> to vector<6x8x16xf32>
    %138 = vector.extract_strided_slice %133 {offsets = [0, 0, 64], sizes = [6, 8, 16], strides = [1, 1, 1]} : vector<6x8x96xf32> to vector<6x8x16xf32>
    "tpu.trace_start"() <{level = 10 : i32, message = "btd,bsd->bts"}> : () -> ()
    %cst_73 = arith.constant dense<0.000000e+00> : vector<6x8x8xf32>
    %139 = tpu.matmul %136, %137, %cst_73 {dimension_numbers = #tpu.dot_dimension_numbers<[2], [2], [1], [1], [0, 0, 0, 1, 1, 1], [0], [0]>} : vector<6x8x16xf32>, vector<6x8x16xf32>, vector<6x8x8xf32> -> vector<6x8x8xf32>
    "tpu.trace_stop"() : () -> ()
    %cst_74 = arith.constant dense<0xFF800000> : vector<6x8xf32>
    %140 = vector.multi_reduction <maximumf>, %139, %cst_74 [2] : vector<6x8x8xf32> to vector<6x8xf32>
    %141 = vector.shape_cast %140 : vector<6x8xf32> to vector<6x8x1xf32>
    %142 = vector.broadcast %141 : vector<6x8x1xf32> to vector<6x8x8xf32>
    %143 = arith.subf %139, %142 : vector<6x8x8xf32>
    %144 = math.exp %143 : vector<6x8x8xf32>
    %cst_75 = arith.constant dense<0.000000e+00> : vector<6x8xf32>
    %145 = vector.multi_reduction <add>, %144, %cst_75 [2] : vector<6x8x8xf32> to vector<6x8xf32>
    %146 = vector.shape_cast %145 : vector<6x8xf32> to vector<6x8x1xf32>
    %147 = tpu.reciprocal %146 : vector<6x8x1xf32> -> vector<6x8x1xf32>
    %148 = vector.broadcast %147 : vector<6x8x1xf32> to vector<6x8x8xf32>
    %149 = arith.mulf %144, %148 : vector<6x8x8xf32>
    "tpu.trace_start"() <{level = 10 : i32, message = "bts,bsd->btd"}> : () -> ()
    %cst_76 = arith.constant dense<0.000000e+00> : vector<6x8x16xf32>
    %150 = tpu.matmul %149, %138, %cst_76 {dimension_numbers = #tpu.dot_dimension_numbers<[2], [1], [1], [2], [0, 0, 0, 1, 1, 2], [0], [0]>} : vector<6x8x8xf32>, vector<6x8x16xf32>, vector<6x8x16xf32> -> vector<6x8x16xf32>
    "tpu.trace_stop"() : () -> ()
    %151 = vector.extract_strided_slice %133 {offsets = [0, 0, 16], sizes = [6, 8, 16], strides = [1, 1, 1]} : vector<6x8x96xf32> to vector<6x8x16xf32>
    %cst_77 = arith.constant 2.500000e-01 : f32
    %152 = vector.broadcast %cst_77 : f32 to vector<6x8x16xf32>
    %153 = arith.mulf %151, %152 : vector<6x8x16xf32>
    %154 = vector.extract_strided_slice %133 {offsets = [0, 0, 48], sizes = [6, 8, 16], strides = [1, 1, 1]} : vector<6x8x96xf32> to vector<6x8x16xf32>
    %155 = vector.extract_strided_slice %133 {offsets = [0, 0, 80], sizes = [6, 8, 16], strides = [1, 1, 1]} : vector<6x8x96xf32> to vector<6x8x16xf32>
    "tpu.trace_start"() <{level = 10 : i32, message = "btd,bsd->bts"}> : () -> ()
    %cst_78 = arith.constant dense<0.000000e+00> : vector<6x8x8xf32>
    %156 = tpu.matmul %153, %154, %cst_78 {dimension_numbers = #tpu.dot_dimension_numbers<[2], [2], [1], [1], [0, 0, 0, 1, 1, 1], [0], [0]>} : vector<6x8x16xf32>, vector<6x8x16xf32>, vector<6x8x8xf32> -> vector<6x8x8xf32>
    "tpu.trace_stop"() : () -> ()
    %cst_79 = arith.constant dense<0xFF800000> : vector<6x8xf32>
    %157 = vector.multi_reduction <maximumf>, %156, %cst_79 [2] : vector<6x8x8xf32> to vector<6x8xf32>
    %158 = vector.shape_cast %157 : vector<6x8xf32> to vector<6x8x1xf32>
    %159 = vector.broadcast %158 : vector<6x8x1xf32> to vector<6x8x8xf32>
    %160 = arith.subf %156, %159 : vector<6x8x8xf32>
    %161 = math.exp %160 : vector<6x8x8xf32>
    %cst_80 = arith.constant dense<0.000000e+00> : vector<6x8xf32>
    %162 = vector.multi_reduction <add>, %161, %cst_80 [2] : vector<6x8x8xf32> to vector<6x8xf32>
    %163 = vector.shape_cast %162 : vector<6x8xf32> to vector<6x8x1xf32>
    %164 = tpu.reciprocal %163 : vector<6x8x1xf32> -> vector<6x8x1xf32>
    %165 = vector.broadcast %164 : vector<6x8x1xf32> to vector<6x8x8xf32>
    %166 = arith.mulf %161, %165 : vector<6x8x8xf32>
    "tpu.trace_start"() <{level = 10 : i32, message = "bts,bsd->btd"}> : () -> ()
    %cst_81 = arith.constant dense<0.000000e+00> : vector<6x8x16xf32>
    %167 = tpu.matmul %166, %155, %cst_81 {dimension_numbers = #tpu.dot_dimension_numbers<[2], [1], [1], [2], [0, 0, 0, 1, 1, 2], [0], [0]>} : vector<6x8x8xf32>, vector<6x8x16xf32>, vector<6x8x16xf32> -> vector<6x8x16xf32>
    "tpu.trace_stop"() : () -> ()
    %168 = tpu.concatenate %150, %167 in 2 : vector<6x8x16xf32>, vector<6x8x16xf32> -> vector<6x8x32xf32>
    %169 = vector.shape_cast %168 : vector<6x8x32xf32> to vector<48x32xf32>
    %c0_82 = arith.constant 0 : index
    %c0_83 = arith.constant 0 : index
    %170 = vector.load %arg22[%c0_82, %c0_83] : memref<32x32xf32, #tpu.memory_space<vmem>>, vector<32x32xf32>
    %cst_84 = arith.constant dense<0.000000e+00> : vector<48x32xf32>
    %171 = tpu.matmul %169, %170, %cst_84 {dimension_numbers = #tpu.dot_dimension_numbers<[1], [0], [0], [1], [0, 0, 1, 1], [], []>} : vector<48x32xf32>, vector<32x32xf32>, vector<48x32xf32> -> vector<48x32xf32>
    %c0_85 = arith.constant 0 : index
    %c0_86 = arith.constant 0 : index
    %172 = vector.load %arg23[%c0_85, %c0_86] : memref<1x32xf32, #tpu.memory_space<vmem>>, vector<1x32xf32>
    %173 = vector.broadcast %172 : vector<1x32xf32> to vector<48x32xf32>
    %174 = arith.addf %171, %173 : vector<48x32xf32>
    %175 = arith.addf %127, %174 : vector<48x32xf32>
    %cst_87 = arith.constant dense<0.000000e+00> : vector<48xf32>
    %176 = vector.multi_reduction <add>, %175, %cst_87 [1] : vector<48x32xf32> to vector<48xf32>
    %177 = vector.shape_cast %176 : vector<48xf32> to vector<48x1xf32>
    %cst_88 = arith.constant 3.200000e+01 : f32
    %178 = vector.broadcast %cst_88 : f32 to vector<48x1xf32>
    %179 = arith.divf %177, %178 : vector<48x1xf32>
    %180 = vector.broadcast %179 : vector<48x1xf32> to vector<48x32xf32>
    %181 = arith.subf %175, %180 : vector<48x32xf32>
    %182 = arith.mulf %181, %181 : vector<48x32xf32>
    %cst_89 = arith.constant dense<0.000000e+00> : vector<48xf32>
    %183 = vector.multi_reduction <add>, %182, %cst_89 [1] : vector<48x32xf32> to vector<48xf32>
    %184 = vector.shape_cast %183 : vector<48xf32> to vector<48x1xf32>
    %cst_90 = arith.constant 3.200000e+01 : f32
    %185 = vector.broadcast %cst_90 : f32 to vector<48x1xf32>
    %186 = arith.divf %184, %185 : vector<48x1xf32>
    %187 = vector.broadcast %179 : vector<48x1xf32> to vector<48x32xf32>
    %188 = arith.subf %175, %187 : vector<48x32xf32>
    %cst_91 = arith.constant 9.99999974E-6 : f32
    %189 = vector.broadcast %cst_91 : f32 to vector<48x1xf32>
    %190 = arith.addf %186, %189 : vector<48x1xf32>
    %191 = math.rsqrt %190 : vector<48x1xf32>
    %192 = vector.broadcast %191 : vector<48x1xf32> to vector<48x32xf32>
    %193 = arith.mulf %188, %192 : vector<48x32xf32>
    %c0_92 = arith.constant 0 : index
    %c0_93 = arith.constant 0 : index
    %194 = vector.load %arg24[%c0_92, %c0_93] : memref<1x32xf32, #tpu.memory_space<vmem>>, vector<1x32xf32>
    %195 = vector.broadcast %194 : vector<1x32xf32> to vector<48x32xf32>
    %196 = arith.mulf %193, %195 : vector<48x32xf32>
    %c0_94 = arith.constant 0 : index
    %c0_95 = arith.constant 0 : index
    %197 = vector.load %arg25[%c0_94, %c0_95] : memref<1x32xf32, #tpu.memory_space<vmem>>, vector<1x32xf32>
    %198 = vector.broadcast %197 : vector<1x32xf32> to vector<48x32xf32>
    %199 = arith.addf %196, %198 : vector<48x32xf32>
    %200 = arith.truncf %199 : vector<48x32xf32> to vector<48x32xbf16>
    %c0_96 = arith.constant 0 : index
    %c0_97 = arith.constant 0 : index
    %201 = vector.load %arg26[%c0_96, %c0_97] : memref<32x2048xbf16, #tpu.memory_space<vmem>>, vector<32x2048xbf16>
    %cst_98 = arith.constant dense<0.000000e+00> : vector<48x2048xf32>
    %202 = tpu.matmul %200, %201, %cst_98 {dimension_numbers = #tpu.dot_dimension_numbers<[1], [0], [0], [1], [0, 0, 1, 1], [], []>} : vector<48x32xbf16>, vector<32x2048xbf16>, vector<48x2048xf32> -> vector<48x2048xf32>
    %c0_99 = arith.constant 0 : index
    %c0_100 = arith.constant 0 : index
    %203 = vector.load %arg27[%c0_99, %c0_100] : memref<1x2048xf32, #tpu.memory_space<vmem>>, vector<1x2048xf32>
    %204 = vector.broadcast %203 : vector<1x2048xf32> to vector<48x2048xf32>
    %205 = arith.addf %202, %204 : vector<48x2048xf32>
    %cst_101 = arith.constant 0.000000e+00 : f32
    %206 = vector.broadcast %cst_101 : f32 to vector<48x2048xf32>
    %207 = arith.maximumf %205, %206 : vector<48x2048xf32>
    %208 = arith.truncf %207 : vector<48x2048xf32> to vector<48x2048xbf16>
    %c0_102 = arith.constant 0 : index
    %c0_103 = arith.constant 0 : index
    %209 = vector.load %arg28[%c0_102, %c0_103] : memref<2048x32xbf16, #tpu.memory_space<vmem>>, vector<2048x32xbf16>
    %cst_104 = arith.constant dense<0.000000e+00> : vector<48x32xf32>
    %210 = tpu.matmul %208, %209, %cst_104 {dimension_numbers = #tpu.dot_dimension_numbers<[1], [0], [0], [1], [0, 0, 1, 1], [], []>} : vector<48x2048xbf16>, vector<2048x32xbf16>, vector<48x32xf32> -> vector<48x32xf32>
    %c0_105 = arith.constant 0 : index
    %c0_106 = arith.constant 0 : index
    %211 = vector.load %arg29[%c0_105, %c0_106] : memref<1x32xf32, #tpu.memory_space<vmem>>, vector<1x32xf32>
    %212 = vector.broadcast %211 : vector<1x32xf32> to vector<48x32xf32>
    %213 = arith.addf %210, %212 : vector<48x32xf32>
    %214 = arith.addf %199, %213 : vector<48x32xf32>
    %cst_107 = arith.constant dense<0.000000e+00> : vector<48xf32>
    %215 = vector.multi_reduction <add>, %214, %cst_107 [1] : vector<48x32xf32> to vector<48xf32>
    %216 = vector.shape_cast %215 : vector<48xf32> to vector<48x1xf32>
    %cst_108 = arith.constant 3.200000e+01 : f32
    %217 = vector.broadcast %cst_108 : f32 to vector<48x1xf32>
    %218 = arith.divf %216, %217 : vector<48x1xf32>
    %219 = vector.broadcast %218 : vector<48x1xf32> to vector<48x32xf32>
    %220 = arith.subf %214, %219 : vector<48x32xf32>
    %221 = arith.mulf %220, %220 : vector<48x32xf32>
    %cst_109 = arith.constant dense<0.000000e+00> : vector<48xf32>
    %222 = vector.multi_reduction <add>, %221, %cst_109 [1] : vector<48x32xf32> to vector<48xf32>
    %223 = vector.shape_cast %222 : vector<48xf32> to vector<48x1xf32>
    %cst_110 = arith.constant 3.200000e+01 : f32
    %224 = vector.broadcast %cst_110 : f32 to vector<48x1xf32>
    %225 = arith.divf %223, %224 : vector<48x1xf32>
    %226 = vector.broadcast %218 : vector<48x1xf32> to vector<48x32xf32>
    %227 = arith.subf %214, %226 : vector<48x32xf32>
    %cst_111 = arith.constant 9.99999974E-6 : f32
    %228 = vector.broadcast %cst_111 : f32 to vector<48x1xf32>
    %229 = arith.addf %225, %228 : vector<48x1xf32>
    %230 = math.rsqrt %229 : vector<48x1xf32>
    %231 = vector.broadcast %230 : vector<48x1xf32> to vector<48x32xf32>
    %232 = arith.mulf %227, %231 : vector<48x32xf32>
    %c0_112 = arith.constant 0 : index
    %c0_113 = arith.constant 0 : index
    %233 = vector.load %arg30[%c0_112, %c0_113] : memref<1x32xf32, #tpu.memory_space<vmem>>, vector<1x32xf32>
    %234 = vector.broadcast %233 : vector<1x32xf32> to vector<48x32xf32>
    %235 = arith.mulf %232, %234 : vector<48x32xf32>
    %c0_114 = arith.constant 0 : index
    %c0_115 = arith.constant 0 : index
    %236 = vector.load %arg31[%c0_114, %c0_115] : memref<1x32xf32, #tpu.memory_space<vmem>>, vector<1x32xf32>
    %237 = vector.broadcast %236 : vector<1x32xf32> to vector<48x32xf32>
    %238 = arith.addf %235, %237 : vector<48x32xf32>
    %c0_116 = arith.constant 0 : index
    %c0_117 = arith.constant 0 : index
    %239 = vector.load %arg33[%c0_116, %c0_117] : memref<48x32xf32, #tpu.memory_space<vmem>>, vector<48x32xf32>
    tpu.vector_store %arg33[%c0_116, %c0_117], %238 {strides = array<i32>} : memref<48x32xf32, #tpu.memory_space<vmem>>, vector<48x32xf32>,
    return
  }
}

module attributes {stable_mosaic.version = 11 : i64} {
  func.func @_gru_fc_kernel(%arg0: memref<6x256xf32, #tpu.memory_space<vmem>>, %arg1: memref<2x256xf32, #tpu.memory_space<vmem>>, %arg2: memref<256x768xf32, #tpu.memory_space<vmem>>, %arg3: memref<256x768xf32, #tpu.memory_space<vmem>>, %arg4: memref<1x768xf32, #tpu.memory_space<vmem>>, %arg5: memref<1x768xf32, #tpu.memory_space<vmem>>, %arg6: memref<256x128xf32, #tpu.memory_space<vmem>>, %arg7: memref<1x128xf32, #tpu.memory_space<vmem>>, %arg8: memref<2x128xf32, #tpu.memory_space<vmem>>) attributes {dimension_semantics = [], scalar_prefetch = 0 : i64, scratch_operands = 0 : i64, tpu.core_type = #tpu.core_type<tc>} {
    %c0 = arith.constant 0 : index
    %c0_0 = arith.constant 0 : index
    %0 = vector.load %arg0[%c0, %c0_0] : memref<6x256xf32, #tpu.memory_space<vmem>>, vector<6x256xf32>
    %c0_1 = arith.constant 0 : index
    %c0_2 = arith.constant 0 : index
    %1 = vector.load %arg2[%c0_1, %c0_2] : memref<256x768xf32, #tpu.memory_space<vmem>>, vector<256x768xf32>
    %cst = arith.constant dense<0.000000e+00> : vector<6x768xf32>
    %2 = tpu.matmul %0, %1, %cst {dimension_numbers = #tpu.dot_dimension_numbers<[1], [0], [0], [1], [0, 0, 1, 1], [], []>} : vector<6x256xf32>, vector<256x768xf32>, vector<6x768xf32> -> vector<6x768xf32>
    %c0_3 = arith.constant 0 : index
    %c0_4 = arith.constant 0 : index
    %3 = vector.load %arg4[%c0_3, %c0_4] : memref<1x768xf32, #tpu.memory_space<vmem>>, vector<1x768xf32>
    %4 = vector.broadcast %3 : vector<1x768xf32> to vector<6x768xf32>
    %5 = arith.addf %2, %4 : vector<6x768xf32>
    %c0_5 = arith.constant 0 : index
    %c0_6 = arith.constant 0 : index
    %6 = vector.load %arg3[%c0_5, %c0_6] : memref<256x768xf32, #tpu.memory_space<vmem>>, vector<256x768xf32>
    %c0_7 = arith.constant 0 : index
    %c0_8 = arith.constant 0 : index
    %7 = vector.load %arg5[%c0_7, %c0_8] : memref<1x768xf32, #tpu.memory_space<vmem>>, vector<1x768xf32>
    %cst_9 = arith.constant 0.000000e+00 : f32
    %8 = vector.broadcast %cst_9 : f32 to vector<2x256xf32>
    %9 = vector.extract_strided_slice %5 {offsets = [0, 0], sizes = [2, 768], strides = [1, 1]} : vector<6x768xf32> to vector<2x768xf32>
    %cst_10 = arith.constant dense<0.000000e+00> : vector<2x768xf32>
    %10 = tpu.matmul %8, %6, %cst_10 {dimension_numbers = #tpu.dot_dimension_numbers<[1], [0], [0], [1], [0, 0, 1, 1], [], []>} : vector<2x256xf32>, vector<256x768xf32>, vector<2x768xf32> -> vector<2x768xf32>
    %11 = vector.broadcast %7 : vector<1x768xf32> to vector<2x768xf32>
    %12 = arith.addf %10, %11 : vector<2x768xf32>
    %13 = vector.extract_strided_slice %9 {offsets = [0, 0], sizes = [2, 256], strides = [1, 1]} : vector<2x768xf32> to vector<2x256xf32>
    %14 = vector.extract_strided_slice %12 {offsets = [0, 0], sizes = [2, 256], strides = [1, 1]} : vector<2x768xf32> to vector<2x256xf32>
    %15 = arith.addf %13, %14 : vector<2x256xf32>
    %cst_11 = arith.constant 5.000000e-01 : f32
    %16 = vector.broadcast %cst_11 : f32 to vector<2x256xf32>
    %17 = arith.mulf %16, %15 : vector<2x256xf32>
    %18 = math.tanh %17 : vector<2x256xf32>
    %cst_12 = arith.constant 1.000000e+00 : f32
    %19 = vector.broadcast %cst_12 : f32 to vector<2x256xf32>
    %20 = arith.addf %18, %19 : vector<2x256xf32>
    %cst_13 = arith.constant 5.000000e-01 : f32
    %21 = vector.broadcast %cst_13 : f32 to vector<2x256xf32>
    %22 = arith.mulf %21, %20 : vector<2x256xf32>
    %23 = vector.extract_strided_slice %9 {offsets = [0, 256], sizes = [2, 256], strides = [1, 1]} : vector<2x768xf32> to vector<2x256xf32>
    %24 = vector.extract_strided_slice %12 {offsets = [0, 256], sizes = [2, 256], strides = [1, 1]} : vector<2x768xf32> to vector<2x256xf32>
    %25 = arith.addf %23, %24 : vector<2x256xf32>
    %cst_14 = arith.constant 5.000000e-01 : f32
    %26 = vector.broadcast %cst_14 : f32 to vector<2x256xf32>
    %27 = arith.mulf %26, %25 : vector<2x256xf32>
    %28 = math.tanh %27 : vector<2x256xf32>
    %cst_15 = arith.constant 1.000000e+00 : f32
    %29 = vector.broadcast %cst_15 : f32 to vector<2x256xf32>
    %30 = arith.addf %28, %29 : vector<2x256xf32>
    %cst_16 = arith.constant 5.000000e-01 : f32
    %31 = vector.broadcast %cst_16 : f32 to vector<2x256xf32>
    %32 = arith.mulf %31, %30 : vector<2x256xf32>
    %33 = vector.extract_strided_slice %9 {offsets = [0, 512], sizes = [2, 256], strides = [1, 1]} : vector<2x768xf32> to vector<2x256xf32>
    %34 = vector.extract_strided_slice %12 {offsets = [0, 512], sizes = [2, 256], strides = [1, 1]} : vector<2x768xf32> to vector<2x256xf32>
    %35 = arith.mulf %22, %34 : vector<2x256xf32>
    %36 = arith.addf %33, %35 : vector<2x256xf32>
    %37 = math.tanh %36 : vector<2x256xf32>
    %cst_17 = arith.constant 1.000000e+00 : f32
    %38 = vector.broadcast %cst_17 : f32 to vector<2x256xf32>
    %39 = arith.subf %38, %32 : vector<2x256xf32>
    %40 = arith.mulf %39, %37 : vector<2x256xf32>
    %41 = arith.mulf %32, %8 : vector<2x256xf32>
    %42 = arith.addf %40, %41 : vector<2x256xf32>
    %43 = vector.extract_strided_slice %5 {offsets = [2, 0], sizes = [2, 768], strides = [1, 1]} : vector<6x768xf32> to vector<2x768xf32>
    %cst_18 = arith.constant dense<0.000000e+00> : vector<2x768xf32>
    %44 = tpu.matmul %42, %6, %cst_18 {dimension_numbers = #tpu.dot_dimension_numbers<[1], [0], [0], [1], [0, 0, 1, 1], [], []>} : vector<2x256xf32>, vector<256x768xf32>, vector<2x768xf32> -> vector<2x768xf32>
    %45 = vector.broadcast %7 : vector<1x768xf32> to vector<2x768xf32>
    %46 = arith.addf %44, %45 : vector<2x768xf32>
    %47 = vector.extract_strided_slice %43 {offsets = [0, 0], sizes = [2, 256], strides = [1, 1]} : vector<2x768xf32> to vector<2x256xf32>
    %48 = vector.extract_strided_slice %46 {offsets = [0, 0], sizes = [2, 256], strides = [1, 1]} : vector<2x768xf32> to vector<2x256xf32>
    %49 = arith.addf %47, %48 : vector<2x256xf32>
    %cst_19 = arith.constant 5.000000e-01 : f32
    %50 = vector.broadcast %cst_19 : f32 to vector<2x256xf32>
    %51 = arith.mulf %50, %49 : vector<2x256xf32>
    %52 = math.tanh %51 : vector<2x256xf32>
    %cst_20 = arith.constant 1.000000e+00 : f32
    %53 = vector.broadcast %cst_20 : f32 to vector<2x256xf32>
    %54 = arith.addf %52, %53 : vector<2x256xf32>
    %cst_21 = arith.constant 5.000000e-01 : f32
    %55 = vector.broadcast %cst_21 : f32 to vector<2x256xf32>
    %56 = arith.mulf %55, %54 : vector<2x256xf32>
    %57 = vector.extract_strided_slice %43 {offsets = [0, 256], sizes = [2, 256], strides = [1, 1]} : vector<2x768xf32> to vector<2x256xf32>
    %58 = vector.extract_strided_slice %46 {offsets = [0, 256], sizes = [2, 256], strides = [1, 1]} : vector<2x768xf32> to vector<2x256xf32>
    %59 = arith.addf %57, %58 : vector<2x256xf32>
    %cst_22 = arith.constant 5.000000e-01 : f32
    %60 = vector.broadcast %cst_22 : f32 to vector<2x256xf32>
    %61 = arith.mulf %60, %59 : vector<2x256xf32>
    %62 = math.tanh %61 : vector<2x256xf32>
    %cst_23 = arith.constant 1.000000e+00 : f32
    %63 = vector.broadcast %cst_23 : f32 to vector<2x256xf32>
    %64 = arith.addf %62, %63 : vector<2x256xf32>
    %cst_24 = arith.constant 5.000000e-01 : f32
    %65 = vector.broadcast %cst_24 : f32 to vector<2x256xf32>
    %66 = arith.mulf %65, %64 : vector<2x256xf32>
    %67 = vector.extract_strided_slice %43 {offsets = [0, 512], sizes = [2, 256], strides = [1, 1]} : vector<2x768xf32> to vector<2x256xf32>
    %68 = vector.extract_strided_slice %46 {offsets = [0, 512], sizes = [2, 256], strides = [1, 1]} : vector<2x768xf32> to vector<2x256xf32>
    %69 = arith.mulf %56, %68 : vector<2x256xf32>
    %70 = arith.addf %67, %69 : vector<2x256xf32>
    %71 = math.tanh %70 : vector<2x256xf32>
    %cst_25 = arith.constant 1.000000e+00 : f32
    %72 = vector.broadcast %cst_25 : f32 to vector<2x256xf32>
    %73 = arith.subf %72, %66 : vector<2x256xf32>
    %74 = arith.mulf %73, %71 : vector<2x256xf32>
    %75 = arith.mulf %66, %42 : vector<2x256xf32>
    %76 = arith.addf %74, %75 : vector<2x256xf32>
    %77 = vector.extract_strided_slice %5 {offsets = [4, 0], sizes = [2, 768], strides = [1, 1]} : vector<6x768xf32> to vector<2x768xf32>
    %cst_26 = arith.constant dense<0.000000e+00> : vector<2x768xf32>
    %78 = tpu.matmul %76, %6, %cst_26 {dimension_numbers = #tpu.dot_dimension_numbers<[1], [0], [0], [1], [0, 0, 1, 1], [], []>} : vector<2x256xf32>, vector<256x768xf32>, vector<2x768xf32> -> vector<2x768xf32>
    %79 = vector.broadcast %7 : vector<1x768xf32> to vector<2x768xf32>
    %80 = arith.addf %78, %79 : vector<2x768xf32>
    %81 = vector.extract_strided_slice %77 {offsets = [0, 0], sizes = [2, 256], strides = [1, 1]} : vector<2x768xf32> to vector<2x256xf32>
    %82 = vector.extract_strided_slice %80 {offsets = [0, 0], sizes = [2, 256], strides = [1, 1]} : vector<2x768xf32> to vector<2x256xf32>
    %83 = arith.addf %81, %82 : vector<2x256xf32>
    %cst_27 = arith.constant 5.000000e-01 : f32
    %84 = vector.broadcast %cst_27 : f32 to vector<2x256xf32>
    %85 = arith.mulf %84, %83 : vector<2x256xf32>
    %86 = math.tanh %85 : vector<2x256xf32>
    %cst_28 = arith.constant 1.000000e+00 : f32
    %87 = vector.broadcast %cst_28 : f32 to vector<2x256xf32>
    %88 = arith.addf %86, %87 : vector<2x256xf32>
    %cst_29 = arith.constant 5.000000e-01 : f32
    %89 = vector.broadcast %cst_29 : f32 to vector<2x256xf32>
    %90 = arith.mulf %89, %88 : vector<2x256xf32>
    %91 = vector.extract_strided_slice %77 {offsets = [0, 256], sizes = [2, 256], strides = [1, 1]} : vector<2x768xf32> to vector<2x256xf32>
    %92 = vector.extract_strided_slice %80 {offsets = [0, 256], sizes = [2, 256], strides = [1, 1]} : vector<2x768xf32> to vector<2x256xf32>
    %93 = arith.addf %91, %92 : vector<2x256xf32>
    %cst_30 = arith.constant 5.000000e-01 : f32
    %94 = vector.broadcast %cst_30 : f32 to vector<2x256xf32>
    %95 = arith.mulf %94, %93 : vector<2x256xf32>
    %96 = math.tanh %95 : vector<2x256xf32>
    %cst_31 = arith.constant 1.000000e+00 : f32
    %97 = vector.broadcast %cst_31 : f32 to vector<2x256xf32>
    %98 = arith.addf %96, %97 : vector<2x256xf32>
    %cst_32 = arith.constant 5.000000e-01 : f32
    %99 = vector.broadcast %cst_32 : f32 to vector<2x256xf32>
    %100 = arith.mulf %99, %98 : vector<2x256xf32>
    %101 = vector.extract_strided_slice %77 {offsets = [0, 512], sizes = [2, 256], strides = [1, 1]} : vector<2x768xf32> to vector<2x256xf32>
    %102 = vector.extract_strided_slice %80 {offsets = [0, 512], sizes = [2, 256], strides = [1, 1]} : vector<2x768xf32> to vector<2x256xf32>
    %103 = arith.mulf %90, %102 : vector<2x256xf32>
    %104 = arith.addf %101, %103 : vector<2x256xf32>
    %105 = math.tanh %104 : vector<2x256xf32>
    %cst_33 = arith.constant 1.000000e+00 : f32
    %106 = vector.broadcast %cst_33 : f32 to vector<2x256xf32>
    %107 = arith.subf %106, %100 : vector<2x256xf32>
    %108 = arith.mulf %107, %105 : vector<2x256xf32>
    %109 = arith.mulf %100, %76 : vector<2x256xf32>
    %110 = arith.addf %108, %109 : vector<2x256xf32>
    %c0_34 = arith.constant 0 : index
    %c0_35 = arith.constant 0 : index
    %111 = vector.load %arg1[%c0_34, %c0_35] : memref<2x256xf32, #tpu.memory_space<vmem>>, vector<2x256xf32>
    %112 = arith.addf %111, %110 : vector<2x256xf32>
    %c0_36 = arith.constant 0 : index
    %c0_37 = arith.constant 0 : index
    %113 = vector.load %arg6[%c0_36, %c0_37] : memref<256x128xf32, #tpu.memory_space<vmem>>, vector<256x128xf32>
    %cst_38 = arith.constant dense<0.000000e+00> : vector<2x128xf32>
    %114 = tpu.matmul %112, %113, %cst_38 {dimension_numbers = #tpu.dot_dimension_numbers<[1], [0], [0], [1], [0, 0, 1, 1], [], []>} : vector<2x256xf32>, vector<256x128xf32>, vector<2x128xf32> -> vector<2x128xf32>
    %c0_39 = arith.constant 0 : index
    %c0_40 = arith.constant 0 : index
    %115 = vector.load %arg7[%c0_39, %c0_40] : memref<1x128xf32, #tpu.memory_space<vmem>>, vector<1x128xf32>
    %116 = vector.broadcast %115 : vector<1x128xf32> to vector<2x128xf32>
    %117 = arith.addf %114, %116 : vector<2x128xf32>
    %c0_41 = arith.constant 0 : index
    %c0_42 = arith.constant 0 : index
    %118 = vector.load %arg8[%c0_41, %c0_42] : memref<2x128xf32, #tpu.memory_space<vmem>>, vector<2x128xf32>
    tpu.vector_store %arg8[%c0_41, %c0_42], %117 {strides = array<i32>} : memref<2x128xf32, #tpu.memory_space<vmem>>, vector<2x128xf32>,
    return
  }
}

</mosaic_0001>

<llo_original>
// kernel: tile.28
$region0: #{tile.28}
  #allocation0 [shape = 's32[1]{0}', space=sflag, size = 0x4, scoped, tag = 'scoped memory for tile.28']
  %s0 = inlined_call_operand.vmem [shape: f32[16], index: 0, kind: input, shape index: {}]
  %s1 = inlined_call_operand.vmem [shape: f32[8,16], index: 1, kind: output, shape index: {}]
  // Predicated region
  $region2: #{tile.28} parent=0 // pred_check
    _
  $region3: #{tile.28} parent=0 // pred_check_branch
    %3 = sbr.rel (0) target = $region5
  $region4: #{tile.28} parent=0 // pred_region
    _
  $region5: #{tile.28} parent=0 // pred_fallthru
    _
  %v4 = vld [vmem:[%s0] ss:$0 sm:$0xff]
  %5 = vst [vmem:[%s1] sm:$0xff] %v4

// kernel: tile.29
$region0: #{tile.29}
  %s0 = inlined_call_operand.vmem [shape: f32[8,16], index: 0, kind: input, shape index: {}]
  %s1 = inlined_call_operand.vmem [shape: f32[1,128], index: 1, kind: output, shape index: {}]
  $region1: #{tile.29} parent=0
    #allocation0 [shape = 'u8[4096]{0}', space=vmem, size = 0x1000, scoped, tag = 'scoped mem for output reshape']
    %v2 = vld [vmem:[%s0] sm:$0x1]
    %vm3 = vcmask 130048
    %4 = vst.msk [vmem:[#allocation0] sm:$0x1] %vm3, %v2
    %s5 = scalar_lea.vmem %s0, 7
    %v6 = vld [vmem:[%s5] sm:$0x1]
    %7 = vrot.lane.b32.xlu0 %v6, 112
    %v8 = vpop.permute.xlu0 %7
    %vm9 = vcmask 1048448
    %10 = vst.msk [vmem:[#allocation0] sm:$0x1] %vm9, %v8
    %s11 = scalar_lea.vmem %s0, 6
    %v12 = vld [vmem:[%s11] sm:$0x1]
    %13 = vrot.lane.b32.xlu0 %v12, 96
    %v14 = vpop.permute.xlu0 %13
    %vm15 = vcmask 917248
    %16 = vst.msk [vmem:[#allocation0] sm:$0x1] %vm15, %v14
    %s17 = scalar_lea.vmem %s0, 5
    %v18 = vld [vmem:[%s17] sm:$0x1]
    %19 = vrot.lane.b32.xlu0 %v18, 80
    %v20 = vpop.permute.xlu0 %19
    %vm21 = vcmask 786048
    %22 = vst.msk [vmem:[#allocation0] sm:$0x1] %vm21, %v20
    %s23 = scalar_lea.vmem %s0, 4
    %v24 = vld [vmem:[%s23] sm:$0x1]
    %25 = vrot.lane.b32.xlu0 %v24, 64
    %v26 = vpop.permute.xlu0 %25
    %vm27 = vcmask 654848
    %28 = vst.msk [vmem:[#allocation0] sm:$0x1] %vm27, %v26
    %s29 = scalar_lea.vmem %s0, 3
    %v30 = vld [vmem:[%s29] sm:$0x1]
    %31 = vrot.lane.b32.xlu0 %v30, 48
    %v32 = vpop.permute.xlu0 %31
    %vm33 = vcmask 523648
    %34 = vst.msk [vmem:[#allocation0] sm:$0x1] %vm33, %v32
    %s35 = scalar_lea.vmem %s0, 2
    %v36 = vld [vmem:[%s35] sm:$0x1]
    %37 = vrot.lane.b32.xlu0 %v36, 32
    %v38 = vpop.permute.xlu0 %37
    %vm39 = vcmask 392448
    %40 = vst.msk [vmem:[#allocation0] sm:$0x1] %vm39, %v38
    %s41 = scalar_lea.vmem %s0, 1
    %v42 = vld [vmem:[%s41] sm:$0x1]
    %43 = vrot.lane.b32.xlu0 %v42, 16
    %v44 = vpop.permute.xlu0 %43
    %vm45 = vcmask 261248
    %46 = vst.msk [vmem:[#allocation0] sm:$0x1] %vm45, %v44
    %s48 = ssub.s32 2, 1
    %v49 = vld [vmem:[#allocation0] sm:%s48]
    %s51 = ssub.s32 2, 1
    %52 = vst [vmem:[%s1] sm:%s51] %v49

// kernel: meta_cdw_forward.3
$region0: #{meta_cdw_forward.3}
  #allocation0 [shape = 'u32[]', space=smem, size = 0x4, offset = 0x4, fixed_abs, tag = 'smem constant byte address 0x4 - core index']
  #allocation1 [shape = 'u32[72,128]{1,0:T(1,128)}', space=vmem, size = 0x9000, scoped, tag = 'internal scratch']
  %s0 = inlined_call_operand.vmem [shape: f32[6,256], index: 0, kind: input, shape index: {}]
  %s1 = inlined_call_operand.vmem [shape: f32[2,256], index: 1, kind: input, shape index: {}]
  %s2 = inlined_call_operand.vmem [shape: f32[256,768], index: 2, kind: input, shape index: {}]
  %s3 = inlined_call_operand.vmem [shape: f32[256,768], index: 3, kind: input, shape index: {}]
  %s4 = inlined_call_operand.vmem [shape: f32[1,768], index: 4, kind: input, shape index: {}]
  %s5 = inlined_call_operand.vmem [shape: f32[1,768], index: 5, kind: input, shape index: {}]
  %s6 = inlined_call_operand.vmem [shape: f32[256,128], index: 6, kind: input, shape index: {}]
  %s7 = inlined_call_operand.vmem [shape: f32[1,128], index: 7, kind: input, shape index: {}]
  %s8 = inlined_call_operand.vmem [shape: f32[2,128], index: 8, kind: output, shape index: {}]
  %s9 = sld [smem:[#allocation0]]
  $region42: #{meta_cdw_forward.3} parent=0
    _
  %s11 = ssub.s32 1, %s9
  %s12 = scalar_select 0, %s11, %s9
  // Predicated region
  $region2: #{meta_cdw_forward.3} parent=0 // pred_check
    _
  $region3: #{meta_cdw_forward.3} parent=0 // pred_check_branch
    %14 = sbr.rel (0) target = $region5
  $region4: #{meta_cdw_forward.3} parent=0 // pred_region
    _
  $region5: #{meta_cdw_forward.3} parent=0 // pred_fallthru
    _
  // Predicated region
  $region6: #{meta_cdw_forward.3} parent=0 // pred_check
    _
  $region7: #{meta_cdw_forward.3} parent=0 // pred_check_branch
    %16 = sbr.rel (0) target = $region9
  $region8: #{meta_cdw_forward.3} parent=0 // pred_region
    _
  $region9: #{meta_cdw_forward.3} parent=0 // pred_fallthru
    _
  // Predicated region
  $region10: #{meta_cdw_forward.3} parent=0 // pred_check
    _
  $region11: #{meta_cdw_forward.3} parent=0 // pred_check_branch
    %18 = sbr.rel (0) target = $region13
  $region12: #{meta_cdw_forward.3} parent=0 // pred_region
    _
  $region13: #{meta_cdw_forward.3} parent=0 // pred_fallthru
    _
  // Predicated region
  $region14: #{meta_cdw_forward.3} parent=0 // pred_check
    _
  $region15: #{meta_cdw_forward.3} parent=0 // pred_check_branch
    %20 = sbr.rel (0) target = $region17
  $region16: #{meta_cdw_forward.3} parent=0 // pred_region
    _
  $region17: #{meta_cdw_forward.3} parent=0 // pred_fallthru
    _
  // Predicated region
  $region18: #{meta_cdw_forward.3} parent=0 // pred_check
    _
  $region19: #{meta_cdw_forward.3} parent=0 // pred_check_branch
    %22 = sbr.rel (0) target = $region21
  $region20: #{meta_cdw_forward.3} parent=0 // pred_region
    _
  $region21: #{meta_cdw_forward.3} parent=0 // pred_fallthru
    _
  // Predicated region
  $region22: #{meta_cdw_forward.3} parent=0 // pred_check
    _
  $region23: #{meta_cdw_forward.3} parent=0 // pred_check_branch
    %24 = sbr.rel (0) target = $region25
  $region24: #{meta_cdw_forward.3} parent=0 // pred_region
    _
  $region25: #{meta_cdw_forward.3} parent=0 // pred_fallthru
    _
  // Predicated region
  $region26: #{meta_cdw_forward.3} parent=0 // pred_check
    _
  $region27: #{meta_cdw_forward.3} parent=0 // pred_check_branch
    %26 = sbr.rel (0) target = $region29
  $region28: #{meta_cdw_forward.3} parent=0 // pred_region
    _
  $region29: #{meta_cdw_forward.3} parent=0 // pred_fallthru
    _
  // Predicated region
  $region30: #{meta_cdw_forward.3} parent=0 // pred_check
    _
  $region31: #{meta_cdw_forward.3} parent=0 // pred_check_branch
    %28 = sbr.rel (0) target = $region33
  $region32: #{meta_cdw_forward.3} parent=0 // pred_region
    _
  $region33: #{meta_cdw_forward.3} parent=0 // pred_fallthru
    _
  %v29 = vld [vmem:[%s0] sm:$0x3f]
  %v30 = vld [vmem:[%s0 + $0x8] sm:$0x3f]
  %v31 = vld [vmem:[%s2] sm:$0xff]
  %v32 = vld [vmem:[%s2 + $0x8] sm:$0xff]
  %v33 = vld [vmem:[%s2 + $0x10] sm:$0xff]
  %v34 = vld [vmem:[%s2 + $0x18] sm:$0xff]
  %v35 = vld [vmem:[%s2 + $0x20] sm:$0xff]
  %v36 = vld [vmem:[%s2 + $0x28] sm:$0xff]
  %v37 = vld [vmem:[%s2 + $0x30] sm:$0xff]
  %v38 = vld [vmem:[%s2 + $0x38] sm:$0xff]
  %v39 = vld [vmem:[%s2 + $0x40] sm:$0xff]
  %v40 = vld [vmem:[%s2 + $0x48] sm:$0xff]
  %v41 = vld [vmem:[%s2 + $0x50] sm:$0xff]
  %v42 = vld [vmem:[%s2 + $0x58] sm:$0xff]
  %v43 = vld [vmem:[%s2 + $0x60] sm:$0xff]
  %v44 = vld [vmem:[%s2 + $0x68] sm:$0xff]
  %v45 = vld [vmem:[%s2 + $0x70] sm:$0xff]
  %v46 = vld [vmem:[%s2 + $0x78] sm:$0xff]
  %v47 = vld [vmem:[%s2 + $0x80] sm:$0xff]
  %v48 = vld [vmem:[%s2 + $0x88] sm:$0xff]
  %v49 = vld [vmem:[%s2 + $0x90] sm:$0xff]
  %v50 = vld [vmem:[%s2 + $0x98] sm:$0xff]
  %v51 = vld [vmem:[%s2 + $0xa0] sm:$0xff]
  %v52 = vld [vmem:[%s2 + $0xa8] sm:$0xff]
  %v53 = vld [vmem:[%s2 + $0xb0] sm:$0xff]
  %v54 = vld [vmem:[%s2 + $0xb8] sm:$0xff]
  %v55 = vld [vmem:[%s2 + $0xc0] sm:$0xff]
  %v56 = vld [vmem:[%s2 + $0xc8] sm:$0xff]
  %v57 = vld [vmem:[%s2 + $0xd0] sm:$0xff]
  %v58 = vld [vmem:[%s2 + $0xd8] sm:$0xff]
  %v59 = vld [vmem:[%s2 + $0xe0] sm:$0xff]
  %v60 = vld [vmem:[%s2 + $0xe8] sm:$0xff]
  %v61 = vld [vmem:[%s2 + $0xf0] sm:$0xff]
  %v62 = vld [vmem:[%s2 + $0xf8] sm:$0xff]
  %v63 = vld [vmem:[%s2 + $0x100] sm:$0xff]
  %v64 = vld [vmem:[%s2 + $0x108] sm:$0xff]
  %v65 = vld [vmem:[%s2 + $0x110] sm:$0xff]
  %v66 = vld [vmem:[%s2 + $0x118] sm:$0xff]
  %v67 = vld [vmem:[%s2 + $0x120] sm:$0xff]
  %v68 = vld [vmem:[%s2 + $0x128] sm:$0xff]
  %v69 = vld [vmem:[%s2 + $0x130] sm:$0xff]
  %v70 = vld [vmem:[%s2 + $0x138] sm:$0xff]
  %v71 = vld [vmem:[%s2 + $0x140] sm:$0xff]
  %v72 = vld [vmem:[%s2 + $0x148] sm:$0xff]
  %v73 = vld [vmem:[%s2 + $0x150] sm:$0xff]
  %v74 = vld [vmem:[%s2 + $0x158] sm:$0xff]
  %v75 = vld [vmem:[%s2 + $0x160] sm:$0xff]
  %v76 = vld [vmem:[%s2 + $0x168] sm:$0xff]
  %v77 = vld [vmem:[%s2 + $0x170] sm:$0xff]
  %v78 = vld [vmem:[%s2 + $0x178] sm:$0xff]
  %v79 = vld [vmem:[%s2 + $0x180] sm:$0xff]
  %v80 = vld [vmem:[%s2 + $0x188] sm:$0xff]
  %v81 = vld [vmem:[%s2 + $0x190] sm:$0xff]
  %v82 = vld [vmem:[%s2 + $0x198] sm:$0xff]
  %v83 = vld [vmem:[%s2 + $0x1a0] sm:$0xff]
  %v84 = vld [vmem:[%s2 + $0x1a8] sm:$0xff]
  %v85 = vld [vmem:[%s2 + $0x1b0] sm:$0xff]
  %v86 = vld [vmem:[%s2 + $0x1b8] sm:$0xff]
  %v87 = vld [vmem:[%s2 + $0x1c0] sm:$0xff]
  %v88 = vld [vmem:[%s2 + $0x1c8] sm:$0xff]
  %v89 = vld [vmem:[%s2 + $0x1d0] sm:$0xff]
  %v90 = vld [vmem:[%s2 + $0x1d8] sm:$0xff]
  %v91 = vld [vmem:[%s2 + $0x1e0] sm:$0xff]
  %v92 = vld [vmem:[%s2 + $0x1e8] sm:$0xff]
  %v93 = vld [vmem:[%s2 + $0x1f0] sm:$0xff]
  %v94 = vld [vmem:[%s2 + $0x1f8] sm:$0xff]
  %v95 = vld [vmem:[%s2 + $0x200] sm:$0xff]
  %v96 = vld [vmem:[%s2 + $0x208] sm:$0xff]
  %v97 = vld [vmem:[%s2 + $0x210] sm:$0xff]
  %v98 = vld [vmem:[%s2 + $0x218] sm:$0xff]
  %v99 = vld [vmem:[%s2 + $0x220] sm:$0xff]
  %v100 = vld [vmem:[%s2 + $0x228] sm:$0xff]
  %v101 = vld [vmem:[%s2 + $0x230] sm:$0xff]
  %v102 = vld [vmem:[%s2 + $0x238] sm:$0xff]
  %v103 = vld [vmem:[%s2 + $0x240] sm:$0xff]
  %v104 = vld [vmem:[%s2 + $0x248] sm:$0xff]
  %v105 = vld [vmem:[%s2 + $0x250] sm:$0xff]
  %v106 = vld [vmem:[%s2 + $0x258] sm:$0xff]
  %v107 = vld [vmem:[%s2 + $0x260] sm:$0xff]
  %v108 = vld [vmem:[%s2 + $0x268] sm:$0xff]
  %v109 = vld [vmem:[%s2 + $0x270] sm:$0xff]
  %v110 = vld [vmem:[%s2 + $0x278] sm:$0xff]
  %v111 = vld [vmem:[%s2 + $0x280] sm:$0xff]
  %v112 = vld [vmem:[%s2 + $0x288] sm:$0xff]
  %v113 = vld [vmem:[%s2 + $0x290] sm:$0xff]
  %v114 = vld [vmem:[%s2 + $0x298] sm:$0xff]
  %v115 = vld [vmem:[%s2 + $0x2a0] sm:$0xff]
  %v116 = vld [vmem:[%s2 + $0x2a8] sm:$0xff]
  %v117 = vld [vmem:[%s2 + $0x2b0] sm:$0xff]
  %v118 = vld [vmem:[%s2 + $0x2b8] sm:$0xff]
  %v119 = vld [vmem:[%s2 + $0x2c0] sm:$0xff]
  %v120 = vld [vmem:[%s2 + $0x2c8] sm:$0xff]
  %v121 = vld [vmem:[%s2 + $0x2d0] sm:$0xff]
  %v122 = vld [vmem:[%s2 + $0x2d8] sm:$0xff]
  %v123 = vld [vmem:[%s2 + $0x2e0] sm:$0xff]
  %v124 = vld [vmem:[%s2 + $0x2e8] sm:$0xff]
  %v125 = vld [vmem:[%s2 + $0x2f0] sm:$0xff]
  %v126 = vld [vmem:[%s2 + $0x2f8] sm:$0xff]
  %v127 = vld [vmem:[%s2 + $0x300] sm:$0xff]
  %v128 = vld [vmem:[%s2 + $0x308] sm:$0xff]
  %v129 = vld [vmem:[%s2 + $0x310] sm:$0xff]
  %v130 = vld [vmem:[%s2 + $0x318] sm:$0xff]
  %v131 = vld [vmem:[%s2 + $0x320] sm:$0xff]
  %v132 = vld [vmem:[%s2 + $0x328] sm:$0xff]
  %v133 = vld [vmem:[%s2 + $0x330] sm:$0xff]
  %v134 = vld [vmem:[%s2 + $0x338] sm:$0xff]
  %v135 = vld [vmem:[%s2 + $0x340] sm:$0xff]
  %v136 = vld [vmem:[%s2 + $0x348] sm:$0xff]
  %v137 = vld [vmem:[%s2 + $0x350] sm:$0xff]
  %v138 = vld [vmem:[%s2 + $0x358] sm:$0xff]
  %v139 = vld [vmem:[%s2 + $0x360] sm:$0xff]
  %v140 = vld [vmem:[%s2 + $0x368] sm:$0xff]
  %v141 = vld [vmem:[%s2 + $0x370] sm:$0xff]
  %v142 = vld [vmem:[%s2 + $0x378] sm:$0xff]
  %v143 = vld [vmem:[%s2 + $0x380] sm:$0xff]
  %v144 = vld [vmem:[%s2 + $0x388] sm:$0xff]
  %v145 = vld [vmem:[%s2 + $0x390] sm:$0xff]
  %v146 = vld [vmem:[%s2 + $0x398] sm:$0xff]
  %v147 = vld [vmem:[%s2 + $0x3a0] sm:$0xff]
  %v148 = vld [vmem:[%s2 + $0x3a8] sm:$0xff]
  %v149 = vld [vmem:[%s2 + $0x3b0] sm:$0xff]
  %v150 = vld [vmem:[%s2 + $0x3b8] sm:$0xff]
  %v151 = vld [vmem:[%s2 + $0x3c0] sm:$0xff]
  %v152 = vld [vmem:[%s2 + $0x3c8] sm:$0xff]
  %v153 = vld [vmem:[%s2 + $0x3d0] sm:$0xff]
  %v154 = vld [vmem:[%s2 + $0x3d8] sm:$0xff]
  %v155 = vld [vmem:[%s2 + $0x3e0] sm:$0xff]
  %v156 = vld [vmem:[%s2 + $0x3e8] sm:$0xff]
  %v157 = vld [vmem:[%s2 + $0x3f0] sm:$0xff]
  %v158 = vld [vmem:[%s2 + $0x3f8] sm:$0xff]
  %v159 = vld [vmem:[%s2 + $0x400] sm:$0xff]
  %v160 = vld [vmem:[%s2 + $0x408] sm:$0xff]
  %v161 = vld [vmem:[%s2 + $0x410] sm:$0xff]
  %v162 = vld [vmem:[%s2 + $0x418] sm:$0xff]
  %v163 = vld [vmem:[%s2 + $0x420] sm:$0xff]
  %v164 = vld [vmem:[%s2 + $0x428] sm:$0xff]
  %v165 = vld [vmem:[%s2 + $0x430] sm:$0xff]
  %v166 = vld [vmem:[%s2 + $0x438] sm:$0xff]
  %v167 = vld [vmem:[%s2 + $0x440] sm:$0xff]
  %v168 = vld [vmem:[%s2 + $0x448] sm:$0xff]
  %v169 = vld [vmem:[%s2 + $0x450] sm:$0xff]
  %v170 = vld [vmem:[%s2 + $0x458] sm:$0xff]
  %v171 = vld [vmem:[%s2 + $0x460] sm:$0xff]
  %v172 = vld [vmem:[%s2 + $0x468] sm:$0xff]
  %v173 = vld [vmem:[%s2 + $0x470] sm:$0xff]
  %v174 = vld [vmem:[%s2 + $0x478] sm:$0xff]
  %v175 = vld [vmem:[%s2 + $0x480] sm:$0xff]
  %v176 = vld [vmem:[%s2 + $0x488] sm:$0xff]
  %v177 = vld [vmem:[%s2 + $0x490] sm:$0xff]
  %v178 = vld [vmem:[%s2 + $0x498] sm:$0xff]
  %v179 = vld [vmem:[%s2 + $0x4a0] sm:$0xff]
  %v180 = vld [vmem:[%s2 + $0x4a8] sm:$0xff]
  %v181 = vld [vmem:[%s2 + $0x4b0] sm:$0xff]
  %v182 = vld [vmem:[%s2 + $0x4b8] sm:$0xff]
  %v183 = vld [vmem:[%s2 + $0x4c0] sm:$0xff]
  %v184 = vld [vmem:[%s2 + $0x4c8] sm:$0xff]
  %v185 = vld [vmem:[%s2 + $0x4d0] sm:$0xff]
  %v186 = vld [vmem:[%s2 + $0x4d8] sm:$0xff]
  %v187 = vld [vmem:[%s2 + $0x4e0] sm:$0xff]
  %v188 = vld [vmem:[%s2 + $0x4e8] sm:$0xff]
  %v189 = vld [vmem:[%s2 + $0x4f0] sm:$0xff]
  %v190 = vld [vmem:[%s2 + $0x4f8] sm:$0xff]
  %v191 = vld [vmem:[%s2 + $0x500] sm:$0xff]
  %v192 = vld [vmem:[%s2 + $0x508] sm:$0xff]
  %v193 = vld [vmem:[%s2 + $0x510] sm:$0xff]
  %v194 = vld [vmem:[%s2 + $0x518] sm:$0xff]
  %v195 = vld [vmem:[%s2 + $0x520] sm:$0xff]
  %v196 = vld [vmem:[%s2 + $0x528] sm:$0xff]
  %v197 = vld [vmem:[%s2 + $0x530] sm:$0xff]
  %v198 = vld [vmem:[%s2 + $0x538] sm:$0xff]
  %v199 = vld [vmem:[%s2 + $0x540] sm:$0xff]
  %v200 = vld [vmem:[%s2 + $0x548] sm:$0xff]
  %v201 = vld [vmem:[%s2 + $0x550] sm:$0xff]
  %v202 = vld [vmem:[%s2 + $0x558] sm:$0xff]
  %v203 = vld [vmem:[%s2 + $0x560] sm:$0xff]
  %v204 = vld [vmem:[%s2 + $0x568] sm:$0xff]
  %v205 = vld [vmem:[%s2 + $0x570] sm:$0xff]
  %v206 = vld [vmem:[%s2 + $0x578] sm:$0xff]
  %v207 = vld [vmem:[%s2 + $0x580] sm:$0xff]
  %v208 = vld [vmem:[%s2 + $0x588] sm:$0xff]
  %v209 = vld [vmem:[%s2 + $0x590] sm:$0xff]
  %v210 = vld [vmem:[%s2 + $0x598] sm:$0xff]
  %v211 = vld [vmem:[%s2 + $0x5a0] sm:$0xff]
  %v212 = vld [vmem:[%s2 + $0x5a8] sm:$0xff]
  %v213 = vld [vmem:[%s2 + $0x5b0] sm:$0xff]
  %v214 = vld [vmem:[%s2 + $0x5b8] sm:$0xff]
  %v215 = vld [vmem:[%s2 + $0x5c0] sm:$0xff]
  %v216 = vld [vmem:[%s2 + $0x5c8] sm:$0xff]
  %v217 = vld [vmem:[%s2 + $0x5d0] sm:$0xff]
  %v218 = vld [vmem:[%s2 + $0x5d8] sm:$0xff]
  %v219 = vld [vmem:[%s2 + $0x5e0] sm:$0xff]
  %v220 = vld [vmem:[%s2 + $0x5e8] sm:$0xff]
  %v221 = vld [vmem:[%s2 + $0x5f0] sm:$0xff]
  %v222 = vld [vmem:[%s2 + $0x5f8] sm:$0xff]
  %v223 = vld [vmem:[%s4] sm:$0x3f]
  %v225 = vperm.slane %v223, 0
  %v226 = vperm.slane %v223, 1
  %v227 = vperm.slane %v223, 2
  %v228 = vperm.slane %v223, 3
  %v229 = vperm.slane %v223, 4
  %v230 = vperm.slane %v223, 5
  %237 = vmatpush.msra.mxu0 %v121
  %238 = vmatpush.msra.mxu0 %v115
  %239 = vmatpush.msra.mxu0 %v109
  %240 = vmatpush.msra.mxu0 %v103
  %241 = vmatpush.msra.mxu0 %v97
  %242 = vmatpush.msra.mxu0 %v91
  %243 = vmatpush.msra.mxu0 %v85
  %244 = vmatpush.msra.mxu0 %v79
  %245 = vmatpush.msra.mxu0 %v73
  %246 = vmatpush.msra.mxu0 %v67
  %247 = vmatpush.msra.mxu0 %v61
  %248 = vmatpush.msra.mxu0 %v55
  %249 = vmatpush.msra.mxu0 %v49
  %250 = vmatpush.msra.mxu0 %v43
  %251 = vmatpush.msra.mxu0 %v37
  %252 = vmatpush.msra.mxu0 %v31
  %253 = vmatmul.f32.gmra.mxu0 %v29
  %v254 = vpop.f32.mrf.mxu0
  %v255 = vadd.f32 %v225, %v254
  %256 = vdwg.mxu0
  %257 = vmatpush.msra.mxu0 %v217
  %258 = vmatpush.msra.mxu0 %v211
  %259 = vmatpush.msra.mxu0 %v205
  %260 = vmatpush.msra.mxu0 %v199
  %261 = vmatpush.msra.mxu0 %v193
  %262 = vmatpush.msra.mxu0 %v187
  %263 = vmatpush.msra.mxu0 %v181
  %264 = vmatpush.msra.mxu0 %v175
  %265 = vmatpush.msra.mxu0 %v169
  %266 = vmatpush.msra.mxu0 %v163
  %267 = vmatpush.msra.mxu0 %v157
  %268 = vmatpush.msra.mxu0 %v151
  %269 = vmatpush.msra.mxu0 %v145
  %270 = vmatpush.msra.mxu0 %v139
  %271 = vmatpush.msra.mxu0 %v133
  %272 = vmatpush.msra.mxu0 %v127
  %273 = vmatmul.f32.gmra.mxu0 %v30
  %v274 = vpop.f32.mrf.mxu0
  %v275 = vadd.f32 %v255, %v274
  %276 = vdwg.mxu0
  %277 = vmatpush.msra.mxu0 %v122
  %278 = vmatpush.msra.mxu0 %v116
  %279 = vmatpush.msra.mxu0 %v110
  %280 = vmatpush.msra.mxu0 %v104
  %281 = vmatpush.msra.mxu0 %v98
  %282 = vmatpush.msra.mxu0 %v92
  %283 = vmatpush.msra.mxu0 %v86
  %284 = vmatpush.msra.mxu0 %v80
  %285 = vmatpush.msra.mxu0 %v74
  %286 = vmatpush.msra.mxu0 %v68
  %287 = vmatpush.msra.mxu0 %v62
  %288 = vmatpush.msra.mxu0 %v56
  %289 = vmatpush.msra.mxu0 %v50
  %290 = vmatpush.msra.mxu0 %v44
  %291 = vmatpush.msra.mxu0 %v38
  %292 = vmatpush.msra.mxu0 %v32
  %293 = vmatmul.f32.gmra.mxu0 %v29
  %v294 = vpop.f32.mrf.mxu0
  %v295 = vadd.f32 %v226, %v294
  %296 = vdwg.mxu0
  %297 = vmatpush.msra.mxu0 %v218
  %298 = vmatpush.msra.mxu0 %v212
  %299 = vmatpush.msra.mxu0 %v206
  %300 = vmatpush.msra.mxu0 %v200
  %301 = vmatpush.msra.mxu0 %v194
  %302 = vmatpush.msra.mxu0 %v188
  %303 = vmatpush.msra.mxu0 %v182
  %304 = vmatpush.msra.mxu0 %v176
  %305 = vmatpush.msra.mxu0 %v170
  %306 = vmatpush.msra.mxu0 %v164
  %307 = vmatpush.msra.mxu0 %v158
  %308 = vmatpush.msra.mxu0 %v152
  %309 = vmatpush.msra.mxu0 %v146
  %310 = vmatpush.msra.mxu0 %v140
  %311 = vmatpush.msra.mxu0 %v134
  %312 = vmatpush.msra.mxu0 %v128
  %313 = vmatmul.f32.gmra.mxu0 %v30
  %v314 = vpop.f32.mrf.mxu0
  %v315 = vadd.f32 %v295, %v314
  %316 = vdwg.mxu0
  %317 = vmatpush.msra.mxu0 %v123
  %318 = vmatpush.msra.mxu0 %v117
  %319 = vmatpush.msra.mxu0 %v111
  %320 = vmatpush.msra.mxu0 %v105
  %321 = vmatpush.msra.mxu0 %v99
  %322 = vmatpush.msra.mxu0 %v93
  %323 = vmatpush.msra.mxu0 %v87
  %324 = vmatpush.msra.mxu0 %v81
  %325 = vmatpush.msra.mxu0 %v75
  %326 = vmatpush.msra.mxu0 %v69
  %327 = vmatpush.msra.mxu0 %v63
  %328 = vmatpush.msra.mxu0 %v57
  %329 = vmatpush.msra.mxu0 %v51
  %330 = vmatpush.msra.mxu0 %v45
  %331 = vmatpush.msra.mxu0 %v39
  %332 = vmatpush.msra.mxu0 %v33
  %333 = vmatmul.f32.gmra.mxu0 %v29
  %v334 = vpop.f32.mrf.mxu0
  %v335 = vadd.f32 %v227, %v334
  %336 = vdwg.mxu0
  %337 = vmatpush.msra.mxu0 %v219
  %338 = vmatpush.msra.mxu0 %v213
  %339 = vmatpush.msra.mxu0 %v207
  %340 = vmatpush.msra.mxu0 %v201
  %341 = vmatpush.msra.mxu0 %v195
  %342 = vmatpush.msra.mxu0 %v189
  %343 = vmatpush.msra.mxu0 %v183
  %344 = vmatpush.msra.mxu0 %v177
  %345 = vmatpush.msra.mxu0 %v171
  %346 = vmatpush.msra.mxu0 %v165
  %347 = vmatpush.msra.mxu0 %v159
  %348 = vmatpush.msra.mxu0 %v153
  %349 = vmatpush.msra.mxu0 %v147
  %350 = vmatpush.msra.mxu0 %v141
  %351 = vmatpush.msra.mxu0 %v135
  %352 = vmatpush.msra.mxu0 %v129
  %353 = vmatmul.f32.gmra.mxu0 %v30
  %v354 = vpop.f32.mrf.mxu0
  %v355 = vadd.f32 %v335, %v354
  %356 = vdwg.mxu0
  %357 = vmatpush.msra.mxu0 %v124
  %358 = vmatpush.msra.mxu0 %v118
  %359 = vmatpush.msra.mxu0 %v112
  %360 = vmatpush.msra.mxu0 %v106
  %361 = vmatpush.msra.mxu0 %v100
  %362 = vmatpush.msra.mxu0 %v94
  %363 = vmatpush.msra.mxu0 %v88
  %364 = vmatpush.msra.mxu0 %v82
  %365 = vmatpush.msra.mxu0 %v76
  %366 = vmatpush.msra.mxu0 %v70
  %367 = vmatpush.msra.mxu0 %v64
  %368 = vmatpush.msra.mxu0 %v58
  %369 = vmatpush.msra.mxu0 %v52
  %370 = vmatpush.msra.mxu0 %v46
  %371 = vmatpush.msra.mxu0 %v40
  %372 = vmatpush.msra.mxu0 %v34
  %373 = vmatmul.f32.gmra.mxu0 %v29
  %v374 = vpop.f32.mrf.mxu0
  %v375 = vadd.f32 %v228, %v374
  %376 = vdwg.mxu0
  %377 = vmatpush.msra.mxu0 %v220
  %378 = vmatpush.msra.mxu0 %v214
  %379 = vmatpush.msra.mxu0 %v208
  %380 = vmatpush.msra.mxu0 %v202
  %381 = vmatpush.msra.mxu0 %v196
  %382 = vmatpush.msra.mxu0 %v190
  %383 = vmatpush.msra.mxu0 %v184
  %384 = vmatpush.msra.mxu0 %v178
  %385 = vmatpush.msra.mxu0 %v172
  %386 = vmatpush.msra.mxu0 %v166
  %387 = vmatpush.msra.mxu0 %v160
  %388 = vmatpush.msra.mxu0 %v154
  %389 = vmatpush.msra.mxu0 %v148
  %390 = vmatpush.msra.mxu0 %v142
  %391 = vmatpush.msra.mxu0 %v136
  %392 = vmatpush.msra.mxu0 %v130
  %393 = vmatmul.f32.gmra.mxu0 %v30
  %v394 = vpop.f32.mrf.mxu0
  %v395 = vadd.f32 %v375, %v394
  %396 = vdwg.mxu0
  %397 = vmatpush.msra.mxu0 %v125
  %398 = vmatpush.msra.mxu0 %v119
  %399 = vmatpush.msra.mxu0 %v113
  %400 = vmatpush.msra.mxu0 %v107
  %401 = vmatpush.msra.mxu0 %v101
  %402 = vmatpush.msra.mxu0 %v95
  %403 = vmatpush.msra.mxu0 %v89
  %404 = vmatpush.msra.mxu0 %v83
  %405 = vmatpush.msra.mxu0 %v77
  %406 = vmatpush.msra.mxu0 %v71
  %407 = vmatpush.msra.mxu0 %v65
  %408 = vmatpush.msra.mxu0 %v59
  %409 = vmatpush.msra.mxu0 %v53
  %410 = vmatpush.msra.mxu0 %v47
  %411 = vmatpush.msra.mxu0 %v41
  %412 = vmatpush.msra.mxu0 %v35
  %413 = vmatmul.f32.gmra.mxu0 %v29
  %v414 = vpop.f32.mrf.mxu0
  %v415 = vadd.f32 %v229, %v414
  %416 = vdwg.mxu0
  %417 = vmatpush.msra.mxu0 %v221
  %418 = vmatpush.msra.mxu0 %v215
  %419 = vmatpush.msra.mxu0 %v209
  %420 = vmatpush.msra.mxu0 %v203
  %421 = vmatpush.msra.mxu0 %v197
  %422 = vmatpush.msra.mxu0 %v191
  %423 = vmatpush.msra.mxu0 %v185
  %424 = vmatpush.msra.mxu0 %v179
  %425 = vmatpush.msra.mxu0 %v173
  %426 = vmatpush.msra.mxu0 %v167
  %427 = vmatpush.msra.mxu0 %v161
  %428 = vmatpush.msra.mxu0 %v155
  %429 = vmatpush.msra.mxu0 %v149
  %430 = vmatpush.msra.mxu0 %v143
  %431 = vmatpush.msra.mxu0 %v137
  %432 = vmatpush.msra.mxu0 %v131
  %433 = vmatmul.f32.gmra.mxu0 %v30
  %v434 = vpop.f32.mrf.mxu0
  %v435 = vadd.f32 %v415, %v434
  %436 = vdwg.mxu0
  %437 = vmatpush.msra.mxu0 %v126
  %438 = vmatpush.msra.mxu0 %v120
  %439 = vmatpush.msra.mxu0 %v114
  %440 = vmatpush.msra.mxu0 %v108
  %441 = vmatpush.msra.mxu0 %v102
  %442 = vmatpush.msra.mxu0 %v96
  %443 = vmatpush.msra.mxu0 %v90
  %444 = vmatpush.msra.mxu0 %v84
  %445 = vmatpush.msra.mxu0 %v78
  %446 = vmatpush.msra.mxu0 %v72
  %447 = vmatpush.msra.mxu0 %v66
  %448 = vmatpush.msra.mxu0 %v60
  %449 = vmatpush.msra.mxu0 %v54
  %450 = vmatpush.msra.mxu0 %v48
  %451 = vmatpush.msra.mxu0 %v42
  %452 = vmatpush.msra.mxu0 %v36
  %453 = vmatmul.f32.gmra.mxu0 %v29
  %v454 = vpop.f32.mrf.mxu0
  %v455 = vadd.f32 %v230, %v454
  %456 = vdwg.mxu0
  %457 = vmatpush.msra.mxu0 %v222
  %458 = vmatpush.msra.mxu0 %v216
  %459 = vmatpush.msra.mxu0 %v210
  %460 = vmatpush.msra.mxu0 %v204
  %461 = vmatpush.msra.mxu0 %v198
  %462 = vmatpush.msra.mxu0 %v192
  %463 = vmatpush.msra.mxu0 %v186
  %464 = vmatpush.msra.mxu0 %v180
  %465 = vmatpush.msra.mxu0 %v174
  %466 = vmatpush.msra.mxu0 %v168
  %467 = vmatpush.msra.mxu0 %v162
  %468 = vmatpush.msra.mxu0 %v156
  %469 = vmatpush.msra.mxu0 %v150
  %470 = vmatpush.msra.mxu0 %v144
  %471 = vmatpush.msra.mxu0 %v138
  %472 = vmatpush.msra.mxu0 %v132
  %473 = vmatmul.f32.gmra.mxu0 %v30
  %v474 = vpop.f32.mrf.mxu0
  %v475 = vadd.f32 %v455, %v474
  %476 = vdwg.mxu0
  %v477 = vld [vmem:[%s3] sm:$0xff]
  %v478 = vld [vmem:[%s3 + $0x8] sm:$0xff]
  %v479 = vld [vmem:[%s3 + $0x10] sm:$0xff]
  %v480 = vld [vmem:[%s3 + $0x18] sm:$0xff]
  %v481 = vld [vmem:[%s3 + $0x20] sm:$0xff]
  %v482 = vld [vmem:[%s3 + $0x28] sm:$0xff]
  %v483 = vld [vmem:[%s3 + $0x30] sm:$0xff]
  %v484 = vld [vmem:[%s3 + $0x38] sm:$0xff]
  %v485 = vld [vmem:[%s3 + $0x40] sm:$0xff]
  %v486 = vld [vmem:[%s3 + $0x48] sm:$0xff]
  %v487 = vld [vmem:[%s3 + $0x50] sm:$0xff]
  %v488 = vld [vmem:[%s3 + $0x58] sm:$0xff]
  %v489 = vld [vmem:[%s3 + $0x60] sm:$0xff]
  %v490 = vld [vmem:[%s3 + $0x68] sm:$0xff]
  %v491 = vld [vmem:[%s3 + $0x70] sm:$0xff]
  %v492 = vld [vmem:[%s3 + $0x78] sm:$0xff]
  %v493 = vld [vmem:[%s3 + $0x80] sm:$0xff]
  %v494 = vld [vmem:[%s3 + $0x88] sm:$0xff]
  %v495 = vld [vmem:[%s3 + $0x90] sm:$0xff]
  %v496 = vld [vmem:[%s3 + $0x98] sm:$0xff]
  %v497 = vld [vmem:[%s3 + $0xa0] sm:$0xff]
  %v498 = vld [vmem:[%s3 + $0xa8] sm:$0xff]
  %v499 = vld [vmem:[%s3 + $0xb0] sm:$0xff]
  %v500 = vld [vmem:[%s3 + $0xb8] sm:$0xff]
  %v501 = vld [vmem:[%s3 + $0xc0] sm:$0xff]
  %v502 = vld [vmem:[%s3 + $0xc8] sm:$0xff]
  %v503 = vld [vmem:[%s3 + $0xd0] sm:$0xff]
  %v504 = vld [vmem:[%s3 + $0xd8] sm:$0xff]
  %v505 = vld [vmem:[%s3 + $0xe0] sm:$0xff]
  %v506 = vld [vmem:[%s3 + $0xe8] sm:$0xff]
  %v507 = vld [vmem:[%s3 + $0xf0] sm:$0xff]
  %v508 = vld [vmem:[%s3 + $0xf8] sm:$0xff]
  %v509 = vld [vmem:[%s3 + $0x100] sm:$0xff]
  %v510 = vld [vmem:[%s3 + $0x108] sm:$0xff]
  %v511 = vld [vmem:[%s3 + $0x110] sm:$0xff]
  %v512 = vld [vmem:[%s3 + $0x118] sm:$0xff]
  %v513 = vld [vmem:[%s3 + $0x120] sm:$0xff]
  %v514 = vld [vmem:[%s3 + $0x128] sm:$0xff]
  %v515 = vld [vmem:[%s3 + $0x130] sm:$0xff]
  %v516 = vld [vmem:[%s3 + $0x138] sm:$0xff]
  %v517 = vld [vmem:[%s3 + $0x140] sm:$0xff]
  %v518 = vld [vmem:[%s3 + $0x148] sm:$0xff]
  %v519 = vld [vmem:[%s3 + $0x150] sm:$0xff]
  %v520 = vld [vmem:[%s3 + $0x158] sm:$0xff]
  %v521 = vld [vmem:[%s3 + $0x160] sm:$0xff]
  %v522 = vld [vmem:[%s3 + $0x168] sm:$0xff]
  %v523 = vld [vmem:[%s3 + $0x170] sm:$0xff]
  %v524 = vld [vmem:[%s3 + $0x178] sm:$0xff]
  %v525 = vld [vmem:[%s3 + $0x180] sm:$0xff]
  %v526 = vld [vmem:[%s3 + $0x188] sm:$0xff]
  %v527 = vld [vmem:[%s3 + $0x190] sm:$0xff]
  %v528 = vld [vmem:[%s3 + $0x198] sm:$0xff]
  %v529 = vld [vmem:[%s3 + $0x1a0] sm:$0xff]
  %v530 = vld [vmem:[%s3 + $0x1a8] sm:$0xff]
  %v531 = vld [vmem:[%s3 + $0x1b0] sm:$0xff]
  %v532 = vld [vmem:[%s3 + $0x1b8] sm:$0xff]
  %v533 = vld [vmem:[%s3 + $0x1c0] sm:$0xff]
  %v534 = vld [vmem:[%s3 + $0x1c8] sm:$0xff]
  %v535 = vld [vmem:[%s3 + $0x1d0] sm:$0xff]
  %v536 = vld [vmem:[%s3 + $0x1d8] sm:$0xff]
  %v537 = vld [vmem:[%s3 + $0x1e0] sm:$0xff]
  %v538 = vld [vmem:[%s3 + $0x1e8] sm:$0xff]
  %v539 = vld [vmem:[%s3 + $0x1f0] sm:$0xff]
  %v540 = vld [vmem:[%s3 + $0x1f8] sm:$0xff]
  %v541 = vld [vmem:[%s3 + $0x200] sm:$0xff]
  %v542 = vld [vmem:[%s3 + $0x208] sm:$0xff]
  %v543 = vld [vmem:[%s3 + $0x210] sm:$0xff]
  %v544 = vld [vmem:[%s3 + $0x218] sm:$0xff]
  %v545 = vld [vmem:[%s3 + $0x220] sm:$0xff]
  %v546 = vld [vmem:[%s3 + $0x228] sm:$0xff]
  %v547 = vld [vmem:[%s3 + $0x230] sm:$0xff]
  %v548 = vld [vmem:[%s3 + $0x238] sm:$0xff]
  %v549 = vld [vmem:[%s3 + $0x240] sm:$0xff]
  %v550 = vld [vmem:[%s3 + $0x248] sm:$0xff]
  %v551 = vld [vmem:[%s3 + $0x250] sm:$0xff]
  %v552 = vld [vmem:[%s3 + $0x258] sm:$0xff]
  %v553 = vld [vmem:[%s3 + $0x260] sm:$0xff]
  %v554 = vld [vmem:[%s3 + $0x268] sm:$0xff]
  %v555 = vld [vmem:[%s3 + $0x270] sm:$0xff]
  %v556 = vld [vmem:[%s3 + $0x278] sm:$0xff]
  %v557 = vld [vmem:[%s3 + $0x280] sm:$0xff]
  %v558 = vld [vmem:[%s3 + $0x288] sm:$0xff]
  %v559 = vld [vmem:[%s3 + $0x290] sm:$0xff]
  %v560 = vld [vmem:[%s3 + $0x298] sm:$0xff]
  %v561 = vld [vmem:[%s3 + $0x2a0] sm:$0xff]
  %v562 = vld [vmem:[%s3 + $0x2a8] sm:$0xff]
  %v563 = vld [vmem:[%s3 + $0x2b0] sm:$0xff]
  %v564 = vld [vmem:[%s3 + $0x2b8] sm:$0xff]
  %v565 = vld [vmem:[%s3 + $0x2c0] sm:$0xff]
  %v566 = vld [vmem:[%s3 + $0x2c8] sm:$0xff]
  %v567 = vld [vmem:[%s3 + $0x2d0] sm:$0xff]
  %v568 = vld [vmem:[%s3 + $0x2d8] sm:$0xff]
  %v569 = vld [vmem:[%s3 + $0x2e0] sm:$0xff]
  %v570 = vld [vmem:[%s3 + $0x2e8] sm:$0xff]
  %v571 = vld [vmem:[%s3 + $0x2f0] sm:$0xff]
  %v572 = vld [vmem:[%s3 + $0x2f8] sm:$0xff]
  %v573 = vld [vmem:[%s3 + $0x300] sm:$0xff]
  %v574 = vld [vmem:[%s3 + $0x308] sm:$0xff]
  %v575 = vld [vmem:[%s3 + $0x310] sm:$0xff]
  %v576 = vld [vmem:[%s3 + $0x318] sm:$0xff]
  %v577 = vld [vmem:[%s3 + $0x320] sm:$0xff]
  %v578 = vld [vmem:[%s3 + $0x328] sm:$0xff]
  %v579 = vld [vmem:[%s3 + $0x330] sm:$0xff]
  %v580 = vld [vmem:[%s3 + $0x338] sm:$0xff]
  %v581 = vld [vmem:[%s3 + $0x340] sm:$0xff]
  %v582 = vld [vmem:[%s3 + $0x348] sm:$0xff]
  %v583 = vld [vmem:[%s3 + $0x350] sm:$0xff]
  %v584 = vld [vmem:[%s3 + $0x358] sm:$0xff]
  %v585 = vld [vmem:[%s3 + $0x360] sm:$0xff]
  %v586 = vld [vmem:[%s3 + $0x368] sm:$0xff]
  %v587 = vld [vmem:[%s3 + $0x370] sm:$0xff]
  %v588 = vld [vmem:[%s3 + $0x378] sm:$0xff]
  %v589 = vld [vmem:[%s3 + $0x380] sm:$0xff]
  %v590 = vld [vmem:[%s3 + $0x388] sm:$0xff]
  %v591 = vld [vmem:[%s3 + $0x390] sm:$0xff]
  %v592 = vld [vmem:[%s3 + $0x398] sm:$0xff]
  %v593 = vld [vmem:[%s3 + $0x3a0] sm:$0xff]
  %v594 = vld [vmem:[%s3 + $0x3a8] sm:$0xff]
  %v595 = vld [vmem:[%s3 + $0x3b0] sm:$0xff]
  %v596 = vld [vmem:[%s3 + $0x3b8] sm:$0xff]
  %v597 = vld [vmem:[%s3 + $0x3c0] sm:$0xff]
  %v598 = vld [vmem:[%s3 + $0x3c8] sm:$0xff]
  %v599 = vld [vmem:[%s3 + $0x3d0] sm:$0xff]
  %v600 = vld [vmem:[%s3 + $0x3d8] sm:$0xff]
  %v601 = vld [vmem:[%s3 + $0x3e0] sm:$0xff]
  %v602 = vld [vmem:[%s3 + $0x3e8] sm:$0xff]
  %v603 = vld [vmem:[%s3 + $0x3f0] sm:$0xff]
  %v604 = vld [vmem:[%s3 + $0x3f8] sm:$0xff]
  %v605 = vld [vmem:[%s3 + $0x400] sm:$0xff]
  %v606 = vld [vmem:[%s3 + $0x408] sm:$0xff]
  %v607 = vld [vmem:[%s3 + $0x410] sm:$0xff]
  %v608 = vld [vmem:[%s3 + $0x418] sm:$0xff]
  %v609 = vld [vmem:[%s3 + $0x420] sm:$0xff]
  %v610 = vld [vmem:[%s3 + $0x428] sm:$0xff]
  %v611 = vld [vmem:[%s3 + $0x430] sm:$0xff]
  %v612 = vld [vmem:[%s3 + $0x438] sm:$0xff]
  %v613 = vld [vmem:[%s3 + $0x440] sm:$0xff]
  %v614 = vld [vmem:[%s3 + $0x448] sm:$0xff]
  %v615 = vld [vmem:[%s3 + $0x450] sm:$0xff]
  %v616 = vld [vmem:[%s3 + $0x458] sm:$0xff]
  %v617 = vld [vmem:[%s3 + $0x460] sm:$0xff]
  %v618 = vld [vmem:[%s3 + $0x468] sm:$0xff]
  %v619 = vld [vmem:[%s3 + $0x470] sm:$0xff]
  %v620 = vld [vmem:[%s3 + $0x478] sm:$0xff]
  %v621 = vld [vmem:[%s3 + $0x480] sm:$0xff]
  %v622 = vld [vmem:[%s3 + $0x488] sm:$0xff]
  %v623 = vld [vmem:[%s3 + $0x490] sm:$0xff]
  %v624 = vld [vmem:[%s3 + $0x498] sm:$0xff]
  %v625 = vld [vmem:[%s3 + $0x4a0] sm:$0xff]
  %v626 = vld [vmem:[%s3 + $0x4a8] sm:$0xff]
  %v627 = vld [vmem:[%s3 + $0x4b0] sm:$0xff]
  %v628 = vld [vmem:[%s3 + $0x4b8] sm:$0xff]
  %v629 = vld [vmem:[%s3 + $0x4c0] sm:$0xff]
  %v630 = vld [vmem:[%s3 + $0x4c8] sm:$0xff]
  %v631 = vld [vmem:[%s3 + $0x4d0] sm:$0xff]
  %v632 = vld [vmem:[%s3 + $0x4d8] sm:$0xff]
  %v633 = vld [vmem:[%s3 + $0x4e0] sm:$0xff]
  %v634 = vld [vmem:[%s3 + $0x4e8] sm:$0xff]
  %v635 = vld [vmem:[%s3 + $0x4f0] sm:$0xff]
  %v636 = vld [vmem:[%s3 + $0x4f8] sm:$0xff]
  %v637 = vld [vmem:[%s3 + $0x500] sm:$0xff]
  %v638 = vld [vmem:[%s3 + $0x508] sm:$0xff]
  %v639 = vld [vmem:[%s3 + $0x510] sm:$0xff]
  %v640 = vld [vmem:[%s3 + $0x518] sm:$0xff]
  %v641 = vld [vmem:[%s3 + $0x520] sm:$0xff]
  %v642 = vld [vmem:[%s3 + $0x528] sm:$0xff]
  %v643 = vld [vmem:[%s3 + $0x530] sm:$0xff]
  %v644 = vld [vmem:[%s3 + $0x538] sm:$0xff]
  %v645 = vld [vmem:[%s3 + $0x540] sm:$0xff]
  %v646 = vld [vmem:[%s3 + $0x548] sm:$0xff]
  %v647 = vld [vmem:[%s3 + $0x550] sm:$0xff]
  %v648 = vld [vmem:[%s3 + $0x558] sm:$0xff]
  %v649 = vld [vmem:[%s3 + $0x560] sm:$0xff]
  %v650 = vld [vmem:[%s3 + $0x568] sm:$0xff]
  %v651 = vld [vmem:[%s3 + $0x570] sm:$0xff]
  %v652 = vld [vmem:[%s3 + $0x578] sm:$0xff]
  %v653 = vld [vmem:[%s3 + $0x580] sm:$0xff]
  %v654 = vld [vmem:[%s3 + $0x588] sm:$0xff]
  %v655 = vld [vmem:[%s3 + $0x590] sm:$0xff]
  %v656 = vld [vmem:[%s3 + $0x598] sm:$0xff]
  %v657 = vld [vmem:[%s3 + $0x5a0] sm:$0xff]
  %v658 = vld [vmem:[%s3 + $0x5a8] sm:$0xff]
  %v659 = vld [vmem:[%s3 + $0x5b0] sm:$0xff]
  %v660 = vld [vmem:[%s3 + $0x5b8] sm:$0xff]
  %v661 = vld [vmem:[%s3 + $0x5c0] sm:$0xff]
  %v662 = vld [vmem:[%s3 + $0x5c8] sm:$0xff]
  %v663 = vld [vmem:[%s3 + $0x5d0] sm:$0xff]
  %v664 = vld [vmem:[%s3 + $0x5d8] sm:$0xff]
  %v665 = vld [vmem:[%s3 + $0x5e0] sm:$0xff]
  %v666 = vld [vmem:[%s3 + $0x5e8] sm:$0xff]
  %v667 = vld [vmem:[%s3 + $0x5f0] sm:$0xff]
  %v668 = vld [vmem:[%s3 + $0x5f8] sm:$0xff]
  %v669 = vld [vmem:[%s5] sm:$0x3f]
  %v671 = vperm.slane %v669, 0
  %v672 = vperm.slane %v669, 1
  %v673 = vperm.slane %v669, 2
  %v674 = vperm.slane %v669, 3
  %v675 = vperm.slane %v669, 4
  %v676 = vperm.slane %v669, 5
  %683 = vmatpush.msra.mxu0 %v567
  %684 = vmatpush.msra.mxu0 %v561
  %685 = vmatpush.msra.mxu0 %v555
  %686 = vmatpush.msra.mxu0 %v549
  %687 = vmatpush.msra.mxu0 %v543
  %688 = vmatpush.msra.mxu0 %v537
  %689 = vmatpush.msra.mxu0 %v531
  %690 = vmatpush.msra.mxu0 %v525
  %691 = vmatpush.msra.mxu0 %v519
  %692 = vmatpush.msra.mxu0 %v513
  %693 = vmatpush.msra.mxu0 %v507
  %694 = vmatpush.msra.mxu0 %v501
  %695 = vmatpush.msra.mxu0 %v495
  %696 = vmatpush.msra.mxu0 %v489
  %697 = vmatpush.msra.mxu0 %v483
  %698 = vmatpush.msra.mxu0 %v477
  %699 = vmatmul.f32.gmra.mxu0 0.0
  %v700 = vpop.f32.mrf.mxu0
  %v701 = vadd.f32 %v671, %v700
  %702 = vdwg.mxu0
  %703 = vmatpush.msra.mxu0 %v663
  %704 = vmatpush.msra.mxu0 %v657
  %705 = vmatpush.msra.mxu0 %v651
  %706 = vmatpush.msra.mxu0 %v645
  %707 = vmatpush.msra.mxu0 %v639
  %708 = vmatpush.msra.mxu0 %v633
  %709 = vmatpush.msra.mxu0 %v627
  %710 = vmatpush.msra.mxu0 %v621
  %711 = vmatpush.msra.mxu0 %v615
  %712 = vmatpush.msra.mxu0 %v609
  %713 = vmatpush.msra.mxu0 %v603
  %714 = vmatpush.msra.mxu0 %v597
  %715 = vmatpush.msra.mxu0 %v591
  %716 = vmatpush.msra.mxu0 %v585
  %717 = vmatpush.msra.mxu0 %v579
  %718 = vmatpush.msra.mxu0 %v573
  %719 = vmatmul.f32.gmra.mxu0 0.0
  %v720 = vpop.f32.mrf.mxu0
  %v721 = vadd.f32 %v701, %v720
  %722 = vdwg.mxu0
  %723 = vmatpush.msra.mxu0 %v568
  %724 = vmatpush.msra.mxu0 %v562
  %725 = vmatpush.msra.mxu0 %v556
  %726 = vmatpush.msra.mxu0 %v550
  %727 = vmatpush.msra.mxu0 %v544
  %728 = vmatpush.msra.mxu0 %v538
  %729 = vmatpush.msra.mxu0 %v532
  %730 = vmatpush.msra.mxu0 %v526
  %731 = vmatpush.msra.mxu0 %v520
  %732 = vmatpush.msra.mxu0 %v514
  %733 = vmatpush.msra.mxu0 %v508
  %734 = vmatpush.msra.mxu0 %v502
  %735 = vmatpush.msra.mxu0 %v496
  %736 = vmatpush.msra.mxu0 %v490
  %737 = vmatpush.msra.mxu0 %v484
  %738 = vmatpush.msra.mxu0 %v478
  %739 = vmatmul.f32.gmra.mxu0 0.0
  %v740 = vpop.f32.mrf.mxu0
  %v741 = vadd.f32 %v672, %v740
  %742 = vdwg.mxu0
  %743 = vmatpush.msra.mxu0 %v664
  %744 = vmatpush.msra.mxu0 %v658
  %745 = vmatpush.msra.mxu0 %v652
  %746 = vmatpush.msra.mxu0 %v646
  %747 = vmatpush.msra.mxu0 %v640
  %748 = vmatpush.msra.mxu0 %v634
  %749 = vmatpush.msra.mxu0 %v628
  %750 = vmatpush.msra.mxu0 %v622
  %751 = vmatpush.msra.mxu0 %v616
  %752 = vmatpush.msra.mxu0 %v610
  %753 = vmatpush.msra.mxu0 %v604
  %754 = vmatpush.msra.mxu0 %v598
  %755 = vmatpush.msra.mxu0 %v592
  %756 = vmatpush.msra.mxu0 %v586
  %757 = vmatpush.msra.mxu0 %v580
  %758 = vmatpush.msra.mxu0 %v574
  %759 = vmatmul.f32.gmra.mxu0 0.0
  %v760 = vpop.f32.mrf.mxu0
  %v761 = vadd.f32 %v741, %v760
  %762 = vdwg.mxu0
  %763 = vmatpush.msra.mxu0 %v569
  %764 = vmatpush.msra.mxu0 %v563
  %765 = vmatpush.msra.mxu0 %v557
  %766 = vmatpush.msra.mxu0 %v551
  %767 = vmatpush.msra.mxu0 %v545
  %768 = vmatpush.msra.mxu0 %v539
  %769 = vmatpush.msra.mxu0 %v533
  %770 = vmatpush.msra.mxu0 %v527
  %771 = vmatpush.msra.mxu0 %v521
  %772 = vmatpush.msra.mxu0 %v515
  %773 = vmatpush.msra.mxu0 %v509
  %774 = vmatpush.msra.mxu0 %v503
  %775 = vmatpush.msra.mxu0 %v497
  %776 = vmatpush.msra.mxu0 %v491
  %777 = vmatpush.msra.mxu0 %v485
  %778 = vmatpush.msra.mxu0 %v479
  %779 = vmatmul.f32.gmra.mxu0 0.0
  %v780 = vpop.f32.mrf.mxu0
  %v781 = vadd.f32 %v673, %v780
  %782 = vdwg.mxu0
  %783 = vmatpush.msra.mxu0 %v665
  %784 = vmatpush.msra.mxu0 %v659
  %785 = vmatpush.msra.mxu0 %v653
  %786 = vmatpush.msra.mxu0 %v647
  %787 = vmatpush.msra.mxu0 %v641
  %788 = vmatpush.msra.mxu0 %v635
  %789 = vmatpush.msra.mxu0 %v629
  %790 = vmatpush.msra.mxu0 %v623
  %791 = vmatpush.msra.mxu0 %v617
  %792 = vmatpush.msra.mxu0 %v611
  %793 = vmatpush.msra.mxu0 %v605
  %794 = vmatpush.msra.mxu0 %v599
  %795 = vmatpush.msra.mxu0 %v593
  %796 = vmatpush.msra.mxu0 %v587
  %797 = vmatpush.msra.mxu0 %v581
  %798 = vmatpush.msra.mxu0 %v575
  %799 = vmatmul.f32.gmra.mxu0 0.0
  %v800 = vpop.f32.mrf.mxu0
  %v801 = vadd.f32 %v781, %v800
  %802 = vdwg.mxu0
  %803 = vmatpush.msra.mxu0 %v570
  %804 = vmatpush.msra.mxu0 %v564
  %805 = vmatpush.msra.mxu0 %v558
  %806 = vmatpush.msra.mxu0 %v552
  %807 = vmatpush.msra.mxu0 %v546
  %808 = vmatpush.msra.mxu0 %v540
  %809 = vmatpush.msra.mxu0 %v534
  %810 = vmatpush.msra.mxu0 %v528
  %811 = vmatpush.msra.mxu0 %v522
  %812 = vmatpush.msra.mxu0 %v516
  %813 = vmatpush.msra.mxu0 %v510
  %814 = vmatpush.msra.mxu0 %v504
  %815 = vmatpush.msra.mxu0 %v498
  %816 = vmatpush.msra.mxu0 %v492
  %817 = vmatpush.msra.mxu0 %v486
  %818 = vmatpush.msra.mxu0 %v480
  %819 = vmatmul.f32.gmra.mxu0 0.0
  %v820 = vpop.f32.mrf.mxu0
  %v821 = vadd.f32 %v674, %v820
  %822 = vdwg.mxu0
  %823 = vmatpush.msra.mxu0 %v666
  %824 = vmatpush.msra.mxu0 %v660
  %825 = vmatpush.msra.mxu0 %v654
  %826 = vmatpush.msra.mxu0 %v648
  %827 = vmatpush.msra.mxu0 %v642
  %828 = vmatpush.msra.mxu0 %v636
  %829 = vmatpush.msra.mxu0 %v630
  %830 = vmatpush.msra.mxu0 %v624
  %831 = vmatpush.msra.mxu0 %v618
  %832 = vmatpush.msra.mxu0 %v612
  %833 = vmatpush.msra.mxu0 %v606
  %834 = vmatpush.msra.mxu0 %v600
  %835 = vmatpush.msra.mxu0 %v594
  %836 = vmatpush.msra.mxu0 %v588
  %837 = vmatpush.msra.mxu0 %v582
  %838 = vmatpush.msra.mxu0 %v576
  %839 = vmatmul.f32.gmra.mxu0 0.0
  %v840 = vpop.f32.mrf.mxu0
  %v841 = vadd.f32 %v821, %v840
  %842 = vdwg.mxu0
  %843 = vmatpush.msra.mxu0 %v571
  %844 = vmatpush.msra.mxu0 %v565
  %845 = vmatpush.msra.mxu0 %v559
  %846 = vmatpush.msra.mxu0 %v553
  %847 = vmatpush.msra.mxu0 %v547
  %848 = vmatpush.msra.mxu0 %v541
  %849 = vmatpush.msra.mxu0 %v535
  %850 = vmatpush.msra.mxu0 %v529
  %851 = vmatpush.msra.mxu0 %v523
  %852 = vmatpush.msra.mxu0 %v517
  %853 = vmatpush.msra.mxu0 %v511
  %854 = vmatpush.msra.mxu0 %v505
  %855 = vmatpush.msra.mxu0 %v499
  %856 = vmatpush.msra.mxu0 %v493
  %857 = vmatpush.msra.mxu0 %v487
  %858 = vmatpush.msra.mxu0 %v481
  %859 = vmatmul.f32.gmra.mxu0 0.0
  %v860 = vpop.f32.mrf.mxu0
  %v861 = vadd.f32 %v675, %v860
  %862 = vdwg.mxu0
  %863 = vmatpush.msra.mxu0 %v667
  %864 = vmatpush.msra.mxu0 %v661
  %865 = vmatpush.msra.mxu0 %v655
  %866 = vmatpush.msra.mxu0 %v649
  %867 = vmatpush.msra.mxu0 %v643
  %868 = vmatpush.msra.mxu0 %v637
  %869 = vmatpush.msra.mxu0 %v631
  %870 = vmatpush.msra.mxu0 %v625
  %871 = vmatpush.msra.mxu0 %v619
  %872 = vmatpush.msra.mxu0 %v613
  %873 = vmatpush.msra.mxu0 %v607
  %874 = vmatpush.msra.mxu0 %v601
  %875 = vmatpush.msra.mxu0 %v595
  %876 = vmatpush.msra.mxu0 %v589
  %877 = vmatpush.msra.mxu0 %v583
  %878 = vmatpush.msra.mxu0 %v577
  %879 = vmatmul.f32.gmra.mxu0 0.0
  %v880 = vpop.f32.mrf.mxu0
  %v881 = vadd.f32 %v861, %v880
  %882 = vdwg.mxu0
  %883 = vmatpush.msra.mxu0 %v572
  %884 = vmatpush.msra.mxu0 %v566
  %885 = vmatpush.msra.mxu0 %v560
  %886 = vmatpush.msra.mxu0 %v554
  %887 = vmatpush.msra.mxu0 %v548
  %888 = vmatpush.msra.mxu0 %v542
  %889 = vmatpush.msra.mxu0 %v536
  %890 = vmatpush.msra.mxu0 %v530
  %891 = vmatpush.msra.mxu0 %v524
  %892 = vmatpush.msra.mxu0 %v518
  %893 = vmatpush.msra.mxu0 %v512
  %894 = vmatpush.msra.mxu0 %v506
  %895 = vmatpush.msra.mxu0 %v500
  %896 = vmatpush.msra.mxu0 %v494
  %897 = vmatpush.msra.mxu0 %v488
  %898 = vmatpush.msra.mxu0 %v482
  %899 = vmatmul.f32.gmra.mxu0 0.0
  %v900 = vpop.f32.mrf.mxu0
  %v901 = vadd.f32 %v676, %v900
  %902 = vdwg.mxu0
  %903 = vmatpush.msra.mxu0 %v668
  %904 = vmatpush.msra.mxu0 %v662
  %905 = vmatpush.msra.mxu0 %v656
  %906 = vmatpush.msra.mxu0 %v650
  %907 = vmatpush.msra.mxu0 %v644
  %908 = vmatpush.msra.mxu0 %v638
  %909 = vmatpush.msra.mxu0 %v632
  %910 = vmatpush.msra.mxu0 %v626
  %911 = vmatpush.msra.mxu0 %v620
  %912 = vmatpush.msra.mxu0 %v614
  %913 = vmatpush.msra.mxu0 %v608
  %914 = vmatpush.msra.mxu0 %v602
  %915 = vmatpush.msra.mxu0 %v596
  %916 = vmatpush.msra.mxu0 %v590
  %917 = vmatpush.msra.mxu0 %v584
  %918 = vmatpush.msra.mxu0 %v578
  %919 = vmatmul.f32.gmra.mxu0 0.0
  %v920 = vpop.f32.mrf.mxu0
  %v921 = vadd.f32 %v901, %v920
  %922 = vdwg.mxu0
  %v923 = vadd.f32 %v275, %v721
  %v924 = vadd.f32 %v315, %v761
  %v925 = vmul.f32 %v923, 0.5
  %v926 = vmul.f32 %v924, 0.5
  %v927 = vtanh.pop %v925
  %v928 = vtanh.pop %v926
  %v929 = vadd.f32 %v927, 1.0
  %v930 = vadd.f32 %v928, 1.0
  %v931 = vmul.f32 %v929, 0.5
  %v932 = vmul.f32 %v930, 0.5
  %v933 = vadd.f32 %v355, %v801
  %v934 = vadd.f32 %v395, %v841
  %v935 = vmul.f32 %v933, 0.5
  %v936 = vmul.f32 %v934, 0.5
  %v937 = vtanh.pop %v935
  %v938 = vtanh.pop %v936
  %v939 = vadd.f32 %v937, 1.0
  %v940 = vadd.f32 %v938, 1.0
  %v941 = vmul.f32 %v939, 0.5
  %v942 = vmul.f32 %v940, 0.5
  %v943 = vmul.f32 %v931, %v881
  %v944 = vmul.f32 %v932, %v921
  %v945 = vadd.f32 %v435, %v943
  %v946 = vadd.f32 %v475, %v944
  %v947 = vtanh.pop %v945
  %v948 = vtanh.pop %v946
  %v949 = vsub.f32 1.0, %v941
  %v950 = vsub.f32 1.0, %v942
  %v951 = vmul.f32 %v949, %v947
  %v952 = vmul.f32 %v950, %v948
  %v953 = vmul.f32 %v941, 0.0
  %v954 = vmul.f32 %v942, 0.0
  %v955 = vadd.f32 %v951, %v953
  %v956 = vadd.f32 %v952, %v954
  %957 = vmatpush.msra.mxu0 %v567
  %958 = vmatpush.msra.mxu0 %v561
  %959 = vmatpush.msra.mxu0 %v555
  %960 = vmatpush.msra.mxu0 %v549
  %961 = vmatpush.msra.mxu0 %v543
  %962 = vmatpush.msra.mxu0 %v537
  %963 = vmatpush.msra.mxu0 %v531
  %964 = vmatpush.msra.mxu0 %v525
  %965 = vmatpush.msra.mxu0 %v519
  %966 = vmatpush.msra.mxu0 %v513
  %967 = vmatpush.msra.mxu0 %v507
  %968 = vmatpush.msra.mxu0 %v501
  %969 = vmatpush.msra.mxu0 %v495
  %970 = vmatpush.msra.mxu0 %v489
  %971 = vmatpush.msra.mxu0 %v483
  %972 = vmatpush.msra.mxu0 %v477
  %973 = vmatmul.f32.gmra.mxu0 %v955
  %v974 = vpop.f32.mrf.mxu0
  %v975 = vadd.f32 %v671, %v974
  %976 = vdwg.mxu0
  %977 = vmatpush.msra.mxu0 %v663
  %978 = vmatpush.msra.mxu0 %v657
  %979 = vmatpush.msra.mxu0 %v651
  %980 = vmatpush.msra.mxu0 %v645
  %981 = vmatpush.msra.mxu0 %v639
  %982 = vmatpush.msra.mxu0 %v633
  %983 = vmatpush.msra.mxu0 %v627
  %984 = vmatpush.msra.mxu0 %v621
  %985 = vmatpush.msra.mxu0 %v615
  %986 = vmatpush.msra.mxu0 %v609
  %987 = vmatpush.msra.mxu0 %v603
  %988 = vmatpush.msra.mxu0 %v597
  %989 = vmatpush.msra.mxu0 %v591
  %990 = vmatpush.msra.mxu0 %v585
  %991 = vmatpush.msra.mxu0 %v579
  %992 = vmatpush.msra.mxu0 %v573
  %993 = vmatmul.f32.gmra.mxu0 %v956
  %v994 = vpop.f32.mrf.mxu0
  %v995 = vadd.f32 %v975, %v994
  %996 = vdwg.mxu0
  %997 = vmatpush.msra.mxu0 %v568
  %998 = vmatpush.msra.mxu0 %v562
  %999 = vmatpush.msra.mxu0 %v556
  %1000 = vmatpush.msra.mxu0 %v550
  %1001 = vmatpush.msra.mxu0 %v544
  %1002 = vmatpush.msra.mxu0 %v538
  %1003 = vmatpush.msra.mxu0 %v532
  %1004 = vmatpush.msra.mxu0 %v526
  %1005 = vmatpush.msra.mxu0 %v520
  %1006 = vmatpush.msra.mxu0 %v514
  %1007 = vmatpush.msra.mxu0 %v508
  %1008 = vmatpush.msra.mxu0 %v502
  %1009 = vmatpush.msra.mxu0 %v496
  %1010 = vmatpush.msra.mxu0 %v490
  %1011 = vmatpush.msra.mxu0 %v484
  %1012 = vmatpush.msra.mxu0 %v478
  %1013 = vmatmul.f32.gmra.mxu0 %v955
  %v1014 = vpop.f32.mrf.mxu0
  %v1015 = vadd.f32 %v672, %v1014
  %1016 = vdwg.mxu0
  %1017 = vmatpush.msra.mxu0 %v664
  %1018 = vmatpush.msra.mxu0 %v658
  %1019 = vmatpush.msra.mxu0 %v652
  %1020 = vmatpush.msra.mxu0 %v646
  %1021 = vmatpush.msra.mxu0 %v640
  %1022 = vmatpush.msra.mxu0 %v634
  %1023 = vmatpush.msra.mxu0 %v628
  %1024 = vmatpush.msra.mxu0 %v622
  %1025 = vmatpush.msra.mxu0 %v616
  %1026 = vmatpush.msra.mxu0 %v610
  %1027 = vmatpush.msra.mxu0 %v604
  %1028 = vmatpush.msra.mxu0 %v598
  %1029 = vmatpush.msra.mxu0 %v592
  %1030 = vmatpush.msra.mxu0 %v586
  %1031 = vmatpush.msra.mxu0 %v580
  %1032 = vmatpush.msra.mxu0 %v574
  %1033 = vmatmul.f32.gmra.mxu0 %v956
  %v1034 = vpop.f32.mrf.mxu0
  %v1035 = vadd.f32 %v1015, %v1034
  %1036 = vdwg.mxu0
  %1037 = vmatpush.msra.mxu0 %v569
  %1038 = vmatpush.msra.mxu0 %v563
  %1039 = vmatpush.msra.mxu0 %v557
  %1040 = vmatpush.msra.mxu0 %v551
  %1041 = vmatpush.msra.mxu0 %v545
  %1042 = vmatpush.msra.mxu0 %v539
  %1043 = vmatpush.msra.mxu0 %v533
  %1044 = vmatpush.msra.mxu0 %v527
  %1045 = vmatpush.msra.mxu0 %v521
  %1046 = vmatpush.msra.mxu0 %v515
  %1047 = vmatpush.msra.mxu0 %v509
  %1048 = vmatpush.msra.mxu0 %v503
  %1049 = vmatpush.msra.mxu0 %v497
  %1050 = vmatpush.msra.mxu0 %v491
  %1051 = vmatpush.msra.mxu0 %v485
  %1052 = vmatpush.msra.mxu0 %v479
  %1053 = vmatmul.f32.gmra.mxu0 %v955
  %v1054 = vpop.f32.mrf.mxu0
  %v1055 = vadd.f32 %v673, %v1054
  %1056 = vdwg.mxu0
  %1057 = vmatpush.msra.mxu0 %v665
  %1058 = vmatpush.msra.mxu0 %v659
  %1059 = vmatpush.msra.mxu0 %v653
  %1060 = vmatpush.msra.mxu0 %v647
  %1061 = vmatpush.msra.mxu0 %v641
  %1062 = vmatpush.msra.mxu0 %v635
  %1063 = vmatpush.msra.mxu0 %v629
  %1064 = vmatpush.msra.mxu0 %v623
  %1065 = vmatpush.msra.mxu0 %v617
  %1066 = vmatpush.msra.mxu0 %v611
  %1067 = vmatpush.msra.mxu0 %v605
  %1068 = vmatpush.msra.mxu0 %v599
  %1069 = vmatpush.msra.mxu0 %v593
  %1070 = vmatpush.msra.mxu0 %v587
  %1071 = vmatpush.msra.mxu0 %v581
  %1072 = vmatpush.msra.mxu0 %v575
  %1073 = vmatmul.f32.gmra.mxu0 %v956
  %v1074 = vpop.f32.mrf.mxu0
  %v1075 = vadd.f32 %v1055, %v1074
  %1076 = vdwg.mxu0
  %1077 = vmatpush.msra.mxu0 %v570
  %1078 = vmatpush.msra.mxu0 %v564
  %1079 = vmatpush.msra.mxu0 %v558
  %1080 = vmatpush.msra.mxu0 %v552
  %1081 = vmatpush.msra.mxu0 %v546
  %1082 = vmatpush.msra.mxu0 %v540
  %1083 = vmatpush.msra.mxu0 %v534
  %1084 = vmatpush.msra.mxu0 %v528
  %1085 = vmatpush.msra.mxu0 %v522
  %1086 = vmatpush.msra.mxu0 %v516
  %1087 = vmatpush.msra.mxu0 %v510
  %1088 = vmatpush.msra.mxu0 %v504
  %1089 = vmatpush.msra.mxu0 %v498
  %1090 = vmatpush.msra.mxu0 %v492
  %1091 = vmatpush.msra.mxu0 %v486
  %1092 = vmatpush.msra.mxu0 %v480
  %1093 = vmatmul.f32.gmra.mxu0 %v955
  %v1094 = vpop.f32.mrf.mxu0
  %v1095 = vadd.f32 %v674, %v1094
  %1096 = vdwg.mxu0
  %1097 = vmatpush.msra.mxu0 %v666
  %1098 = vmatpush.msra.mxu0 %v660
  %1099 = vmatpush.msra.mxu0 %v654
  %1100 = vmatpush.msra.mxu0 %v648
  %1101 = vmatpush.msra.mxu0 %v642
  %1102 = vmatpush.msra.mxu0 %v636
  %1103 = vmatpush.msra.mxu0 %v630
  %1104 = vmatpush.msra.mxu0 %v624
  %1105 = vmatpush.msra.mxu0 %v618
  %1106 = vmatpush.msra.mxu0 %v612
  %1107 = vmatpush.msra.mxu0 %v606
  %1108 = vmatpush.msra.mxu0 %v600
  %1109 = vmatpush.msra.mxu0 %v594
  %1110 = vmatpush.msra.mxu0 %v588
  %1111 = vmatpush.msra.mxu0 %v582
  %1112 = vmatpush.msra.mxu0 %v576
  %1113 = vmatmul.f32.gmra.mxu0 %v956
  %v1114 = vpop.f32.mrf.mxu0
  %v1115 = vadd.f32 %v1095, %v1114
  %1116 = vdwg.mxu0
  %1117 = vmatpush.msra.mxu0 %v571
  %1118 = vmatpush.msra.mxu0 %v565
  %1119 = vmatpush.msra.mxu0 %v559
  %1120 = vmatpush.msra.mxu0 %v553
  %1121 = vmatpush.msra.mxu0 %v547
  %1122 = vmatpush.msra.mxu0 %v541
  %1123 = vmatpush.msra.mxu0 %v535
  %1124 = vmatpush.msra.mxu0 %v529
  %1125 = vmatpush.msra.mxu0 %v523
  %1126 = vmatpush.msra.mxu0 %v517
  %1127 = vmatpush.msra.mxu0 %v511
  %1128 = vmatpush.msra.mxu0 %v505
  %1129 = vmatpush.msra.mxu0 %v499
  %1130 = vmatpush.msra.mxu0 %v493
  %1131 = vmatpush.msra.mxu0 %v487
  %1132 = vmatpush.msra.mxu0 %v481
  %1133 = vmatmul.f32.gmra.mxu0 %v955
  %v1134 = vpop.f32.mrf.mxu0
  %v1135 = vadd.f32 %v675, %v1134
  %1136 = vdwg.mxu0
  %1137 = vmatpush.msra.mxu0 %v667
  %1138 = vmatpush.msra.mxu0 %v661
  %1139 = vmatpush.msra.mxu0 %v655
  %1140 = vmatpush.msra.mxu0 %v649
  %1141 = vmatpush.msra.mxu0 %v643
  %1142 = vmatpush.msra.mxu0 %v637
  %1143 = vmatpush.msra.mxu0 %v631
  %1144 = vmatpush.msra.mxu0 %v625
  %1145 = vmatpush.msra.mxu0 %v619
  %1146 = vmatpush.msra.mxu0 %v613
  %1147 = vmatpush.msra.mxu0 %v607
  %1148 = vmatpush.msra.mxu0 %v601
  %1149 = vmatpush.msra.mxu0 %v595
  %1150 = vmatpush.msra.mxu0 %v589
  %1151 = vmatpush.msra.mxu0 %v583
  %1152 = vmatpush.msra.mxu0 %v577
  %1153 = vmatmul.f32.gmra.mxu0 %v956
  %v1154 = vpop.f32.mrf.mxu0
  %v1155 = vadd.f32 %v1135, %v1154
  %1156 = vdwg.mxu0
  %1157 = vmatpush.msra.mxu0 %v572
  %1158 = vmatpush.msra.mxu0 %v566
  %1159 = vmatpush.msra.mxu0 %v560
  %1160 = vmatpush.msra.mxu0 %v554
  %1161 = vmatpush.msra.mxu0 %v548
  %1162 = vmatpush.msra.mxu0 %v542
  %1163 = vmatpush.msra.mxu0 %v536
  %1164 = vmatpush.msra.mxu0 %v530
  %1165 = vmatpush.msra.mxu0 %v524
  %1166 = vmatpush.msra.mxu0 %v518
  %1167 = vmatpush.msra.mxu0 %v512
  %1168 = vmatpush.msra.mxu0 %v506
  %1169 = vmatpush.msra.mxu0 %v500
  %1170 = vmatpush.msra.mxu0 %v494
  %1171 = vmatpush.msra.mxu0 %v488
  %1172 = vmatpush.msra.mxu0 %v482
  %1173 = vmatmul.f32.gmra.mxu0 %v955
  %v1174 = vpop.f32.mrf.mxu0
  %v1175 = vadd.f32 %v676, %v1174
  %1176 = vdwg.mxu0
  %1177 = vmatpush.msra.mxu0 %v668
  %1178 = vmatpush.msra.mxu0 %v662
  %1179 = vmatpush.msra.mxu0 %v656
  %1180 = vmatpush.msra.mxu0 %v650
  %1181 = vmatpush.msra.mxu0 %v644
  %1182 = vmatpush.msra.mxu0 %v638
  %1183 = vmatpush.msra.mxu0 %v632
  %1184 = vmatpush.msra.mxu0 %v626
  %1185 = vmatpush.msra.mxu0 %v620
  %1186 = vmatpush.msra.mxu0 %v614
  %1187 = vmatpush.msra.mxu0 %v608
  %1188 = vmatpush.msra.mxu0 %v602
  %1189 = vmatpush.msra.mxu0 %v596
  %1190 = vmatpush.msra.mxu0 %v590
  %1191 = vmatpush.msra.mxu0 %v584
  %1192 = vmatpush.msra.mxu0 %v578
  %1193 = vmatmul.f32.gmra.mxu0 %v956
  %v1194 = vpop.f32.mrf.mxu0
  %v1195 = vadd.f32 %v1175, %v1194
  %1196 = vdwg.mxu0
  %v1199 = vrot.slane %v995, 6
  %v1200 = vrot.slane %v1035, 6
  %v1203 = vadd.f32 %v275, %v1199
  %v1204 = vadd.f32 %v315, %v1200
  %v1205 = vmul.f32 %v1203, 0.5
  %v1206 = vmul.f32 %v1204, 0.5
  %v1207 = vtanh.pop %v1205
  %v1208 = vtanh.pop %v1206
  %v1209 = vadd.f32 %v1207, 1.0
  %v1210 = vadd.f32 %v1208, 1.0
  %v1211 = vmul.f32 %v1209, 0.5
  %v1212 = vmul.f32 %v1210, 0.5
  %v1215 = vrot.slane %v1075, 6
  %v1216 = vrot.slane %v1115, 6
  %v1219 = vadd.f32 %v355, %v1215
  %v1220 = vadd.f32 %v395, %v1216
  %v1221 = vmul.f32 %v1219, 0.5
  %v1222 = vmul.f32 %v1220, 0.5
  %v1223 = vtanh.pop %v1221
  %v1224 = vtanh.pop %v1222
  %v1225 = vadd.f32 %v1223, 1.0
  %v1226 = vadd.f32 %v1224, 1.0
  %v1227 = vmul.f32 %v1225, 0.5
  %v1228 = vmul.f32 %v1226, 0.5
  %v1231 = vrot.slane %v1155, 6
  %v1232 = vrot.slane %v1195, 6
  %v1235 = vmul.f32 %v1211, %v1231
  %v1236 = vmul.f32 %v1212, %v1232
  %v1237 = vadd.f32 %v435, %v1235
  %v1238 = vadd.f32 %v475, %v1236
  %v1239 = vtanh.pop %v1237
  %v1240 = vtanh.pop %v1238
  %v1241 = vsub.f32 1.0, %v1227
  %v1242 = vsub.f32 1.0, %v1228
  %v1243 = vmul.f32 %v1241, %v1239
  %v1244 = vmul.f32 %v1242, %v1240
  %v1247 = vrot.slane %v955, 6
  %v1248 = vrot.slane %v956, 6
  %v1251 = vmul.f32 %v1227, %v1247
  %v1252 = vmul.f32 %v1228, %v1248
  %v1253 = vadd.f32 %v1243, %v1251
  %v1254 = vadd.f32 %v1244, %v1252
  %v1257 = vrot.slane %v1253, 2
  %v1258 = vrot.slane %v1254, 2
  %1261 = vmatpush.msra.mxu0 %v567
  %1262 = vmatpush.msra.mxu0 %v561
  %1263 = vmatpush.msra.mxu0 %v555
  %1264 = vmatpush.msra.mxu0 %v549
  %1265 = vmatpush.msra.mxu0 %v543
  %1266 = vmatpush.msra.mxu0 %v537
  %1267 = vmatpush.msra.mxu0 %v531
  %1268 = vmatpush.msra.mxu0 %v525
  %1269 = vmatpush.msra.mxu0 %v519
  %1270 = vmatpush.msra.mxu0 %v513
  %1271 = vmatpush.msra.mxu0 %v507
  %1272 = vmatpush.msra.mxu0 %v501
  %1273 = vmatpush.msra.mxu0 %v495
  %1274 = vmatpush.msra.mxu0 %v489
  %1275 = vmatpush.msra.mxu0 %v483
  %1276 = vmatpush.msra.mxu0 %v477
  %1277 = vmatmul.f32.gmra.mxu0 %v1257
  %v1278 = vpop.f32.mrf.mxu0
  %v1279 = vadd.f32 %v671, %v1278
  %1280 = vdwg.mxu0
  %1281 = vmatpush.msra.mxu0 %v663
  %1282 = vmatpush.msra.mxu0 %v657
  %1283 = vmatpush.msra.mxu0 %v651
  %1284 = vmatpush.msra.mxu0 %v645
  %1285 = vmatpush.msra.mxu0 %v639
  %1286 = vmatpush.msra.mxu0 %v633
  %1287 = vmatpush.msra.mxu0 %v627
  %1288 = vmatpush.msra.mxu0 %v621
  %1289 = vmatpush.msra.mxu0 %v615
  %1290 = vmatpush.msra.mxu0 %v609
  %1291 = vmatpush.msra.mxu0 %v603
  %1292 = vmatpush.msra.mxu0 %v597
  %1293 = vmatpush.msra.mxu0 %v591
  %1294 = vmatpush.msra.mxu0 %v585
  %1295 = vmatpush.msra.mxu0 %v579
  %1296 = vmatpush.msra.mxu0 %v573
  %1297 = vmatmul.f32.gmra.mxu0 %v1258
  %v1298 = vpop.f32.mrf.mxu0
  %v1299 = vadd.f32 %v1279, %v1298
  %1300 = vdwg.mxu0
  %1301 = vmatpush.msra.mxu0 %v568
  %1302 = vmatpush.msra.mxu0 %v562
  %1303 = vmatpush.msra.mxu0 %v556
  %1304 = vmatpush.msra.mxu0 %v550
  %1305 = vmatpush.msra.mxu0 %v544
  %1306 = vmatpush.msra.mxu0 %v538
  %1307 = vmatpush.msra.mxu0 %v532
  %1308 = vmatpush.msra.mxu0 %v526
  %1309 = vmatpush.msra.mxu0 %v520
  %1310 = vmatpush.msra.mxu0 %v514
  %1311 = vmatpush.msra.mxu0 %v508
  %1312 = vmatpush.msra.mxu0 %v502
  %1313 = vmatpush.msra.mxu0 %v496
  %1314 = vmatpush.msra.mxu0 %v490
  %1315 = vmatpush.msra.mxu0 %v484
  %1316 = vmatpush.msra.mxu0 %v478
  %1317 = vmatmul.f32.gmra.mxu0 %v1257
  %v1318 = vpop.f32.mrf.mxu0
  %v1319 = vadd.f32 %v672, %v1318
  %1320 = vdwg.mxu0
  %1321 = vmatpush.msra.mxu0 %v664
  %1322 = vmatpush.msra.mxu0 %v658
  %1323 = vmatpush.msra.mxu0 %v652
  %1324 = vmatpush.msra.mxu0 %v646
  %1325 = vmatpush.msra.mxu0 %v640
  %1326 = vmatpush.msra.mxu0 %v634
  %1327 = vmatpush.msra.mxu0 %v628
  %1328 = vmatpush.msra.mxu0 %v622
  %1329 = vmatpush.msra.mxu0 %v616
  %1330 = vmatpush.msra.mxu0 %v610
  %1331 = vmatpush.msra.mxu0 %v604
  %1332 = vmatpush.msra.mxu0 %v598
  %1333 = vmatpush.msra.mxu0 %v592
  %1334 = vmatpush.msra.mxu0 %v586
  %1335 = vmatpush.msra.mxu0 %v580
  %1336 = vmatpush.msra.mxu0 %v574
  %1337 = vmatmul.f32.gmra.mxu0 %v1258
  %v1338 = vpop.f32.mrf.mxu0
  %v1339 = vadd.f32 %v1319, %v1338
  %1340 = vdwg.mxu0
  %1341 = vmatpush.msra.mxu0 %v569
  %1342 = vmatpush.msra.mxu0 %v563
  %1343 = vmatpush.msra.mxu0 %v557
  %1344 = vmatpush.msra.mxu0 %v551
  %1345 = vmatpush.msra.mxu0 %v545
  %1346 = vmatpush.msra.mxu0 %v539
  %1347 = vmatpush.msra.mxu0 %v533
  %1348 = vmatpush.msra.mxu0 %v527
  %1349 = vmatpush.msra.mxu0 %v521
  %1350 = vmatpush.msra.mxu0 %v515
  %1351 = vmatpush.msra.mxu0 %v509
  %1352 = vmatpush.msra.mxu0 %v503
  %1353 = vmatpush.msra.mxu0 %v497
  %1354 = vmatpush.msra.mxu0 %v491
  %1355 = vmatpush.msra.mxu0 %v485
  %1356 = vmatpush.msra.mxu0 %v479
  %1357 = vmatmul.f32.gmra.mxu0 %v1257
  %v1358 = vpop.f32.mrf.mxu0
  %v1359 = vadd.f32 %v673, %v1358
  %1360 = vdwg.mxu0
  %1361 = vmatpush.msra.mxu0 %v665
  %1362 = vmatpush.msra.mxu0 %v659
  %1363 = vmatpush.msra.mxu0 %v653
  %1364 = vmatpush.msra.mxu0 %v647
  %1365 = vmatpush.msra.mxu0 %v641
  %1366 = vmatpush.msra.mxu0 %v635
  %1367 = vmatpush.msra.mxu0 %v629
  %1368 = vmatpush.msra.mxu0 %v623
  %1369 = vmatpush.msra.mxu0 %v617
  %1370 = vmatpush.msra.mxu0 %v611
  %1371 = vmatpush.msra.mxu0 %v605
  %1372 = vmatpush.msra.mxu0 %v599
  %1373 = vmatpush.msra.mxu0 %v593
  %1374 = vmatpush.msra.mxu0 %v587
  %1375 = vmatpush.msra.mxu0 %v581
  %1376 = vmatpush.msra.mxu0 %v575
  %1377 = vmatmul.f32.gmra.mxu0 %v1258
  %v1378 = vpop.f32.mrf.mxu0
  %v1379 = vadd.f32 %v1359, %v1378
  %1380 = vdwg.mxu0
  %1381 = vmatpush.msra.mxu0 %v570
  %1382 = vmatpush.msra.mxu0 %v564
  %1383 = vmatpush.msra.mxu0 %v558
  %1384 = vmatpush.msra.mxu0 %v552
  %1385 = vmatpush.msra.mxu0 %v546
  %1386 = vmatpush.msra.mxu0 %v540
  %1387 = vmatpush.msra.mxu0 %v534
  %1388 = vmatpush.msra.mxu0 %v528
  %1389 = vmatpush.msra.mxu0 %v522
  %1390 = vmatpush.msra.mxu0 %v516
  %1391 = vmatpush.msra.mxu0 %v510
  %1392 = vmatpush.msra.mxu0 %v504
  %1393 = vmatpush.msra.mxu0 %v498
  %1394 = vmatpush.msra.mxu0 %v492
  %1395 = vmatpush.msra.mxu0 %v486
  %1396 = vmatpush.msra.mxu0 %v480
  %1397 = vmatmul.f32.gmra.mxu0 %v1257
  %v1398 = vpop.f32.mrf.mxu0
  %v1399 = vadd.f32 %v674, %v1398
  %1400 = vdwg.mxu0
  %1401 = vmatpush.msra.mxu0 %v666
  %1402 = vmatpush.msra.mxu0 %v660
  %1403 = vmatpush.msra.mxu0 %v654
  %1404 = vmatpush.msra.mxu0 %v648
  %1405 = vmatpush.msra.mxu0 %v642
  %1406 = vmatpush.msra.mxu0 %v636
  %1407 = vmatpush.msra.mxu0 %v630
  %1408 = vmatpush.msra.mxu0 %v624
  %1409 = vmatpush.msra.mxu0 %v618
  %1410 = vmatpush.msra.mxu0 %v612
  %1411 = vmatpush.msra.mxu0 %v606
  %1412 = vmatpush.msra.mxu0 %v600
  %1413 = vmatpush.msra.mxu0 %v594
  %1414 = vmatpush.msra.mxu0 %v588
  %1415 = vmatpush.msra.mxu0 %v582
  %1416 = vmatpush.msra.mxu0 %v576
  %1417 = vmatmul.f32.gmra.mxu0 %v1258
  %v1418 = vpop.f32.mrf.mxu0
  %v1419 = vadd.f32 %v1399, %v1418
  %1420 = vdwg.mxu0
  %1421 = vmatpush.msra.mxu0 %v571
  %1422 = vmatpush.msra.mxu0 %v565
  %1423 = vmatpush.msra.mxu0 %v559
  %1424 = vmatpush.msra.mxu0 %v553
  %1425 = vmatpush.msra.mxu0 %v547
  %1426 = vmatpush.msra.mxu0 %v541
  %1427 = vmatpush.msra.mxu0 %v535
  %1428 = vmatpush.msra.mxu0 %v529
  %1429 = vmatpush.msra.mxu0 %v523
  %1430 = vmatpush.msra.mxu0 %v517
  %1431 = vmatpush.msra.mxu0 %v511
  %1432 = vmatpush.msra.mxu0 %v505
  %1433 = vmatpush.msra.mxu0 %v499
  %1434 = vmatpush.msra.mxu0 %v493
  %1435 = vmatpush.msra.mxu0 %v487
  %1436 = vmatpush.msra.mxu0 %v481
  %1437 = vmatmul.f32.gmra.mxu0 %v1257
  %v1438 = vpop.f32.mrf.mxu0
  %v1439 = vadd.f32 %v675, %v1438
  %1440 = vdwg.mxu0
  %1441 = vmatpush.msra.mxu0 %v667
  %1442 = vmatpush.msra.mxu0 %v661
  %1443 = vmatpush.msra.mxu0 %v655
  %1444 = vmatpush.msra.mxu0 %v649
  %1445 = vmatpush.msra.mxu0 %v643
  %1446 = vmatpush.msra.mxu0 %v637
  %1447 = vmatpush.msra.mxu0 %v631
  %1448 = vmatpush.msra.mxu0 %v625
  %1449 = vmatpush.msra.mxu0 %v619
  %1450 = vmatpush.msra.mxu0 %v613
  %1451 = vmatpush.msra.mxu0 %v607
  %1452 = vmatpush.msra.mxu0 %v601
  %1453 = vmatpush.msra.mxu0 %v595
  %1454 = vmatpush.msra.mxu0 %v589
  %1455 = vmatpush.msra.mxu0 %v583
  %1456 = vmatpush.msra.mxu0 %v577
  %1457 = vmatmul.f32.gmra.mxu0 %v1258
  %v1458 = vpop.f32.mrf.mxu0
  %v1459 = vadd.f32 %v1439, %v1458
  %1460 = vdwg.mxu0
  %1461 = vmatpush.msra.mxu0 %v572
  %1462 = vmatpush.msra.mxu0 %v566
  %1463 = vmatpush.msra.mxu0 %v560
  %1464 = vmatpush.msra.mxu0 %v554
  %1465 = vmatpush.msra.mxu0 %v548
  %1466 = vmatpush.msra.mxu0 %v542
  %1467 = vmatpush.msra.mxu0 %v536
  %1468 = vmatpush.msra.mxu0 %v530
  %1469 = vmatpush.msra.mxu0 %v524
  %1470 = vmatpush.msra.mxu0 %v518
  %1471 = vmatpush.msra.mxu0 %v512
  %1472 = vmatpush.msra.mxu0 %v506
  %1473 = vmatpush.msra.mxu0 %v500
  %1474 = vmatpush.msra.mxu0 %v494
  %1475 = vmatpush.msra.mxu0 %v488
  %1476 = vmatpush.msra.mxu0 %v482
  %1477 = vmatmul.f32.gmra.mxu0 %v1257
  %v1478 = vpop.f32.mrf.mxu0
  %v1479 = vadd.f32 %v676, %v1478
  %1480 = vdwg.mxu0
  %1481 = vmatpush.msra.mxu0 %v668
  %1482 = vmatpush.msra.mxu0 %v662
  %1483 = vmatpush.msra.mxu0 %v656
  %1484 = vmatpush.msra.mxu0 %v650
  %1485 = vmatpush.msra.mxu0 %v644
  %1486 = vmatpush.msra.mxu0 %v638
  %1487 = vmatpush.msra.mxu0 %v632
  %1488 = vmatpush.msra.mxu0 %v626
  %1489 = vmatpush.msra.mxu0 %v620
  %1490 = vmatpush.msra.mxu0 %v614
  %1491 = vmatpush.msra.mxu0 %v608
  %1492 = vmatpush.msra.mxu0 %v602
  %1493 = vmatpush.msra.mxu0 %v596
  %1494 = vmatpush.msra.mxu0 %v590
  %1495 = vmatpush.msra.mxu0 %v584
  %1496 = vmatpush.msra.mxu0 %v578
  %1497 = vmatmul.f32.gmra.mxu0 %v1258
  %v1498 = vpop.f32.mrf.mxu0
  %v1499 = vadd.f32 %v1479, %v1498
  %1500 = vdwg.mxu0
  %v1503 = vrot.slane %v1299, 4
  %v1504 = vrot.slane %v1339, 4
  %v1507 = vadd.f32 %v275, %v1503
  %v1508 = vadd.f32 %v315, %v1504
  %v1509 = vmul.f32 %v1507, 0.5
  %v1510 = vmul.f32 %v1508, 0.5
  %v1511 = vtanh.pop %v1509
  %v1512 = vtanh.pop %v1510
  %v1513 = vadd.f32 %v1511, 1.0
  %v1514 = vadd.f32 %v1512, 1.0
  %v1515 = vmul.f32 %v1513, 0.5
  %v1516 = vmul.f32 %v1514, 0.5
  %v1519 = vrot.slane %v1379, 4
  %v1520 = vrot.slane %v1419, 4
  %v1523 = vadd.f32 %v355, %v1519
  %v1524 = vadd.f32 %v395, %v1520
  %v1525 = vmul.f32 %v1523, 0.5
  %v1526 = vmul.f32 %v1524, 0.5
  %v1527 = vtanh.pop %v1525
  %v1528 = vtanh.pop %v1526
  %v1529 = vadd.f32 %v1527, 1.0
  %v1530 = vadd.f32 %v1528, 1.0
  %v1531 = vmul.f32 %v1529, 0.5
  %v1532 = vmul.f32 %v1530, 0.5
  %v1535 = vrot.slane %v1459, 4
  %v1536 = vrot.slane %v1499, 4
  %v1539 = vmul.f32 %v1515, %v1535
  %v1540 = vmul.f32 %v1516, %v1536
  %v1541 = vadd.f32 %v435, %v1539
  %v1542 = vadd.f32 %v475, %v1540
  %v1543 = vtanh.pop %v1541
  %v1544 = vtanh.pop %v1542
  %v1545 = vsub.f32 1.0, %v1531
  %v1546 = vsub.f32 1.0, %v1532
  %v1547 = vmul.f32 %v1545, %v1543
  %v1548 = vmul.f32 %v1546, %v1544
  %v1549 = vrot.slane %v1253, 6
  %v1550 = vrot.slane %v1254, 6
  %v1553 = vmul.f32 %v1531, %v1549
  %v1554 = vmul.f32 %v1532, %v1550
  %v1555 = vadd.f32 %v1547, %v1553
  %v1556 = vadd.f32 %v1548, %v1554
  %v1557 = vld [vmem:[%s1] sm:$0xf]
  %1560 = vst.sshfl [vmem:[#allocation1] sm:$0xff pattern:$0x73625140] %v1555
  %1561 = vst.sshfl [vmem:[#allocation1 + $0x8] sm:$0xff pattern:$0x73625140] %v1556
  %s1562 = scalar_lea.vmem [#allocation1], 2
  %v1563 = vld [vmem:[%s1562] ss:$4 sm:$0xff]
  %v1565 = vadd.f32 %v1557, %v1563
  %v1566 = vld [vmem:[%s6] sm:$0xff]
  %v1567 = vld [vmem:[%s6 + $0x8] sm:$0xff]
  %v1568 = vld [vmem:[%s6 + $0x10] sm:$0xff]
  %v1569 = vld [vmem:[%s6 + $0x18] sm:$0xff]
  %v1570 = vld [vmem:[%s6 + $0x20] sm:$0xff]
  %v1571 = vld [vmem:[%s6 + $0x28] sm:$0xff]
  %v1572 = vld [vmem:[%s6 + $0x30] sm:$0xff]
  %v1573 = vld [vmem:[%s6 + $0x38] sm:$0xff]
  %v1574 = vld [vmem:[%s6 + $0x40] sm:$0xff]
  %v1575 = vld [vmem:[%s6 + $0x48] sm:$0xff]
  %v1576 = vld [vmem:[%s6 + $0x50] sm:$0xff]
  %v1577 = vld [vmem:[%s6 + $0x58] sm:$0xff]
  %v1578 = vld [vmem:[%s6 + $0x60] sm:$0xff]
  %v1579 = vld [vmem:[%s6 + $0x68] sm:$0xff]
  %v1580 = vld [vmem:[%s6 + $0x70] sm:$0xff]
  %v1581 = vld [vmem:[%s6 + $0x78] sm:$0xff]
  %v1582 = vld [vmem:[%s6 + $0x80] sm:$0xff]
  %v1583 = vld [vmem:[%s6 + $0x88] sm:$0xff]
  %v1584 = vld [vmem:[%s6 + $0x90] sm:$0xff]
  %v1585 = vld [vmem:[%s6 + $0x98] sm:$0xff]
  %v1586 = vld [vmem:[%s6 + $0xa0] sm:$0xff]
  %v1587 = vld [vmem:[%s6 + $0xa8] sm:$0xff]
  %v1588 = vld [vmem:[%s6 + $0xb0] sm:$0xff]
  %v1589 = vld [vmem:[%s6 + $0xb8] sm:$0xff]
  %v1590 = vld [vmem:[%s6 + $0xc0] sm:$0xff]
  %v1591 = vld [vmem:[%s6 + $0xc8] sm:$0xff]
  %v1592 = vld [vmem:[%s6 + $0xd0] sm:$0xff]
  %v1593 = vld [vmem:[%s6 + $0xd8] sm:$0xff]
  %v1594 = vld [vmem:[%s6 + $0xe0] sm:$0xff]
  %v1595 = vld [vmem:[%s6 + $0xe8] sm:$0xff]
  %v1596 = vld [vmem:[%s6 + $0xf0] sm:$0xff]
  %v1597 = vld [vmem:[%s6 + $0xf8] sm:$0xff]
  %v1598 = vld [vmem:[%s7] sm:$0x1]
  %v1600 = vperm.slane %v1598, 0
  %1603 = vst [vmem:[#allocation1] ss:$4 sm:$0xff] %v1565
  %v1604 = vld.sshfl [vmem:[#allocation1] sm:$0xff pattern:$0x73625140]
  %v1605 = vld.sshfl [vmem:[#allocation1 + $0x8] sm:$0xff pattern:$0x73625140]
  %1608 = vmatpush.msra.mxu0 %v1581
  %1609 = vmatpush.msra.mxu0 %v1580
  %1610 = vmatpush.msra.mxu0 %v1579
  %1611 = vmatpush.msra.mxu0 %v1578
  %1612 = vmatpush.msra.mxu0 %v1577
  %1613 = vmatpush.msra.mxu0 %v1576
  %1614 = vmatpush.msra.mxu0 %v1575
  %1615 = vmatpush.msra.mxu0 %v1574
  %1616 = vmatpush.msra.mxu0 %v1573
  %1617 = vmatpush.msra.mxu0 %v1572
  %1618 = vmatpush.msra.mxu0 %v1571
  %1619 = vmatpush.msra.mxu0 %v1570
  %1620 = vmatpush.msra.mxu0 %v1569
  %1621 = vmatpush.msra.mxu0 %v1568
  %1622 = vmatpush.msra.mxu0 %v1567
  %1623 = vmatpush.msra.mxu0 %v1566
  %1624 = vmatmul.f32.gmra.mxu0 %v1604
  %v1625 = vpop.f32.mrf.mxu0
  %v1626 = vadd.f32 %v1600, %v1625
  %1627 = vdwg.mxu0
  %1628 = vmatpush.msra.mxu0 %v1597
  %1629 = vmatpush.msra.mxu0 %v1596
  %1630 = vmatpush.msra.mxu0 %v1595
  %1631 = vmatpush.msra.mxu0 %v1594
  %1632 = vmatpush.msra.mxu0 %v1593
  %1633 = vmatpush.msra.mxu0 %v1592
  %1634 = vmatpush.msra.mxu0 %v1591
  %1635 = vmatpush.msra.mxu0 %v1590
  %1636 = vmatpush.msra.mxu0 %v1589
  %1637 = vmatpush.msra.mxu0 %v1588
  %1638 = vmatpush.msra.mxu0 %v1587
  %1639 = vmatpush.msra.mxu0 %v1586
  %1640 = vmatpush.msra.mxu0 %v1585
  %1641 = vmatpush.msra.mxu0 %v1584
  %1642 = vmatpush.msra.mxu0 %v1583
  %1643 = vmatpush.msra.mxu0 %v1582
  %1644 = vmatmul.f32.gmra.mxu0 %v1605
  %v1645 = vpop.f32.mrf.mxu0
  %v1646 = vadd.f32 %v1626, %v1645
  %1647 = vdwg.mxu0
  %1648 = vst [vmem:[%s8] sm:$0x3] %v1646
  // Predicated region
  $region34: #{meta_cdw_forward.3} parent=0 // pred_check
    _
  $region35: #{meta_cdw_forward.3} parent=0 // pred_check_branch
    %1650 = sbr.rel (0) target = $region37
  $region36: #{meta_cdw_forward.3} parent=0 // pred_region
    _
  $region37: #{meta_cdw_forward.3} parent=0 // pred_fallthru
    _
  // Predicated region
  $region38: #{meta_cdw_forward.3} parent=0 // pred_check
    _
  $region39: #{meta_cdw_forward.3} parent=0 // pred_check_branch
    %1652 = sbr.rel (0) target = $region41
  $region40: #{meta_cdw_forward.3} parent=0 // pred_region
    _
  $region41: #{meta_cdw_forward.3} parent=0 // pred_fallthru
    _

// kernel: meta_cdw_forward.2
$region0: #{meta_cdw_forward.2}
  #allocation0 [shape = 'u32[]', space=smem, size = 0x4, offset = 0x4, fixed_abs, tag = 'smem constant byte address 0x4 - core index']
  #allocation1 [shape = 'u32[72,128]{1,0:T(1,128)}', space=vmem, size = 0x9000, scoped, tag = 'internal scratch']
  %s0 = inlined_call_operand.smem [shape: u32[34], index: -1, kind: input, shape index: {}]
  %s1 = sld [smem:[%s0]]
  %s2 = scalar_lea.smem %s0, 1
  %s3 = sld [smem:[%s2]]
  %s4 = scalar_lea.smem %s0, 2
  %s5 = sld [smem:[%s4]]
  %s6 = scalar_lea.smem %s0, 3
  %s7 = sld [smem:[%s6]]
  %s8 = scalar_lea.smem %s0, 4
  %s9 = sld [smem:[%s8]]
  %s10 = scalar_lea.smem %s0, 5
  %s11 = sld [smem:[%s10]]
  %s12 = scalar_lea.smem %s0, 6
  %s13 = sld [smem:[%s12]]
  %s14 = scalar_lea.smem %s0, 7
  %s15 = sld [smem:[%s14]]
  %s16 = scalar_lea.smem %s0, 8
  %s17 = sld [smem:[%s16]]
  %s18 = scalar_lea.smem %s0, 9
  %s19 = sld [smem:[%s18]]
  %s20 = scalar_lea.smem %s0, 10
  %s21 = sld [smem:[%s20]]
  %s22 = scalar_lea.smem %s0, 11
  %s23 = sld [smem:[%s22]]
  %s24 = scalar_lea.smem %s0, 12
  %s25 = sld [smem:[%s24]]
  %s26 = scalar_lea.smem %s0, 13
  %s27 = sld [smem:[%s26]]
  %s28 = scalar_lea.smem %s0, 14
  %s29 = sld [smem:[%s28]]
  %s30 = scalar_lea.smem %s0, 15
  %s31 = sld [smem:[%s30]]
  %s32 = scalar_lea.smem %s0, 16
  %s33 = sld [smem:[%s32]]
  %s34 = scalar_lea.smem %s0, 17
  %s35 = sld [smem:[%s34]]
  %s36 = scalar_lea.smem %s0, 18
  %s37 = sld [smem:[%s36]]
  %s38 = scalar_lea.smem %s0, 19
  %s39 = sld [smem:[%s38]]
  %s40 = scalar_lea.smem %s0, 20
  %s41 = sld [smem:[%s40]]
  %s42 = scalar_lea.smem %s0, 21
  %s43 = sld [smem:[%s42]]
  %s44 = scalar_lea.smem %s0, 22
  %s45 = sld [smem:[%s44]]
  %s46 = scalar_lea.smem %s0, 23
  %s47 = sld [smem:[%s46]]
  %s48 = scalar_lea.smem %s0, 24
  %s49 = sld [smem:[%s48]]
  %s50 = scalar_lea.smem %s0, 25
  %s51 = sld [smem:[%s50]]
  %s52 = scalar_lea.smem %s0, 26
  %s53 = sld [smem:[%s52]]
  %s54 = scalar_lea.smem %s0, 27
  %s55 = sld [smem:[%s54]]
  %s56 = scalar_lea.smem %s0, 28
  %s57 = sld [smem:[%s56]]
  %s58 = scalar_lea.smem %s0, 29
  %s59 = sld [smem:[%s58]]
  %s60 = scalar_lea.smem %s0, 30
  %s61 = sld [smem:[%s60]]
  %s62 = scalar_lea.smem %s0, 31
  %s63 = sld [smem:[%s62]]
  %s64 = scalar_lea.smem %s0, 32
  %s65 = sld [smem:[%s64]]
  %s66 = scalar_lea.smem %s0, 33
  %s67 = sld [smem:[%s66]]
  %68 = xla_tuple %s65, %s67
  %s69 = sld [smem:[#allocation0]]
  $region146: #{meta_cdw_forward.2} parent=0
    _
  %s71 = ssub.s32 1, %s69
  %s72 = scalar_select 0, %s71, %s69
  // Predicated region
  $region2: #{meta_cdw_forward.2} parent=0 // pred_check
    _
  $region3: #{meta_cdw_forward.2} parent=0 // pred_check_branch
    %74 = sbr.rel (0) target = $region5
  $region4: #{meta_cdw_forward.2} parent=0 // pred_region
    _
  $region5: #{meta_cdw_forward.2} parent=0 // pred_fallthru
    _
  // Predicated region
  $region6: #{meta_cdw_forward.2} parent=0 // pred_check
    _
  $region7: #{meta_cdw_forward.2} parent=0 // pred_check_branch
    %76 = sbr.rel (0) target = $region9
  $region8: #{meta_cdw_forward.2} parent=0 // pred_region
    _
  $region9: #{meta_cdw_forward.2} parent=0 // pred_fallthru
    _
  // Predicated region
  $region10: #{meta_cdw_forward.2} parent=0 // pred_check
    _
  $region11: #{meta_cdw_forward.2} parent=0 // pred_check_branch
    %78 = sbr.rel (0) target = $region13
  $region12: #{meta_cdw_forward.2} parent=0 // pred_region
    _
  $region13: #{meta_cdw_forward.2} parent=0 // pred_fallthru
    _
  // Predicated region
  $region14: #{meta_cdw_forward.2} parent=0 // pred_check
    _
  $region15: #{meta_cdw_forward.2} parent=0 // pred_check_branch
    %80 = sbr.rel (0) target = $region17
  $region16: #{meta_cdw_forward.2} parent=0 // pred_region
    _
  $region17: #{meta_cdw_forward.2} parent=0 // pred_fallthru
    _
  // Predicated region
  $region18: #{meta_cdw_forward.2} parent=0 // pred_check
    _
  $region19: #{meta_cdw_forward.2} parent=0 // pred_check_branch
    %82 = sbr.rel (0) target = $region21
  $region20: #{meta_cdw_forward.2} parent=0 // pred_region
    _
  $region21: #{meta_cdw_forward.2} parent=0 // pred_fallthru
    _
  // Predicated region
  $region22: #{meta_cdw_forward.2} parent=0 // pred_check
    _
  $region23: #{meta_cdw_forward.2} parent=0 // pred_check_branch
    %84 = sbr.rel (0) target = $region25
  $region24: #{meta_cdw_forward.2} parent=0 // pred_region
    _
  $region25: #{meta_cdw_forward.2} parent=0 // pred_fallthru
    _
  // Predicated region
  $region26: #{meta_cdw_forward.2} parent=0 // pred_check
    _
  $region27: #{meta_cdw_forward.2} parent=0 // pred_check_branch
    %86 = sbr.rel (0) target = $region29
  $region28: #{meta_cdw_forward.2} parent=0 // pred_region
    _
  $region29: #{meta_cdw_forward.2} parent=0 // pred_fallthru
    _
  // Predicated region
  $region30: #{meta_cdw_forward.2} parent=0 // pred_check
    _
  $region31: #{meta_cdw_forward.2} parent=0 // pred_check_branch
    %88 = sbr.rel (0) target = $region33
  $region32: #{meta_cdw_forward.2} parent=0 // pred_region
    _
  $region33: #{meta_cdw_forward.2} parent=0 // pred_fallthru
    _
  // Predicated region
  $region34: #{meta_cdw_forward.2} parent=0 // pred_check
    _
  $region35: #{meta_cdw_forward.2} parent=0 // pred_check_branch
    %90 = sbr.rel (0) target = $region37
  $region36: #{meta_cdw_forward.2} parent=0 // pred_region
    _
  $region37: #{meta_cdw_forward.2} parent=0 // pred_fallthru
    _
  // Predicated region
  $region38: #{meta_cdw_forward.2} parent=0 // pred_check
    _
  $region39: #{meta_cdw_forward.2} parent=0 // pred_check_branch
    %92 = sbr.rel (0) target = $region41
  $region40: #{meta_cdw_forward.2} parent=0 // pred_region
    _
  $region41: #{meta_cdw_forward.2} parent=0 // pred_fallthru
    _
  // Predicated region
  $region42: #{meta_cdw_forward.2} parent=0 // pred_check
    _
  $region43: #{meta_cdw_forward.2} parent=0 // pred_check_branch
    %94 = sbr.rel (0) target = $region45
  $region44: #{meta_cdw_forward.2} parent=0 // pred_region
    _
  $region45: #{meta_cdw_forward.2} parent=0 // pred_fallthru
    _
  // Predicated region
  $region46: #{meta_cdw_forward.2} parent=0 // pred_check
    _
  $region47: #{meta_cdw_forward.2} parent=0 // pred_check_branch
    %96 = sbr.rel (0) target = $region49
  $region48: #{meta_cdw_forward.2} parent=0 // pred_region
    _
  $region49: #{meta_cdw_forward.2} parent=0 // pred_fallthru
    _
  // Predicated region
  $region50: #{meta_cdw_forward.2} parent=0 // pred_check
    _
  $region51: #{meta_cdw_forward.2} parent=0 // pred_check_branch
    %98 = sbr.rel (0) target = $region53
  $region52: #{meta_cdw_forward.2} parent=0 // pred_region
    _
  $region53: #{meta_cdw_forward.2} parent=0 // pred_fallthru
    _
  // Predicated region
  $region54: #{meta_cdw_forward.2} parent=0 // pred_check
    _
  $region55: #{meta_cdw_forward.2} parent=0 // pred_check_branch
    %100 = sbr.rel (0) target = $region57
  $region56: #{meta_cdw_forward.2} parent=0 // pred_region
    _
  $region57: #{meta_cdw_forward.2} parent=0 // pred_fallthru
    _
  // Predicated region
  $region58: #{meta_cdw_forward.2} parent=0 // pred_check
    _
  $region59: #{meta_cdw_forward.2} parent=0 // pred_check_branch
    %102 = sbr.rel (0) target = $region61
  $region60: #{meta_cdw_forward.2} parent=0 // pred_region
    _
  $region61: #{meta_cdw_forward.2} parent=0 // pred_fallthru
    _
  // Predicated region
  $region62: #{meta_cdw_forward.2} parent=0 // pred_check
    _
  $region63: #{meta_cdw_forward.2} parent=0 // pred_check_branch
    %104 = sbr.rel (0) target = $region65
  $region64: #{meta_cdw_forward.2} parent=0 // pred_region
    _
  $region65: #{meta_cdw_forward.2} parent=0 // pred_fallthru
    _
  // Predicated region
  $region66: #{meta_cdw_forward.2} parent=0 // pred_check
    _
  $region67: #{meta_cdw_forward.2} parent=0 // pred_check_branch
    %106 = sbr.rel (0) target = $region69
  $region68: #{meta_cdw_forward.2} parent=0 // pred_region
    _
  $region69: #{meta_cdw_forward.2} parent=0 // pred_fallthru
    _
  // Predicated region
  $region70: #{meta_cdw_forward.2} parent=0 // pred_check
    _
  $region71: #{meta_cdw_forward.2} parent=0 // pred_check_branch
    %108 = sbr.rel (0) target = $region73
  $region72: #{meta_cdw_forward.2} parent=0 // pred_region
    _
  $region73: #{meta_cdw_forward.2} parent=0 // pred_fallthru
    _
  // Predicated region
  $region74: #{meta_cdw_forward.2} parent=0 // pred_check
    _
  $region75: #{meta_cdw_forward.2} parent=0 // pred_check_branch
    %110 = sbr.rel (0) target = $region77
  $region76: #{meta_cdw_forward.2} parent=0 // pred_region
    _
  $region77: #{meta_cdw_forward.2} parent=0 // pred_fallthru
    _
  // Predicated region
  $region78: #{meta_cdw_forward.2} parent=0 // pred_check
    _
  $region79: #{meta_cdw_forward.2} parent=0 // pred_check_branch
    %112 = sbr.rel (0) target = $region81
  $region80: #{meta_cdw_forward.2} parent=0 // pred_region
    _
  $region81: #{meta_cdw_forward.2} parent=0 // pred_fallthru
    _
  // Predicated region
  $region82: #{meta_cdw_forward.2} parent=0 // pred_check
    _
  $region83: #{meta_cdw_forward.2} parent=0 // pred_check_branch
    %114 = sbr.rel (0) target = $region85
  $region84: #{meta_cdw_forward.2} parent=0 // pred_region
    _
  $region85: #{meta_cdw_forward.2} parent=0 // pred_fallthru
    _
  // Predicated region
  $region86: #{meta_cdw_forward.2} parent=0 // pred_check
    _
  $region87: #{meta_cdw_forward.2} parent=0 // pred_check_branch
    %116 = sbr.rel (0) target = $region89
  $region88: #{meta_cdw_forward.2} parent=0 // pred_region
    _
  $region89: #{meta_cdw_forward.2} parent=0 // pred_fallthru
    _
  // Predicated region
  $region90: #{meta_cdw_forward.2} parent=0 // pred_check
    _
  $region91: #{meta_cdw_forward.2} parent=0 // pred_check_branch
    %118 = sbr.rel (0) target = $region93
  $region92: #{meta_cdw_forward.2} parent=0 // pred_region
    _
  $region93: #{meta_cdw_forward.2} parent=0 // pred_fallthru
    _
  // Predicated region
  $region94: #{meta_cdw_forward.2} parent=0 // pred_check
    _
  $region95: #{meta_cdw_forward.2} parent=0 // pred_check_branch
    %120 = sbr.rel (0) target = $region97
  $region96: #{meta_cdw_forward.2} parent=0 // pred_region
    _
  $region97: #{meta_cdw_forward.2} parent=0 // pred_fallthru
    _
  // Predicated region
  $region98: #{meta_cdw_forward.2} parent=0 // pred_check
    _
  $region99: #{meta_cdw_forward.2} parent=0 // pred_check_branch
    %122 = sbr.rel (0) target = $region101
  $region100: #{meta_cdw_forward.2} parent=0 // pred_region
    _
  $region101: #{meta_cdw_forward.2} parent=0 // pred_fallthru
    _
  // Predicated region
  $region102: #{meta_cdw_forward.2} parent=0 // pred_check
    _
  $region103: #{meta_cdw_forward.2} parent=0 // pred_check_branch
    %124 = sbr.rel (0) target = $region105
  $region104: #{meta_cdw_forward.2} parent=0 // pred_region
    _
  $region105: #{meta_cdw_forward.2} parent=0 // pred_fallthru
    _
  // Predicated region
  $region106: #{meta_cdw_forward.2} parent=0 // pred_check
    _
  $region107: #{meta_cdw_forward.2} parent=0 // pred_check_branch
    %126 = sbr.rel (0) target = $region109
  $region108: #{meta_cdw_forward.2} parent=0 // pred_region
    _
  $region109: #{meta_cdw_forward.2} parent=0 // pred_fallthru
    _
  // Predicated region
  $region110: #{meta_cdw_forward.2} parent=0 // pred_check
    _
  $region111: #{meta_cdw_forward.2} parent=0 // pred_check_branch
    %128 = sbr.rel (0) target = $region113
  $region112: #{meta_cdw_forward.2} parent=0 // pred_region
    _
  $region113: #{meta_cdw_forward.2} parent=0 // pred_fallthru
    _
  // Predicated region
  $region114: #{meta_cdw_forward.2} parent=0 // pred_check
    _
  $region115: #{meta_cdw_forward.2} parent=0 // pred_check_branch
    %130 = sbr.rel (0) target = $region117
  $region116: #{meta_cdw_forward.2} parent=0 // pred_region
    _
  $region117: #{meta_cdw_forward.2} parent=0 // pred_fallthru
    _
  // Predicated region
  $region118: #{meta_cdw_forward.2} parent=0 // pred_check
    _
  $region119: #{meta_cdw_forward.2} parent=0 // pred_check_branch
    %132 = sbr.rel (0) target = $region121
  $region120: #{meta_cdw_forward.2} parent=0 // pred_region
    _
  $region121: #{meta_cdw_forward.2} parent=0 // pred_fallthru
    _
  // Predicated region
  $region122: #{meta_cdw_forward.2} parent=0 // pred_check
    _
  $region123: #{meta_cdw_forward.2} parent=0 // pred_check_branch
    %134 = sbr.rel (0) target = $region125
  $region124: #{meta_cdw_forward.2} parent=0 // pred_region
    _
  $region125: #{meta_cdw_forward.2} parent=0 // pred_fallthru
    _
  // Predicated region
  $region126: #{meta_cdw_forward.2} parent=0 // pred_check
    _
  $region127: #{meta_cdw_forward.2} parent=0 // pred_check_branch
    %136 = sbr.rel (0) target = $region129
  $region128: #{meta_cdw_forward.2} parent=0 // pred_region
    _
  $region129: #{meta_cdw_forward.2} parent=0 // pred_fallthru
    _
  %v138 = vld [vmem:[%s1] sm:$0xff]
  %v139 = vld [vmem:[%s1 + $0x8] sm:$0xff]
  %v140 = vld [vmem:[%s9] sm:$0xff]
  %v141 = vld [vmem:[%s9 + $0x8] sm:$0xff]
  %v142 = vld [vmem:[%s11] sm:$0x1]
  %v144 = vperm.slane %v142, 0
  %vm146 = vcmask 130048
  %v148 = vsel %vm146, %v138, 0
  %v151 = vsel %vm146, %v139, 0
  %153 = vmatpush.msra.mxu0 0.0
  %154 = vmatpush.msra.mxu0 0.0
  %155 = vmatpush.msra.mxu0 0.0
  %156 = vmatpush.msra.mxu0 0.0
  %157 = vmatpush.msra.mxu0 0.0
  %158 = vmatpush.msra.mxu0 0.0
  %159 = vmatpush.msra.mxu0 0.0
  %160 = vmatpush.msra.mxu0 0.0
  %161 = vmatpush.msra.mxu0 0.0
  %162 = vmatpush.msra.mxu0 0.0
  %163 = vmatpush.msra.mxu0 0.0
  %164 = vmatpush.msra.mxu0 0.0
  %165 = vmatpush.msra.mxu0 0.0
  %166 = vmatpush.msra.mxu0 0.0
  %167 = vmatpush.msra.mxu0 %v141
  %168 = vmatpush.msra.mxu0 %v140
  %169 = vmatmul.f32.gmra.mxu0 %v148
  %v170 = vpop.f32.mrf.mxu0
  %v171 = vadd.f32 %v144, %v170
  %172 = vmatmul.f32.gmra.mxu0 %v151
  %v173 = vpop.f32.mrf.mxu0
  %v174 = vadd.f32 %v144, %v173
  %175 = vdwg.mxu0
  %v176 = vld [vmem:[%s5] sm:$0xff]
  %v177 = vld [vmem:[%s5 + $0x8] sm:$0xff]
  %v178 = vadd.f32 %v171, %v176
  %v179 = vadd.f32 %v174, %v177
  %v180 = vld [vmem:[%s17] sm:$0xff]
  %v181 = vld [vmem:[%s17 + $0x8] sm:$0xff]
  %v182 = vld [vmem:[%s17 + $0x10] sm:$0xff]
  %v183 = vld [vmem:[%s17 + $0x18] sm:$0xff]
  %v184 = vld [vmem:[%s19] sm:$0x1]
  %v186 = vperm.slane %v184, 0
  %vm188 = vcmask 261120
  %v190 = vsel %vm188, %v178, 0
  %v193 = vsel %vm188, %v179, 0
  %195 = vmatpush.msra.mxu0 0.0
  %196 = vmatpush.msra.mxu0 0.0
  %197 = vmatpush.msra.mxu0 0.0
  %198 = vmatpush.msra.mxu0 0.0
  %199 = vmatpush.msra.mxu0 0.0
  %200 = vmatpush.msra.mxu0 0.0
  %201 = vmatpush.msra.mxu0 0.0
  %202 = vmatpush.msra.mxu0 0.0
  %203 = vmatpush.msra.mxu0 0.0
  %204 = vmatpush.msra.mxu0 0.0
  %205 = vmatpush.msra.mxu0 0.0
  %206 = vmatpush.msra.mxu0 0.0
  %207 = vmatpush.msra.mxu0 %v183
  %208 = vmatpush.msra.mxu0 %v182
  %209 = vmatpush.msra.mxu0 %v181
  %210 = vmatpush.msra.mxu0 %v180
  %211 = vmatmul.f32.gmra.mxu0 %v190
  %v212 = vpop.f32.mrf.mxu0
  %v213 = vadd.f32 %v186, %v212
  %214 = vmatmul.f32.gmra.mxu0 %v193
  %v215 = vpop.f32.mrf.mxu0
  %v216 = vadd.f32 %v186, %v215
  %217 = vdwg.mxu0
  %v218 = vmul.f32 %v213, 0.25
  %v219 = vmul.f32 %v216, 0.25
  %221 = vrot.lane.b32.xlu0 %v213, 96
  %v222 = vpop.permute.xlu0 %221
  %v224 = vsel %vm146, %v218, 0
  %v226 = vsel %vm146, %v222, 0
  %228 = vmatpush.xpose.msra.mxu0 0.0
  %229 = vmatpush.xpose.msra.mxu0 0.0
  %230 = vmatpush.xpose.msra.mxu0 0.0
  %231 = vmatpush.xpose.msra.mxu0 0.0
  %232 = vmatpush.xpose.msra.mxu0 0.0
  %233 = vmatpush.xpose.msra.mxu0 0.0
  %234 = vmatpush.xpose.msra.mxu0 0.0
  %235 = vmatpush.xpose.msra.mxu0 0.0
  %236 = vmatpush.xpose.msra.mxu0 0.0
  %237 = vmatpush.xpose.msra.mxu0 0.0
  %238 = vmatpush.xpose.msra.mxu0 0.0
  %239 = vmatpush.xpose.msra.mxu0 0.0
  %240 = vmatpush.xpose.msra.mxu0 0.0
  %241 = vmatpush.xpose.msra.mxu0 0.0
  %242 = vmatpush.xpose.msra.mxu0 0.0
  %243 = vmatpush.xpose.msra.mxu0 %v226
  %244 = vmatmul.f32.gmra.mxu0 %v224
  %v245 = vpop.f32.mrf.mxu0
  %v246 = vadd.f32 0.0, %v245
  %247 = vdwg.mxu0
  %249 = vrot.lane.b32.xlu0 %v216, 96
  %v250 = vpop.permute.xlu0 %249
  %v252 = vsel %vm146, %v219, 0
  %v254 = vsel %vm146, %v250, 0
  %256 = vmatpush.xpose.msra.mxu0 0.0
  %257 = vmatpush.xpose.msra.mxu0 0.0
  %258 = vmatpush.xpose.msra.mxu0 0.0
  %259 = vmatpush.xpose.msra.mxu0 0.0
  %260 = vmatpush.xpose.msra.mxu0 0.0
  %261 = vmatpush.xpose.msra.mxu0 0.0
  %262 = vmatpush.xpose.msra.mxu0 0.0
  %263 = vmatpush.xpose.msra.mxu0 0.0
  %264 = vmatpush.xpose.msra.mxu0 0.0
  %265 = vmatpush.xpose.msra.mxu0 0.0
  %266 = vmatpush.xpose.msra.mxu0 0.0
  %267 = vmatpush.xpose.msra.mxu0 0.0
  %268 = vmatpush.xpose.msra.mxu0 0.0
  %269 = vmatpush.xpose.msra.mxu0 0.0
  %270 = vmatpush.xpose.msra.mxu0 0.0
  %271 = vmatpush.xpose.msra.mxu0 %v254
  %272 = vmatmul.f32.gmra.mxu0 %v252
  %v273 = vpop.f32.mrf.mxu0
  %v274 = vadd.f32 0.0, %v273
  %275 = vdwg.mxu0
  %vm276 = vcmask 64512
  %v277 = vsel %vm276, %v246, -inf
  %278 = vmax.xlane.f32.xlu0 %v277
  %v279 = vpop.xlane.xlu0 %278
  %v280 = vsel %vm276, %v274, -inf
  %281 = vmax.xlane.f32.xlu0 %v280
  %v282 = vpop.xlane.xlu0 %281
  %v283 = vsub.f32 %v246, %v279
  %v284 = vsub.f32 %v274, %v282
  %v285 = vmul.f32 %v283, 1.442695
  %v286 = vpow.pop %v285
  %v287 = vmul.f32 %v284, 1.442695
  %v288 = vpow.pop %v287
  %v289 = vsel %vm276, %v286, 0.0
  %290 = vadd.xlane.f32.xlu0 %v289
  %v291 = vpop.xlane.xlu0 %290
  %v292 = vsel %vm276, %v288, 0.0
  %293 = vadd.xlane.f32.xlu0 %v292
  %v294 = vpop.xlane.xlu0 %293
  %v295 = vrcp.pop %v291
  %v296 = vmul.f32 %v291, %v295
  %v297 = vsub.f32 1.0, %v296
  %v298 = vmul.f32 %v295, %v297
  %v299 = vadd.f32 %v295, %v298
  %vm300 = vweird.f32 %v291
  %vm301 = vweird.f32 %v295
  %vm302 = vmor %vm300, %vm301
  %v303 = vsel %vm302, %v295, %v299
  %v304 = vand.u32 2147483647, %v291
  %vm305 = vcmp.eq.f32.partialorder %v304, 8.507059e+37
  %v306 = vand.u32 %v291, 2147483648
  %v307 = vor.u32 1.1754944e-38, %v306
  %v308 = vsel %vm305, %v307, %v303
  %v309 = vrcp.pop %v294
  %v310 = vmul.f32 %v294, %v309
  %v311 = vsub.f32 1.0, %v310
  %v312 = vmul.f32 %v309, %v311
  %v313 = vadd.f32 %v309, %v312
  %vm314 = vweird.f32 %v294
  %vm315 = vweird.f32 %v309
  %vm316 = vmor %vm314, %vm315
  %v317 = vsel %vm316, %v309, %v313
  %v318 = vand.u32 2147483647, %v294
  %vm319 = vcmp.eq.f32.partialorder %v318, 8.507059e+37
  %v320 = vand.u32 %v294, 2147483648
  %v321 = vor.u32 1.1754944e-38, %v320
  %v322 = vsel %vm319, %v321, %v317
  %v323 = vmul.f32 %v286, %v308
  %v324 = vmul.f32 %v288, %v322
  %325 = vrot.lane.b32.xlu0 %v213, 64
  %v326 = vpop.permute.xlu0 %325
  %v329 = vsel %vm276, %v323, 0
  %331 = vmatpush.msra.mxu0 0.0
  %332 = vmatpush.msra.mxu0 0.0
  %333 = vmatpush.msra.mxu0 0.0
  %334 = vmatpush.msra.mxu0 0.0
  %335 = vmatpush.msra.mxu0 0.0
  %336 = vmatpush.msra.mxu0 0.0
  %337 = vmatpush.msra.mxu0 0.0
  %338 = vmatpush.msra.mxu0 0.0
  %339 = vmatpush.msra.mxu0 0.0
  %340 = vmatpush.msra.mxu0 0.0
  %341 = vmatpush.msra.mxu0 0.0
  %342 = vmatpush.msra.mxu0 0.0
  %343 = vmatpush.msra.mxu0 0.0
  %344 = vmatpush.msra.mxu0 0.0
  %345 = vmatpush.msra.mxu0 0.0
  %346 = vmatpush.msra.mxu0 %v326
  %347 = vmatmul.f32.gmra.mxu0 %v329
  %v348 = vpop.f32.mrf.mxu0
  %v349 = vadd.f32 0.0, %v348
  %350 = vdwg.mxu0
  %351 = vrot.lane.b32.xlu0 %v216, 64
  %v352 = vpop.permute.xlu0 %351
  %v355 = vsel %vm276, %v324, 0
  %357 = vmatpush.msra.mxu0 0.0
  %358 = vmatpush.msra.mxu0 0.0
  %359 = vmatpush.msra.mxu0 0.0
  %360 = vmatpush.msra.mxu0 0.0
  %361 = vmatpush.msra.mxu0 0.0
  %362 = vmatpush.msra.mxu0 0.0
  %363 = vmatpush.msra.mxu0 0.0
  %364 = vmatpush.msra.mxu0 0.0
  %365 = vmatpush.msra.mxu0 0.0
  %366 = vmatpush.msra.mxu0 0.0
  %367 = vmatpush.msra.mxu0 0.0
  %368 = vmatpush.msra.mxu0 0.0
  %369 = vmatpush.msra.mxu0 0.0
  %370 = vmatpush.msra.mxu0 0.0
  %371 = vmatpush.msra.mxu0 0.0
  %372 = vmatpush.msra.mxu0 %v352
  %373 = vmatmul.f32.gmra.mxu0 %v355
  %v374 = vpop.f32.mrf.mxu0
  %v375 = vadd.f32 0.0, %v374
  %376 = vdwg.mxu0
  %377 = vrot.lane.b32.xlu0 %v218, 112
  %v378 = vpop.permute.xlu0 %377
  %379 = vrot.lane.b32.xlu0 %v213, 80
  %v380 = vpop.permute.xlu0 %379
  %v381 = vsel %vm146, %v378, 0
  %v383 = vsel %vm146, %v380, 0
  %385 = vmatpush.xpose.msra.mxu0 0.0
  %386 = vmatpush.xpose.msra.mxu0 0.0
  %387 = vmatpush.xpose.msra.mxu0 0.0
  %388 = vmatpush.xpose.msra.mxu0 0.0
  %389 = vmatpush.xpose.msra.mxu0 0.0
  %390 = vmatpush.xpose.msra.mxu0 0.0
  %391 = vmatpush.xpose.msra.mxu0 0.0
  %392 = vmatpush.xpose.msra.mxu0 0.0
  %393 = vmatpush.xpose.msra.mxu0 0.0
  %394 = vmatpush.xpose.msra.mxu0 0.0
  %395 = vmatpush.xpose.msra.mxu0 0.0
  %396 = vmatpush.xpose.msra.mxu0 0.0
  %397 = vmatpush.xpose.msra.mxu0 0.0
  %398 = vmatpush.xpose.msra.mxu0 0.0
  %399 = vmatpush.xpose.msra.mxu0 0.0
  %400 = vmatpush.xpose.msra.mxu0 %v383
  %401 = vmatmul.f32.gmra.mxu0 %v381
  %v402 = vpop.f32.mrf.mxu0
  %v403 = vadd.f32 0.0, %v402
  %404 = vdwg.mxu0
  %405 = vrot.lane.b32.xlu0 %v219, 112
  %v406 = vpop.permute.xlu0 %405
  %407 = vrot.lane.b32.xlu0 %v216, 80
  %v408 = vpop.permute.xlu0 %407
  %v409 = vsel %vm146, %v406, 0
  %v411 = vsel %vm146, %v408, 0
  %413 = vmatpush.xpose.msra.mxu0 0.0
  %414 = vmatpush.xpose.msra.mxu0 0.0
  %415 = vmatpush.xpose.msra.mxu0 0.0
  %416 = vmatpush.xpose.msra.mxu0 0.0
  %417 = vmatpush.xpose.msra.mxu0 0.0
  %418 = vmatpush.xpose.msra.mxu0 0.0
  %419 = vmatpush.xpose.msra.mxu0 0.0
  %420 = vmatpush.xpose.msra.mxu0 0.0
  %421 = vmatpush.xpose.msra.mxu0 0.0
  %422 = vmatpush.xpose.msra.mxu0 0.0
  %423 = vmatpush.xpose.msra.mxu0 0.0
  %424 = vmatpush.xpose.msra.mxu0 0.0
  %425 = vmatpush.xpose.msra.mxu0 0.0
  %426 = vmatpush.xpose.msra.mxu0 0.0
  %427 = vmatpush.xpose.msra.mxu0 0.0
  %428 = vmatpush.xpose.msra.mxu0 %v411
  %429 = vmatmul.f32.gmra.mxu0 %v409
  %v430 = vpop.f32.mrf.mxu0
  %v431 = vadd.f32 0.0, %v430
  %432 = vdwg.mxu0
  %v433 = vsel %vm276, %v403, -inf
  %434 = vmax.xlane.f32.xlu0 %v433
  %v435 = vpop.xlane.xlu0 %434
  %v436 = vsel %vm276, %v431, -inf
  %437 = vmax.xlane.f32.xlu0 %v436
  %v438 = vpop.xlane.xlu0 %437
  %v439 = vsub.f32 %v403, %v435
  %v440 = vsub.f32 %v431, %v438
  %v441 = vmul.f32 %v439, 1.442695
  %v442 = vpow.pop %v441
  %v443 = vmul.f32 %v440, 1.442695
  %v444 = vpow.pop %v443
  %v445 = vsel %vm276, %v442, 0.0
  %446 = vadd.xlane.f32.xlu0 %v445
  %v447 = vpop.xlane.xlu0 %446
  %v448 = vsel %vm276, %v444, 0.0
  %449 = vadd.xlane.f32.xlu0 %v448
  %v450 = vpop.xlane.xlu0 %449
  %v451 = vrcp.pop %v447
  %v452 = vmul.f32 %v447, %v451
  %v453 = vsub.f32 1.0, %v452
  %v454 = vmul.f32 %v451, %v453
  %v455 = vadd.f32 %v451, %v454
  %vm456 = vweird.f32 %v447
  %vm457 = vweird.f32 %v451
  %vm458 = vmor %vm456, %vm457
  %v459 = vsel %vm458, %v451, %v455
  %v460 = vand.u32 2147483647, %v447
  %vm461 = vcmp.eq.f32.partialorder %v460, 8.507059e+37
  %v462 = vand.u32 %v447, 2147483648
  %v463 = vor.u32 1.1754944e-38, %v462
  %v464 = vsel %vm461, %v463, %v459
  %v465 = vrcp.pop %v450
  %v466 = vmul.f32 %v450, %v465
  %v467 = vsub.f32 1.0, %v466
  %v468 = vmul.f32 %v465, %v467
  %v469 = vadd.f32 %v465, %v468
  %vm470 = vweird.f32 %v450
  %vm471 = vweird.f32 %v465
  %vm472 = vmor %vm470, %vm471
  %v473 = vsel %vm472, %v465, %v469
  %v474 = vand.u32 2147483647, %v450
  %vm475 = vcmp.eq.f32.partialorder %v474, 8.507059e+37
  %v476 = vand.u32 %v450, 2147483648
  %v477 = vor.u32 1.1754944e-38, %v476
  %v478 = vsel %vm475, %v477, %v473
  %v479 = vmul.f32 %v442, %v464
  %v480 = vmul.f32 %v444, %v478
  %481 = vrot.lane.b32.xlu0 %v213, 48
  %v482 = vpop.permute.xlu0 %481
  %v485 = vsel %vm276, %v479, 0
  %487 = vmatpush.msra.mxu0 0.0
  %488 = vmatpush.msra.mxu0 0.0
  %489 = vmatpush.msra.mxu0 0.0
  %490 = vmatpush.msra.mxu0 0.0
  %491 = vmatpush.msra.mxu0 0.0
  %492 = vmatpush.msra.mxu0 0.0
  %493 = vmatpush.msra.mxu0 0.0
  %494 = vmatpush.msra.mxu0 0.0
  %495 = vmatpush.msra.mxu0 0.0
  %496 = vmatpush.msra.mxu0 0.0
  %497 = vmatpush.msra.mxu0 0.0
  %498 = vmatpush.msra.mxu0 0.0
  %499 = vmatpush.msra.mxu0 0.0
  %500 = vmatpush.msra.mxu0 0.0
  %501 = vmatpush.msra.mxu0 0.0
  %502 = vmatpush.msra.mxu0 %v482
  %503 = vmatmul.f32.gmra.mxu0 %v485
  %v504 = vpop.f32.mrf.mxu0
  %v505 = vadd.f32 0.0, %v504
  %506 = vdwg.mxu0
  %507 = vrot.lane.b32.xlu0 %v216, 48
  %v508 = vpop.permute.xlu0 %507
  %v511 = vsel %vm276, %v480, 0
  %513 = vmatpush.msra.mxu0 0.0
  %514 = vmatpush.msra.mxu0 0.0
  %515 = vmatpush.msra.mxu0 0.0
  %516 = vmatpush.msra.mxu0 0.0
  %517 = vmatpush.msra.mxu0 0.0
  %518 = vmatpush.msra.mxu0 0.0
  %519 = vmatpush.msra.mxu0 0.0
  %520 = vmatpush.msra.mxu0 0.0
  %521 = vmatpush.msra.mxu0 0.0
  %522 = vmatpush.msra.mxu0 0.0
  %523 = vmatpush.msra.mxu0 0.0
  %524 = vmatpush.msra.mxu0 0.0
  %525 = vmatpush.msra.mxu0 0.0
  %526 = vmatpush.msra.mxu0 0.0
  %527 = vmatpush.msra.mxu0 0.0
  %528 = vmatpush.msra.mxu0 %v508
  %529 = vmatmul.f32.gmra.mxu0 %v511
  %v530 = vpop.f32.mrf.mxu0
  %v531 = vadd.f32 0.0, %v530
  %532 = vdwg.mxu0
  %535 = vrot.lane.b32.xlu0 %v505, 16
  %v536 = vpop.permute.xlu0 %535
  %537 = vrot.lane.b32.xlu0 %v531, 16
  %v538 = vpop.permute.xlu0 %537
  %v541 = vsel %vm146, %v349, %v536
  %v542 = vsel %vm146, %v375, %v538
  %v543 = vld [vmem:[%s21] sm:$0xff]
  %v544 = vld [vmem:[%s21 + $0x8] sm:$0xff]
  %v545 = vld [vmem:[%s21 + $0x10] sm:$0xff]
  %v546 = vld [vmem:[%s21 + $0x18] sm:$0xff]
  %v547 = vld [vmem:[%s23] sm:$0x1]
  %v549 = vperm.slane %v547, 0
  %v552 = vsel %vm188, %v541, 0
  %v555 = vsel %vm188, %v542, 0
  %557 = vmatpush.msra.mxu0 0.0
  %558 = vmatpush.msra.mxu0 0.0
  %559 = vmatpush.msra.mxu0 0.0
  %560 = vmatpush.msra.mxu0 0.0
  %561 = vmatpush.msra.mxu0 0.0
  %562 = vmatpush.msra.mxu0 0.0
  %563 = vmatpush.msra.mxu0 0.0
  %564 = vmatpush.msra.mxu0 0.0
  %565 = vmatpush.msra.mxu0 0.0
  %566 = vmatpush.msra.mxu0 0.0
  %567 = vmatpush.msra.mxu0 0.0
  %568 = vmatpush.msra.mxu0 0.0
  %569 = vmatpush.msra.mxu0 %v546
  %570 = vmatpush.msra.mxu0 %v545
  %571 = vmatpush.msra.mxu0 %v544
  %572 = vmatpush.msra.mxu0 %v543
  %573 = vmatmul.f32.gmra.mxu0 %v552
  %v574 = vpop.f32.mrf.mxu0
  %v575 = vadd.f32 %v549, %v574
  %576 = vmatmul.f32.gmra.mxu0 %v555
  %v577 = vpop.f32.mrf.mxu0
  %v578 = vadd.f32 %v549, %v577
  %579 = vdwg.mxu0
  %v580 = vadd.f32 %v178, %v575
  %v581 = vadd.f32 %v179, %v578
  %v582 = vsel %vm188, %v580, 0.0
  %583 = vadd.xlane.f32.xlu0 %v582
  %v584 = vpop.xlane.xlu0 %583
  %v585 = vsel %vm188, %v581, 0.0
  %586 = vadd.xlane.f32.xlu0 %v585
  %v587 = vpop.xlane.xlu0 %586
  %v588 = vrcp.pop 32.0
  %v589 = vmul.f32 32.0, %v588
  %v590 = vsub.f32 1.0, %v589
  %v591 = vmul.f32 %v588, %v590
  %v592 = vadd.f32 %v588, %v591
  %vm593 = vweird.f32 %v588
  %v594 = vsel %vm593, %v588, %v592
  %v595 = vmul.f32 %v584, %v594
  %v596 = vmul.f32 %v587, %v594
  %v597 = vsub.f32 %v580, %v595
  %v598 = vsub.f32 %v581, %v596
  %v599 = vmul.f32 %v597, %v597
  %v600 = vmul.f32 %v598, %v598
  %v601 = vsel %vm188, %v599, 0.0
  %602 = vadd.xlane.f32.xlu0 %v601
  %v603 = vpop.xlane.xlu0 %602
  %v604 = vsel %vm188, %v600, 0.0
  %605 = vadd.xlane.f32.xlu0 %v604
  %v606 = vpop.xlane.xlu0 %605
  %v607 = vmul.f32 %v603, %v594
  %v608 = vmul.f32 %v606, %v594
  %v609 = vadd.f32 %v607, 1e-05
  %v610 = vadd.f32 %v608, 1e-05
  %v611 = vrsqrt.pop %v609
  %v612 = vmul.f32 %v611, %v609
  %v613 = vmul.f32 %v612, %v611
  %v614 = vmul.f32 0.5, %v613
  %v615 = vsub.f32 1.5, %v614
  %v616 = vmul.f32 %v611, %v615
  %vm617 = vweird.f32 %v609
  %vm618 = vweird.f32 %v611
  %vm619 = vmor %vm617, %vm618
  %v620 = vsel %vm619, %v611, %v616
  %v621 = vrsqrt.pop %v610
  %v622 = vmul.f32 %v621, %v610
  %v623 = vmul.f32 %v622, %v621
  %v624 = vmul.f32 0.5, %v623
  %v625 = vsub.f32 1.5, %v624
  %v626 = vmul.f32 %v621, %v625
  %vm627 = vweird.f32 %v610
  %vm628 = vweird.f32 %v621
  %vm629 = vmor %vm627, %vm628
  %v630 = vsel %vm629, %v621, %v626
  %v631 = vmul.f32 %v597, %v620
  %v632 = vmul.f32 %v598, %v630
  %v633 = vld [vmem:[%s25] sm:$0x1]
  %v635 = vperm.slane %v633, 0
  %v637 = vmul.f32 %v631, %v635
  %v638 = vmul.f32 %v632, %v635
  %v639 = vld [vmem:[%s27] sm:$0x1]
  %v641 = vperm.slane %v639, 0
  %v643 = vadd.f32 %v637, %v641
  %v644 = vadd.f32 %v638, %v641
  %v645 = vpack.c.bf16 %v644, %v643
  %v646 = vld [vmem:[%s29] sm:$0xff]
  %v647 = vld [vmem:[%s29 + $0x8] sm:$0xff]
  %v648 = vld [vmem:[%s29 + $0x10] sm:$0xff]
  %v649 = vld [vmem:[%s29 + $0x18] sm:$0xff]
  %v650 = vld [vmem:[%s29 + $0x20] sm:$0xff]
  %v651 = vld [vmem:[%s29 + $0x28] sm:$0xff]
  %v652 = vld [vmem:[%s29 + $0x30] sm:$0xff]
  %v653 = vld [vmem:[%s29 + $0x38] sm:$0xff]
  %v654 = vld [vmem:[%s29 + $0x40] sm:$0xff]
  %v655 = vld [vmem:[%s29 + $0x48] sm:$0xff]
  %v656 = vld [vmem:[%s29 + $0x50] sm:$0xff]
  %v657 = vld [vmem:[%s29 + $0x58] sm:$0xff]
  %v658 = vld [vmem:[%s29 + $0x60] sm:$0xff]
  %v659 = vld [vmem:[%s29 + $0x68] sm:$0xff]
  %v660 = vld [vmem:[%s29 + $0x70] sm:$0xff]
  %v661 = vld [vmem:[%s29 + $0x78] sm:$0xff]
  %v662 = vld [vmem:[%s29 + $0x80] sm:$0xff]
  %v663 = vld [vmem:[%s29 + $0x88] sm:$0xff]
  %v664 = vld [vmem:[%s29 + $0x90] sm:$0xff]
  %v665 = vld [vmem:[%s29 + $0x98] sm:$0xff]
  %v666 = vld [vmem:[%s29 + $0xa0] sm:$0xff]
  %v667 = vld [vmem:[%s29 + $0xa8] sm:$0xff]
  %v668 = vld [vmem:[%s29 + $0xb0] sm:$0xff]
  %v669 = vld [vmem:[%s29 + $0xb8] sm:$0xff]
  %v670 = vld [vmem:[%s29 + $0xc0] sm:$0xff]
  %v671 = vld [vmem:[%s29 + $0xc8] sm:$0xff]
  %v672 = vld [vmem:[%s29 + $0xd0] sm:$0xff]
  %v673 = vld [vmem:[%s29 + $0xd8] sm:$0xff]
  %v674 = vld [vmem:[%s29 + $0xe0] sm:$0xff]
  %v675 = vld [vmem:[%s29 + $0xe8] sm:$0xff]
  %v676 = vld [vmem:[%s29 + $0xf0] sm:$0xff]
  %v677 = vld [vmem:[%s29 + $0xf8] sm:$0xff]
  %v678 = vld [vmem:[%s31] sm:$0xff]
  %v679 = vld [vmem:[%s31 + $0x8] sm:$0xff]
  %v682 = vperm.slane %v678, 0
  %v683 = vperm.slane %v678, 1
  %v684 = vperm.slane %v678, 2
  %v685 = vperm.slane %v678, 3
  %v686 = vperm.slane %v678, 4
  %v687 = vperm.slane %v678, 5
  %v688 = vperm.slane %v678, 6
  %v689 = vperm.slane %v678, 7
  %v690 = vperm.slane %v679, 0
  %v691 = vperm.slane %v679, 1
  %v692 = vperm.slane %v679, 2
  %v693 = vperm.slane %v679, 3
  %v694 = vperm.slane %v679, 4
  %v695 = vperm.slane %v679, 5
  %v696 = vperm.slane %v679, 6
  %v697 = vperm.slane %v679, 7
  %v746 = vunpack.c.l.b16 %v646
  %v747 = vunpack.c.h.b16 %v646
  %v748 = vunpack.c.l.b16 %v647
  %v749 = vunpack.c.h.b16 %v647
  %v750 = vunpack.c.l.b16 %v648
  %v751 = vunpack.c.h.b16 %v648
  %v752 = vunpack.c.l.b16 %v649
  %v753 = vunpack.c.h.b16 %v649
  %v754 = vunpack.c.l.b16 %v650
  %v755 = vunpack.c.h.b16 %v650
  %v756 = vunpack.c.l.b16 %v651
  %v757 = vunpack.c.h.b16 %v651
  %v758 = vunpack.c.l.b16 %v652
  %v759 = vunpack.c.h.b16 %v652
  %v760 = vunpack.c.l.b16 %v653
  %v761 = vunpack.c.h.b16 %v653
  %v762 = vunpack.c.l.b16 %v654
  %v763 = vunpack.c.h.b16 %v654
  %v764 = vunpack.c.l.b16 %v655
  %v765 = vunpack.c.h.b16 %v655
  %v766 = vunpack.c.l.b16 %v656
  %v767 = vunpack.c.h.b16 %v656
  %v768 = vunpack.c.l.b16 %v657
  %v769 = vunpack.c.h.b16 %v657
  %v770 = vunpack.c.l.b16 %v658
  %v771 = vunpack.c.h.b16 %v658
  %v772 = vunpack.c.l.b16 %v659
  %v773 = vunpack.c.h.b16 %v659
  %v774 = vunpack.c.l.b16 %v660
  %v775 = vunpack.c.h.b16 %v660
  %v776 = vunpack.c.l.b16 %v661
  %v777 = vunpack.c.h.b16 %v661
  %v778 = vunpack.c.l.b16 %v662
  %v779 = vunpack.c.h.b16 %v662
  %v780 = vunpack.c.l.b16 %v663
  %v781 = vunpack.c.h.b16 %v663
  %v782 = vunpack.c.l.b16 %v664
  %v783 = vunpack.c.h.b16 %v664
  %v784 = vunpack.c.l.b16 %v665
  %v785 = vunpack.c.h.b16 %v665
  %v786 = vunpack.c.l.b16 %v666
  %v787 = vunpack.c.h.b16 %v666
  %v788 = vunpack.c.l.b16 %v667
  %v789 = vunpack.c.h.b16 %v667
  %v790 = vunpack.c.l.b16 %v668
  %v791 = vunpack.c.h.b16 %v668
  %v792 = vunpack.c.l.b16 %v669
  %v793 = vunpack.c.h.b16 %v669
  %v794 = vunpack.c.l.b16 %v670
  %v795 = vunpack.c.h.b16 %v670
  %v796 = vunpack.c.l.b16 %v671
  %v797 = vunpack.c.h.b16 %v671
  %v798 = vunpack.c.l.b16 %v672
  %v799 = vunpack.c.h.b16 %v672
  %v800 = vunpack.c.l.b16 %v673
  %v801 = vunpack.c.h.b16 %v673
  %v802 = vunpack.c.l.b16 %v674
  %v803 = vunpack.c.h.b16 %v674
  %v804 = vunpack.c.l.b16 %v675
  %v805 = vunpack.c.h.b16 %v675
  %v806 = vunpack.c.l.b16 %v676
  %v807 = vunpack.c.h.b16 %v676
  %v808 = vunpack.c.l.b16 %v677
  %v809 = vunpack.c.h.b16 %v677
  %v810 = vpack.c.b16 %v762, %v746
  %v811 = vpack.c.b16 %v763, %v747
  %v812 = vpack.c.b16 %v764, %v748
  %v813 = vpack.c.b16 %v765, %v749
  %v814 = vpack.c.b16 %v766, %v750
  %v815 = vpack.c.b16 %v767, %v751
  %v816 = vpack.c.b16 %v768, %v752
  %v817 = vpack.c.b16 %v769, %v753
  %v818 = vpack.c.b16 %v770, %v754
  %v819 = vpack.c.b16 %v771, %v755
  %v820 = vpack.c.b16 %v772, %v756
  %v821 = vpack.c.b16 %v773, %v757
  %v822 = vpack.c.b16 %v774, %v758
  %v823 = vpack.c.b16 %v775, %v759
  %v824 = vpack.c.b16 %v776, %v760
  %v825 = vpack.c.b16 %v777, %v761
  %v826 = vpack.c.b16 %v794, %v778
  %v827 = vpack.c.b16 %v795, %v779
  %v828 = vpack.c.b16 %v796, %v780
  %v829 = vpack.c.b16 %v797, %v781
  %v830 = vpack.c.b16 %v798, %v782
  %v831 = vpack.c.b16 %v799, %v783
  %v832 = vpack.c.b16 %v800, %v784
  %v833 = vpack.c.b16 %v801, %v785
  %v834 = vpack.c.b16 %v802, %v786
  %v835 = vpack.c.b16 %v803, %v787
  %v836 = vpack.c.b16 %v804, %v788
  %v837 = vpack.c.b16 %v805, %v789
  %v838 = vpack.c.b16 %v806, %v790
  %v839 = vpack.c.b16 %v807, %v791
  %v840 = vpack.c.b16 %v808, %v792
  %v841 = vpack.c.b16 %v809, %v793
  %v875 = vsel %vm188, %v645, 0
  %877 = vmatpush.bf16.msra.mxu0 0
  %878 = vmatpush.bf16.msra.mxu0 0
  %879 = vmatpush.bf16.msra.mxu0 0
  %880 = vmatpush.bf16.msra.mxu0 0
  %881 = vmatpush.bf16.msra.mxu0 0
  %882 = vmatpush.bf16.msra.mxu0 0
  %883 = vmatpush.bf16.msra.mxu0 %v826
  %884 = vmatpush.bf16.msra.mxu0 %v810
  %885 = vmatmul.bf16.gmra.mxu0 %v875
  %v886 = vpop.f32.mrf.mxu0
  %v887 = vadd.f32 %v682, %v886
  %v888 = vpop.f32.mrf.mxu0
  %v889 = vadd.f32 %v682, %v888
  %890 = vdwg.mxu0
  %891 = vmatpush.bf16.msra.mxu0 0
  %892 = vmatpush.bf16.msra.mxu0 0
  %893 = vmatpush.bf16.msra.mxu0 0
  %894 = vmatpush.bf16.msra.mxu0 0
  %895 = vmatpush.bf16.msra.mxu0 0
  %896 = vmatpush.bf16.msra.mxu0 0
  %897 = vmatpush.bf16.msra.mxu0 %v827
  %898 = vmatpush.bf16.msra.mxu0 %v811
  %899 = vmatmul.bf16.gmra.mxu0 %v875
  %v900 = vpop.f32.mrf.mxu0
  %v901 = vadd.f32 %v683, %v900
  %v902 = vpop.f32.mrf.mxu0
  %v903 = vadd.f32 %v683, %v902
  %904 = vdwg.mxu0
  %905 = vmatpush.bf16.msra.mxu0 0
  %906 = vmatpush.bf16.msra.mxu0 0
  %907 = vmatpush.bf16.msra.mxu0 0
  %908 = vmatpush.bf16.msra.mxu0 0
  %909 = vmatpush.bf16.msra.mxu0 0
  %910 = vmatpush.bf16.msra.mxu0 0
  %911 = vmatpush.bf16.msra.mxu0 %v828
  %912 = vmatpush.bf16.msra.mxu0 %v812
  %913 = vmatmul.bf16.gmra.mxu0 %v875
  %v914 = vpop.f32.mrf.mxu0
  %v915 = vadd.f32 %v684, %v914
  %v916 = vpop.f32.mrf.mxu0
  %v917 = vadd.f32 %v684, %v916
  %918 = vdwg.mxu0
  %919 = vmatpush.bf16.msra.mxu0 0
  %920 = vmatpush.bf16.msra.mxu0 0
  %921 = vmatpush.bf16.msra.mxu0 0
  %922 = vmatpush.bf16.msra.mxu0 0
  %923 = vmatpush.bf16.msra.mxu0 0
  %924 = vmatpush.bf16.msra.mxu0 0
  %925 = vmatpush.bf16.msra.mxu0 %v829
  %926 = vmatpush.bf16.msra.mxu0 %v813
  %927 = vmatmul.bf16.gmra.mxu0 %v875
  %v928 = vpop.f32.mrf.mxu0
  %v929 = vadd.f32 %v685, %v928
  %v930 = vpop.f32.mrf.mxu0
  %v931 = vadd.f32 %v685, %v930
  %932 = vdwg.mxu0
  %933 = vmatpush.bf16.msra.mxu0 0
  %934 = vmatpush.bf16.msra.mxu0 0
  %935 = vmatpush.bf16.msra.mxu0 0
  %936 = vmatpush.bf16.msra.mxu0 0
  %937 = vmatpush.bf16.msra.mxu0 0
  %938 = vmatpush.bf16.msra.mxu0 0
  %939 = vmatpush.bf16.msra.mxu0 %v830
  %940 = vmatpush.bf16.msra.mxu0 %v814
  %941 = vmatmul.bf16.gmra.mxu0 %v875
  %v942 = vpop.f32.mrf.mxu0
  %v943 = vadd.f32 %v686, %v942
  %v944 = vpop.f32.mrf.mxu0
  %v945 = vadd.f32 %v686, %v944
  %946 = vdwg.mxu0
  %947 = vmatpush.bf16.msra.mxu0 0
  %948 = vmatpush.bf16.msra.mxu0 0
  %949 = vmatpush.bf16.msra.mxu0 0
  %950 = vmatpush.bf16.msra.mxu0 0
  %951 = vmatpush.bf16.msra.mxu0 0
  %952 = vmatpush.bf16.msra.mxu0 0
  %953 = vmatpush.bf16.msra.mxu0 %v831
  %954 = vmatpush.bf16.msra.mxu0 %v815
  %955 = vmatmul.bf16.gmra.mxu0 %v875
  %v956 = vpop.f32.mrf.mxu0
  %v957 = vadd.f32 %v687, %v956
  %v958 = vpop.f32.mrf.mxu0
  %v959 = vadd.f32 %v687, %v958
  %960 = vdwg.mxu0
  %961 = vmatpush.bf16.msra.mxu0 0
  %962 = vmatpush.bf16.msra.mxu0 0
  %963 = vmatpush.bf16.msra.mxu0 0
  %964 = vmatpush.bf16.msra.mxu0 0
  %965 = vmatpush.bf16.msra.mxu0 0
  %966 = vmatpush.bf16.msra.mxu0 0
  %967 = vmatpush.bf16.msra.mxu0 %v832
  %968 = vmatpush.bf16.msra.mxu0 %v816
  %969 = vmatmul.bf16.gmra.mxu0 %v875
  %v970 = vpop.f32.mrf.mxu0
  %v971 = vadd.f32 %v688, %v970
  %v972 = vpop.f32.mrf.mxu0
  %v973 = vadd.f32 %v688, %v972
  %974 = vdwg.mxu0
  %975 = vmatpush.bf16.msra.mxu0 0
  %976 = vmatpush.bf16.msra.mxu0 0
  %977 = vmatpush.bf16.msra.mxu0 0
  %978 = vmatpush.bf16.msra.mxu0 0
  %979 = vmatpush.bf16.msra.mxu0 0
  %980 = vmatpush.bf16.msra.mxu0 0
  %981 = vmatpush.bf16.msra.mxu0 %v833
  %982 = vmatpush.bf16.msra.mxu0 %v817
  %983 = vmatmul.bf16.gmra.mxu0 %v875
  %v984 = vpop.f32.mrf.mxu0
  %v985 = vadd.f32 %v689, %v984
  %v986 = vpop.f32.mrf.mxu0
  %v987 = vadd.f32 %v689, %v986
  %988 = vdwg.mxu0
  %989 = vmatpush.bf16.msra.mxu0 0
  %990 = vmatpush.bf16.msra.mxu0 0
  %991 = vmatpush.bf16.msra.mxu0 0
  %992 = vmatpush.bf16.msra.mxu0 0
  %993 = vmatpush.bf16.msra.mxu0 0
  %994 = vmatpush.bf16.msra.mxu0 0
  %995 = vmatpush.bf16.msra.mxu0 %v834
  %996 = vmatpush.bf16.msra.mxu0 %v818
  %997 = vmatmul.bf16.gmra.mxu0 %v875
  %v998 = vpop.f32.mrf.mxu0
  %v999 = vadd.f32 %v690, %v998
  %v1000 = vpop.f32.mrf.mxu0
  %v1001 = vadd.f32 %v690, %v1000
  %1002 = vdwg.mxu0
  %1003 = vmatpush.bf16.msra.mxu0 0
  %1004 = vmatpush.bf16.msra.mxu0 0
  %1005 = vmatpush.bf16.msra.mxu0 0
  %1006 = vmatpush.bf16.msra.mxu0 0
  %1007 = vmatpush.bf16.msra.mxu0 0
  %1008 = vmatpush.bf16.msra.mxu0 0
  %1009 = vmatpush.bf16.msra.mxu0 %v835
  %1010 = vmatpush.bf16.msra.mxu0 %v819
  %1011 = vmatmul.bf16.gmra.mxu0 %v875
  %v1012 = vpop.f32.mrf.mxu0
  %v1013 = vadd.f32 %v691, %v1012
  %v1014 = vpop.f32.mrf.mxu0
  %v1015 = vadd.f32 %v691, %v1014
  %1016 = vdwg.mxu0
  %1017 = vmatpush.bf16.msra.mxu0 0
  %1018 = vmatpush.bf16.msra.mxu0 0
  %1019 = vmatpush.bf16.msra.mxu0 0
  %1020 = vmatpush.bf16.msra.mxu0 0
  %1021 = vmatpush.bf16.msra.mxu0 0
  %1022 = vmatpush.bf16.msra.mxu0 0
  %1023 = vmatpush.bf16.msra.mxu0 %v836
  %1024 = vmatpush.bf16.msra.mxu0 %v820
  %1025 = vmatmul.bf16.gmra.mxu0 %v875
  %v1026 = vpop.f32.mrf.mxu0
  %v1027 = vadd.f32 %v692, %v1026
  %v1028 = vpop.f32.mrf.mxu0
  %v1029 = vadd.f32 %v692, %v1028
  %1030 = vdwg.mxu0
  %1031 = vmatpush.bf16.msra.mxu0 0
  %1032 = vmatpush.bf16.msra.mxu0 0
  %1033 = vmatpush.bf16.msra.mxu0 0
  %1034 = vmatpush.bf16.msra.mxu0 0
  %1035 = vmatpush.bf16.msra.mxu0 0
  %1036 = vmatpush.bf16.msra.mxu0 0
  %1037 = vmatpush.bf16.msra.mxu0 %v837
  %1038 = vmatpush.bf16.msra.mxu0 %v821
  %1039 = vmatmul.bf16.gmra.mxu0 %v875
  %v1040 = vpop.f32.mrf.mxu0
  %v1041 = vadd.f32 %v693, %v1040
  %v1042 = vpop.f32.mrf.mxu0
  %v1043 = vadd.f32 %v693, %v1042
  %1044 = vdwg.mxu0
  %1045 = vmatpush.bf16.msra.mxu0 0
  %1046 = vmatpush.bf16.msra.mxu0 0
  %1047 = vmatpush.bf16.msra.mxu0 0
  %1048 = vmatpush.bf16.msra.mxu0 0
  %1049 = vmatpush.bf16.msra.mxu0 0
  %1050 = vmatpush.bf16.msra.mxu0 0
  %1051 = vmatpush.bf16.msra.mxu0 %v838
  %1052 = vmatpush.bf16.msra.mxu0 %v822
  %1053 = vmatmul.bf16.gmra.mxu0 %v875
  %v1054 = vpop.f32.mrf.mxu0
  %v1055 = vadd.f32 %v694, %v1054
  %v1056 = vpop.f32.mrf.mxu0
  %v1057 = vadd.f32 %v694, %v1056
  %1058 = vdwg.mxu0
  %1059 = vmatpush.bf16.msra.mxu0 0
  %1060 = vmatpush.bf16.msra.mxu0 0
  %1061 = vmatpush.bf16.msra.mxu0 0
  %1062 = vmatpush.bf16.msra.mxu0 0
  %1063 = vmatpush.bf16.msra.mxu0 0
  %1064 = vmatpush.bf16.msra.mxu0 0
  %1065 = vmatpush.bf16.msra.mxu0 %v839
  %1066 = vmatpush.bf16.msra.mxu0 %v823
  %1067 = vmatmul.bf16.gmra.mxu0 %v875
  %v1068 = vpop.f32.mrf.mxu0
  %v1069 = vadd.f32 %v695, %v1068
  %v1070 = vpop.f32.mrf.mxu0
  %v1071 = vadd.f32 %v695, %v1070
  %1072 = vdwg.mxu0
  %1073 = vmatpush.bf16.msra.mxu0 0
  %1074 = vmatpush.bf16.msra.mxu0 0
  %1075 = vmatpush.bf16.msra.mxu0 0
  %1076 = vmatpush.bf16.msra.mxu0 0
  %1077 = vmatpush.bf16.msra.mxu0 0
  %1078 = vmatpush.bf16.msra.mxu0 0
  %1079 = vmatpush.bf16.msra.mxu0 %v840
  %1080 = vmatpush.bf16.msra.mxu0 %v824
  %1081 = vmatmul.bf16.gmra.mxu0 %v875
  %v1082 = vpop.f32.mrf.mxu0
  %v1083 = vadd.f32 %v696, %v1082
  %v1084 = vpop.f32.mrf.mxu0
  %v1085 = vadd.f32 %v696, %v1084
  %1086 = vdwg.mxu0
  %1087 = vmatpush.bf16.msra.mxu0 0
  %1088 = vmatpush.bf16.msra.mxu0 0
  %1089 = vmatpush.bf16.msra.mxu0 0
  %1090 = vmatpush.bf16.msra.mxu0 0
  %1091 = vmatpush.bf16.msra.mxu0 0
  %1092 = vmatpush.bf16.msra.mxu0 0
  %1093 = vmatpush.bf16.msra.mxu0 %v841
  %1094 = vmatpush.bf16.msra.mxu0 %v825
  %1095 = vmatmul.bf16.gmra.mxu0 %v875
  %v1096 = vpop.f32.mrf.mxu0
  %v1097 = vadd.f32 %v697, %v1096
  %v1098 = vpop.f32.mrf.mxu0
  %v1099 = vadd.f32 %v697, %v1098
  %1100 = vdwg.mxu0
  %v1101 = vmax.f32 %v887, 0.0
  %v1102 = vmax.f32 %v901, 0.0
  %v1103 = vmax.f32 %v915, 0.0
  %v1104 = vmax.f32 %v929, 0.0
  %v1105 = vmax.f32 %v943, 0.0
  %v1106 = vmax.f32 %v957, 0.0
  %v1107 = vmax.f32 %v971, 0.0
  %v1108 = vmax.f32 %v985, 0.0
  %v1109 = vmax.f32 %v999, 0.0
  %v1110 = vmax.f32 %v1013, 0.0
  %v1111 = vmax.f32 %v1027, 0.0
  %v1112 = vmax.f32 %v1041, 0.0
  %v1113 = vmax.f32 %v1055, 0.0
  %v1114 = vmax.f32 %v1069, 0.0
  %v1115 = vmax.f32 %v1083, 0.0
  %v1116 = vmax.f32 %v1097, 0.0
  %v1117 = vmax.f32 %v889, 0.0
  %v1118 = vmax.f32 %v903, 0.0
  %v1119 = vmax.f32 %v917, 0.0
  %v1120 = vmax.f32 %v931, 0.0
  %v1121 = vmax.f32 %v945, 0.0
  %v1122 = vmax.f32 %v959, 0.0
  %v1123 = vmax.f32 %v973, 0.0
  %v1124 = vmax.f32 %v987, 0.0
  %v1125 = vmax.f32 %v1001, 0.0
  %v1126 = vmax.f32 %v1015, 0.0
  %v1127 = vmax.f32 %v1029, 0.0
  %v1128 = vmax.f32 %v1043, 0.0
  %v1129 = vmax.f32 %v1057, 0.0
  %v1130 = vmax.f32 %v1071, 0.0
  %v1131 = vmax.f32 %v1085, 0.0
  %v1132 = vmax.f32 %v1099, 0.0
  %v1133 = vpack.c.bf16 %v1117, %v1101
  %v1134 = vpack.c.bf16 %v1118, %v1102
  %v1135 = vpack.c.bf16 %v1119, %v1103
  %v1136 = vpack.c.bf16 %v1120, %v1104
  %v1137 = vpack.c.bf16 %v1121, %v1105
  %v1138 = vpack.c.bf16 %v1122, %v1106
  %v1139 = vpack.c.bf16 %v1123, %v1107
  %v1140 = vpack.c.bf16 %v1124, %v1108
  %v1141 = vpack.c.bf16 %v1125, %v1109
  %v1142 = vpack.c.bf16 %v1126, %v1110
  %v1143 = vpack.c.bf16 %v1127, %v1111
  %v1144 = vpack.c.bf16 %v1128, %v1112
  %v1145 = vpack.c.bf16 %v1129, %v1113
  %v1146 = vpack.c.bf16 %v1130, %v1114
  %v1147 = vpack.c.bf16 %v1131, %v1115
  %v1148 = vpack.c.bf16 %v1132, %v1116
  %v1149 = vld [vmem:[%s33] sm:$0xf]
  %v1150 = vld [vmem:[%s33 + $0x4] sm:$0xf]
  %v1151 = vld [vmem:[%s33 + $0x8] sm:$0xf]
  %v1152 = vld [vmem:[%s33 + $0xc] sm:$0xf]
  %v1153 = vld [vmem:[%s33 + $0x10] sm:$0xf]
  %v1154 = vld [vmem:[%s33 + $0x14] sm:$0xf]
  %v1155 = vld [vmem:[%s33 + $0x18] sm:$0xf]
  %v1156 = vld [vmem:[%s33 + $0x1c] sm:$0xf]
  %v1157 = vld [vmem:[%s33 + $0x20] sm:$0xf]
  %v1158 = vld [vmem:[%s33 + $0x24] sm:$0xf]
  %v1159 = vld [vmem:[%s33 + $0x28] sm:$0xf]
  %v1160 = vld [vmem:[%s33 + $0x2c] sm:$0xf]
  %v1161 = vld [vmem:[%s33 + $0x30] sm:$0xf]
  %v1162 = vld [vmem:[%s33 + $0x34] sm:$0xf]
  %v1163 = vld [vmem:[%s33 + $0x38] sm:$0xf]
  %v1164 = vld [vmem:[%s33 + $0x3c] sm:$0xf]
  %v1165 = vld [vmem:[%s33 + $0x40] sm:$0xf]
  %v1166 = vld [vmem:[%s33 + $0x44] sm:$0xf]
  %v1167 = vld [vmem:[%s33 + $0x48] sm:$0xf]
  %v1168 = vld [vmem:[%s33 + $0x4c] sm:$0xf]
  %v1169 = vld [vmem:[%s33 + $0x50] sm:$0xf]
  %v1170 = vld [vmem:[%s33 + $0x54] sm:$0xf]
  %v1171 = vld [vmem:[%s33 + $0x58] sm:$0xf]
  %v1172 = vld [vmem:[%s33 + $0x5c] sm:$0xf]
  %v1173 = vld [vmem:[%s33 + $0x60] sm:$0xf]
  %v1174 = vld [vmem:[%s33 + $0x64] sm:$0xf]
  %v1175 = vld [vmem:[%s33 + $0x68] sm:$0xf]
  %v1176 = vld [vmem:[%s33 + $0x6c] sm:$0xf]
  %v1177 = vld [vmem:[%s33 + $0x70] sm:$0xf]
  %v1178 = vld [vmem:[%s33 + $0x74] sm:$0xf]
  %v1179 = vld [vmem:[%s33 + $0x78] sm:$0xf]
  %v1180 = vld [vmem:[%s33 + $0x7c] sm:$0xf]
  %v1181 = vld [vmem:[%s33 + $0x80] sm:$0xf]
  %v1182 = vld [vmem:[%s33 + $0x84] sm:$0xf]
  %v1183 = vld [vmem:[%s33 + $0x88] sm:$0xf]
  %v1184 = vld [vmem:[%s33 + $0x8c] sm:$0xf]
  %v1185 = vld [vmem:[%s33 + $0x90] sm:$0xf]
  %v1186 = vld [vmem:[%s33 + $0x94] sm:$0xf]
  %v1187 = vld [vmem:[%s33 + $0x98] sm:$0xf]
  %v1188 = vld [vmem:[%s33 + $0x9c] sm:$0xf]
  %v1189 = vld [vmem:[%s33 + $0xa0] sm:$0xf]
  %v1190 = vld [vmem:[%s33 + $0xa4] sm:$0xf]
  %v1191 = vld [vmem:[%s33 + $0xa8] sm:$0xf]
  %v1192 = vld [vmem:[%s33 + $0xac] sm:$0xf]
  %v1193 = vld [vmem:[%s33 + $0xb0] sm:$0xf]
  %v1194 = vld [vmem:[%s33 + $0xb4] sm:$0xf]
  %v1195 = vld [vmem:[%s33 + $0xb8] sm:$0xf]
  %v1196 = vld [vmem:[%s33 + $0xbc] sm:$0xf]
  %v1197 = vld [vmem:[%s33 + $0xc0] sm:$0xf]
  %v1198 = vld [vmem:[%s33 + $0xc4] sm:$0xf]
  %v1199 = vld [vmem:[%s33 + $0xc8] sm:$0xf]
  %v1200 = vld [vmem:[%s33 + $0xcc] sm:$0xf]
  %v1201 = vld [vmem:[%s33 + $0xd0] sm:$0xf]
  %v1202 = vld [vmem:[%s33 + $0xd4] sm:$0xf]
  %v1203 = vld [vmem:[%s33 + $0xd8] sm:$0xf]
  %v1204 = vld [vmem:[%s33 + $0xdc] sm:$0xf]
  %v1205 = vld [vmem:[%s33 + $0xe0] sm:$0xf]
  %v1206 = vld [vmem:[%s33 + $0xe4] sm:$0xf]
  %v1207 = vld [vmem:[%s33 + $0xe8] sm:$0xf]
  %v1208 = vld [vmem:[%s33 + $0xec] sm:$0xf]
  %v1209 = vld [vmem:[%s33 + $0xf0] sm:$0xf]
  %v1210 = vld [vmem:[%s33 + $0xf4] sm:$0xf]
  %v1211 = vld [vmem:[%s33 + $0xf8] sm:$0xf]
  %v1212 = vld [vmem:[%s33 + $0xfc] sm:$0xf]
  %v1213 = vld [vmem:[%s33 + $0x100] sm:$0xf]
  %v1214 = vld [vmem:[%s33 + $0x104] sm:$0xf]
  %v1215 = vld [vmem:[%s33 + $0x108] sm:$0xf]
  %v1216 = vld [vmem:[%s33 + $0x10c] sm:$0xf]
  %v1217 = vld [vmem:[%s33 + $0x110] sm:$0xf]
  %v1218 = vld [vmem:[%s33 + $0x114] sm:$0xf]
  %v1219 = vld [vmem:[%s33 + $0x118] sm:$0xf]
  %v1220 = vld [vmem:[%s33 + $0x11c] sm:$0xf]
  %v1221 = vld [vmem:[%s33 + $0x120] sm:$0xf]
  %v1222 = vld [vmem:[%s33 + $0x124] sm:$0xf]
  %v1223 = vld [vmem:[%s33 + $0x128] sm:$0xf]
  %v1224 = vld [vmem:[%s33 + $0x12c] sm:$0xf]
  %v1225 = vld [vmem:[%s33 + $0x130] sm:$0xf]
  %v1226 = vld [vmem:[%s33 + $0x134] sm:$0xf]
  %v1227 = vld [vmem:[%s33 + $0x138] sm:$0xf]
  %v1228 = vld [vmem:[%s33 + $0x13c] sm:$0xf]
  %v1229 = vld [vmem:[%s33 + $0x140] sm:$0xf]
  %v1230 = vld [vmem:[%s33 + $0x144] sm:$0xf]
  %v1231 = vld [vmem:[%s33 + $0x148] sm:$0xf]
  %v1232 = vld [vmem:[%s33 + $0x14c] sm:$0xf]
  %v1233 = vld [vmem:[%s33 + $0x150] sm:$0xf]
  %v1234 = vld [vmem:[%s33 + $0x154] sm:$0xf]
  %v1235 = vld [vmem:[%s33 + $0x158] sm:$0xf]
  %v1236 = vld [vmem:[%s33 + $0x15c] sm:$0xf]
  %v1237 = vld [vmem:[%s33 + $0x160] sm:$0xf]
  %v1238 = vld [vmem:[%s33 + $0x164] sm:$0xf]
  %v1239 = vld [vmem:[%s33 + $0x168] sm:$0xf]
  %v1240 = vld [vmem:[%s33 + $0x16c] sm:$0xf]
  %v1241 = vld [vmem:[%s33 + $0x170] sm:$0xf]
  %v1242 = vld [vmem:[%s33 + $0x174] sm:$0xf]
  %v1243 = vld [vmem:[%s33 + $0x178] sm:$0xf]
  %v1244 = vld [vmem:[%s33 + $0x17c] sm:$0xf]
  %v1245 = vld [vmem:[%s33 + $0x180] sm:$0xf]
  %v1246 = vld [vmem:[%s33 + $0x184] sm:$0xf]
  %v1247 = vld [vmem:[%s33 + $0x188] sm:$0xf]
  %v1248 = vld [vmem:[%s33 + $0x18c] sm:$0xf]
  %v1249 = vld [vmem:[%s33 + $0x190] sm:$0xf]
  %v1250 = vld [vmem:[%s33 + $0x194] sm:$0xf]
  %v1251 = vld [vmem:[%s33 + $0x198] sm:$0xf]
  %v1252 = vld [vmem:[%s33 + $0x19c] sm:$0xf]
  %v1253 = vld [vmem:[%s33 + $0x1a0] sm:$0xf]
  %v1254 = vld [vmem:[%s33 + $0x1a4] sm:$0xf]
  %v1255 = vld [vmem:[%s33 + $0x1a8] sm:$0xf]
  %v1256 = vld [vmem:[%s33 + $0x1ac] sm:$0xf]
  %v1257 = vld [vmem:[%s33 + $0x1b0] sm:$0xf]
  %v1258 = vld [vmem:[%s33 + $0x1b4] sm:$0xf]
  %v1259 = vld [vmem:[%s33 + $0x1b8] sm:$0xf]
  %v1260 = vld [vmem:[%s33 + $0x1bc] sm:$0xf]
  %v1261 = vld [vmem:[%s33 + $0x1c0] sm:$0xf]
  %v1262 = vld [vmem:[%s33 + $0x1c4] sm:$0xf]
  %v1263 = vld [vmem:[%s33 + $0x1c8] sm:$0xf]
  %v1264 = vld [vmem:[%s33 + $0x1cc] sm:$0xf]
  %v1265 = vld [vmem:[%s33 + $0x1d0] sm:$0xf]
  %v1266 = vld [vmem:[%s33 + $0x1d4] sm:$0xf]
  %v1267 = vld [vmem:[%s33 + $0x1d8] sm:$0xf]
  %v1268 = vld [vmem:[%s33 + $0x1dc] sm:$0xf]
  %v1269 = vld [vmem:[%s33 + $0x1e0] sm:$0xf]
  %v1270 = vld [vmem:[%s33 + $0x1e4] sm:$0xf]
  %v1271 = vld [vmem:[%s33 + $0x1e8] sm:$0xf]
  %v1272 = vld [vmem:[%s33 + $0x1ec] sm:$0xf]
  %v1273 = vld [vmem:[%s33 + $0x1f0] sm:$0xf]
  %v1274 = vld [vmem:[%s33 + $0x1f4] sm:$0xf]
  %v1275 = vld [vmem:[%s33 + $0x1f8] sm:$0xf]
  %v1276 = vld [vmem:[%s33 + $0x1fc] sm:$0xf]
  %v1277 = vld [vmem:[%s33 + $0x200] sm:$0xf]
  %v1278 = vld [vmem:[%s33 + $0x204] sm:$0xf]
  %v1279 = vld [vmem:[%s33 + $0x208] sm:$0xf]
  %v1280 = vld [vmem:[%s33 + $0x20c] sm:$0xf]
  %v1281 = vld [vmem:[%s33 + $0x210] sm:$0xf]
  %v1282 = vld [vmem:[%s33 + $0x214] sm:$0xf]
  %v1283 = vld [vmem:[%s33 + $0x218] sm:$0xf]
  %v1284 = vld [vmem:[%s33 + $0x21c] sm:$0xf]
  %v1285 = vld [vmem:[%s33 + $0x220] sm:$0xf]
  %v1286 = vld [vmem:[%s33 + $0x224] sm:$0xf]
  %v1287 = vld [vmem:[%s33 + $0x228] sm:$0xf]
  %v1288 = vld [vmem:[%s33 + $0x22c] sm:$0xf]
  %v1289 = vld [vmem:[%s33 + $0x230] sm:$0xf]
  %v1290 = vld [vmem:[%s33 + $0x234] sm:$0xf]
  %v1291 = vld [vmem:[%s33 + $0x238] sm:$0xf]
  %v1292 = vld [vmem:[%s33 + $0x23c] sm:$0xf]
  %v1293 = vld [vmem:[%s33 + $0x240] sm:$0xf]
  %v1294 = vld [vmem:[%s33 + $0x244] sm:$0xf]
  %v1295 = vld [vmem:[%s33 + $0x248] sm:$0xf]
  %v1296 = vld [vmem:[%s33 + $0x24c] sm:$0xf]
  %v1297 = vld [vmem:[%s33 + $0x250] sm:$0xf]
  %v1298 = vld [vmem:[%s33 + $0x254] sm:$0xf]
  %v1299 = vld [vmem:[%s33 + $0x258] sm:$0xf]
  %v1300 = vld [vmem:[%s33 + $0x25c] sm:$0xf]
  %v1301 = vld [vmem:[%s33 + $0x260] sm:$0xf]
  %v1302 = vld [vmem:[%s33 + $0x264] sm:$0xf]
  %v1303 = vld [vmem:[%s33 + $0x268] sm:$0xf]
  %v1304 = vld [vmem:[%s33 + $0x26c] sm:$0xf]
  %v1305 = vld [vmem:[%s33 + $0x270] sm:$0xf]
  %v1306 = vld [vmem:[%s33 + $0x274] sm:$0xf]
  %v1307 = vld [vmem:[%s33 + $0x278] sm:$0xf]
  %v1308 = vld [vmem:[%s33 + $0x27c] sm:$0xf]
  %v1309 = vld [vmem:[%s33 + $0x280] sm:$0xf]
  %v1310 = vld [vmem:[%s33 + $0x284] sm:$0xf]
  %v1311 = vld [vmem:[%s33 + $0x288] sm:$0xf]
  %v1312 = vld [vmem:[%s33 + $0x28c] sm:$0xf]
  %v1313 = vld [vmem:[%s33 + $0x290] sm:$0xf]
  %v1314 = vld [vmem:[%s33 + $0x294] sm:$0xf]
  %v1315 = vld [vmem:[%s33 + $0x298] sm:$0xf]
  %v1316 = vld [vmem:[%s33 + $0x29c] sm:$0xf]
  %v1317 = vld [vmem:[%s33 + $0x2a0] sm:$0xf]
  %v1318 = vld [vmem:[%s33 + $0x2a4] sm:$0xf]
  %v1319 = vld [vmem:[%s33 + $0x2a8] sm:$0xf]
  %v1320 = vld [vmem:[%s33 + $0x2ac] sm:$0xf]
  %v1321 = vld [vmem:[%s33 + $0x2b0] sm:$0xf]
  %v1322 = vld [vmem:[%s33 + $0x2b4] sm:$0xf]
  %v1323 = vld [vmem:[%s33 + $0x2b8] sm:$0xf]
  %v1324 = vld [vmem:[%s33 + $0x2bc] sm:$0xf]
  %v1325 = vld [vmem:[%s33 + $0x2c0] sm:$0xf]
  %v1326 = vld [vmem:[%s33 + $0x2c4] sm:$0xf]
  %v1327 = vld [vmem:[%s33 + $0x2c8] sm:$0xf]
  %v1328 = vld [vmem:[%s33 + $0x2cc] sm:$0xf]
  %v1329 = vld [vmem:[%s33 + $0x2d0] sm:$0xf]
  %v1330 = vld [vmem:[%s33 + $0x2d4] sm:$0xf]
  %v1331 = vld [vmem:[%s33 + $0x2d8] sm:$0xf]
  %v1332 = vld [vmem:[%s33 + $0x2dc] sm:$0xf]
  %v1333 = vld [vmem:[%s33 + $0x2e0] sm:$0xf]
  %v1334 = vld [vmem:[%s33 + $0x2e4] sm:$0xf]
  %v1335 = vld [vmem:[%s33 + $0x2e8] sm:$0xf]
  %v1336 = vld [vmem:[%s33 + $0x2ec] sm:$0xf]
  %v1337 = vld [vmem:[%s33 + $0x2f0] sm:$0xf]
  %v1338 = vld [vmem:[%s33 + $0x2f4] sm:$0xf]
  %v1339 = vld [vmem:[%s33 + $0x2f8] sm:$0xf]
  %v1340 = vld [vmem:[%s33 + $0x2fc] sm:$0xf]
  %v1341 = vld [vmem:[%s33 + $0x300] sm:$0xf]
  %v1342 = vld [vmem:[%s33 + $0x304] sm:$0xf]
  %v1343 = vld [vmem:[%s33 + $0x308] sm:$0xf]
  %v1344 = vld [vmem:[%s33 + $0x30c] sm:$0xf]
  %v1345 = vld [vmem:[%s33 + $0x310] sm:$0xf]
  %v1346 = vld [vmem:[%s33 + $0x314] sm:$0xf]
  %v1347 = vld [vmem:[%s33 + $0x318] sm:$0xf]
  %v1348 = vld [vmem:[%s33 + $0x31c] sm:$0xf]
  %v1349 = vld [vmem:[%s33 + $0x320] sm:$0xf]
  %v1350 = vld [vmem:[%s33 + $0x324] sm:$0xf]
  %v1351 = vld [vmem:[%s33 + $0x328] sm:$0xf]
  %v1352 = vld [vmem:[%s33 + $0x32c] sm:$0xf]
  %v1353 = vld [vmem:[%s33 + $0x330] sm:$0xf]
  %v1354 = vld [vmem:[%s33 + $0x334] sm:$0xf]
  %v1355 = vld [vmem:[%s33 + $0x338] sm:$0xf]
  %v1356 = vld [vmem:[%s33 + $0x33c] sm:$0xf]
  %v1357 = vld [vmem:[%s33 + $0x340] sm:$0xf]
  %v1358 = vld [vmem:[%s33 + $0x344] sm:$0xf]
  %v1359 = vld [vmem:[%s33 + $0x348] sm:$0xf]
  %v1360 = vld [vmem:[%s33 + $0x34c] sm:$0xf]
  %v1361 = vld [vmem:[%s33 + $0x350] sm:$0xf]
  %v1362 = vld [vmem:[%s33 + $0x354] sm:$0xf]
  %v1363 = vld [vmem:[%s33 + $0x358] sm:$0xf]
  %v1364 = vld [vmem:[%s33 + $0x35c] sm:$0xf]
  %v1365 = vld [vmem:[%s33 + $0x360] sm:$0xf]
  %v1366 = vld [vmem:[%s33 + $0x364] sm:$0xf]
  %v1367 = vld [vmem:[%s33 + $0x368] sm:$0xf]
  %v1368 = vld [vmem:[%s33 + $0x36c] sm:$0xf]
  %v1369 = vld [vmem:[%s33 + $0x370] sm:$0xf]
  %v1370 = vld [vmem:[%s33 + $0x374] sm:$0xf]
  %v1371 = vld [vmem:[%s33 + $0x378] sm:$0xf]
  %v1372 = vld [vmem:[%s33 + $0x37c] sm:$0xf]
  %v1373 = vld [vmem:[%s33 + $0x380] sm:$0xf]
  %v1374 = vld [vmem:[%s33 + $0x384] sm:$0xf]
  %v1375 = vld [vmem:[%s33 + $0x388] sm:$0xf]
  %v1376 = vld [vmem:[%s33 + $0x38c] sm:$0xf]
  %v1377 = vld [vmem:[%s33 + $0x390] sm:$0xf]
  %v1378 = vld [vmem:[%s33 + $0x394] sm:$0xf]
  %v1379 = vld [vmem:[%s33 + $0x398] sm:$0xf]
  %v1380 = vld [vmem:[%s33 + $0x39c] sm:$0xf]
  %v1381 = vld [vmem:[%s33 + $0x3a0] sm:$0xf]
  %v1382 = vld [vmem:[%s33 + $0x3a4] sm:$0xf]
  %v1383 = vld [vmem:[%s33 + $0x3a8] sm:$0xf]
  %v1384 = vld [vmem:[%s33 + $0x3ac] sm:$0xf]
  %v1385 = vld [vmem:[%s33 + $0x3b0] sm:$0xf]
  %v1386 = vld [vmem:[%s33 + $0x3b4] sm:$0xf]
  %v1387 = vld [vmem:[%s33 + $0x3b8] sm:$0xf]
  %v1388 = vld [vmem:[%s33 + $0x3bc] sm:$0xf]
  %v1389 = vld [vmem:[%s33 + $0x3c0] sm:$0xf]
  %v1390 = vld [vmem:[%s33 + $0x3c4] sm:$0xf]
  %v1391 = vld [vmem:[%s33 + $0x3c8] sm:$0xf]
  %v1392 = vld [vmem:[%s33 + $0x3cc] sm:$0xf]
  %v1393 = vld [vmem:[%s33 + $0x3d0] sm:$0xf]
  %v1394 = vld [vmem:[%s33 + $0x3d4] sm:$0xf]
  %v1395 = vld [vmem:[%s33 + $0x3d8] sm:$0xf]
  %v1396 = vld [vmem:[%s33 + $0x3dc] sm:$0xf]
  %v1397 = vld [vmem:[%s33 + $0x3e0] sm:$0xf]
  %v1398 = vld [vmem:[%s33 + $0x3e4] sm:$0xf]
  %v1399 = vld [vmem:[%s33 + $0x3e8] sm:$0xf]
  %v1400 = vld [vmem:[%s33 + $0x3ec] sm:$0xf]
  %v1401 = vld [vmem:[%s33 + $0x3f0] sm:$0xf]
  %v1402 = vld [vmem:[%s33 + $0x3f4] sm:$0xf]
  %v1403 = vld [vmem:[%s33 + $0x3f8] sm:$0xf]
  %v1404 = vld [vmem:[%s33 + $0x3fc] sm:$0xf]
  %v1405 = vld [vmem:[%s35] sm:$0x1]
  %v1407 = vperm.slane %v1405, 0
  %v1665 = vunpack.c.l.b16 %v1149
  %v1666 = vunpack.c.l.b16 %v1150
  %v1667 = vunpack.c.l.b16 %v1151
  %v1668 = vunpack.c.l.b16 %v1152
  %v1669 = vunpack.c.l.b16 %v1153
  %v1670 = vunpack.c.l.b16 %v1154
  %v1671 = vunpack.c.l.b16 %v1155
  %v1672 = vunpack.c.l.b16 %v1156
  %v1673 = vunpack.c.l.b16 %v1157
  %v1674 = vunpack.c.l.b16 %v1158
  %v1675 = vunpack.c.l.b16 %v1159
  %v1676 = vunpack.c.l.b16 %v1160
  %v1677 = vunpack.c.l.b16 %v1161
  %v1678 = vunpack.c.l.b16 %v1162
  %v1679 = vunpack.c.l.b16 %v1163
  %v1680 = vunpack.c.l.b16 %v1164
  %v1681 = vunpack.c.l.b16 %v1165
  %v1682 = vunpack.c.l.b16 %v1166
  %v1683 = vunpack.c.l.b16 %v1167
  %v1684 = vunpack.c.l.b16 %v1168
  %v1685 = vunpack.c.l.b16 %v1169
  %v1686 = vunpack.c.l.b16 %v1170
  %v1687 = vunpack.c.l.b16 %v1171
  %v1688 = vunpack.c.l.b16 %v1172
  %v1689 = vunpack.c.l.b16 %v1173
  %v1690 = vunpack.c.l.b16 %v1174
  %v1691 = vunpack.c.l.b16 %v1175
  %v1692 = vunpack.c.l.b16 %v1176
  %v1693 = vunpack.c.l.b16 %v1177
  %v1694 = vunpack.c.l.b16 %v1178
  %v1695 = vunpack.c.l.b16 %v1179
  %v1696 = vunpack.c.l.b16 %v1180
  %v1697 = vunpack.c.l.b16 %v1181
  %v1698 = vunpack.c.l.b16 %v1182
  %v1699 = vunpack.c.l.b16 %v1183
  %v1700 = vunpack.c.l.b16 %v1184
  %v1701 = vunpack.c.l.b16 %v1185
  %v1702 = vunpack.c.l.b16 %v1186
  %v1703 = vunpack.c.l.b16 %v1187
  %v1704 = vunpack.c.l.b16 %v1188
  %v1705 = vunpack.c.l.b16 %v1189
  %v1706 = vunpack.c.l.b16 %v1190
  %v1707 = vunpack.c.l.b16 %v1191
  %v1708 = vunpack.c.l.b16 %v1192
  %v1709 = vunpack.c.l.b16 %v1193
  %v1710 = vunpack.c.l.b16 %v1194
  %v1711 = vunpack.c.l.b16 %v1195
  %v1712 = vunpack.c.l.b16 %v1196
  %v1713 = vunpack.c.l.b16 %v1197
  %v1714 = vunpack.c.l.b16 %v1198
  %v1715 = vunpack.c.l.b16 %v1199
  %v1716 = vunpack.c.l.b16 %v1200
  %v1717 = vunpack.c.l.b16 %v1201
  %v1718 = vunpack.c.l.b16 %v1202
  %v1719 = vunpack.c.l.b16 %v1203
  %v1720 = vunpack.c.l.b16 %v1204
  %v1721 = vunpack.c.l.b16 %v1205
  %v1722 = vunpack.c.l.b16 %v1206
  %v1723 = vunpack.c.l.b16 %v1207
  %v1724 = vunpack.c.l.b16 %v1208
  %v1725 = vunpack.c.l.b16 %v1209
  %v1726 = vunpack.c.l.b16 %v1210
  %v1727 = vunpack.c.l.b16 %v1211
  %v1728 = vunpack.c.l.b16 %v1212
  %v1729 = vunpack.c.l.b16 %v1213
  %v1730 = vunpack.c.l.b16 %v1214
  %v1731 = vunpack.c.l.b16 %v1215
  %v1732 = vunpack.c.l.b16 %v1216
  %v1733 = vunpack.c.l.b16 %v1217
  %v1734 = vunpack.c.l.b16 %v1218
  %v1735 = vunpack.c.l.b16 %v1219
  %v1736 = vunpack.c.l.b16 %v1220
  %v1737 = vunpack.c.l.b16 %v1221
  %v1738 = vunpack.c.l.b16 %v1222
  %v1739 = vunpack.c.l.b16 %v1223
  %v1740 = vunpack.c.l.b16 %v1224
  %v1741 = vunpack.c.l.b16 %v1225
  %v1742 = vunpack.c.l.b16 %v1226
  %v1743 = vunpack.c.l.b16 %v1227
  %v1744 = vunpack.c.l.b16 %v1228
  %v1745 = vunpack.c.l.b16 %v1229
  %v1746 = vunpack.c.l.b16 %v1230
  %v1747 = vunpack.c.l.b16 %v1231
  %v1748 = vunpack.c.l.b16 %v1232
  %v1749 = vunpack.c.l.b16 %v1233
  %v1750 = vunpack.c.l.b16 %v1234
  %v1751 = vunpack.c.l.b16 %v1235
  %v1752 = vunpack.c.l.b16 %v1236
  %v1753 = vunpack.c.l.b16 %v1237
  %v1754 = vunpack.c.l.b16 %v1238
  %v1755 = vunpack.c.l.b16 %v1239
  %v1756 = vunpack.c.l.b16 %v1240
  %v1757 = vunpack.c.l.b16 %v1241
  %v1758 = vunpack.c.l.b16 %v1242
  %v1759 = vunpack.c.l.b16 %v1243
  %v1760 = vunpack.c.l.b16 %v1244
  %v1761 = vunpack.c.l.b16 %v1245
  %v1762 = vunpack.c.l.b16 %v1246
  %v1763 = vunpack.c.l.b16 %v1247
  %v1764 = vunpack.c.l.b16 %v1248
  %v1765 = vunpack.c.l.b16 %v1249
  %v1766 = vunpack.c.l.b16 %v1250
  %v1767 = vunpack.c.l.b16 %v1251
  %v1768 = vunpack.c.l.b16 %v1252
  %v1769 = vunpack.c.l.b16 %v1253
  %v1770 = vunpack.c.l.b16 %v1254
  %v1771 = vunpack.c.l.b16 %v1255
  %v1772 = vunpack.c.l.b16 %v1256
  %v1773 = vunpack.c.l.b16 %v1257
  %v1774 = vunpack.c.l.b16 %v1258
  %v1775 = vunpack.c.l.b16 %v1259
  %v1776 = vunpack.c.l.b16 %v1260
  %v1777 = vunpack.c.l.b16 %v1261
  %v1778 = vunpack.c.l.b16 %v1262
  %v1779 = vunpack.c.l.b16 %v1263
  %v1780 = vunpack.c.l.b16 %v1264
  %v1781 = vunpack.c.l.b16 %v1265
  %v1782 = vunpack.c.l.b16 %v1266
  %v1783 = vunpack.c.l.b16 %v1267
  %v1784 = vunpack.c.l.b16 %v1268
  %v1785 = vunpack.c.l.b16 %v1269
  %v1786 = vunpack.c.l.b16 %v1270
  %v1787 = vunpack.c.l.b16 %v1271
  %v1788 = vunpack.c.l.b16 %v1272
  %v1789 = vunpack.c.l.b16 %v1273
  %v1790 = vunpack.c.l.b16 %v1274
  %v1791 = vunpack.c.l.b16 %v1275
  %v1792 = vunpack.c.l.b16 %v1276
  %v1793 = vunpack.c.l.b16 %v1277
  %v1794 = vunpack.c.l.b16 %v1278
  %v1795 = vunpack.c.l.b16 %v1279
  %v1796 = vunpack.c.l.b16 %v1280
  %v1797 = vunpack.c.l.b16 %v1281
  %v1798 = vunpack.c.l.b16 %v1282
  %v1799 = vunpack.c.l.b16 %v1283
  %v1800 = vunpack.c.l.b16 %v1284
  %v1801 = vunpack.c.l.b16 %v1285
  %v1802 = vunpack.c.l.b16 %v1286
  %v1803 = vunpack.c.l.b16 %v1287
  %v1804 = vunpack.c.l.b16 %v1288
  %v1805 = vunpack.c.l.b16 %v1289
  %v1806 = vunpack.c.l.b16 %v1290
  %v1807 = vunpack.c.l.b16 %v1291
  %v1808 = vunpack.c.l.b16 %v1292
  %v1809 = vunpack.c.l.b16 %v1293
  %v1810 = vunpack.c.l.b16 %v1294
  %v1811 = vunpack.c.l.b16 %v1295
  %v1812 = vunpack.c.l.b16 %v1296
  %v1813 = vunpack.c.l.b16 %v1297
  %v1814 = vunpack.c.l.b16 %v1298
  %v1815 = vunpack.c.l.b16 %v1299
  %v1816 = vunpack.c.l.b16 %v1300
  %v1817 = vunpack.c.l.b16 %v1301
  %v1818 = vunpack.c.l.b16 %v1302
  %v1819 = vunpack.c.l.b16 %v1303
  %v1820 = vunpack.c.l.b16 %v1304
  %v1821 = vunpack.c.l.b16 %v1305
  %v1822 = vunpack.c.l.b16 %v1306
  %v1823 = vunpack.c.l.b16 %v1307
  %v1824 = vunpack.c.l.b16 %v1308
  %v1825 = vunpack.c.l.b16 %v1309
  %v1826 = vunpack.c.l.b16 %v1310
  %v1827 = vunpack.c.l.b16 %v1311
  %v1828 = vunpack.c.l.b16 %v1312
  %v1829 = vunpack.c.l.b16 %v1313
  %v1830 = vunpack.c.l.b16 %v1314
  %v1831 = vunpack.c.l.b16 %v1315
  %v1832 = vunpack.c.l.b16 %v1316
  %v1833 = vunpack.c.l.b16 %v1317
  %v1834 = vunpack.c.l.b16 %v1318
  %v1835 = vunpack.c.l.b16 %v1319
  %v1836 = vunpack.c.l.b16 %v1320
  %v1837 = vunpack.c.l.b16 %v1321
  %v1838 = vunpack.c.l.b16 %v1322
  %v1839 = vunpack.c.l.b16 %v1323
  %v1840 = vunpack.c.l.b16 %v1324
  %v1841 = vunpack.c.l.b16 %v1325
  %v1842 = vunpack.c.l.b16 %v1326
  %v1843 = vunpack.c.l.b16 %v1327
  %v1844 = vunpack.c.l.b16 %v1328
  %v1845 = vunpack.c.l.b16 %v1329
  %v1846 = vunpack.c.l.b16 %v1330
  %v1847 = vunpack.c.l.b16 %v1331
  %v1848 = vunpack.c.l.b16 %v1332
  %v1849 = vunpack.c.l.b16 %v1333
  %v1850 = vunpack.c.l.b16 %v1334
  %v1851 = vunpack.c.l.b16 %v1335
  %v1852 = vunpack.c.l.b16 %v1336
  %v1853 = vunpack.c.l.b16 %v1337
  %v1854 = vunpack.c.l.b16 %v1338
  %v1855 = vunpack.c.l.b16 %v1339
  %v1856 = vunpack.c.l.b16 %v1340
  %v1857 = vunpack.c.l.b16 %v1341
  %v1858 = vunpack.c.l.b16 %v1342
  %v1859 = vunpack.c.l.b16 %v1343
  %v1860 = vunpack.c.l.b16 %v1344
  %v1861 = vunpack.c.l.b16 %v1345
  %v1862 = vunpack.c.l.b16 %v1346
  %v1863 = vunpack.c.l.b16 %v1347
  %v1864 = vunpack.c.l.b16 %v1348
  %v1865 = vunpack.c.l.b16 %v1349
  %v1866 = vunpack.c.l.b16 %v1350
  %v1867 = vunpack.c.l.b16 %v1351
  %v1868 = vunpack.c.l.b16 %v1352
  %v1869 = vunpack.c.l.b16 %v1353
  %v1870 = vunpack.c.l.b16 %v1354
  %v1871 = vunpack.c.l.b16 %v1355
  %v1872 = vunpack.c.l.b16 %v1356
  %v1873 = vunpack.c.l.b16 %v1357
  %v1874 = vunpack.c.l.b16 %v1358
  %v1875 = vunpack.c.l.b16 %v1359
  %v1876 = vunpack.c.l.b16 %v1360
  %v1877 = vunpack.c.l.b16 %v1361
  %v1878 = vunpack.c.l.b16 %v1362
  %v1879 = vunpack.c.l.b16 %v1363
  %v1880 = vunpack.c.l.b16 %v1364
  %v1881 = vunpack.c.l.b16 %v1365
  %v1882 = vunpack.c.l.b16 %v1366
  %v1883 = vunpack.c.l.b16 %v1367
  %v1884 = vunpack.c.l.b16 %v1368
  %v1885 = vunpack.c.l.b16 %v1369
  %v1886 = vunpack.c.l.b16 %v1370
  %v1887 = vunpack.c.l.b16 %v1371
  %v1888 = vunpack.c.l.b16 %v1372
  %v1889 = vunpack.c.l.b16 %v1373
  %v1890 = vunpack.c.l.b16 %v1374
  %v1891 = vunpack.c.l.b16 %v1375
  %v1892 = vunpack.c.l.b16 %v1376
  %v1893 = vunpack.c.l.b16 %v1377
  %v1894 = vunpack.c.l.b16 %v1378
  %v1895 = vunpack.c.l.b16 %v1379
  %v1896 = vunpack.c.l.b16 %v1380
  %v1897 = vunpack.c.l.b16 %v1381
  %v1898 = vunpack.c.l.b16 %v1382
  %v1899 = vunpack.c.l.b16 %v1383
  %v1900 = vunpack.c.l.b16 %v1384
  %v1901 = vunpack.c.l.b16 %v1385
  %v1902 = vunpack.c.l.b16 %v1386
  %v1903 = vunpack.c.l.b16 %v1387
  %v1904 = vunpack.c.l.b16 %v1388
  %v1905 = vunpack.c.l.b16 %v1389
  %v1906 = vunpack.c.l.b16 %v1390
  %v1907 = vunpack.c.l.b16 %v1391
  %v1908 = vunpack.c.l.b16 %v1392
  %v1909 = vunpack.c.l.b16 %v1393
  %v1910 = vunpack.c.l.b16 %v1394
  %v1911 = vunpack.c.l.b16 %v1395
  %v1912 = vunpack.c.l.b16 %v1396
  %v1913 = vunpack.c.l.b16 %v1397
  %v1914 = vunpack.c.l.b16 %v1398
  %v1915 = vunpack.c.l.b16 %v1399
  %v1916 = vunpack.c.l.b16 %v1400
  %v1917 = vunpack.c.l.b16 %v1401
  %v1918 = vunpack.c.l.b16 %v1402
  %v1919 = vunpack.c.l.b16 %v1403
  %v1920 = vunpack.c.l.b16 %v1404
  %v1921 = vpack.c.b16 %v1666, %v1665
  %v1922 = vpack.c.b16 %v1668, %v1667
  %v1923 = vpack.c.b16 %v1670, %v1669
  %v1924 = vpack.c.b16 %v1672, %v1671
  %v1925 = vpack.c.b16 %v1674, %v1673
  %v1926 = vpack.c.b16 %v1676, %v1675
  %v1927 = vpack.c.b16 %v1678, %v1677
  %v1928 = vpack.c.b16 %v1680, %v1679
  %v1929 = vpack.c.b16 %v1682, %v1681
  %v1930 = vpack.c.b16 %v1684, %v1683
  %v1931 = vpack.c.b16 %v1686, %v1685
  %v1932 = vpack.c.b16 %v1688, %v1687
  %v1933 = vpack.c.b16 %v1690, %v1689
  %v1934 = vpack.c.b16 %v1692, %v1691
  %v1935 = vpack.c.b16 %v1694, %v1693
  %v1936 = vpack.c.b16 %v1696, %v1695
  %v1937 = vpack.c.b16 %v1698, %v1697
  %v1938 = vpack.c.b16 %v1700, %v1699
  %v1939 = vpack.c.b16 %v1702, %v1701
  %v1940 = vpack.c.b16 %v1704, %v1703
  %v1941 = vpack.c.b16 %v1706, %v1705
  %v1942 = vpack.c.b16 %v1708, %v1707
  %v1943 = vpack.c.b16 %v1710, %v1709
  %v1944 = vpack.c.b16 %v1712, %v1711
  %v1945 = vpack.c.b16 %v1714, %v1713
  %v1946 = vpack.c.b16 %v1716, %v1715
  %v1947 = vpack.c.b16 %v1718, %v1717
  %v1948 = vpack.c.b16 %v1720, %v1719
  %v1949 = vpack.c.b16 %v1722, %v1721
  %v1950 = vpack.c.b16 %v1724, %v1723
  %v1951 = vpack.c.b16 %v1726, %v1725
  %v1952 = vpack.c.b16 %v1728, %v1727
  %v1953 = vpack.c.b16 %v1730, %v1729
  %v1954 = vpack.c.b16 %v1732, %v1731
  %v1955 = vpack.c.b16 %v1734, %v1733
  %v1956 = vpack.c.b16 %v1736, %v1735
  %v1957 = vpack.c.b16 %v1738, %v1737
  %v1958 = vpack.c.b16 %v1740, %v1739
  %v1959 = vpack.c.b16 %v1742, %v1741
  %v1960 = vpack.c.b16 %v1744, %v1743
  %v1961 = vpack.c.b16 %v1746, %v1745
  %v1962 = vpack.c.b16 %v1748, %v1747
  %v1963 = vpack.c.b16 %v1750, %v1749
  %v1964 = vpack.c.b16 %v1752, %v1751
  %v1965 = vpack.c.b16 %v1754, %v1753
  %v1966 = vpack.c.b16 %v1756, %v1755
  %v1967 = vpack.c.b16 %v1758, %v1757
  %v1968 = vpack.c.b16 %v1760, %v1759
  %v1969 = vpack.c.b16 %v1762, %v1761
  %v1970 = vpack.c.b16 %v1764, %v1763
  %v1971 = vpack.c.b16 %v1766, %v1765
  %v1972 = vpack.c.b16 %v1768, %v1767
  %v1973 = vpack.c.b16 %v1770, %v1769
  %v1974 = vpack.c.b16 %v1772, %v1771
  %v1975 = vpack.c.b16 %v1774, %v1773
  %v1976 = vpack.c.b16 %v1776, %v1775
  %v1977 = vpack.c.b16 %v1778, %v1777
  %v1978 = vpack.c.b16 %v1780, %v1779
  %v1979 = vpack.c.b16 %v1782, %v1781
  %v1980 = vpack.c.b16 %v1784, %v1783
  %v1981 = vpack.c.b16 %v1786, %v1785
  %v1982 = vpack.c.b16 %v1788, %v1787
  %v1983 = vpack.c.b16 %v1790, %v1789
  %v1984 = vpack.c.b16 %v1792, %v1791
  %v1985 = vpack.c.b16 %v1794, %v1793
  %v1986 = vpack.c.b16 %v1796, %v1795
  %v1987 = vpack.c.b16 %v1798, %v1797
  %v1988 = vpack.c.b16 %v1800, %v1799
  %v1989 = vpack.c.b16 %v1802, %v1801
  %v1990 = vpack.c.b16 %v1804, %v1803
  %v1991 = vpack.c.b16 %v1806, %v1805
  %v1992 = vpack.c.b16 %v1808, %v1807
  %v1993 = vpack.c.b16 %v1810, %v1809
  %v1994 = vpack.c.b16 %v1812, %v1811
  %v1995 = vpack.c.b16 %v1814, %v1813
  %v1996 = vpack.c.b16 %v1816, %v1815
  %v1997 = vpack.c.b16 %v1818, %v1817
  %v1998 = vpack.c.b16 %v1820, %v1819
  %v1999 = vpack.c.b16 %v1822, %v1821
  %v2000 = vpack.c.b16 %v1824, %v1823
  %v2001 = vpack.c.b16 %v1826, %v1825
  %v2002 = vpack.c.b16 %v1828, %v1827
  %v2003 = vpack.c.b16 %v1830, %v1829
  %v2004 = vpack.c.b16 %v1832, %v1831
  %v2005 = vpack.c.b16 %v1834, %v1833
  %v2006 = vpack.c.b16 %v1836, %v1835
  %v2007 = vpack.c.b16 %v1838, %v1837
  %v2008 = vpack.c.b16 %v1840, %v1839
  %v2009 = vpack.c.b16 %v1842, %v1841
  %v2010 = vpack.c.b16 %v1844, %v1843
  %v2011 = vpack.c.b16 %v1846, %v1845
  %v2012 = vpack.c.b16 %v1848, %v1847
  %v2013 = vpack.c.b16 %v1850, %v1849
  %v2014 = vpack.c.b16 %v1852, %v1851
  %v2015 = vpack.c.b16 %v1854, %v1853
  %v2016 = vpack.c.b16 %v1856, %v1855
  %v2017 = vpack.c.b16 %v1858, %v1857
  %v2018 = vpack.c.b16 %v1860, %v1859
  %v2019 = vpack.c.b16 %v1862, %v1861
  %v2020 = vpack.c.b16 %v1864, %v1863
  %v2021 = vpack.c.b16 %v1866, %v1865
  %v2022 = vpack.c.b16 %v1868, %v1867
  %v2023 = vpack.c.b16 %v1870, %v1869
  %v2024 = vpack.c.b16 %v1872, %v1871
  %v2025 = vpack.c.b16 %v1874, %v1873
  %v2026 = vpack.c.b16 %v1876, %v1875
  %v2027 = vpack.c.b16 %v1878, %v1877
  %v2028 = vpack.c.b16 %v1880, %v1879
  %v2029 = vpack.c.b16 %v1882, %v1881
  %v2030 = vpack.c.b16 %v1884, %v1883
  %v2031 = vpack.c.b16 %v1886, %v1885
  %v2032 = vpack.c.b16 %v1888, %v1887
  %v2033 = vpack.c.b16 %v1890, %v1889
  %v2034 = vpack.c.b16 %v1892, %v1891
  %v2035 = vpack.c.b16 %v1894, %v1893
  %v2036 = vpack.c.b16 %v1896, %v1895
  %v2037 = vpack.c.b16 %v1898, %v1897
  %v2038 = vpack.c.b16 %v1900, %v1899
  %v2039 = vpack.c.b16 %v1902, %v1901
  %v2040 = vpack.c.b16 %v1904, %v1903
  %v2041 = vpack.c.b16 %v1906, %v1905
  %v2042 = vpack.c.b16 %v1908, %v1907
  %v2043 = vpack.c.b16 %v1910, %v1909
  %v2044 = vpack.c.b16 %v1912, %v1911
  %v2045 = vpack.c.b16 %v1914, %v1913
  %v2046 = vpack.c.b16 %v1916, %v1915
  %v2047 = vpack.c.b16 %v1918, %v1917
  %v2048 = vpack.c.b16 %v1920, %v1919
  %2177 = vmatpush.bf16.msra.mxu0 %v1928
  %2178 = vmatpush.bf16.msra.mxu0 %v1927
  %2179 = vmatpush.bf16.msra.mxu0 %v1926
  %2180 = vmatpush.bf16.msra.mxu0 %v1925
  %2181 = vmatpush.bf16.msra.mxu0 %v1924
  %2182 = vmatpush.bf16.msra.mxu0 %v1923
  %2183 = vmatpush.bf16.msra.mxu0 %v1922
  %2184 = vmatpush.bf16.msra.mxu0 %v1921
  %2185 = vmatmul.bf16.gmra.mxu0 %v1133
  %v2186 = vpop.f32.mrf.mxu0
  %v2187 = vadd.f32 %v1407, %v2186
  %v2188 = vpop.f32.mrf.mxu0
  %v2189 = vadd.f32 %v1407, %v2188
  %2190 = vdwg.mxu0
  %2191 = vmatpush.bf16.msra.mxu0 %v1936
  %2192 = vmatpush.bf16.msra.mxu0 %v1935
  %2193 = vmatpush.bf16.msra.mxu0 %v1934
  %2194 = vmatpush.bf16.msra.mxu0 %v1933
  %2195 = vmatpush.bf16.msra.mxu0 %v1932
  %2196 = vmatpush.bf16.msra.mxu0 %v1931
  %2197 = vmatpush.bf16.msra.mxu0 %v1930
  %2198 = vmatpush.bf16.msra.mxu0 %v1929
  %2199 = vmatmul.bf16.gmra.mxu0 %v1134
  %v2200 = vpop.f32.mrf.mxu0
  %v2201 = vadd.f32 %v2187, %v2200
  %v2202 = vpop.f32.mrf.mxu0
  %v2203 = vadd.f32 %v2189, %v2202
  %2204 = vdwg.mxu0
  %2205 = vmatpush.bf16.msra.mxu0 %v1944
  %2206 = vmatpush.bf16.msra.mxu0 %v1943
  %2207 = vmatpush.bf16.msra.mxu0 %v1942
  %2208 = vmatpush.bf16.msra.mxu0 %v1941
  %2209 = vmatpush.bf16.msra.mxu0 %v1940
  %2210 = vmatpush.bf16.msra.mxu0 %v1939
  %2211 = vmatpush.bf16.msra.mxu0 %v1938
  %2212 = vmatpush.bf16.msra.mxu0 %v1937
  %2213 = vmatmul.bf16.gmra.mxu0 %v1135
  %v2214 = vpop.f32.mrf.mxu0
  %v2215 = vadd.f32 %v2201, %v2214
  %v2216 = vpop.f32.mrf.mxu0
  %v2217 = vadd.f32 %v2203, %v2216
  %2218 = vdwg.mxu0
  %2219 = vmatpush.bf16.msra.mxu0 %v1952
  %2220 = vmatpush.bf16.msra.mxu0 %v1951
  %2221 = vmatpush.bf16.msra.mxu0 %v1950
  %2222 = vmatpush.bf16.msra.mxu0 %v1949
  %2223 = vmatpush.bf16.msra.mxu0 %v1948
  %2224 = vmatpush.bf16.msra.mxu0 %v1947
  %2225 = vmatpush.bf16.msra.mxu0 %v1946
  %2226 = vmatpush.bf16.msra.mxu0 %v1945
  %2227 = vmatmul.bf16.gmra.mxu0 %v1136
  %v2228 = vpop.f32.mrf.mxu0
  %v2229 = vadd.f32 %v2215, %v2228
  %v2230 = vpop.f32.mrf.mxu0
  %v2231 = vadd.f32 %v2217, %v2230
  %2232 = vdwg.mxu0
  %2233 = vmatpush.bf16.msra.mxu0 %v1960
  %2234 = vmatpush.bf16.msra.mxu0 %v1959
  %2235 = vmatpush.bf16.msra.mxu0 %v1958
  %2236 = vmatpush.bf16.msra.mxu0 %v1957
  %2237 = vmatpush.bf16.msra.mxu0 %v1956
  %2238 = vmatpush.bf16.msra.mxu0 %v1955
  %2239 = vmatpush.bf16.msra.mxu0 %v1954
  %2240 = vmatpush.bf16.msra.mxu0 %v1953
  %2241 = vmatmul.bf16.gmra.mxu0 %v1137
  %v2242 = vpop.f32.mrf.mxu0
  %v2243 = vadd.f32 %v2229, %v2242
  %v2244 = vpop.f32.mrf.mxu0
  %v2245 = vadd.f32 %v2231, %v2244
  %2246 = vdwg.mxu0
  %2247 = vmatpush.bf16.msra.mxu0 %v1968
  %2248 = vmatpush.bf16.msra.mxu0 %v1967
  %2249 = vmatpush.bf16.msra.mxu0 %v1966
  %2250 = vmatpush.bf16.msra.mxu0 %v1965
  %2251 = vmatpush.bf16.msra.mxu0 %v1964
  %2252 = vmatpush.bf16.msra.mxu0 %v1963
  %2253 = vmatpush.bf16.msra.mxu0 %v1962
  %2254 = vmatpush.bf16.msra.mxu0 %v1961
  %2255 = vmatmul.bf16.gmra.mxu0 %v1138
  %v2256 = vpop.f32.mrf.mxu0
  %v2257 = vadd.f32 %v2243, %v2256
  %v2258 = vpop.f32.mrf.mxu0
  %v2259 = vadd.f32 %v2245, %v2258
  %2260 = vdwg.mxu0
  %2261 = vmatpush.bf16.msra.mxu0 %v1976
  %2262 = vmatpush.bf16.msra.mxu0 %v1975
  %2263 = vmatpush.bf16.msra.mxu0 %v1974
  %2264 = vmatpush.bf16.msra.mxu0 %v1973
  %2265 = vmatpush.bf16.msra.mxu0 %v1972
  %2266 = vmatpush.bf16.msra.mxu0 %v1971
  %2267 = vmatpush.bf16.msra.mxu0 %v1970
  %2268 = vmatpush.bf16.msra.mxu0 %v1969
  %2269 = vmatmul.bf16.gmra.mxu0 %v1139
  %v2270 = vpop.f32.mrf.mxu0
  %v2271 = vadd.f32 %v2257, %v2270
  %v2272 = vpop.f32.mrf.mxu0
  %v2273 = vadd.f32 %v2259, %v2272
  %2274 = vdwg.mxu0
  %2275 = vmatpush.bf16.msra.mxu0 %v1984
  %2276 = vmatpush.bf16.msra.mxu0 %v1983
  %2277 = vmatpush.bf16.msra.mxu0 %v1982
  %2278 = vmatpush.bf16.msra.mxu0 %v1981
  %2279 = vmatpush.bf16.msra.mxu0 %v1980
  %2280 = vmatpush.bf16.msra.mxu0 %v1979
  %2281 = vmatpush.bf16.msra.mxu0 %v1978
  %2282 = vmatpush.bf16.msra.mxu0 %v1977
  %2283 = vmatmul.bf16.gmra.mxu0 %v1140
  %v2284 = vpop.f32.mrf.mxu0
  %v2285 = vadd.f32 %v2271, %v2284
  %v2286 = vpop.f32.mrf.mxu0
  %v2287 = vadd.f32 %v2273, %v2286
  %2288 = vdwg.mxu0
  %2289 = vmatpush.bf16.msra.mxu0 %v1992
  %2290 = vmatpush.bf16.msra.mxu0 %v1991
  %2291 = vmatpush.bf16.msra.mxu0 %v1990
  %2292 = vmatpush.bf16.msra.mxu0 %v1989
  %2293 = vmatpush.bf16.msra.mxu0 %v1988
  %2294 = vmatpush.bf16.msra.mxu0 %v1987
  %2295 = vmatpush.bf16.msra.mxu0 %v1986
  %2296 = vmatpush.bf16.msra.mxu0 %v1985
  %2297 = vmatmul.bf16.gmra.mxu0 %v1141
  %v2298 = vpop.f32.mrf.mxu0
  %v2299 = vadd.f32 %v2285, %v2298
  %v2300 = vpop.f32.mrf.mxu0
  %v2301 = vadd.f32 %v2287, %v2300
  %2302 = vdwg.mxu0
  %2303 = vmatpush.bf16.msra.mxu0 %v2000
  %2304 = vmatpush.bf16.msra.mxu0 %v1999
  %2305 = vmatpush.bf16.msra.mxu0 %v1998
  %2306 = vmatpush.bf16.msra.mxu0 %v1997
  %2307 = vmatpush.bf16.msra.mxu0 %v1996
  %2308 = vmatpush.bf16.msra.mxu0 %v1995
  %2309 = vmatpush.bf16.msra.mxu0 %v1994
  %2310 = vmatpush.bf16.msra.mxu0 %v1993
  %2311 = vmatmul.bf16.gmra.mxu0 %v1142
  %v2312 = vpop.f32.mrf.mxu0
  %v2313 = vadd.f32 %v2299, %v2312
  %v2314 = vpop.f32.mrf.mxu0
  %v2315 = vadd.f32 %v2301, %v2314
  %2316 = vdwg.mxu0
  %2317 = vmatpush.bf16.msra.mxu0 %v2008
  %2318 = vmatpush.bf16.msra.mxu0 %v2007
  %2319 = vmatpush.bf16.msra.mxu0 %v2006
  %2320 = vmatpush.bf16.msra.mxu0 %v2005
  %2321 = vmatpush.bf16.msra.mxu0 %v2004
  %2322 = vmatpush.bf16.msra.mxu0 %v2003
  %2323 = vmatpush.bf16.msra.mxu0 %v2002
  %2324 = vmatpush.bf16.msra.mxu0 %v2001
  %2325 = vmatmul.bf16.gmra.mxu0 %v1143
  %v2326 = vpop.f32.mrf.mxu0
  %v2327 = vadd.f32 %v2313, %v2326
  %v2328 = vpop.f32.mrf.mxu0
  %v2329 = vadd.f32 %v2315, %v2328
  %2330 = vdwg.mxu0
  %2331 = vmatpush.bf16.msra.mxu0 %v2016
  %2332 = vmatpush.bf16.msra.mxu0 %v2015
  %2333 = vmatpush.bf16.msra.mxu0 %v2014
  %2334 = vmatpush.bf16.msra.mxu0 %v2013
  %2335 = vmatpush.bf16.msra.mxu0 %v2012
  %2336 = vmatpush.bf16.msra.mxu0 %v2011
  %2337 = vmatpush.bf16.msra.mxu0 %v2010
  %2338 = vmatpush.bf16.msra.mxu0 %v2009
  %2339 = vmatmul.bf16.gmra.mxu0 %v1144
  %v2340 = vpop.f32.mrf.mxu0
  %v2341 = vadd.f32 %v2327, %v2340
  %v2342 = vpop.f32.mrf.mxu0
  %v2343 = vadd.f32 %v2329, %v2342
  %2344 = vdwg.mxu0
  %2345 = vmatpush.bf16.msra.mxu0 %v2024
  %2346 = vmatpush.bf16.msra.mxu0 %v2023
  %2347 = vmatpush.bf16.msra.mxu0 %v2022
  %2348 = vmatpush.bf16.msra.mxu0 %v2021
  %2349 = vmatpush.bf16.msra.mxu0 %v2020
  %2350 = vmatpush.bf16.msra.mxu0 %v2019
  %2351 = vmatpush.bf16.msra.mxu0 %v2018
  %2352 = vmatpush.bf16.msra.mxu0 %v2017
  %2353 = vmatmul.bf16.gmra.mxu0 %v1145
  %v2354 = vpop.f32.mrf.mxu0
  %v2355 = vadd.f32 %v2341, %v2354
  %v2356 = vpop.f32.mrf.mxu0
  %v2357 = vadd.f32 %v2343, %v2356
  %2358 = vdwg.mxu0
  %2359 = vmatpush.bf16.msra.mxu0 %v2032
  %2360 = vmatpush.bf16.msra.mxu0 %v2031
  %2361 = vmatpush.bf16.msra.mxu0 %v2030
  %2362 = vmatpush.bf16.msra.mxu0 %v2029
  %2363 = vmatpush.bf16.msra.mxu0 %v2028
  %2364 = vmatpush.bf16.msra.mxu0 %v2027
  %2365 = vmatpush.bf16.msra.mxu0 %v2026
  %2366 = vmatpush.bf16.msra.mxu0 %v2025
  %2367 = vmatmul.bf16.gmra.mxu0 %v1146
  %v2368 = vpop.f32.mrf.mxu0
  %v2369 = vadd.f32 %v2355, %v2368
  %v2370 = vpop.f32.mrf.mxu0
  %v2371 = vadd.f32 %v2357, %v2370
  %2372 = vdwg.mxu0
  %2373 = vmatpush.bf16.msra.mxu0 %v2040
  %2374 = vmatpush.bf16.msra.mxu0 %v2039
  %2375 = vmatpush.bf16.msra.mxu0 %v2038
  %2376 = vmatpush.bf16.msra.mxu0 %v2037
  %2377 = vmatpush.bf16.msra.mxu0 %v2036
  %2378 = vmatpush.bf16.msra.mxu0 %v2035
  %2379 = vmatpush.bf16.msra.mxu0 %v2034
  %2380 = vmatpush.bf16.msra.mxu0 %v2033
  %2381 = vmatmul.bf16.gmra.mxu0 %v1147
  %v2382 = vpop.f32.mrf.mxu0
  %v2383 = vadd.f32 %v2369, %v2382
  %v2384 = vpop.f32.mrf.mxu0
  %v2385 = vadd.f32 %v2371, %v2384
  %2386 = vdwg.mxu0
  %2387 = vmatpush.bf16.msra.mxu0 %v2048
  %2388 = vmatpush.bf16.msra.mxu0 %v2047
  %2389 = vmatpush.bf16.msra.mxu0 %v2046
  %2390 = vmatpush.bf16.msra.mxu0 %v2045
  %2391 = vmatpush.bf16.msra.mxu0 %v2044
  %2392 = vmatpush.bf16.msra.mxu0 %v2043
  %2393 = vmatpush.bf16.msra.mxu0 %v2042
  %2394 = vmatpush.bf16.msra.mxu0 %v2041
  %2395 = vmatmul.bf16.gmra.mxu0 %v1148
  %v2396 = vpop.f32.mrf.mxu0
  %v2397 = vadd.f32 %v2383, %v2396
  %v2398 = vpop.f32.mrf.mxu0
  %v2399 = vadd.f32 %v2385, %v2398
  %2400 = vdwg.mxu0
  %v2401 = vadd.f32 %v643, %v2397
  %v2402 = vadd.f32 %v644, %v2399
  %v2403 = vsel %vm188, %v2401, 0.0
  %2404 = vadd.xlane.f32.xlu0 %v2403
  %v2405 = vpop.xlane.xlu0 %2404
  %v2406 = vsel %vm188, %v2402, 0.0
  %2407 = vadd.xlane.f32.xlu0 %v2406
  %v2408 = vpop.xlane.xlu0 %2407
  %v2409 = vmul.f32 %v2405, %v594
  %v2410 = vmul.f32 %v2408, %v594
  %v2411 = vsub.f32 %v2401, %v2409
  %v2412 = vsub.f32 %v2402, %v2410
  %v2413 = vmul.f32 %v2411, %v2411
  %v2414 = vmul.f32 %v2412, %v2412
  %v2415 = vsel %vm188, %v2413, 0.0
  %2416 = vadd.xlane.f32.xlu0 %v2415
  %v2417 = vpop.xlane.xlu0 %2416
  %v2418 = vsel %vm188, %v2414, 0.0
  %2419 = vadd.xlane.f32.xlu0 %v2418
  %v2420 = vpop.xlane.xlu0 %2419
  %v2421 = vmul.f32 %v2417, %v594
  %v2422 = vmul.f32 %v2420, %v594
  %v2423 = vadd.f32 %v2421, 1e-05
  %v2424 = vadd.f32 %v2422, 1e-05
  %v2425 = vrsqrt.pop %v2423
  %v2426 = vmul.f32 %v2425, %v2423
  %v2427 = vmul.f32 %v2426, %v2425
  %v2428 = vmul.f32 0.5, %v2427
  %v2429 = vsub.f32 1.5, %v2428
  %v2430 = vmul.f32 %v2425, %v2429
  %vm2431 = vweird.f32 %v2423
  %vm2432 = vweird.f32 %v2425
  %vm2433 = vmor %vm2431, %vm2432
  %v2434 = vsel %vm2433, %v2425, %v2430
  %v2435 = vrsqrt.pop %v2424
  %v2436 = vmul.f32 %v2435, %v2424
  %v2437 = vmul.f32 %v2436, %v2435
  %v2438 = vmul.f32 0.5, %v2437
  %v2439 = vsub.f32 1.5, %v2438
  %v2440 = vmul.f32 %v2435, %v2439
  %vm2441 = vweird.f32 %v2424
  %vm2442 = vweird.f32 %v2435
  %vm2443 = vmor %vm2441, %vm2442
  %v2444 = vsel %vm2443, %v2435, %v2440
  %v2445 = vmul.f32 %v2411, %v2434
  %v2446 = vmul.f32 %v2412, %v2444
  %v2447 = vld [vmem:[%s37] sm:$0x1]
  %v2449 = vperm.slane %v2447, 0
  %v2451 = vmul.f32 %v2445, %v2449
  %v2452 = vmul.f32 %v2446, %v2449
  %v2453 = vld [vmem:[%s39] sm:$0x1]
  %v2455 = vperm.slane %v2453, 0
  %v2457 = vadd.f32 %v2451, %v2455
  %v2458 = vadd.f32 %v2452, %v2455
  %2459 = vst.msk [vmem:[%s65] sm:$0xff] %vm188, %v2457
  %2460 = vst.msk [vmem:[%s65 + $0x8] sm:$0xff] %vm188, %v2458
  %v2461 = vld [vmem:[%s3] sm:$0xff]
  %v2462 = vld [vmem:[%s3 + $0x8] sm:$0xff]
  %v2463 = vld [vmem:[%s3 + $0x10] sm:$0xff]
  %v2464 = vld [vmem:[%s3 + $0x18] sm:$0xff]
  %v2465 = vld [vmem:[%s3 + $0x20] sm:$0xff]
  %v2466 = vld [vmem:[%s3 + $0x28] sm:$0xff]
  %v2467 = vld [vmem:[%s13] sm:$0xff]
  %v2468 = vld [vmem:[%s13 + $0x8] sm:$0xff]
  %v2469 = vld [vmem:[%s15] sm:$0x1]
  %v2471 = vperm.slane %v2469, 0
  %v2474 = vsel %vm146, %v2461, 0
  %v2477 = vsel %vm146, %v2462, 0
  %v2480 = vsel %vm146, %v2463, 0
  %v2483 = vsel %vm146, %v2464, 0
  %v2486 = vsel %vm146, %v2465, 0
  %v2489 = vsel %vm146, %v2466, 0
  %2491 = vmatpush.msra.mxu0 0.0
  %2492 = vmatpush.msra.mxu0 0.0
  %2493 = vmatpush.msra.mxu0 0.0
  %2494 = vmatpush.msra.mxu0 0.0
  %2495 = vmatpush.msra.mxu0 0.0
  %2496 = vmatpush.msra.mxu0 0.0
  %2497 = vmatpush.msra.mxu0 0.0
  %2498 = vmatpush.msra.mxu0 0.0
  %2499 = vmatpush.msra.mxu0 0.0
  %2500 = vmatpush.msra.mxu0 0.0
  %2501 = vmatpush.msra.mxu0 0.0
  %2502 = vmatpush.msra.mxu0 0.0
  %2503 = vmatpush.msra.mxu0 0.0
  %2504 = vmatpush.msra.mxu0 0.0
  %2505 = vmatpush.msra.mxu0 %v2468
  %2506 = vmatpush.msra.mxu0 %v2467
  %2507 = vmatmul.f32.gmra.mxu0 %v2474
  %v2508 = vpop.f32.mrf.mxu0
  %v2509 = vadd.f32 %v2471, %v2508
  %2510 = vmatmul.f32.gmra.mxu0 %v2477
  %v2511 = vpop.f32.mrf.mxu0
  %v2512 = vadd.f32 %v2471, %v2511
  %2513 = vmatmul.f32.gmra.mxu0 %v2480
  %v2514 = vpop.f32.mrf.mxu0
  %v2515 = vadd.f32 %v2471, %v2514
  %2516 = vmatmul.f32.gmra.mxu0 %v2483
  %v2517 = vpop.f32.mrf.mxu0
  %v2518 = vadd.f32 %v2471, %v2517
  %2519 = vmatmul.f32.gmra.mxu0 %v2486
  %v2520 = vpop.f32.mrf.mxu0
  %v2521 = vadd.f32 %v2471, %v2520
  %2522 = vmatmul.f32.gmra.mxu0 %v2489
  %v2523 = vpop.f32.mrf.mxu0
  %v2524 = vadd.f32 %v2471, %v2523
  %2525 = vdwg.mxu0
  %v2526 = vld [vmem:[%s7] sm:$0xff]
  %v2527 = vld [vmem:[%s7 + $0x8] sm:$0xff]
  %v2528 = vld [vmem:[%s7 + $0x10] sm:$0xff]
  %v2529 = vld [vmem:[%s7 + $0x18] sm:$0xff]
  %v2530 = vld [vmem:[%s7 + $0x20] sm:$0xff]
  %v2531 = vld [vmem:[%s7 + $0x28] sm:$0xff]
  %v2532 = vadd.f32 %v2509, %v2526
  %v2533 = vadd.f32 %v2512, %v2527
  %v2534 = vadd.f32 %v2515, %v2528
  %v2535 = vadd.f32 %v2518, %v2529
  %v2536 = vadd.f32 %v2521, %v2530
  %v2537 = vadd.f32 %v2524, %v2531
  %v2538 = vld [vmem:[%s41] sm:$0xff]
  %v2539 = vld [vmem:[%s41 + $0x8] sm:$0xff]
  %v2540 = vld [vmem:[%s41 + $0x10] sm:$0xff]
  %v2541 = vld [vmem:[%s41 + $0x18] sm:$0xff]
  %v2542 = vld [vmem:[%s43] sm:$0x1]
  %v2544 = vperm.slane %v2542, 0
  %v2547 = vsel %vm188, %v2532, 0
  %v2550 = vsel %vm188, %v2533, 0
  %v2553 = vsel %vm188, %v2534, 0
  %v2556 = vsel %vm188, %v2535, 0
  %v2559 = vsel %vm188, %v2536, 0
  %v2562 = vsel %vm188, %v2537, 0
  %2564 = vmatpush.msra.mxu0 0.0
  %2565 = vmatpush.msra.mxu0 0.0
  %2566 = vmatpush.msra.mxu0 0.0
  %2567 = vmatpush.msra.mxu0 0.0
  %2568 = vmatpush.msra.mxu0 0.0
  %2569 = vmatpush.msra.mxu0 0.0
  %2570 = vmatpush.msra.mxu0 0.0
  %2571 = vmatpush.msra.mxu0 0.0
  %2572 = vmatpush.msra.mxu0 0.0
  %2573 = vmatpush.msra.mxu0 0.0
  %2574 = vmatpush.msra.mxu0 0.0
  %2575 = vmatpush.msra.mxu0 0.0
  %2576 = vmatpush.msra.mxu0 %v2541
  %2577 = vmatpush.msra.mxu0 %v2540
  %2578 = vmatpush.msra.mxu0 %v2539
  %2579 = vmatpush.msra.mxu0 %v2538
  %2580 = vmatmul.f32.gmra.mxu0 %v2547
  %v2581 = vpop.f32.mrf.mxu0
  %v2582 = vadd.f32 %v2544, %v2581
  %2583 = vmatmul.f32.gmra.mxu0 %v2550
  %v2584 = vpop.f32.mrf.mxu0
  %v2585 = vadd.f32 %v2544, %v2584
  %2586 = vmatmul.f32.gmra.mxu0 %v2553
  %v2587 = vpop.f32.mrf.mxu0
  %v2588 = vadd.f32 %v2544, %v2587
  %2589 = vmatmul.f32.gmra.mxu0 %v2556
  %v2590 = vpop.f32.mrf.mxu0
  %v2591 = vadd.f32 %v2544, %v2590
  %2592 = vmatmul.f32.gmra.mxu0 %v2559
  %v2593 = vpop.f32.mrf.mxu0
  %v2594 = vadd.f32 %v2544, %v2593
  %2595 = vmatmul.f32.gmra.mxu0 %v2562
  %v2596 = vpop.f32.mrf.mxu0
  %v2597 = vadd.f32 %v2544, %v2596
  %2598 = vdwg.mxu0
  %v2599 = vmul.f32 %v2582, 0.25
  %v2600 = vmul.f32 %v2585, 0.25
  %v2601 = vmul.f32 %v2588, 0.25
  %v2602 = vmul.f32 %v2591, 0.25
  %v2603 = vmul.f32 %v2594, 0.25
  %v2604 = vmul.f32 %v2597, 0.25
  %2606 = vrot.lane.b32.xlu0 %v2582, 96
  %v2607 = vpop.permute.xlu0 %2606
  %v2609 = vsel %vm146, %v2599, 0
  %v2611 = vsel %vm146, %v2607, 0
  %2613 = vmatpush.xpose.msra.mxu0 0.0
  %2614 = vmatpush.xpose.msra.mxu0 0.0
  %2615 = vmatpush.xpose.msra.mxu0 0.0
  %2616 = vmatpush.xpose.msra.mxu0 0.0
  %2617 = vmatpush.xpose.msra.mxu0 0.0
  %2618 = vmatpush.xpose.msra.mxu0 0.0
  %2619 = vmatpush.xpose.msra.mxu0 0.0
  %2620 = vmatpush.xpose.msra.mxu0 0.0
  %2621 = vmatpush.xpose.msra.mxu0 0.0
  %2622 = vmatpush.xpose.msra.mxu0 0.0
  %2623 = vmatpush.xpose.msra.mxu0 0.0
  %2624 = vmatpush.xpose.msra.mxu0 0.0
  %2625 = vmatpush.xpose.msra.mxu0 0.0
  %2626 = vmatpush.xpose.msra.mxu0 0.0
  %2627 = vmatpush.xpose.msra.mxu0 0.0
  %2628 = vmatpush.xpose.msra.mxu0 %v2611
  %2629 = vmatmul.f32.gmra.mxu0 %v2609
  %v2630 = vpop.f32.mrf.mxu0
  %v2631 = vadd.f32 0.0, %v2630
  %2632 = vdwg.mxu0
  %2634 = vrot.lane.b32.xlu0 %v2585, 96
  %v2635 = vpop.permute.xlu0 %2634
  %v2637 = vsel %vm146, %v2600, 0
  %v2639 = vsel %vm146, %v2635, 0
  %2641 = vmatpush.xpose.msra.mxu0 0.0
  %2642 = vmatpush.xpose.msra.mxu0 0.0
  %2643 = vmatpush.xpose.msra.mxu0 0.0
  %2644 = vmatpush.xpose.msra.mxu0 0.0
  %2645 = vmatpush.xpose.msra.mxu0 0.0
  %2646 = vmatpush.xpose.msra.mxu0 0.0
  %2647 = vmatpush.xpose.msra.mxu0 0.0
  %2648 = vmatpush.xpose.msra.mxu0 0.0
  %2649 = vmatpush.xpose.msra.mxu0 0.0
  %2650 = vmatpush.xpose.msra.mxu0 0.0
  %2651 = vmatpush.xpose.msra.mxu0 0.0
  %2652 = vmatpush.xpose.msra.mxu0 0.0
  %2653 = vmatpush.xpose.msra.mxu0 0.0
  %2654 = vmatpush.xpose.msra.mxu0 0.0
  %2655 = vmatpush.xpose.msra.mxu0 0.0
  %2656 = vmatpush.xpose.msra.mxu0 %v2639
  %2657 = vmatmul.f32.gmra.mxu0 %v2637
  %v2658 = vpop.f32.mrf.mxu0
  %v2659 = vadd.f32 0.0, %v2658
  %2660 = vdwg.mxu0
  %2662 = vrot.lane.b32.xlu0 %v2588, 96
  %v2663 = vpop.permute.xlu0 %2662
  %v2665 = vsel %vm146, %v2601, 0
  %v2667 = vsel %vm146, %v2663, 0
  %2669 = vmatpush.xpose.msra.mxu0 0.0
  %2670 = vmatpush.xpose.msra.mxu0 0.0
  %2671 = vmatpush.xpose.msra.mxu0 0.0
  %2672 = vmatpush.xpose.msra.mxu0 0.0
  %2673 = vmatpush.xpose.msra.mxu0 0.0
  %2674 = vmatpush.xpose.msra.mxu0 0.0
  %2675 = vmatpush.xpose.msra.mxu0 0.0
  %2676 = vmatpush.xpose.msra.mxu0 0.0
  %2677 = vmatpush.xpose.msra.mxu0 0.0
  %2678 = vmatpush.xpose.msra.mxu0 0.0
  %2679 = vmatpush.xpose.msra.mxu0 0.0
  %2680 = vmatpush.xpose.msra.mxu0 0.0
  %2681 = vmatpush.xpose.msra.mxu0 0.0
  %2682 = vmatpush.xpose.msra.mxu0 0.0
  %2683 = vmatpush.xpose.msra.mxu0 0.0
  %2684 = vmatpush.xpose.msra.mxu0 %v2667
  %2685 = vmatmul.f32.gmra.mxu0 %v2665
  %v2686 = vpop.f32.mrf.mxu0
  %v2687 = vadd.f32 0.0, %v2686
  %2688 = vdwg.mxu0
  %2690 = vrot.lane.b32.xlu0 %v2591, 96
  %v2691 = vpop.permute.xlu0 %2690
  %v2693 = vsel %vm146, %v2602, 0
  %v2695 = vsel %vm146, %v2691, 0
  %2697 = vmatpush.xpose.msra.mxu0 0.0
  %2698 = vmatpush.xpose.msra.mxu0 0.0
  %2699 = vmatpush.xpose.msra.mxu0 0.0
  %2700 = vmatpush.xpose.msra.mxu0 0.0
  %2701 = vmatpush.xpose.msra.mxu0 0.0
  %2702 = vmatpush.xpose.msra.mxu0 0.0
  %2703 = vmatpush.xpose.msra.mxu0 0.0
  %2704 = vmatpush.xpose.msra.mxu0 0.0
  %2705 = vmatpush.xpose.msra.mxu0 0.0
  %2706 = vmatpush.xpose.msra.mxu0 0.0
  %2707 = vmatpush.xpose.msra.mxu0 0.0
  %2708 = vmatpush.xpose.msra.mxu0 0.0
  %2709 = vmatpush.xpose.msra.mxu0 0.0
  %2710 = vmatpush.xpose.msra.mxu0 0.0
  %2711 = vmatpush.xpose.msra.mxu0 0.0
  %2712 = vmatpush.xpose.msra.mxu0 %v2695
  %2713 = vmatmul.f32.gmra.mxu0 %v2693
  %v2714 = vpop.f32.mrf.mxu0
  %v2715 = vadd.f32 0.0, %v2714
  %2716 = vdwg.mxu0
  %2718 = vrot.lane.b32.xlu0 %v2594, 96
  %v2719 = vpop.permute.xlu0 %2718
  %v2721 = vsel %vm146, %v2603, 0
  %v2723 = vsel %vm146, %v2719, 0
  %2725 = vmatpush.xpose.msra.mxu0 0.0
  %2726 = vmatpush.xpose.msra.mxu0 0.0
  %2727 = vmatpush.xpose.msra.mxu0 0.0
  %2728 = vmatpush.xpose.msra.mxu0 0.0
  %2729 = vmatpush.xpose.msra.mxu0 0.0
  %2730 = vmatpush.xpose.msra.mxu0 0.0
  %2731 = vmatpush.xpose.msra.mxu0 0.0
  %2732 = vmatpush.xpose.msra.mxu0 0.0
  %2733 = vmatpush.xpose.msra.mxu0 0.0
  %2734 = vmatpush.xpose.msra.mxu0 0.0
  %2735 = vmatpush.xpose.msra.mxu0 0.0
  %2736 = vmatpush.xpose.msra.mxu0 0.0
  %2737 = vmatpush.xpose.msra.mxu0 0.0
  %2738 = vmatpush.xpose.msra.mxu0 0.0
  %2739 = vmatpush.xpose.msra.mxu0 0.0
  %2740 = vmatpush.xpose.msra.mxu0 %v2723
  %2741 = vmatmul.f32.gmra.mxu0 %v2721
  %v2742 = vpop.f32.mrf.mxu0
  %v2743 = vadd.f32 0.0, %v2742
  %2744 = vdwg.mxu0
  %2746 = vrot.lane.b32.xlu0 %v2597, 96
  %v2747 = vpop.permute.xlu0 %2746
  %v2749 = vsel %vm146, %v2604, 0
  %v2751 = vsel %vm146, %v2747, 0
  %2753 = vmatpush.xpose.msra.mxu0 0.0
  %2754 = vmatpush.xpose.msra.mxu0 0.0
  %2755 = vmatpush.xpose.msra.mxu0 0.0
  %2756 = vmatpush.xpose.msra.mxu0 0.0
  %2757 = vmatpush.xpose.msra.mxu0 0.0
  %2758 = vmatpush.xpose.msra.mxu0 0.0
  %2759 = vmatpush.xpose.msra.mxu0 0.0
  %2760 = vmatpush.xpose.msra.mxu0 0.0
  %2761 = vmatpush.xpose.msra.mxu0 0.0
  %2762 = vmatpush.xpose.msra.mxu0 0.0
  %2763 = vmatpush.xpose.msra.mxu0 0.0
  %2764 = vmatpush.xpose.msra.mxu0 0.0
  %2765 = vmatpush.xpose.msra.mxu0 0.0
  %2766 = vmatpush.xpose.msra.mxu0 0.0
  %2767 = vmatpush.xpose.msra.mxu0 0.0
  %2768 = vmatpush.xpose.msra.mxu0 %v2751
  %2769 = vmatmul.f32.gmra.mxu0 %v2749
  %v2770 = vpop.f32.mrf.mxu0
  %v2771 = vadd.f32 0.0, %v2770
  %2772 = vdwg.mxu0
  %v2773 = vsel %vm276, %v2631, -inf
  %2774 = vmax.xlane.f32.xlu0 %v2773
  %v2775 = vpop.xlane.xlu0 %2774
  %v2776 = vsel %vm276, %v2659, -inf
  %2777 = vmax.xlane.f32.xlu0 %v2776
  %v2778 = vpop.xlane.xlu0 %2777
  %v2779 = vsel %vm276, %v2687, -inf
  %2780 = vmax.xlane.f32.xlu0 %v2779
  %v2781 = vpop.xlane.xlu0 %2780
  %v2782 = vsel %vm276, %v2715, -inf
  %2783 = vmax.xlane.f32.xlu0 %v2782
  %v2784 = vpop.xlane.xlu0 %2783
  %v2785 = vsel %vm276, %v2743, -inf
  %2786 = vmax.xlane.f32.xlu0 %v2785
  %v2787 = vpop.xlane.xlu0 %2786
  %v2788 = vsel %vm276, %v2771, -inf
  %2789 = vmax.xlane.f32.xlu0 %v2788
  %v2790 = vpop.xlane.xlu0 %2789
  %v2791 = vsub.f32 %v2631, %v2775
  %v2792 = vsub.f32 %v2659, %v2778
  %v2793 = vsub.f32 %v2687, %v2781
  %v2794 = vsub.f32 %v2715, %v2784
  %v2795 = vsub.f32 %v2743, %v2787
  %v2796 = vsub.f32 %v2771, %v2790
  %v2797 = vmul.f32 %v2791, 1.442695
  %v2798 = vpow.pop %v2797
  %v2799 = vmul.f32 %v2792, 1.442695
  %v2800 = vpow.pop %v2799
  %v2801 = vmul.f32 %v2793, 1.442695
  %v2802 = vpow.pop %v2801
  %v2803 = vmul.f32 %v2794, 1.442695
  %v2804 = vpow.pop %v2803
  %v2805 = vmul.f32 %v2795, 1.442695
  %v2806 = vpow.pop %v2805
  %v2807 = vmul.f32 %v2796, 1.442695
  %v2808 = vpow.pop %v2807
  %v2809 = vsel %vm276, %v2798, 0.0
  %2810 = vadd.xlane.f32.xlu0 %v2809
  %v2811 = vpop.xlane.xlu0 %2810
  %v2812 = vsel %vm276, %v2800, 0.0
  %2813 = vadd.xlane.f32.xlu0 %v2812
  %v2814 = vpop.xlane.xlu0 %2813
  %v2815 = vsel %vm276, %v2802, 0.0
  %2816 = vadd.xlane.f32.xlu0 %v2815
  %v2817 = vpop.xlane.xlu0 %2816
  %v2818 = vsel %vm276, %v2804, 0.0
  %2819 = vadd.xlane.f32.xlu0 %v2818
  %v2820 = vpop.xlane.xlu0 %2819
  %v2821 = vsel %vm276, %v2806, 0.0
  %2822 = vadd.xlane.f32.xlu0 %v2821
  %v2823 = vpop.xlane.xlu0 %2822
  %v2824 = vsel %vm276, %v2808, 0.0
  %2825 = vadd.xlane.f32.xlu0 %v2824
  %v2826 = vpop.xlane.xlu0 %2825
  %v2827 = vrcp.pop %v2811
  %v2828 = vmul.f32 %v2811, %v2827
  %v2829 = vsub.f32 1.0, %v2828
  %v2830 = vmul.f32 %v2827, %v2829
  %v2831 = vadd.f32 %v2827, %v2830
  %vm2832 = vweird.f32 %v2811
  %vm2833 = vweird.f32 %v2827
  %vm2834 = vmor %vm2832, %vm2833
  %v2835 = vsel %vm2834, %v2827, %v2831
  %v2836 = vand.u32 2147483647, %v2811
  %vm2837 = vcmp.eq.f32.partialorder %v2836, 8.507059e+37
  %v2838 = vand.u32 %v2811, 2147483648
  %v2839 = vor.u32 1.1754944e-38, %v2838
  %v2840 = vsel %vm2837, %v2839, %v2835
  %v2841 = vrcp.pop %v2814
  %v2842 = vmul.f32 %v2814, %v2841
  %v2843 = vsub.f32 1.0, %v2842
  %v2844 = vmul.f32 %v2841, %v2843
  %v2845 = vadd.f32 %v2841, %v2844
  %vm2846 = vweird.f32 %v2814
  %vm2847 = vweird.f32 %v2841
  %vm2848 = vmor %vm2846, %vm2847
  %v2849 = vsel %vm2848, %v2841, %v2845
  %v2850 = vand.u32 2147483647, %v2814
  %vm2851 = vcmp.eq.f32.partialorder %v2850, 8.507059e+37
  %v2852 = vand.u32 %v2814, 2147483648
  %v2853 = vor.u32 1.1754944e-38, %v2852
  %v2854 = vsel %vm2851, %v2853, %v2849
  %v2855 = vrcp.pop %v2817
  %v2856 = vmul.f32 %v2817, %v2855
  %v2857 = vsub.f32 1.0, %v2856
  %v2858 = vmul.f32 %v2855, %v2857
  %v2859 = vadd.f32 %v2855, %v2858
  %vm2860 = vweird.f32 %v2817
  %vm2861 = vweird.f32 %v2855
  %vm2862 = vmor %vm2860, %vm2861
  %v2863 = vsel %vm2862, %v2855, %v2859
  %v2864 = vand.u32 2147483647, %v2817
  %vm2865 = vcmp.eq.f32.partialorder %v2864, 8.507059e+37
  %v2866 = vand.u32 %v2817, 2147483648
  %v2867 = vor.u32 1.1754944e-38, %v2866
  %v2868 = vsel %vm2865, %v2867, %v2863
  %v2869 = vrcp.pop %v2820
  %v2870 = vmul.f32 %v2820, %v2869
  %v2871 = vsub.f32 1.0, %v2870
  %v2872 = vmul.f32 %v2869, %v2871
  %v2873 = vadd.f32 %v2869, %v2872
  %vm2874 = vweird.f32 %v2820
  %vm2875 = vweird.f32 %v2869
  %vm2876 = vmor %vm2874, %vm2875
  %v2877 = vsel %vm2876, %v2869, %v2873
  %v2878 = vand.u32 2147483647, %v2820
  %vm2879 = vcmp.eq.f32.partialorder %v2878, 8.507059e+37
  %v2880 = vand.u32 %v2820, 2147483648
  %v2881 = vor.u32 1.1754944e-38, %v2880
  %v2882 = vsel %vm2879, %v2881, %v2877
  %v2883 = vrcp.pop %v2823
  %v2884 = vmul.f32 %v2823, %v2883
  %v2885 = vsub.f32 1.0, %v2884
  %v2886 = vmul.f32 %v2883, %v2885
  %v2887 = vadd.f32 %v2883, %v2886
  %vm2888 = vweird.f32 %v2823
  %vm2889 = vweird.f32 %v2883
  %vm2890 = vmor %vm2888, %vm2889
  %v2891 = vsel %vm2890, %v2883, %v2887
  %v2892 = vand.u32 2147483647, %v2823
  %vm2893 = vcmp.eq.f32.partialorder %v2892, 8.507059e+37
  %v2894 = vand.u32 %v2823, 2147483648
  %v2895 = vor.u32 1.1754944e-38, %v2894
  %v2896 = vsel %vm2893, %v2895, %v2891
  %v2897 = vrcp.pop %v2826
  %v2898 = vmul.f32 %v2826, %v2897
  %v2899 = vsub.f32 1.0, %v2898
  %v2900 = vmul.f32 %v2897, %v2899
  %v2901 = vadd.f32 %v2897, %v2900
  %vm2902 = vweird.f32 %v2826
  %vm2903 = vweird.f32 %v2897
  %vm2904 = vmor %vm2902, %vm2903
  %v2905 = vsel %vm2904, %v2897, %v2901
  %v2906 = vand.u32 2147483647, %v2826
  %vm2907 = vcmp.eq.f32.partialorder %v2906, 8.507059e+37
  %v2908 = vand.u32 %v2826, 2147483648
  %v2909 = vor.u32 1.1754944e-38, %v2908
  %v2910 = vsel %vm2907, %v2909, %v2905
  %v2911 = vmul.f32 %v2798, %v2840
  %v2912 = vmul.f32 %v2800, %v2854
  %v2913 = vmul.f32 %v2802, %v2868
  %v2914 = vmul.f32 %v2804, %v2882
  %v2915 = vmul.f32 %v2806, %v2896
  %v2916 = vmul.f32 %v2808, %v2910
  %2917 = vrot.lane.b32.xlu0 %v2582, 64
  %v2918 = vpop.permute.xlu0 %2917
  %v2921 = vsel %vm276, %v2911, 0
  %2923 = vmatpush.msra.mxu0 0.0
  %2924 = vmatpush.msra.mxu0 0.0
  %2925 = vmatpush.msra.mxu0 0.0
  %2926 = vmatpush.msra.mxu0 0.0
  %2927 = vmatpush.msra.mxu0 0.0
  %2928 = vmatpush.msra.mxu0 0.0
  %2929 = vmatpush.msra.mxu0 0.0
  %2930 = vmatpush.msra.mxu0 0.0
  %2931 = vmatpush.msra.mxu0 0.0
  %2932 = vmatpush.msra.mxu0 0.0
  %2933 = vmatpush.msra.mxu0 0.0
  %2934 = vmatpush.msra.mxu0 0.0
  %2935 = vmatpush.msra.mxu0 0.0
  %2936 = vmatpush.msra.mxu0 0.0
  %2937 = vmatpush.msra.mxu0 0.0
  %2938 = vmatpush.msra.mxu0 %v2918
  %2939 = vmatmul.f32.gmra.mxu0 %v2921
  %v2940 = vpop.f32.mrf.mxu0
  %v2941 = vadd.f32 0.0, %v2940
  %2942 = vdwg.mxu0
  %2943 = vrot.lane.b32.xlu0 %v2585, 64
  %v2944 = vpop.permute.xlu0 %2943
  %v2947 = vsel %vm276, %v2912, 0
  %2949 = vmatpush.msra.mxu0 0.0
  %2950 = vmatpush.msra.mxu0 0.0
  %2951 = vmatpush.msra.mxu0 0.0
  %2952 = vmatpush.msra.mxu0 0.0
  %2953 = vmatpush.msra.mxu0 0.0
  %2954 = vmatpush.msra.mxu0 0.0
  %2955 = vmatpush.msra.mxu0 0.0
  %2956 = vmatpush.msra.mxu0 0.0
  %2957 = vmatpush.msra.mxu0 0.0
  %2958 = vmatpush.msra.mxu0 0.0
  %2959 = vmatpush.msra.mxu0 0.0
  %2960 = vmatpush.msra.mxu0 0.0
  %2961 = vmatpush.msra.mxu0 0.0
  %2962 = vmatpush.msra.mxu0 0.0
  %2963 = vmatpush.msra.mxu0 0.0
  %2964 = vmatpush.msra.mxu0 %v2944
  %2965 = vmatmul.f32.gmra.mxu0 %v2947
  %v2966 = vpop.f32.mrf.mxu0
  %v2967 = vadd.f32 0.0, %v2966
  %2968 = vdwg.mxu0
  %2969 = vrot.lane.b32.xlu0 %v2588, 64
  %v2970 = vpop.permute.xlu0 %2969
  %v2973 = vsel %vm276, %v2913, 0
  %2975 = vmatpush.msra.mxu0 0.0
  %2976 = vmatpush.msra.mxu0 0.0
  %2977 = vmatpush.msra.mxu0 0.0
  %2978 = vmatpush.msra.mxu0 0.0
  %2979 = vmatpush.msra.mxu0 0.0
  %2980 = vmatpush.msra.mxu0 0.0
  %2981 = vmatpush.msra.mxu0 0.0
  %2982 = vmatpush.msra.mxu0 0.0
  %2983 = vmatpush.msra.mxu0 0.0
  %2984 = vmatpush.msra.mxu0 0.0
  %2985 = vmatpush.msra.mxu0 0.0
  %2986 = vmatpush.msra.mxu0 0.0
  %2987 = vmatpush.msra.mxu0 0.0
  %2988 = vmatpush.msra.mxu0 0.0
  %2989 = vmatpush.msra.mxu0 0.0
  %2990 = vmatpush.msra.mxu0 %v2970
  %2991 = vmatmul.f32.gmra.mxu0 %v2973
  %v2992 = vpop.f32.mrf.mxu0
  %v2993 = vadd.f32 0.0, %v2992
  %2994 = vdwg.mxu0
  %2995 = vrot.lane.b32.xlu0 %v2591, 64
  %v2996 = vpop.permute.xlu0 %2995
  %v2999 = vsel %vm276, %v2914, 0
  %3001 = vmatpush.msra.mxu0 0.0
  %3002 = vmatpush.msra.mxu0 0.0
  %3003 = vmatpush.msra.mxu0 0.0
  %3004 = vmatpush.msra.mxu0 0.0
  %3005 = vmatpush.msra.mxu0 0.0
  %3006 = vmatpush.msra.mxu0 0.0
  %3007 = vmatpush.msra.mxu0 0.0
  %3008 = vmatpush.msra.mxu0 0.0
  %3009 = vmatpush.msra.mxu0 0.0
  %3010 = vmatpush.msra.mxu0 0.0
  %3011 = vmatpush.msra.mxu0 0.0
  %3012 = vmatpush.msra.mxu0 0.0
  %3013 = vmatpush.msra.mxu0 0.0
  %3014 = vmatpush.msra.mxu0 0.0
  %3015 = vmatpush.msra.mxu0 0.0
  %3016 = vmatpush.msra.mxu0 %v2996
  %3017 = vmatmul.f32.gmra.mxu0 %v2999
  %v3018 = vpop.f32.mrf.mxu0
  %v3019 = vadd.f32 0.0, %v3018
  %3020 = vdwg.mxu0
  %3021 = vrot.lane.b32.xlu0 %v2594, 64
  %v3022 = vpop.permute.xlu0 %3021
  %v3025 = vsel %vm276, %v2915, 0
  %3027 = vmatpush.msra.mxu0 0.0
  %3028 = vmatpush.msra.mxu0 0.0
  %3029 = vmatpush.msra.mxu0 0.0
  %3030 = vmatpush.msra.mxu0 0.0
  %3031 = vmatpush.msra.mxu0 0.0
  %3032 = vmatpush.msra.mxu0 0.0
  %3033 = vmatpush.msra.mxu0 0.0
  %3034 = vmatpush.msra.mxu0 0.0
  %3035 = vmatpush.msra.mxu0 0.0
  %3036 = vmatpush.msra.mxu0 0.0
  %3037 = vmatpush.msra.mxu0 0.0
  %3038 = vmatpush.msra.mxu0 0.0
  %3039 = vmatpush.msra.mxu0 0.0
  %3040 = vmatpush.msra.mxu0 0.0
  %3041 = vmatpush.msra.mxu0 0.0
  %3042 = vmatpush.msra.mxu0 %v3022
  %3043 = vmatmul.f32.gmra.mxu0 %v3025
  %v3044 = vpop.f32.mrf.mxu0
  %v3045 = vadd.f32 0.0, %v3044
  %3046 = vdwg.mxu0
  %3047 = vrot.lane.b32.xlu0 %v2597, 64
  %v3048 = vpop.permute.xlu0 %3047
  %v3051 = vsel %vm276, %v2916, 0
  %3053 = vmatpush.msra.mxu0 0.0
  %3054 = vmatpush.msra.mxu0 0.0
  %3055 = vmatpush.msra.mxu0 0.0
  %3056 = vmatpush.msra.mxu0 0.0
  %3057 = vmatpush.msra.mxu0 0.0
  %3058 = vmatpush.msra.mxu0 0.0
  %3059 = vmatpush.msra.mxu0 0.0
  %3060 = vmatpush.msra.mxu0 0.0
  %3061 = vmatpush.msra.mxu0 0.0
  %3062 = vmatpush.msra.mxu0 0.0
  %3063 = vmatpush.msra.mxu0 0.0
  %3064 = vmatpush.msra.mxu0 0.0
  %3065 = vmatpush.msra.mxu0 0.0
  %3066 = vmatpush.msra.mxu0 0.0
  %3067 = vmatpush.msra.mxu0 0.0
  %3068 = vmatpush.msra.mxu0 %v3048
  %3069 = vmatmul.f32.gmra.mxu0 %v3051
  %v3070 = vpop.f32.mrf.mxu0
  %v3071 = vadd.f32 0.0, %v3070
  %3072 = vdwg.mxu0
  %3073 = vrot.lane.b32.xlu0 %v2599, 112
  %v3074 = vpop.permute.xlu0 %3073
  %3075 = vrot.lane.b32.xlu0 %v2582, 80
  %v3076 = vpop.permute.xlu0 %3075
  %v3077 = vsel %vm146, %v3074, 0
  %v3079 = vsel %vm146, %v3076, 0
  %3081 = vmatpush.xpose.msra.mxu0 0.0
  %3082 = vmatpush.xpose.msra.mxu0 0.0
  %3083 = vmatpush.xpose.msra.mxu0 0.0
  %3084 = vmatpush.xpose.msra.mxu0 0.0
  %3085 = vmatpush.xpose.msra.mxu0 0.0
  %3086 = vmatpush.xpose.msra.mxu0 0.0
  %3087 = vmatpush.xpose.msra.mxu0 0.0
  %3088 = vmatpush.xpose.msra.mxu0 0.0
  %3089 = vmatpush.xpose.msra.mxu0 0.0
  %3090 = vmatpush.xpose.msra.mxu0 0.0
  %3091 = vmatpush.xpose.msra.mxu0 0.0
  %3092 = vmatpush.xpose.msra.mxu0 0.0
  %3093 = vmatpush.xpose.msra.mxu0 0.0
  %3094 = vmatpush.xpose.msra.mxu0 0.0
  %3095 = vmatpush.xpose.msra.mxu0 0.0
  %3096 = vmatpush.xpose.msra.mxu0 %v3079
  %3097 = vmatmul.f32.gmra.mxu0 %v3077
  %v3098 = vpop.f32.mrf.mxu0
  %v3099 = vadd.f32 0.0, %v3098
  %3100 = vdwg.mxu0
  %3101 = vrot.lane.b32.xlu0 %v2600, 112
  %v3102 = vpop.permute.xlu0 %3101
  %3103 = vrot.lane.b32.xlu0 %v2585, 80
  %v3104 = vpop.permute.xlu0 %3103
  %v3105 = vsel %vm146, %v3102, 0
  %v3107 = vsel %vm146, %v3104, 0
  %3109 = vmatpush.xpose.msra.mxu0 0.0
  %3110 = vmatpush.xpose.msra.mxu0 0.0
  %3111 = vmatpush.xpose.msra.mxu0 0.0
  %3112 = vmatpush.xpose.msra.mxu0 0.0
  %3113 = vmatpush.xpose.msra.mxu0 0.0
  %3114 = vmatpush.xpose.msra.mxu0 0.0
  %3115 = vmatpush.xpose.msra.mxu0 0.0
  %3116 = vmatpush.xpose.msra.mxu0 0.0
  %3117 = vmatpush.xpose.msra.mxu0 0.0
  %3118 = vmatpush.xpose.msra.mxu0 0.0
  %3119 = vmatpush.xpose.msra.mxu0 0.0
  %3120 = vmatpush.xpose.msra.mxu0 0.0
  %3121 = vmatpush.xpose.msra.mxu0 0.0
  %3122 = vmatpush.xpose.msra.mxu0 0.0
  %3123 = vmatpush.xpose.msra.mxu0 0.0
  %3124 = vmatpush.xpose.msra.mxu0 %v3107
  %3125 = vmatmul.f32.gmra.mxu0 %v3105
  %v3126 = vpop.f32.mrf.mxu0
  %v3127 = vadd.f32 0.0, %v3126
  %3128 = vdwg.mxu0
  %3129 = vrot.lane.b32.xlu0 %v2601, 112
  %v3130 = vpop.permute.xlu0 %3129
  %3131 = vrot.lane.b32.xlu0 %v2588, 80
  %v3132 = vpop.permute.xlu0 %3131
  %v3133 = vsel %vm146, %v3130, 0
  %v3135 = vsel %vm146, %v3132, 0
  %3137 = vmatpush.xpose.msra.mxu0 0.0
  %3138 = vmatpush.xpose.msra.mxu0 0.0
  %3139 = vmatpush.xpose.msra.mxu0 0.0
  %3140 = vmatpush.xpose.msra.mxu0 0.0
  %3141 = vmatpush.xpose.msra.mxu0 0.0
  %3142 = vmatpush.xpose.msra.mxu0 0.0
  %3143 = vmatpush.xpose.msra.mxu0 0.0
  %3144 = vmatpush.xpose.msra.mxu0 0.0
  %3145 = vmatpush.xpose.msra.mxu0 0.0
  %3146 = vmatpush.xpose.msra.mxu0 0.0
  %3147 = vmatpush.xpose.msra.mxu0 0.0
  %3148 = vmatpush.xpose.msra.mxu0 0.0
  %3149 = vmatpush.xpose.msra.mxu0 0.0
  %3150 = vmatpush.xpose.msra.mxu0 0.0
  %3151 = vmatpush.xpose.msra.mxu0 0.0
  %3152 = vmatpush.xpose.msra.mxu0 %v3135
  %3153 = vmatmul.f32.gmra.mxu0 %v3133
  %v3154 = vpop.f32.mrf.mxu0
  %v3155 = vadd.f32 0.0, %v3154
  %3156 = vdwg.mxu0
  %3157 = vrot.lane.b32.xlu0 %v2602, 112
  %v3158 = vpop.permute.xlu0 %3157
  %3159 = vrot.lane.b32.xlu0 %v2591, 80
  %v3160 = vpop.permute.xlu0 %3159
  %v3161 = vsel %vm146, %v3158, 0
  %v3163 = vsel %vm146, %v3160, 0
  %3165 = vmatpush.xpose.msra.mxu0 0.0
  %3166 = vmatpush.xpose.msra.mxu0 0.0
  %3167 = vmatpush.xpose.msra.mxu0 0.0
  %3168 = vmatpush.xpose.msra.mxu0 0.0
  %3169 = vmatpush.xpose.msra.mxu0 0.0
  %3170 = vmatpush.xpose.msra.mxu0 0.0
  %3171 = vmatpush.xpose.msra.mxu0 0.0
  %3172 = vmatpush.xpose.msra.mxu0 0.0
  %3173 = vmatpush.xpose.msra.mxu0 0.0
  %3174 = vmatpush.xpose.msra.mxu0 0.0
  %3175 = vmatpush.xpose.msra.mxu0 0.0
  %3176 = vmatpush.xpose.msra.mxu0 0.0
  %3177 = vmatpush.xpose.msra.mxu0 0.0
  %3178 = vmatpush.xpose.msra.mxu0 0.0
  %3179 = vmatpush.xpose.msra.mxu0 0.0
  %3180 = vmatpush.xpose.msra.mxu0 %v3163
  %3181 = vmatmul.f32.gmra.mxu0 %v3161
  %v3182 = vpop.f32.mrf.mxu0
  %v3183 = vadd.f32 0.0, %v3182
  %3184 = vdwg.mxu0
  %3185 = vrot.lane.b32.xlu0 %v2603, 112
  %v3186 = vpop.permute.xlu0 %3185
  %3187 = vrot.lane.b32.xlu0 %v2594, 80
  %v3188 = vpop.permute.xlu0 %3187
  %v3189 = vsel %vm146, %v3186, 0
  %v3191 = vsel %vm146, %v3188, 0
  %3193 = vmatpush.xpose.msra.mxu0 0.0
  %3194 = vmatpush.xpose.msra.mxu0 0.0
  %3195 = vmatpush.xpose.msra.mxu0 0.0
  %3196 = vmatpush.xpose.msra.mxu0 0.0
  %3197 = vmatpush.xpose.msra.mxu0 0.0
  %3198 = vmatpush.xpose.msra.mxu0 0.0
  %3199 = vmatpush.xpose.msra.mxu0 0.0
  %3200 = vmatpush.xpose.msra.mxu0 0.0
  %3201 = vmatpush.xpose.msra.mxu0 0.0
  %3202 = vmatpush.xpose.msra.mxu0 0.0
  %3203 = vmatpush.xpose.msra.mxu0 0.0
  %3204 = vmatpush.xpose.msra.mxu0 0.0
  %3205 = vmatpush.xpose.msra.mxu0 0.0
  %3206 = vmatpush.xpose.msra.mxu0 0.0
  %3207 = vmatpush.xpose.msra.mxu0 0.0
  %3208 = vmatpush.xpose.msra.mxu0 %v3191
  %3209 = vmatmul.f32.gmra.mxu0 %v3189
  %v3210 = vpop.f32.mrf.mxu0
  %v3211 = vadd.f32 0.0, %v3210
  %3212 = vdwg.mxu0
  %3213 = vrot.lane.b32.xlu0 %v2604, 112
  %v3214 = vpop.permute.xlu0 %3213
  %3215 = vrot.lane.b32.xlu0 %v2597, 80
  %v3216 = vpop.permute.xlu0 %3215
  %v3217 = vsel %vm146, %v3214, 0
  %v3219 = vsel %vm146, %v3216, 0
  %3221 = vmatpush.xpose.msra.mxu0 0.0
  %3222 = vmatpush.xpose.msra.mxu0 0.0
  %3223 = vmatpush.xpose.msra.mxu0 0.0
  %3224 = vmatpush.xpose.msra.mxu0 0.0
  %3225 = vmatpush.xpose.msra.mxu0 0.0
  %3226 = vmatpush.xpose.msra.mxu0 0.0
  %3227 = vmatpush.xpose.msra.mxu0 0.0
  %3228 = vmatpush.xpose.msra.mxu0 0.0
  %3229 = vmatpush.xpose.msra.mxu0 0.0
  %3230 = vmatpush.xpose.msra.mxu0 0.0
  %3231 = vmatpush.xpose.msra.mxu0 0.0
  %3232 = vmatpush.xpose.msra.mxu0 0.0
  %3233 = vmatpush.xpose.msra.mxu0 0.0
  %3234 = vmatpush.xpose.msra.mxu0 0.0
  %3235 = vmatpush.xpose.msra.mxu0 0.0
  %3236 = vmatpush.xpose.msra.mxu0 %v3219
  %3237 = vmatmul.f32.gmra.mxu0 %v3217
  %v3238 = vpop.f32.mrf.mxu0
  %v3239 = vadd.f32 0.0, %v3238
  %3240 = vdwg.mxu0
  %v3241 = vsel %vm276, %v3099, -inf
  %3242 = vmax.xlane.f32.xlu0 %v3241
  %v3243 = vpop.xlane.xlu0 %3242
  %v3244 = vsel %vm276, %v3127, -inf
  %3245 = vmax.xlane.f32.xlu0 %v3244
  %v3246 = vpop.xlane.xlu0 %3245
  %v3247 = vsel %vm276, %v3155, -inf
  %3248 = vmax.xlane.f32.xlu0 %v3247
  %v3249 = vpop.xlane.xlu0 %3248
  %v3250 = vsel %vm276, %v3183, -inf
  %3251 = vmax.xlane.f32.xlu0 %v3250
  %v3252 = vpop.xlane.xlu0 %3251
  %v3253 = vsel %vm276, %v3211, -inf
  %3254 = vmax.xlane.f32.xlu0 %v3253
  %v3255 = vpop.xlane.xlu0 %3254
  %v3256 = vsel %vm276, %v3239, -inf
  %3257 = vmax.xlane.f32.xlu0 %v3256
  %v3258 = vpop.xlane.xlu0 %3257
  %v3259 = vsub.f32 %v3099, %v3243
  %v3260 = vsub.f32 %v3127, %v3246
  %v3261 = vsub.f32 %v3155, %v3249
  %v3262 = vsub.f32 %v3183, %v3252
  %v3263 = vsub.f32 %v3211, %v3255
  %v3264 = vsub.f32 %v3239, %v3258
  %v3265 = vmul.f32 %v3259, 1.442695
  %v3266 = vpow.pop %v3265
  %v3267 = vmul.f32 %v3260, 1.442695
  %v3268 = vpow.pop %v3267
  %v3269 = vmul.f32 %v3261, 1.442695
  %v3270 = vpow.pop %v3269
  %v3271 = vmul.f32 %v3262, 1.442695
  %v3272 = vpow.pop %v3271
  %v3273 = vmul.f32 %v3263, 1.442695
  %v3274 = vpow.pop %v3273
  %v3275 = vmul.f32 %v3264, 1.442695
  %v3276 = vpow.pop %v3275
  %v3277 = vsel %vm276, %v3266, 0.0
  %3278 = vadd.xlane.f32.xlu0 %v3277
  %v3279 = vpop.xlane.xlu0 %3278
  %v3280 = vsel %vm276, %v3268, 0.0
  %3281 = vadd.xlane.f32.xlu0 %v3280
  %v3282 = vpop.xlane.xlu0 %3281
  %v3283 = vsel %vm276, %v3270, 0.0
  %3284 = vadd.xlane.f32.xlu0 %v3283
  %v3285 = vpop.xlane.xlu0 %3284
  %v3286 = vsel %vm276, %v3272, 0.0
  %3287 = vadd.xlane.f32.xlu0 %v3286
  %v3288 = vpop.xlane.xlu0 %3287
  %v3289 = vsel %vm276, %v3274, 0.0
  %3290 = vadd.xlane.f32.xlu0 %v3289
  %v3291 = vpop.xlane.xlu0 %3290
  %v3292 = vsel %vm276, %v3276, 0.0
  %3293 = vadd.xlane.f32.xlu0 %v3292
  %v3294 = vpop.xlane.xlu0 %3293
  %v3295 = vrcp.pop %v3279
  %v3296 = vmul.f32 %v3279, %v3295
  %v3297 = vsub.f32 1.0, %v3296
  %v3298 = vmul.f32 %v3295, %v3297
  %v3299 = vadd.f32 %v3295, %v3298
  %vm3300 = vweird.f32 %v3279
  %vm3301 = vweird.f32 %v3295
  %vm3302 = vmor %vm3300, %vm3301
  %v3303 = vsel %vm3302, %v3295, %v3299
  %v3304 = vand.u32 2147483647, %v3279
  %vm3305 = vcmp.eq.f32.partialorder %v3304, 8.507059e+37
  %v3306 = vand.u32 %v3279, 2147483648
  %v3307 = vor.u32 1.1754944e-38, %v3306
  %v3308 = vsel %vm3305, %v3307, %v3303
  %v3309 = vrcp.pop %v3282
  %v3310 = vmul.f32 %v3282, %v3309
  %v3311 = vsub.f32 1.0, %v3310
  %v3312 = vmul.f32 %v3309, %v3311
  %v3313 = vadd.f32 %v3309, %v3312
  %vm3314 = vweird.f32 %v3282
  %vm3315 = vweird.f32 %v3309
  %vm3316 = vmor %vm3314, %vm3315
  %v3317 = vsel %vm3316, %v3309, %v3313
  %v3318 = vand.u32 2147483647, %v3282
  %vm3319 = vcmp.eq.f32.partialorder %v3318, 8.507059e+37
  %v3320 = vand.u32 %v3282, 2147483648
  %v3321 = vor.u32 1.1754944e-38, %v3320
  %v3322 = vsel %vm3319, %v3321, %v3317
  %v3323 = vrcp.pop %v3285
  %v3324 = vmul.f32 %v3285, %v3323
  %v3325 = vsub.f32 1.0, %v3324
  %v3326 = vmul.f32 %v3323, %v3325
  %v3327 = vadd.f32 %v3323, %v3326
  %vm3328 = vweird.f32 %v3285
  %vm3329 = vweird.f32 %v3323
  %vm3330 = vmor %vm3328, %vm3329
  %v3331 = vsel %vm3330, %v3323, %v3327
  %v3332 = vand.u32 2147483647, %v3285
  %vm3333 = vcmp.eq.f32.partialorder %v3332, 8.507059e+37
  %v3334 = vand.u32 %v3285, 2147483648
  %v3335 = vor.u32 1.1754944e-38, %v3334
  %v3336 = vsel %vm3333, %v3335, %v3331
  %v3337 = vrcp.pop %v3288
  %v3338 = vmul.f32 %v3288, %v3337
  %v3339 = vsub.f32 1.0, %v3338
  %v3340 = vmul.f32 %v3337, %v3339
  %v3341 = vadd.f32 %v3337, %v3340
  %vm3342 = vweird.f32 %v3288
  %vm3343 = vweird.f32 %v3337
  %vm3344 = vmor %vm3342, %vm3343
  %v3345 = vsel %vm3344, %v3337, %v3341
  %v3346 = vand.u32 2147483647, %v3288
  %vm3347 = vcmp.eq.f32.partialorder %v3346, 8.507059e+37
  %v3348 = vand.u32 %v3288, 2147483648
  %v3349 = vor.u32 1.1754944e-38, %v3348
  %v3350 = vsel %vm3347, %v3349, %v3345
  %v3351 = vrcp.pop %v3291
  %v3352 = vmul.f32 %v3291, %v3351
  %v3353 = vsub.f32 1.0, %v3352
  %v3354 = vmul.f32 %v3351, %v3353
  %v3355 = vadd.f32 %v3351, %v3354
  %vm3356 = vweird.f32 %v3291
  %vm3357 = vweird.f32 %v3351
  %vm3358 = vmor %vm3356, %vm3357
  %v3359 = vsel %vm3358, %v3351, %v3355
  %v3360 = vand.u32 2147483647, %v3291
  %vm3361 = vcmp.eq.f32.partialorder %v3360, 8.507059e+37
  %v3362 = vand.u32 %v3291, 2147483648
  %v3363 = vor.u32 1.1754944e-38, %v3362
  %v3364 = vsel %vm3361, %v3363, %v3359
  %v3365 = vrcp.pop %v3294
  %v3366 = vmul.f32 %v3294, %v3365
  %v3367 = vsub.f32 1.0, %v3366
  %v3368 = vmul.f32 %v3365, %v3367
  %v3369 = vadd.f32 %v3365, %v3368
  %vm3370 = vweird.f32 %v3294
  %vm3371 = vweird.f32 %v3365
  %vm3372 = vmor %vm3370, %vm3371
  %v3373 = vsel %vm3372, %v3365, %v3369
  %v3374 = vand.u32 2147483647, %v3294
  %vm3375 = vcmp.eq.f32.partialorder %v3374, 8.507059e+37
  %v3376 = vand.u32 %v3294, 2147483648
  %v3377 = vor.u32 1.1754944e-38, %v3376
  %v3378 = vsel %vm3375, %v3377, %v3373
  %v3379 = vmul.f32 %v3266, %v3308
  %v3380 = vmul.f32 %v3268, %v3322
  %v3381 = vmul.f32 %v3270, %v3336
  %v3382 = vmul.f32 %v3272, %v3350
  %v3383 = vmul.f32 %v3274, %v3364
  %v3384 = vmul.f32 %v3276, %v3378
  %3385 = vrot.lane.b32.xlu0 %v2582, 48
  %v3386 = vpop.permute.xlu0 %3385
  %v3389 = vsel %vm276, %v3379, 0
  %3391 = vmatpush.msra.mxu0 0.0
  %3392 = vmatpush.msra.mxu0 0.0
  %3393 = vmatpush.msra.mxu0 0.0
  %3394 = vmatpush.msra.mxu0 0.0
  %3395 = vmatpush.msra.mxu0 0.0
  %3396 = vmatpush.msra.mxu0 0.0
  %3397 = vmatpush.msra.mxu0 0.0
  %3398 = vmatpush.msra.mxu0 0.0
  %3399 = vmatpush.msra.mxu0 0.0
  %3400 = vmatpush.msra.mxu0 0.0
  %3401 = vmatpush.msra.mxu0 0.0
  %3402 = vmatpush.msra.mxu0 0.0
  %3403 = vmatpush.msra.mxu0 0.0
  %3404 = vmatpush.msra.mxu0 0.0
  %3405 = vmatpush.msra.mxu0 0.0
  %3406 = vmatpush.msra.mxu0 %v3386
  %3407 = vmatmul.f32.gmra.mxu0 %v3389
  %v3408 = vpop.f32.mrf.mxu0
  %v3409 = vadd.f32 0.0, %v3408
  %3410 = vdwg.mxu0
  %3411 = vrot.lane.b32.xlu0 %v2585, 48
  %v3412 = vpop.permute.xlu0 %3411
  %v3415 = vsel %vm276, %v3380, 0
  %3417 = vmatpush.msra.mxu0 0.0
  %3418 = vmatpush.msra.mxu0 0.0
  %3419 = vmatpush.msra.mxu0 0.0
  %3420 = vmatpush.msra.mxu0 0.0
  %3421 = vmatpush.msra.mxu0 0.0
  %3422 = vmatpush.msra.mxu0 0.0
  %3423 = vmatpush.msra.mxu0 0.0
  %3424 = vmatpush.msra.mxu0 0.0
  %3425 = vmatpush.msra.mxu0 0.0
  %3426 = vmatpush.msra.mxu0 0.0
  %3427 = vmatpush.msra.mxu0 0.0
  %3428 = vmatpush.msra.mxu0 0.0
  %3429 = vmatpush.msra.mxu0 0.0
  %3430 = vmatpush.msra.mxu0 0.0
  %3431 = vmatpush.msra.mxu0 0.0
  %3432 = vmatpush.msra.mxu0 %v3412
  %3433 = vmatmul.f32.gmra.mxu0 %v3415
  %v3434 = vpop.f32.mrf.mxu0
  %v3435 = vadd.f32 0.0, %v3434
  %3436 = vdwg.mxu0
  %3437 = vrot.lane.b32.xlu0 %v2588, 48
  %v3438 = vpop.permute.xlu0 %3437
  %v3441 = vsel %vm276, %v3381, 0
  %3443 = vmatpush.msra.mxu0 0.0
  %3444 = vmatpush.msra.mxu0 0.0
  %3445 = vmatpush.msra.mxu0 0.0
  %3446 = vmatpush.msra.mxu0 0.0
  %3447 = vmatpush.msra.mxu0 0.0
  %3448 = vmatpush.msra.mxu0 0.0
  %3449 = vmatpush.msra.mxu0 0.0
  %3450 = vmatpush.msra.mxu0 0.0
  %3451 = vmatpush.msra.mxu0 0.0
  %3452 = vmatpush.msra.mxu0 0.0
  %3453 = vmatpush.msra.mxu0 0.0
  %3454 = vmatpush.msra.mxu0 0.0
  %3455 = vmatpush.msra.mxu0 0.0
  %3456 = vmatpush.msra.mxu0 0.0
  %3457 = vmatpush.msra.mxu0 0.0
  %3458 = vmatpush.msra.mxu0 %v3438
  %3459 = vmatmul.f32.gmra.mxu0 %v3441
  %v3460 = vpop.f32.mrf.mxu0
  %v3461 = vadd.f32 0.0, %v3460
  %3462 = vdwg.mxu0
  %3463 = vrot.lane.b32.xlu0 %v2591, 48
  %v3464 = vpop.permute.xlu0 %3463
  %v3467 = vsel %vm276, %v3382, 0
  %3469 = vmatpush.msra.mxu0 0.0
  %3470 = vmatpush.msra.mxu0 0.0
  %3471 = vmatpush.msra.mxu0 0.0
  %3472 = vmatpush.msra.mxu0 0.0
  %3473 = vmatpush.msra.mxu0 0.0
  %3474 = vmatpush.msra.mxu0 0.0
  %3475 = vmatpush.msra.mxu0 0.0
  %3476 = vmatpush.msra.mxu0 0.0
  %3477 = vmatpush.msra.mxu0 0.0
  %3478 = vmatpush.msra.mxu0 0.0
  %3479 = vmatpush.msra.mxu0 0.0
  %3480 = vmatpush.msra.mxu0 0.0
  %3481 = vmatpush.msra.mxu0 0.0
  %3482 = vmatpush.msra.mxu0 0.0
  %3483 = vmatpush.msra.mxu0 0.0
  %3484 = vmatpush.msra.mxu0 %v3464
  %3485 = vmatmul.f32.gmra.mxu0 %v3467
  %v3486 = vpop.f32.mrf.mxu0
  %v3487 = vadd.f32 0.0, %v3486
  %3488 = vdwg.mxu0
  %3489 = vrot.lane.b32.xlu0 %v2594, 48
  %v3490 = vpop.permute.xlu0 %3489
  %v3493 = vsel %vm276, %v3383, 0
  %3495 = vmatpush.msra.mxu0 0.0
  %3496 = vmatpush.msra.mxu0 0.0
  %3497 = vmatpush.msra.mxu0 0.0
  %3498 = vmatpush.msra.mxu0 0.0
  %3499 = vmatpush.msra.mxu0 0.0
  %3500 = vmatpush.msra.mxu0 0.0
  %3501 = vmatpush.msra.mxu0 0.0
  %3502 = vmatpush.msra.mxu0 0.0
  %3503 = vmatpush.msra.mxu0 0.0
  %3504 = vmatpush.msra.mxu0 0.0
  %3505 = vmatpush.msra.mxu0 0.0
  %3506 = vmatpush.msra.mxu0 0.0
  %3507 = vmatpush.msra.mxu0 0.0
  %3508 = vmatpush.msra.mxu0 0.0
  %3509 = vmatpush.msra.mxu0 0.0
  %3510 = vmatpush.msra.mxu0 %v3490
  %3511 = vmatmul.f32.gmra.mxu0 %v3493
  %v3512 = vpop.f32.mrf.mxu0
  %v3513 = vadd.f32 0.0, %v3512
  %3514 = vdwg.mxu0
  %3515 = vrot.lane.b32.xlu0 %v2597, 48
  %v3516 = vpop.permute.xlu0 %3515
  %v3519 = vsel %vm276, %v3384, 0
  %3521 = vmatpush.msra.mxu0 0.0
  %3522 = vmatpush.msra.mxu0 0.0
  %3523 = vmatpush.msra.mxu0 0.0
  %3524 = vmatpush.msra.mxu0 0.0
  %3525 = vmatpush.msra.mxu0 0.0
  %3526 = vmatpush.msra.mxu0 0.0
  %3527 = vmatpush.msra.mxu0 0.0
  %3528 = vmatpush.msra.mxu0 0.0
  %3529 = vmatpush.msra.mxu0 0.0
  %3530 = vmatpush.msra.mxu0 0.0
  %3531 = vmatpush.msra.mxu0 0.0
  %3532 = vmatpush.msra.mxu0 0.0
  %3533 = vmatpush.msra.mxu0 0.0
  %3534 = vmatpush.msra.mxu0 0.0
  %3535 = vmatpush.msra.mxu0 0.0
  %3536 = vmatpush.msra.mxu0 %v3516
  %3537 = vmatmul.f32.gmra.mxu0 %v3519
  %v3538 = vpop.f32.mrf.mxu0
  %v3539 = vadd.f32 0.0, %v3538
  %3540 = vdwg.mxu0
  %3547 = vrot.lane.b32.xlu0 %v3409, 16
  %v3548 = vpop.permute.xlu0 %3547
  %3549 = vrot.lane.b32.xlu0 %v3435, 16
  %v3550 = vpop.permute.xlu0 %3549
  %3551 = vrot.lane.b32.xlu0 %v3461, 16
  %v3552 = vpop.permute.xlu0 %3551
  %3553 = vrot.lane.b32.xlu0 %v3487, 16
  %v3554 = vpop.permute.xlu0 %3553
  %3555 = vrot.lane.b32.xlu0 %v3513, 16
  %v3556 = vpop.permute.xlu0 %3555
  %3557 = vrot.lane.b32.xlu0 %v3539, 16
  %v3558 = vpop.permute.xlu0 %3557
  %v3565 = vsel %vm146, %v2941, %v3548
  %v3566 = vsel %vm146, %v2967, %v3550
  %v3567 = vsel %vm146, %v2993, %v3552
  %v3568 = vsel %vm146, %v3019, %v3554
  %v3569 = vsel %vm146, %v3045, %v3556
  %v3570 = vsel %vm146, %v3071, %v3558
  %v3571 = vld [vmem:[%s45] sm:$0xff]
  %v3572 = vld [vmem:[%s45 + $0x8] sm:$0xff]
  %v3573 = vld [vmem:[%s45 + $0x10] sm:$0xff]
  %v3574 = vld [vmem:[%s45 + $0x18] sm:$0xff]
  %v3575 = vld [vmem:[%s47] sm:$0x1]
  %v3577 = vperm.slane %v3575, 0
  %v3580 = vsel %vm188, %v3565, 0
  %v3583 = vsel %vm188, %v3566, 0
  %v3586 = vsel %vm188, %v3567, 0
  %v3589 = vsel %vm188, %v3568, 0
  %v3592 = vsel %vm188, %v3569, 0
  %v3595 = vsel %vm188, %v3570, 0
  %3597 = vmatpush.msra.mxu0 0.0
  %3598 = vmatpush.msra.mxu0 0.0
  %3599 = vmatpush.msra.mxu0 0.0
  %3600 = vmatpush.msra.mxu0 0.0
  %3601 = vmatpush.msra.mxu0 0.0
  %3602 = vmatpush.msra.mxu0 0.0
  %3603 = vmatpush.msra.mxu0 0.0
  %3604 = vmatpush.msra.mxu0 0.0
  %3605 = vmatpush.msra.mxu0 0.0
  %3606 = vmatpush.msra.mxu0 0.0
  %3607 = vmatpush.msra.mxu0 0.0
  %3608 = vmatpush.msra.mxu0 0.0
  %3609 = vmatpush.msra.mxu0 %v3574
  %3610 = vmatpush.msra.mxu0 %v3573
  %3611 = vmatpush.msra.mxu0 %v3572
  %3612 = vmatpush.msra.mxu0 %v3571
  %3613 = vmatmul.f32.gmra.mxu0 %v3580
  %v3614 = vpop.f32.mrf.mxu0
  %v3615 = vadd.f32 %v3577, %v3614
  %3616 = vmatmul.f32.gmra.mxu0 %v3583
  %v3617 = vpop.f32.mrf.mxu0
  %v3618 = vadd.f32 %v3577, %v3617
  %3619 = vmatmul.f32.gmra.mxu0 %v3586
  %v3620 = vpop.f32.mrf.mxu0
  %v3621 = vadd.f32 %v3577, %v3620
  %3622 = vmatmul.f32.gmra.mxu0 %v3589
  %v3623 = vpop.f32.mrf.mxu0
  %v3624 = vadd.f32 %v3577, %v3623
  %3625 = vmatmul.f32.gmra.mxu0 %v3592
  %v3626 = vpop.f32.mrf.mxu0
  %v3627 = vadd.f32 %v3577, %v3626
  %3628 = vmatmul.f32.gmra.mxu0 %v3595
  %v3629 = vpop.f32.mrf.mxu0
  %v3630 = vadd.f32 %v3577, %v3629
  %3631 = vdwg.mxu0
  %v3632 = vadd.f32 %v2532, %v3615
  %v3633 = vadd.f32 %v2533, %v3618
  %v3634 = vadd.f32 %v2534, %v3621
  %v3635 = vadd.f32 %v2535, %v3624
  %v3636 = vadd.f32 %v2536, %v3627
  %v3637 = vadd.f32 %v2537, %v3630
  %v3638 = vsel %vm188, %v3632, 0.0
  %3639 = vadd.xlane.f32.xlu0 %v3638
  %v3640 = vpop.xlane.xlu0 %3639
  %v3641 = vsel %vm188, %v3633, 0.0
  %3642 = vadd.xlane.f32.xlu0 %v3641
  %v3643 = vpop.xlane.xlu0 %3642
  %v3644 = vsel %vm188, %v3634, 0.0
  %3645 = vadd.xlane.f32.xlu0 %v3644
  %v3646 = vpop.xlane.xlu0 %3645
  %v3647 = vsel %vm188, %v3635, 0.0
  %3648 = vadd.xlane.f32.xlu0 %v3647
  %v3649 = vpop.xlane.xlu0 %3648
  %v3650 = vsel %vm188, %v3636, 0.0
  %3651 = vadd.xlane.f32.xlu0 %v3650
  %v3652 = vpop.xlane.xlu0 %3651
  %v3653 = vsel %vm188, %v3637, 0.0
  %3654 = vadd.xlane.f32.xlu0 %v3653
  %v3655 = vpop.xlane.xlu0 %3654
  %v3656 = vmul.f32 %v3640, %v594
  %v3657 = vmul.f32 %v3643, %v594
  %v3658 = vmul.f32 %v3646, %v594
  %v3659 = vmul.f32 %v3649, %v594
  %v3660 = vmul.f32 %v3652, %v594
  %v3661 = vmul.f32 %v3655, %v594
  %v3662 = vsub.f32 %v3632, %v3656
  %v3663 = vsub.f32 %v3633, %v3657
  %v3664 = vsub.f32 %v3634, %v3658
  %v3665 = vsub.f32 %v3635, %v3659
  %v3666 = vsub.f32 %v3636, %v3660
  %v3667 = vsub.f32 %v3637, %v3661
  %v3668 = vmul.f32 %v3662, %v3662
  %v3669 = vmul.f32 %v3663, %v3663
  %v3670 = vmul.f32 %v3664, %v3664
  %v3671 = vmul.f32 %v3665, %v3665
  %v3672 = vmul.f32 %v3666, %v3666
  %v3673 = vmul.f32 %v3667, %v3667
  %v3674 = vsel %vm188, %v3668, 0.0
  %3675 = vadd.xlane.f32.xlu0 %v3674
  %v3676 = vpop.xlane.xlu0 %3675
  %v3677 = vsel %vm188, %v3669, 0.0
  %3678 = vadd.xlane.f32.xlu0 %v3677
  %v3679 = vpop.xlane.xlu0 %3678
  %v3680 = vsel %vm188, %v3670, 0.0
  %3681 = vadd.xlane.f32.xlu0 %v3680
  %v3682 = vpop.xlane.xlu0 %3681
  %v3683 = vsel %vm188, %v3671, 0.0
  %3684 = vadd.xlane.f32.xlu0 %v3683
  %v3685 = vpop.xlane.xlu0 %3684
  %v3686 = vsel %vm188, %v3672, 0.0
  %3687 = vadd.xlane.f32.xlu0 %v3686
  %v3688 = vpop.xlane.xlu0 %3687
  %v3689 = vsel %vm188, %v3673, 0.0
  %3690 = vadd.xlane.f32.xlu0 %v3689
  %v3691 = vpop.xlane.xlu0 %3690
  %v3692 = vmul.f32 %v3676, %v594
  %v3693 = vmul.f32 %v3679, %v594
  %v3694 = vmul.f32 %v3682, %v594
  %v3695 = vmul.f32 %v3685, %v594
  %v3696 = vmul.f32 %v3688, %v594
  %v3697 = vmul.f32 %v3691, %v594
  %v3698 = vadd.f32 %v3692, 1e-05
  %v3699 = vadd.f32 %v3693, 1e-05
  %v3700 = vadd.f32 %v3694, 1e-05
  %v3701 = vadd.f32 %v3695, 1e-05
  %v3702 = vadd.f32 %v3696, 1e-05
  %v3703 = vadd.f32 %v3697, 1e-05
  %v3704 = vrsqrt.pop %v3698
  %v3705 = vmul.f32 %v3704, %v3698
  %v3706 = vmul.f32 %v3705, %v3704
  %v3707 = vmul.f32 0.5, %v3706
  %v3708 = vsub.f32 1.5, %v3707
  %v3709 = vmul.f32 %v3704, %v3708
  %vm3710 = vweird.f32 %v3698
  %vm3711 = vweird.f32 %v3704
  %vm3712 = vmor %vm3710, %vm3711
  %v3713 = vsel %vm3712, %v3704, %v3709
  %v3714 = vrsqrt.pop %v3699
  %v3715 = vmul.f32 %v3714, %v3699
  %v3716 = vmul.f32 %v3715, %v3714
  %v3717 = vmul.f32 0.5, %v3716
  %v3718 = vsub.f32 1.5, %v3717
  %v3719 = vmul.f32 %v3714, %v3718
  %vm3720 = vweird.f32 %v3699
  %vm3721 = vweird.f32 %v3714
  %vm3722 = vmor %vm3720, %vm3721
  %v3723 = vsel %vm3722, %v3714, %v3719
  %v3724 = vrsqrt.pop %v3700
  %v3725 = vmul.f32 %v3724, %v3700
  %v3726 = vmul.f32 %v3725, %v3724
  %v3727 = vmul.f32 0.5, %v3726
  %v3728 = vsub.f32 1.5, %v3727
  %v3729 = vmul.f32 %v3724, %v3728
  %vm3730 = vweird.f32 %v3700
  %vm3731 = vweird.f32 %v3724
  %vm3732 = vmor %vm3730, %vm3731
  %v3733 = vsel %vm3732, %v3724, %v3729
  %v3734 = vrsqrt.pop %v3701
  %v3735 = vmul.f32 %v3734, %v3701
  %v3736 = vmul.f32 %v3735, %v3734
  %v3737 = vmul.f32 0.5, %v3736
  %v3738 = vsub.f32 1.5, %v3737
  %v3739 = vmul.f32 %v3734, %v3738
  %vm3740 = vweird.f32 %v3701
  %vm3741 = vweird.f32 %v3734
  %vm3742 = vmor %vm3740, %vm3741
  %v3743 = vsel %vm3742, %v3734, %v3739
  %v3744 = vrsqrt.pop %v3702
  %v3745 = vmul.f32 %v3744, %v3702
  %v3746 = vmul.f32 %v3745, %v3744
  %v3747 = vmul.f32 0.5, %v3746
  %v3748 = vsub.f32 1.5, %v3747
  %v3749 = vmul.f32 %v3744, %v3748
  %vm3750 = vweird.f32 %v3702
  %vm3751 = vweird.f32 %v3744
  %vm3752 = vmor %vm3750, %vm3751
  %v3753 = vsel %vm3752, %v3744, %v3749
  %v3754 = vrsqrt.pop %v3703
  %v3755 = vmul.f32 %v3754, %v3703
  %v3756 = vmul.f32 %v3755, %v3754
  %v3757 = vmul.f32 0.5, %v3756
  %v3758 = vsub.f32 1.5, %v3757
  %v3759 = vmul.f32 %v3754, %v3758
  %vm3760 = vweird.f32 %v3703
  %vm3761 = vweird.f32 %v3754
  %vm3762 = vmor %vm3760, %vm3761
  %v3763 = vsel %vm3762, %v3754, %v3759
  %v3764 = vmul.f32 %v3662, %v3713
  %v3765 = vmul.f32 %v3663, %v3723
  %v3766 = vmul.f32 %v3664, %v3733
  %v3767 = vmul.f32 %v3665, %v3743
  %v3768 = vmul.f32 %v3666, %v3753
  %v3769 = vmul.f32 %v3667, %v3763
  %v3770 = vld [vmem:[%s49] sm:$0x1]
  %v3772 = vperm.slane %v3770, 0
  %v3774 = vmul.f32 %v3764, %v3772
  %v3775 = vmul.f32 %v3765, %v3772
  %v3776 = vmul.f32 %v3766, %v3772
  %v3777 = vmul.f32 %v3767, %v3772
  %v3778 = vmul.f32 %v3768, %v3772
  %v3779 = vmul.f32 %v3769, %v3772
  %v3780 = vld [vmem:[%s51] sm:$0x1]
  %v3782 = vperm.slane %v3780, 0
  %v3784 = vadd.f32 %v3774, %v3782
  %v3785 = vadd.f32 %v3775, %v3782
  %v3786 = vadd.f32 %v3776, %v3782
  %v3787 = vadd.f32 %v3777, %v3782
  %v3788 = vadd.f32 %v3778, %v3782
  %v3789 = vadd.f32 %v3779, %v3782
  %v3790 = vpack.c.bf16 %v3785, %v3784
  %v3791 = vpack.c.bf16 %v3787, %v3786
  %v3792 = vpack.c.bf16 %v3789, %v3788
  %v3793 = vld [vmem:[%s53] sm:$0xff]
  %v3794 = vld [vmem:[%s53 + $0x8] sm:$0xff]
  %v3795 = vld [vmem:[%s53 + $0x10] sm:$0xff]
  %v3796 = vld [vmem:[%s53 + $0x18] sm:$0xff]
  %v3797 = vld [vmem:[%s53 + $0x20] sm:$0xff]
  %v3798 = vld [vmem:[%s53 + $0x28] sm:$0xff]
  %v3799 = vld [vmem:[%s53 + $0x30] sm:$0xff]
  %v3800 = vld [vmem:[%s53 + $0x38] sm:$0xff]
  %v3801 = vld [vmem:[%s53 + $0x40] sm:$0xff]
  %v3802 = vld [vmem:[%s53 + $0x48] sm:$0xff]
  %v3803 = vld [vmem:[%s53 + $0x50] sm:$0xff]
  %v3804 = vld [vmem:[%s53 + $0x58] sm:$0xff]
  %v3805 = vld [vmem:[%s53 + $0x60] sm:$0xff]
  %v3806 = vld [vmem:[%s53 + $0x68] sm:$0xff]
  %v3807 = vld [vmem:[%s53 + $0x70] sm:$0xff]
  %v3808 = vld [vmem:[%s53 + $0x78] sm:$0xff]
  %v3809 = vld [vmem:[%s53 + $0x80] sm:$0xff]
  %v3810 = vld [vmem:[%s53 + $0x88] sm:$0xff]
  %v3811 = vld [vmem:[%s53 + $0x90] sm:$0xff]
  %v3812 = vld [vmem:[%s53 + $0x98] sm:$0xff]
  %v3813 = vld [vmem:[%s53 + $0xa0] sm:$0xff]
  %v3814 = vld [vmem:[%s53 + $0xa8] sm:$0xff]
  %v3815 = vld [vmem:[%s53 + $0xb0] sm:$0xff]
  %v3816 = vld [vmem:[%s53 + $0xb8] sm:$0xff]
  %v3817 = vld [vmem:[%s53 + $0xc0] sm:$0xff]
  %v3818 = vld [vmem:[%s53 + $0xc8] sm:$0xff]
  %v3819 = vld [vmem:[%s53 + $0xd0] sm:$0xff]
  %v3820 = vld [vmem:[%s53 + $0xd8] sm:$0xff]
  %v3821 = vld [vmem:[%s53 + $0xe0] sm:$0xff]
  %v3822 = vld [vmem:[%s53 + $0xe8] sm:$0xff]
  %v3823 = vld [vmem:[%s53 + $0xf0] sm:$0xff]
  %v3824 = vld [vmem:[%s53 + $0xf8] sm:$0xff]
  %v3825 = vld [vmem:[%s55] sm:$0xff]
  %v3826 = vld [vmem:[%s55 + $0x8] sm:$0xff]
  %v3829 = vperm.slane %v3825, 0
  %v3830 = vperm.slane %v3825, 1
  %v3831 = vperm.slane %v3825, 2
  %v3832 = vperm.slane %v3825, 3
  %v3833 = vperm.slane %v3825, 4
  %v3834 = vperm.slane %v3825, 5
  %v3835 = vperm.slane %v3825, 6
  %v3836 = vperm.slane %v3825, 7
  %v3837 = vperm.slane %v3826, 0
  %v3838 = vperm.slane %v3826, 1
  %v3839 = vperm.slane %v3826, 2
  %v3840 = vperm.slane %v3826, 3
  %v3841 = vperm.slane %v3826, 4
  %v3842 = vperm.slane %v3826, 5
  %v3843 = vperm.slane %v3826, 6
  %v3844 = vperm.slane %v3826, 7
  %v3893 = vunpack.c.l.b16 %v3793
  %v3894 = vunpack.c.h.b16 %v3793
  %v3895 = vunpack.c.l.b16 %v3794
  %v3896 = vunpack.c.h.b16 %v3794
  %v3897 = vunpack.c.l.b16 %v3795
  %v3898 = vunpack.c.h.b16 %v3795
  %v3899 = vunpack.c.l.b16 %v3796
  %v3900 = vunpack.c.h.b16 %v3796
  %v3901 = vunpack.c.l.b16 %v3797
  %v3902 = vunpack.c.h.b16 %v3797
  %v3903 = vunpack.c.l.b16 %v3798
  %v3904 = vunpack.c.h.b16 %v3798
  %v3905 = vunpack.c.l.b16 %v3799
  %v3906 = vunpack.c.h.b16 %v3799
  %v3907 = vunpack.c.l.b16 %v3800
  %v3908 = vunpack.c.h.b16 %v3800
  %v3909 = vunpack.c.l.b16 %v3801
  %v3910 = vunpack.c.h.b16 %v3801
  %v3911 = vunpack.c.l.b16 %v3802
  %v3912 = vunpack.c.h.b16 %v3802
  %v3913 = vunpack.c.l.b16 %v3803
  %v3914 = vunpack.c.h.b16 %v3803
  %v3915 = vunpack.c.l.b16 %v3804
  %v3916 = vunpack.c.h.b16 %v3804
  %v3917 = vunpack.c.l.b16 %v3805
  %v3918 = vunpack.c.h.b16 %v3805
  %v3919 = vunpack.c.l.b16 %v3806
  %v3920 = vunpack.c.h.b16 %v3806
  %v3921 = vunpack.c.l.b16 %v3807
  %v3922 = vunpack.c.h.b16 %v3807
  %v3923 = vunpack.c.l.b16 %v3808
  %v3924 = vunpack.c.h.b16 %v3808
  %v3925 = vunpack.c.l.b16 %v3809
  %v3926 = vunpack.c.h.b16 %v3809
  %v3927 = vunpack.c.l.b16 %v3810
  %v3928 = vunpack.c.h.b16 %v3810
  %v3929 = vunpack.c.l.b16 %v3811
  %v3930 = vunpack.c.h.b16 %v3811
  %v3931 = vunpack.c.l.b16 %v3812
  %v3932 = vunpack.c.h.b16 %v3812
  %v3933 = vunpack.c.l.b16 %v3813
  %v3934 = vunpack.c.h.b16 %v3813
  %v3935 = vunpack.c.l.b16 %v3814
  %v3936 = vunpack.c.h.b16 %v3814
  %v3937 = vunpack.c.l.b16 %v3815
  %v3938 = vunpack.c.h.b16 %v3815
  %v3939 = vunpack.c.l.b16 %v3816
  %v3940 = vunpack.c.h.b16 %v3816
  %v3941 = vunpack.c.l.b16 %v3817
  %v3942 = vunpack.c.h.b16 %v3817
  %v3943 = vunpack.c.l.b16 %v3818
  %v3944 = vunpack.c.h.b16 %v3818
  %v3945 = vunpack.c.l.b16 %v3819
  %v3946 = vunpack.c.h.b16 %v3819
  %v3947 = vunpack.c.l.b16 %v3820
  %v3948 = vunpack.c.h.b16 %v3820
  %v3949 = vunpack.c.l.b16 %v3821
  %v3950 = vunpack.c.h.b16 %v3821
  %v3951 = vunpack.c.l.b16 %v3822
  %v3952 = vunpack.c.h.b16 %v3822
  %v3953 = vunpack.c.l.b16 %v3823
  %v3954 = vunpack.c.h.b16 %v3823
  %v3955 = vunpack.c.l.b16 %v3824
  %v3956 = vunpack.c.h.b16 %v3824
  %v3957 = vpack.c.b16 %v3909, %v3893
  %v3958 = vpack.c.b16 %v3910, %v3894
  %v3959 = vpack.c.b16 %v3911, %v3895
  %v3960 = vpack.c.b16 %v3912, %v3896
  %v3961 = vpack.c.b16 %v3913, %v3897
  %v3962 = vpack.c.b16 %v3914, %v3898
  %v3963 = vpack.c.b16 %v3915, %v3899
  %v3964 = vpack.c.b16 %v3916, %v3900
  %v3965 = vpack.c.b16 %v3917, %v3901
  %v3966 = vpack.c.b16 %v3918, %v3902
  %v3967 = vpack.c.b16 %v3919, %v3903
  %v3968 = vpack.c.b16 %v3920, %v3904
  %v3969 = vpack.c.b16 %v3921, %v3905
  %v3970 = vpack.c.b16 %v3922, %v3906
  %v3971 = vpack.c.b16 %v3923, %v3907
  %v3972 = vpack.c.b16 %v3924, %v3908
  %v3973 = vpack.c.b16 %v3941, %v3925
  %v3974 = vpack.c.b16 %v3942, %v3926
  %v3975 = vpack.c.b16 %v3943, %v3927
  %v3976 = vpack.c.b16 %v3944, %v3928
  %v3977 = vpack.c.b16 %v3945, %v3929
  %v3978 = vpack.c.b16 %v3946, %v3930
  %v3979 = vpack.c.b16 %v3947, %v3931
  %v3980 = vpack.c.b16 %v3948, %v3932
  %v3981 = vpack.c.b16 %v3949, %v3933
  %v3982 = vpack.c.b16 %v3950, %v3934
  %v3983 = vpack.c.b16 %v3951, %v3935
  %v3984 = vpack.c.b16 %v3952, %v3936
  %v3985 = vpack.c.b16 %v3953, %v3937
  %v3986 = vpack.c.b16 %v3954, %v3938
  %v3987 = vpack.c.b16 %v3955, %v3939
  %v3988 = vpack.c.b16 %v3956, %v3940
  %v4022 = vsel %vm188, %v3790, 0
  %v4025 = vsel %vm188, %v3791, 0
  %v4028 = vsel %vm188, %v3792, 0
  %4030 = vmatpush.bf16.msra.mxu0 0
  %4031 = vmatpush.bf16.msra.mxu0 0
  %4032 = vmatpush.bf16.msra.mxu0 0
  %4033 = vmatpush.bf16.msra.mxu0 0
  %4034 = vmatpush.bf16.msra.mxu0 0
  %4035 = vmatpush.bf16.msra.mxu0 0
  %4036 = vmatpush.bf16.msra.mxu0 %v3973
  %4037 = vmatpush.bf16.msra.mxu0 %v3957
  %4038 = vmatmul.bf16.gmra.mxu0 %v4022
  %v4039 = vpop.f32.mrf.mxu0
  %v4040 = vadd.f32 %v3829, %v4039
  %v4041 = vpop.f32.mrf.mxu0
  %v4042 = vadd.f32 %v3829, %v4041
  %4043 = vmatmul.bf16.gmra.mxu0 %v4025
  %v4044 = vpop.f32.mrf.mxu0
  %v4045 = vadd.f32 %v3829, %v4044
  %v4046 = vpop.f32.mrf.mxu0
  %v4047 = vadd.f32 %v3829, %v4046
  %4048 = vmatmul.bf16.gmra.mxu0 %v4028
  %v4049 = vpop.f32.mrf.mxu0
  %v4050 = vadd.f32 %v3829, %v4049
  %v4051 = vpop.f32.mrf.mxu0
  %v4052 = vadd.f32 %v3829, %v4051
  %4053 = vdwg.mxu0
  %4054 = vmatpush.bf16.msra.mxu0 0
  %4055 = vmatpush.bf16.msra.mxu0 0
  %4056 = vmatpush.bf16.msra.mxu0 0
  %4057 = vmatpush.bf16.msra.mxu0 0
  %4058 = vmatpush.bf16.msra.mxu0 0
  %4059 = vmatpush.bf16.msra.mxu0 0
  %4060 = vmatpush.bf16.msra.mxu0 %v3974
  %4061 = vmatpush.bf16.msra.mxu0 %v3958
  %4062 = vmatmul.bf16.gmra.mxu0 %v4022
  %v4063 = vpop.f32.mrf.mxu0
  %v4064 = vadd.f32 %v3830, %v4063
  %v4065 = vpop.f32.mrf.mxu0
  %v4066 = vadd.f32 %v3830, %v4065
  %4067 = vmatmul.bf16.gmra.mxu0 %v4025
  %v4068 = vpop.f32.mrf.mxu0
  %v4069 = vadd.f32 %v3830, %v4068
  %v4070 = vpop.f32.mrf.mxu0
  %v4071 = vadd.f32 %v3830, %v4070
  %4072 = vmatmul.bf16.gmra.mxu0 %v4028
  %v4073 = vpop.f32.mrf.mxu0
  %v4074 = vadd.f32 %v3830, %v4073
  %v4075 = vpop.f32.mrf.mxu0
  %v4076 = vadd.f32 %v3830, %v4075
  %4077 = vdwg.mxu0
  %4078 = vmatpush.bf16.msra.mxu0 0
  %4079 = vmatpush.bf16.msra.mxu0 0
  %4080 = vmatpush.bf16.msra.mxu0 0
  %4081 = vmatpush.bf16.msra.mxu0 0
  %4082 = vmatpush.bf16.msra.mxu0 0
  %4083 = vmatpush.bf16.msra.mxu0 0
  %4084 = vmatpush.bf16.msra.mxu0 %v3975
  %4085 = vmatpush.bf16.msra.mxu0 %v3959
  %4086 = vmatmul.bf16.gmra.mxu0 %v4022
  %v4087 = vpop.f32.mrf.mxu0
  %v4088 = vadd.f32 %v3831, %v4087
  %v4089 = vpop.f32.mrf.mxu0
  %v4090 = vadd.f32 %v3831, %v4089
  %4091 = vmatmul.bf16.gmra.mxu0 %v4025
  %v4092 = vpop.f32.mrf.mxu0
  %v4093 = vadd.f32 %v3831, %v4092
  %v4094 = vpop.f32.mrf.mxu0
  %v4095 = vadd.f32 %v3831, %v4094
  %4096 = vmatmul.bf16.gmra.mxu0 %v4028
  %v4097 = vpop.f32.mrf.mxu0
  %v4098 = vadd.f32 %v3831, %v4097
  %v4099 = vpop.f32.mrf.mxu0
  %v4100 = vadd.f32 %v3831, %v4099
  %4101 = vdwg.mxu0
  %4102 = vmatpush.bf16.msra.mxu0 0
  %4103 = vmatpush.bf16.msra.mxu0 0
  %4104 = vmatpush.bf16.msra.mxu0 0
  %4105 = vmatpush.bf16.msra.mxu0 0
  %4106 = vmatpush.bf16.msra.mxu0 0
  %4107 = vmatpush.bf16.msra.mxu0 0
  %4108 = vmatpush.bf16.msra.mxu0 %v3976
  %4109 = vmatpush.bf16.msra.mxu0 %v3960
  %4110 = vmatmul.bf16.gmra.mxu0 %v4022
  %v4111 = vpop.f32.mrf.mxu0
  %v4112 = vadd.f32 %v3832, %v4111
  %v4113 = vpop.f32.mrf.mxu0
  %v4114 = vadd.f32 %v3832, %v4113
  %4115 = vmatmul.bf16.gmra.mxu0 %v4025
  %v4116 = vpop.f32.mrf.mxu0
  %v4117 = vadd.f32 %v3832, %v4116
  %v4118 = vpop.f32.mrf.mxu0
  %v4119 = vadd.f32 %v3832, %v4118
  %4120 = vmatmul.bf16.gmra.mxu0 %v4028
  %v4121 = vpop.f32.mrf.mxu0
  %v4122 = vadd.f32 %v3832, %v4121
  %v4123 = vpop.f32.mrf.mxu0
  %v4124 = vadd.f32 %v3832, %v4123
  %4125 = vdwg.mxu0
  %4126 = vmatpush.bf16.msra.mxu0 0
  %4127 = vmatpush.bf16.msra.mxu0 0
  %4128 = vmatpush.bf16.msra.mxu0 0
  %4129 = vmatpush.bf16.msra.mxu0 0
  %4130 = vmatpush.bf16.msra.mxu0 0
  %4131 = vmatpush.bf16.msra.mxu0 0
  %4132 = vmatpush.bf16.msra.mxu0 %v3977
  %4133 = vmatpush.bf16.msra.mxu0 %v3961
  %4134 = vmatmul.bf16.gmra.mxu0 %v4022
  %v4135 = vpop.f32.mrf.mxu0
  %v4136 = vadd.f32 %v3833, %v4135
  %v4137 = vpop.f32.mrf.mxu0
  %v4138 = vadd.f32 %v3833, %v4137
  %4139 = vmatmul.bf16.gmra.mxu0 %v4025
  %v4140 = vpop.f32.mrf.mxu0
  %v4141 = vadd.f32 %v3833, %v4140
  %v4142 = vpop.f32.mrf.mxu0
  %v4143 = vadd.f32 %v3833, %v4142
  %4144 = vmatmul.bf16.gmra.mxu0 %v4028
  %v4145 = vpop.f32.mrf.mxu0
  %v4146 = vadd.f32 %v3833, %v4145
  %v4147 = vpop.f32.mrf.mxu0
  %v4148 = vadd.f32 %v3833, %v4147
  %4149 = vdwg.mxu0
  %4150 = vmatpush.bf16.msra.mxu0 0
  %4151 = vmatpush.bf16.msra.mxu0 0
  %4152 = vmatpush.bf16.msra.mxu0 0
  %4153 = vmatpush.bf16.msra.mxu0 0
  %4154 = vmatpush.bf16.msra.mxu0 0
  %4155 = vmatpush.bf16.msra.mxu0 0
  %4156 = vmatpush.bf16.msra.mxu0 %v3978
  %4157 = vmatpush.bf16.msra.mxu0 %v3962
  %4158 = vmatmul.bf16.gmra.mxu0 %v4022
  %v4159 = vpop.f32.mrf.mxu0
  %v4160 = vadd.f32 %v3834, %v4159
  %v4161 = vpop.f32.mrf.mxu0
  %v4162 = vadd.f32 %v3834, %v4161
  %4163 = vmatmul.bf16.gmra.mxu0 %v4025
  %v4164 = vpop.f32.mrf.mxu0
  %v4165 = vadd.f32 %v3834, %v4164
  %v4166 = vpop.f32.mrf.mxu0
  %v4167 = vadd.f32 %v3834, %v4166
  %4168 = vmatmul.bf16.gmra.mxu0 %v4028
  %v4169 = vpop.f32.mrf.mxu0
  %v4170 = vadd.f32 %v3834, %v4169
  %v4171 = vpop.f32.mrf.mxu0
  %v4172 = vadd.f32 %v3834, %v4171
  %4173 = vdwg.mxu0
  %4174 = vmatpush.bf16.msra.mxu0 0
  %4175 = vmatpush.bf16.msra.mxu0 0
  %4176 = vmatpush.bf16.msra.mxu0 0
  %4177 = vmatpush.bf16.msra.mxu0 0
  %4178 = vmatpush.bf16.msra.mxu0 0
  %4179 = vmatpush.bf16.msra.mxu0 0
  %4180 = vmatpush.bf16.msra.mxu0 %v3979
  %4181 = vmatpush.bf16.msra.mxu0 %v3963
  %4182 = vmatmul.bf16.gmra.mxu0 %v4022
  %v4183 = vpop.f32.mrf.mxu0
  %v4184 = vadd.f32 %v3835, %v4183
  %v4185 = vpop.f32.mrf.mxu0
  %v4186 = vadd.f32 %v3835, %v4185
  %4187 = vmatmul.bf16.gmra.mxu0 %v4025
  %v4188 = vpop.f32.mrf.mxu0
  %v4189 = vadd.f32 %v3835, %v4188
  %v4190 = vpop.f32.mrf.mxu0
  %v4191 = vadd.f32 %v3835, %v4190
  %4192 = vmatmul.bf16.gmra.mxu0 %v4028
  %v4193 = vpop.f32.mrf.mxu0
  %v4194 = vadd.f32 %v3835, %v4193
  %v4195 = vpop.f32.mrf.mxu0
  %v4196 = vadd.f32 %v3835, %v4195
  %4197 = vdwg.mxu0
  %4198 = vmatpush.bf16.msra.mxu0 0
  %4199 = vmatpush.bf16.msra.mxu0 0
  %4200 = vmatpush.bf16.msra.mxu0 0
  %4201 = vmatpush.bf16.msra.mxu0 0
  %4202 = vmatpush.bf16.msra.mxu0 0
  %4203 = vmatpush.bf16.msra.mxu0 0
  %4204 = vmatpush.bf16.msra.mxu0 %v3980
  %4205 = vmatpush.bf16.msra.mxu0 %v3964
  %4206 = vmatmul.bf16.gmra.mxu0 %v4022
  %v4207 = vpop.f32.mrf.mxu0
  %v4208 = vadd.f32 %v3836, %v4207
  %v4209 = vpop.f32.mrf.mxu0
  %v4210 = vadd.f32 %v3836, %v4209
  %4211 = vmatmul.bf16.gmra.mxu0 %v4025
  %v4212 = vpop.f32.mrf.mxu0
  %v4213 = vadd.f32 %v3836, %v4212
  %v4214 = vpop.f32.mrf.mxu0
  %v4215 = vadd.f32 %v3836, %v4214
  %4216 = vmatmul.bf16.gmra.mxu0 %v4028
  %v4217 = vpop.f32.mrf.mxu0
  %v4218 = vadd.f32 %v3836, %v4217
  %v4219 = vpop.f32.mrf.mxu0
  %v4220 = vadd.f32 %v3836, %v4219
  %4221 = vdwg.mxu0
  %4222 = vmatpush.bf16.msra.mxu0 0
  %4223 = vmatpush.bf16.msra.mxu0 0
  %4224 = vmatpush.bf16.msra.mxu0 0
  %4225 = vmatpush.bf16.msra.mxu0 0
  %4226 = vmatpush.bf16.msra.mxu0 0
  %4227 = vmatpush.bf16.msra.mxu0 0
  %4228 = vmatpush.bf16.msra.mxu0 %v3981
  %4229 = vmatpush.bf16.msra.mxu0 %v3965
  %4230 = vmatmul.bf16.gmra.mxu0 %v4022
  %v4231 = vpop.f32.mrf.mxu0
  %v4232 = vadd.f32 %v3837, %v4231
  %v4233 = vpop.f32.mrf.mxu0
  %v4234 = vadd.f32 %v3837, %v4233
  %4235 = vmatmul.bf16.gmra.mxu0 %v4025
  %v4236 = vpop.f32.mrf.mxu0
  %v4237 = vadd.f32 %v3837, %v4236
  %v4238 = vpop.f32.mrf.mxu0
  %v4239 = vadd.f32 %v3837, %v4238
  %4240 = vmatmul.bf16.gmra.mxu0 %v4028
  %v4241 = vpop.f32.mrf.mxu0
  %v4242 = vadd.f32 %v3837, %v4241
  %v4243 = vpop.f32.mrf.mxu0
  %v4244 = vadd.f32 %v3837, %v4243
  %4245 = vdwg.mxu0
  %4246 = vmatpush.bf16.msra.mxu0 0
  %4247 = vmatpush.bf16.msra.mxu0 0
  %4248 = vmatpush.bf16.msra.mxu0 0
  %4249 = vmatpush.bf16.msra.mxu0 0
  %4250 = vmatpush.bf16.msra.mxu0 0
  %4251 = vmatpush.bf16.msra.mxu0 0
  %4252 = vmatpush.bf16.msra.mxu0 %v3982
  %4253 = vmatpush.bf16.msra.mxu0 %v3966
  %4254 = vmatmul.bf16.gmra.mxu0 %v4022
  %v4255 = vpop.f32.mrf.mxu0
  %v4256 = vadd.f32 %v3838, %v4255
  %v4257 = vpop.f32.mrf.mxu0
  %v4258 = vadd.f32 %v3838, %v4257
  %4259 = vmatmul.bf16.gmra.mxu0 %v4025
  %v4260 = vpop.f32.mrf.mxu0
  %v4261 = vadd.f32 %v3838, %v4260
  %v4262 = vpop.f32.mrf.mxu0
  %v4263 = vadd.f32 %v3838, %v4262
  %4264 = vmatmul.bf16.gmra.mxu0 %v4028
  %v4265 = vpop.f32.mrf.mxu0
  %v4266 = vadd.f32 %v3838, %v4265
  %v4267 = vpop.f32.mrf.mxu0
  %v4268 = vadd.f32 %v3838, %v4267
  %4269 = vdwg.mxu0
  %4270 = vmatpush.bf16.msra.mxu0 0
  %4271 = vmatpush.bf16.msra.mxu0 0
  %4272 = vmatpush.bf16.msra.mxu0 0
  %4273 = vmatpush.bf16.msra.mxu0 0
  %4274 = vmatpush.bf16.msra.mxu0 0
  %4275 = vmatpush.bf16.msra.mxu0 0
  %4276 = vmatpush.bf16.msra.mxu0 %v3983
  %4277 = vmatpush.bf16.msra.mxu0 %v3967
  %4278 = vmatmul.bf16.gmra.mxu0 %v4022
  %v4279 = vpop.f32.mrf.mxu0
  %v4280 = vadd.f32 %v3839, %v4279
  %v4281 = vpop.f32.mrf.mxu0
  %v4282 = vadd.f32 %v3839, %v4281
  %4283 = vmatmul.bf16.gmra.mxu0 %v4025
  %v4284 = vpop.f32.mrf.mxu0
  %v4285 = vadd.f32 %v3839, %v4284
  %v4286 = vpop.f32.mrf.mxu0
  %v4287 = vadd.f32 %v3839, %v4286
  %4288 = vmatmul.bf16.gmra.mxu0 %v4028
  %v4289 = vpop.f32.mrf.mxu0
  %v4290 = vadd.f32 %v3839, %v4289
  %v4291 = vpop.f32.mrf.mxu0
  %v4292 = vadd.f32 %v3839, %v4291
  %4293 = vdwg.mxu0
  %4294 = vmatpush.bf16.msra.mxu0 0
  %4295 = vmatpush.bf16.msra.mxu0 0
  %4296 = vmatpush.bf16.msra.mxu0 0
  %4297 = vmatpush.bf16.msra.mxu0 0
  %4298 = vmatpush.bf16.msra.mxu0 0
  %4299 = vmatpush.bf16.msra.mxu0 0
  %4300 = vmatpush.bf16.msra.mxu0 %v3984
  %4301 = vmatpush.bf16.msra.mxu0 %v3968
  %4302 = vmatmul.bf16.gmra.mxu0 %v4022
  %v4303 = vpop.f32.mrf.mxu0
  %v4304 = vadd.f32 %v3840, %v4303
  %v4305 = vpop.f32.mrf.mxu0
  %v4306 = vadd.f32 %v3840, %v4305
  %4307 = vmatmul.bf16.gmra.mxu0 %v4025
  %v4308 = vpop.f32.mrf.mxu0
  %v4309 = vadd.f32 %v3840, %v4308
  %v4310 = vpop.f32.mrf.mxu0
  %v4311 = vadd.f32 %v3840, %v4310
  %4312 = vmatmul.bf16.gmra.mxu0 %v4028
  %v4313 = vpop.f32.mrf.mxu0
  %v4314 = vadd.f32 %v3840, %v4313
  %v4315 = vpop.f32.mrf.mxu0
  %v4316 = vadd.f32 %v3840, %v4315
  %4317 = vdwg.mxu0
  %4318 = vmatpush.bf16.msra.mxu0 0
  %4319 = vmatpush.bf16.msra.mxu0 0
  %4320 = vmatpush.bf16.msra.mxu0 0
  %4321 = vmatpush.bf16.msra.mxu0 0
  %4322 = vmatpush.bf16.msra.mxu0 0
  %4323 = vmatpush.bf16.msra.mxu0 0
  %4324 = vmatpush.bf16.msra.mxu0 %v3985
  %4325 = vmatpush.bf16.msra.mxu0 %v3969
  %4326 = vmatmul.bf16.gmra.mxu0 %v4022
  %v4327 = vpop.f32.mrf.mxu0
  %v4328 = vadd.f32 %v3841, %v4327
  %v4329 = vpop.f32.mrf.mxu0
  %v4330 = vadd.f32 %v3841, %v4329
  %4331 = vmatmul.bf16.gmra.mxu0 %v4025
  %v4332 = vpop.f32.mrf.mxu0
  %v4333 = vadd.f32 %v3841, %v4332
  %v4334 = vpop.f32.mrf.mxu0
  %v4335 = vadd.f32 %v3841, %v4334
  %4336 = vmatmul.bf16.gmra.mxu0 %v4028
  %v4337 = vpop.f32.mrf.mxu0
  %v4338 = vadd.f32 %v3841, %v4337
  %v4339 = vpop.f32.mrf.mxu0
  %v4340 = vadd.f32 %v3841, %v4339
  %4341 = vdwg.mxu0
  %4342 = vmatpush.bf16.msra.mxu0 0
  %4343 = vmatpush.bf16.msra.mxu0 0
  %4344 = vmatpush.bf16.msra.mxu0 0
  %4345 = vmatpush.bf16.msra.mxu0 0
  %4346 = vmatpush.bf16.msra.mxu0 0
  %4347 = vmatpush.bf16.msra.mxu0 0
  %4348 = vmatpush.bf16.msra.mxu0 %v3986
  %4349 = vmatpush.bf16.msra.mxu0 %v3970
  %4350 = vmatmul.bf16.gmra.mxu0 %v4022
  %v4351 = vpop.f32.mrf.mxu0
  %v4352 = vadd.f32 %v3842, %v4351
  %v4353 = vpop.f32.mrf.mxu0
  %v4354 = vadd.f32 %v3842, %v4353
  %4355 = vmatmul.bf16.gmra.mxu0 %v4025
  %v4356 = vpop.f32.mrf.mxu0
  %v4357 = vadd.f32 %v3842, %v4356
  %v4358 = vpop.f32.mrf.mxu0
  %v4359 = vadd.f32 %v3842, %v4358
  %4360 = vmatmul.bf16.gmra.mxu0 %v4028
  %v4361 = vpop.f32.mrf.mxu0
  %v4362 = vadd.f32 %v3842, %v4361
  %v4363 = vpop.f32.mrf.mxu0
  %v4364 = vadd.f32 %v3842, %v4363
  %4365 = vdwg.mxu0
  %4366 = vmatpush.bf16.msra.mxu0 0
  %4367 = vmatpush.bf16.msra.mxu0 0
  %4368 = vmatpush.bf16.msra.mxu0 0
  %4369 = vmatpush.bf16.msra.mxu0 0
  %4370 = vmatpush.bf16.msra.mxu0 0
  %4371 = vmatpush.bf16.msra.mxu0 0
  %4372 = vmatpush.bf16.msra.mxu0 %v3987
  %4373 = vmatpush.bf16.msra.mxu0 %v3971
  %4374 = vmatmul.bf16.gmra.mxu0 %v4022
  %v4375 = vpop.f32.mrf.mxu0
  %v4376 = vadd.f32 %v3843, %v4375
  %v4377 = vpop.f32.mrf.mxu0
  %v4378 = vadd.f32 %v3843, %v4377
  %4379 = vmatmul.bf16.gmra.mxu0 %v4025
  %v4380 = vpop.f32.mrf.mxu0
  %v4381 = vadd.f32 %v3843, %v4380
  %v4382 = vpop.f32.mrf.mxu0
  %v4383 = vadd.f32 %v3843, %v4382
  %4384 = vmatmul.bf16.gmra.mxu0 %v4028
  %v4385 = vpop.f32.mrf.mxu0
  %v4386 = vadd.f32 %v3843, %v4385
  %v4387 = vpop.f32.mrf.mxu0
  %v4388 = vadd.f32 %v3843, %v4387
  %4389 = vdwg.mxu0
  %4390 = vmatpush.bf16.msra.mxu0 0
  %4391 = vmatpush.bf16.msra.mxu0 0
  %4392 = vmatpush.bf16.msra.mxu0 0
  %4393 = vmatpush.bf16.msra.mxu0 0
  %4394 = vmatpush.bf16.msra.mxu0 0
  %4395 = vmatpush.bf16.msra.mxu0 0
  %4396 = vmatpush.bf16.msra.mxu0 %v3988
  %4397 = vmatpush.bf16.msra.mxu0 %v3972
  %4398 = vmatmul.bf16.gmra.mxu0 %v4022
  %v4399 = vpop.f32.mrf.mxu0
  %v4400 = vadd.f32 %v3844, %v4399
  %v4401 = vpop.f32.mrf.mxu0
  %v4402 = vadd.f32 %v3844, %v4401
  %4403 = vmatmul.bf16.gmra.mxu0 %v4025
  %v4404 = vpop.f32.mrf.mxu0
  %v4405 = vadd.f32 %v3844, %v4404
  %v4406 = vpop.f32.mrf.mxu0
  %v4407 = vadd.f32 %v3844, %v4406
  %4408 = vmatmul.bf16.gmra.mxu0 %v4028
  %v4409 = vpop.f32.mrf.mxu0
  %v4410 = vadd.f32 %v3844, %v4409
  %v4411 = vpop.f32.mrf.mxu0
  %v4412 = vadd.f32 %v3844, %v4411
  %4413 = vdwg.mxu0
  %v4414 = vmax.f32 %v4040, 0.0
  %v4415 = vmax.f32 %v4064, 0.0
  %v4416 = vmax.f32 %v4088, 0.0
  %v4417 = vmax.f32 %v4112, 0.0
  %v4418 = vmax.f32 %v4136, 0.0
  %v4419 = vmax.f32 %v4160, 0.0
  %v4420 = vmax.f32 %v4184, 0.0
  %v4421 = vmax.f32 %v4208, 0.0
  %v4422 = vmax.f32 %v4232, 0.0
  %v4423 = vmax.f32 %v4256, 0.0
  %v4424 = vmax.f32 %v4280, 0.0
  %v4425 = vmax.f32 %v4304, 0.0
  %v4426 = vmax.f32 %v4328, 0.0
  %v4427 = vmax.f32 %v4352, 0.0
  %v4428 = vmax.f32 %v4376, 0.0
  %v4429 = vmax.f32 %v4400, 0.0
  %v4430 = vmax.f32 %v4042, 0.0
  %v4431 = vmax.f32 %v4066, 0.0
  %v4432 = vmax.f32 %v4090, 0.0
  %v4433 = vmax.f32 %v4114, 0.0
  %v4434 = vmax.f32 %v4138, 0.0
  %v4435 = vmax.f32 %v4162, 0.0
  %v4436 = vmax.f32 %v4186, 0.0
  %v4437 = vmax.f32 %v4210, 0.0
  %v4438 = vmax.f32 %v4234, 0.0
  %v4439 = vmax.f32 %v4258, 0.0
  %v4440 = vmax.f32 %v4282, 0.0
  %v4441 = vmax.f32 %v4306, 0.0
  %v4442 = vmax.f32 %v4330, 0.0
  %v4443 = vmax.f32 %v4354, 0.0
  %v4444 = vmax.f32 %v4378, 0.0
  %v4445 = vmax.f32 %v4402, 0.0
  %v4446 = vmax.f32 %v4045, 0.0
  %v4447 = vmax.f32 %v4069, 0.0
  %v4448 = vmax.f32 %v4093, 0.0
  %v4449 = vmax.f32 %v4117, 0.0
  %v4450 = vmax.f32 %v4141, 0.0
  %v4451 = vmax.f32 %v4165, 0.0
  %v4452 = vmax.f32 %v4189, 0.0
  %v4453 = vmax.f32 %v4213, 0.0
  %v4454 = vmax.f32 %v4237, 0.0
  %v4455 = vmax.f32 %v4261, 0.0
  %v4456 = vmax.f32 %v4285, 0.0
  %v4457 = vmax.f32 %v4309, 0.0
  %v4458 = vmax.f32 %v4333, 0.0
  %v4459 = vmax.f32 %v4357, 0.0
  %v4460 = vmax.f32 %v4381, 0.0
  %v4461 = vmax.f32 %v4405, 0.0
  %v4462 = vmax.f32 %v4047, 0.0
  %v4463 = vmax.f32 %v4071, 0.0
  %v4464 = vmax.f32 %v4095, 0.0
  %v4465 = vmax.f32 %v4119, 0.0
  %v4466 = vmax.f32 %v4143, 0.0
  %v4467 = vmax.f32 %v4167, 0.0
  %v4468 = vmax.f32 %v4191, 0.0
  %v4469 = vmax.f32 %v4215, 0.0
  %v4470 = vmax.f32 %v4239, 0.0
  %v4471 = vmax.f32 %v4263, 0.0
  %v4472 = vmax.f32 %v4287, 0.0
  %v4473 = vmax.f32 %v4311, 0.0
  %v4474 = vmax.f32 %v4335, 0.0
  %v4475 = vmax.f32 %v4359, 0.0
  %v4476 = vmax.f32 %v4383, 0.0
  %v4477 = vmax.f32 %v4407, 0.0
  %v4478 = vmax.f32 %v4050, 0.0
  %v4479 = vmax.f32 %v4074, 0.0
  %v4480 = vmax.f32 %v4098, 0.0
  %v4481 = vmax.f32 %v4122, 0.0
  %v4482 = vmax.f32 %v4146, 0.0
  %v4483 = vmax.f32 %v4170, 0.0
  %v4484 = vmax.f32 %v4194, 0.0
  %v4485 = vmax.f32 %v4218, 0.0
  %v4486 = vmax.f32 %v4242, 0.0
  %v4487 = vmax.f32 %v4266, 0.0
  %v4488 = vmax.f32 %v4290, 0.0
  %v4489 = vmax.f32 %v4314, 0.0
  %v4490 = vmax.f32 %v4338, 0.0
  %v4491 = vmax.f32 %v4362, 0.0
  %v4492 = vmax.f32 %v4386, 0.0
  %v4493 = vmax.f32 %v4410, 0.0
  %v4494 = vmax.f32 %v4052, 0.0
  %v4495 = vmax.f32 %v4076, 0.0
  %v4496 = vmax.f32 %v4100, 0.0
  %v4497 = vmax.f32 %v4124, 0.0
  %v4498 = vmax.f32 %v4148, 0.0
  %v4499 = vmax.f32 %v4172, 0.0
  %v4500 = vmax.f32 %v4196, 0.0
  %v4501 = vmax.f32 %v4220, 0.0
  %v4502 = vmax.f32 %v4244, 0.0
  %v4503 = vmax.f32 %v4268, 0.0
  %v4504 = vmax.f32 %v4292, 0.0
  %v4505 = vmax.f32 %v4316, 0.0
  %v4506 = vmax.f32 %v4340, 0.0
  %v4507 = vmax.f32 %v4364, 0.0
  %v4508 = vmax.f32 %v4388, 0.0
  %v4509 = vmax.f32 %v4412, 0.0
  %v4510 = vpack.c.bf16 %v4430, %v4414
  %v4511 = vpack.c.bf16 %v4431, %v4415
  %v4512 = vpack.c.bf16 %v4432, %v4416
  %v4513 = vpack.c.bf16 %v4433, %v4417
  %v4514 = vpack.c.bf16 %v4434, %v4418
  %v4515 = vpack.c.bf16 %v4435, %v4419
  %v4516 = vpack.c.bf16 %v4436, %v4420
  %v4517 = vpack.c.bf16 %v4437, %v4421
  %v4518 = vpack.c.bf16 %v4438, %v4422
  %v4519 = vpack.c.bf16 %v4439, %v4423
  %v4520 = vpack.c.bf16 %v4440, %v4424
  %v4521 = vpack.c.bf16 %v4441, %v4425
  %v4522 = vpack.c.bf16 %v4442, %v4426
  %v4523 = vpack.c.bf16 %v4443, %v4427
  %v4524 = vpack.c.bf16 %v4444, %v4428
  %v4525 = vpack.c.bf16 %v4445, %v4429
  %v4526 = vpack.c.bf16 %v4462, %v4446
  %v4527 = vpack.c.bf16 %v4463, %v4447
  %v4528 = vpack.c.bf16 %v4464, %v4448
  %v4529 = vpack.c.bf16 %v4465, %v4449
  %v4530 = vpack.c.bf16 %v4466, %v4450
  %v4531 = vpack.c.bf16 %v4467, %v4451
  %v4532 = vpack.c.bf16 %v4468, %v4452
  %v4533 = vpack.c.bf16 %v4469, %v4453
  %v4534 = vpack.c.bf16 %v4470, %v4454
  %v4535 = vpack.c.bf16 %v4471, %v4455
  %v4536 = vpack.c.bf16 %v4472, %v4456
  %v4537 = vpack.c.bf16 %v4473, %v4457
  %v4538 = vpack.c.bf16 %v4474, %v4458
  %v4539 = vpack.c.bf16 %v4475, %v4459
  %v4540 = vpack.c.bf16 %v4476, %v4460
  %v4541 = vpack.c.bf16 %v4477, %v4461
  %v4542 = vpack.c.bf16 %v4494, %v4478
  %v4543 = vpack.c.bf16 %v4495, %v4479
  %v4544 = vpack.c.bf16 %v4496, %v4480
  %v4545 = vpack.c.bf16 %v4497, %v4481
  %v4546 = vpack.c.bf16 %v4498, %v4482
  %v4547 = vpack.c.bf16 %v4499, %v4483
  %v4548 = vpack.c.bf16 %v4500, %v4484
  %v4549 = vpack.c.bf16 %v4501, %v4485
  %v4550 = vpack.c.bf16 %v4502, %v4486
  %v4551 = vpack.c.bf16 %v4503, %v4487
  %v4552 = vpack.c.bf16 %v4504, %v4488
  %v4553 = vpack.c.bf16 %v4505, %v4489
  %v4554 = vpack.c.bf16 %v4506, %v4490
  %v4555 = vpack.c.bf16 %v4507, %v4491
  %v4556 = vpack.c.bf16 %v4508, %v4492
  %v4557 = vpack.c.bf16 %v4509, %v4493
  %v4558 = vld [vmem:[%s57] sm:$0xf]
  %v4559 = vld [vmem:[%s57 + $0x4] sm:$0xf]
  %v4560 = vld [vmem:[%s57 + $0x8] sm:$0xf]
  %v4561 = vld [vmem:[%s57 + $0xc] sm:$0xf]
  %v4562 = vld [vmem:[%s57 + $0x10] sm:$0xf]
  %v4563 = vld [vmem:[%s57 + $0x14] sm:$0xf]
  %v4564 = vld [vmem:[%s57 + $0x18] sm:$0xf]
  %v4565 = vld [vmem:[%s57 + $0x1c] sm:$0xf]
  %v4566 = vld [vmem:[%s57 + $0x20] sm:$0xf]
  %v4567 = vld [vmem:[%s57 + $0x24] sm:$0xf]
  %v4568 = vld [vmem:[%s57 + $0x28] sm:$0xf]
  %v4569 = vld [vmem:[%s57 + $0x2c] sm:$0xf]
  %v4570 = vld [vmem:[%s57 + $0x30] sm:$0xf]
  %v4571 = vld [vmem:[%s57 + $0x34] sm:$0xf]
  %v4572 = vld [vmem:[%s57 + $0x38] sm:$0xf]
  %v4573 = vld [vmem:[%s57 + $0x3c] sm:$0xf]
  %v4574 = vld [vmem:[%s57 + $0x40] sm:$0xf]
  %v4575 = vld [vmem:[%s57 + $0x44] sm:$0xf]
  %v4576 = vld [vmem:[%s57 + $0x48] sm:$0xf]
  %v4577 = vld [vmem:[%s57 + $0x4c] sm:$0xf]
  %v4578 = vld [vmem:[%s57 + $0x50] sm:$0xf]
  %v4579 = vld [vmem:[%s57 + $0x54] sm:$0xf]
  %v4580 = vld [vmem:[%s57 + $0x58] sm:$0xf]
  %v4581 = vld [vmem:[%s57 + $0x5c] sm:$0xf]
  %v4582 = vld [vmem:[%s57 + $0x60] sm:$0xf]
  %v4583 = vld [vmem:[%s57 + $0x64] sm:$0xf]
  %v4584 = vld [vmem:[%s57 + $0x68] sm:$0xf]
  %v4585 = vld [vmem:[%s57 + $0x6c] sm:$0xf]
  %v4586 = vld [vmem:[%s57 + $0x70] sm:$0xf]
  %v4587 = vld [vmem:[%s57 + $0x74] sm:$0xf]
  %v4588 = vld [vmem:[%s57 + $0x78] sm:$0xf]
  %v4589 = vld [vmem:[%s57 + $0x7c] sm:$0xf]
  %v4590 = vld [vmem:[%s57 + $0x80] sm:$0xf]
  %v4591 = vld [vmem:[%s57 + $0x84] sm:$0xf]
  %v4592 = vld [vmem:[%s57 + $0x88] sm:$0xf]
  %v4593 = vld [vmem:[%s57 + $0x8c] sm:$0xf]
  %v4594 = vld [vmem:[%s57 + $0x90] sm:$0xf]
  %v4595 = vld [vmem:[%s57 + $0x94] sm:$0xf]
  %v4596 = vld [vmem:[%s57 + $0x98] sm:$0xf]
  %v4597 = vld [vmem:[%s57 + $0x9c] sm:$0xf]
  %v4598 = vld [vmem:[%s57 + $0xa0] sm:$0xf]
  %v4599 = vld [vmem:[%s57 + $0xa4] sm:$0xf]
  %v4600 = vld [vmem:[%s57 + $0xa8] sm:$0xf]
  %v4601 = vld [vmem:[%s57 + $0xac] sm:$0xf]
  %v4602 = vld [vmem:[%s57 + $0xb0] sm:$0xf]
  %v4603 = vld [vmem:[%s57 + $0xb4] sm:$0xf]
  %v4604 = vld [vmem:[%s57 + $0xb8] sm:$0xf]
  %v4605 = vld [vmem:[%s57 + $0xbc] sm:$0xf]
  %v4606 = vld [vmem:[%s57 + $0xc0] sm:$0xf]
  %v4607 = vld [vmem:[%s57 + $0xc4] sm:$0xf]
  %v4608 = vld [vmem:[%s57 + $0xc8] sm:$0xf]
  %v4609 = vld [vmem:[%s57 + $0xcc] sm:$0xf]
  %v4610 = vld [vmem:[%s57 + $0xd0] sm:$0xf]
  %v4611 = vld [vmem:[%s57 + $0xd4] sm:$0xf]
  %v4612 = vld [vmem:[%s57 + $0xd8] sm:$0xf]
  %v4613 = vld [vmem:[%s57 + $0xdc] sm:$0xf]
  %v4614 = vld [vmem:[%s57 + $0xe0] sm:$0xf]
  %v4615 = vld [vmem:[%s57 + $0xe4] sm:$0xf]
  %v4616 = vld [vmem:[%s57 + $0xe8] sm:$0xf]
  %v4617 = vld [vmem:[%s57 + $0xec] sm:$0xf]
  %v4618 = vld [vmem:[%s57 + $0xf0] sm:$0xf]
  %v4619 = vld [vmem:[%s57 + $0xf4] sm:$0xf]
  %v4620 = vld [vmem:[%s57 + $0xf8] sm:$0xf]
  %v4621 = vld [vmem:[%s57 + $0xfc] sm:$0xf]
  %v4622 = vld [vmem:[%s57 + $0x100] sm:$0xf]
  %v4623 = vld [vmem:[%s57 + $0x104] sm:$0xf]
  %v4624 = vld [vmem:[%s57 + $0x108] sm:$0xf]
  %v4625 = vld [vmem:[%s57 + $0x10c] sm:$0xf]
  %v4626 = vld [vmem:[%s57 + $0x110] sm:$0xf]
  %v4627 = vld [vmem:[%s57 + $0x114] sm:$0xf]
  %v4628 = vld [vmem:[%s57 + $0x118] sm:$0xf]
  %v4629 = vld [vmem:[%s57 + $0x11c] sm:$0xf]
  %v4630 = vld [vmem:[%s57 + $0x120] sm:$0xf]
  %v4631 = vld [vmem:[%s57 + $0x124] sm:$0xf]
  %v4632 = vld [vmem:[%s57 + $0x128] sm:$0xf]
  %v4633 = vld [vmem:[%s57 + $0x12c] sm:$0xf]
  %v4634 = vld [vmem:[%s57 + $0x130] sm:$0xf]
  %v4635 = vld [vmem:[%s57 + $0x134] sm:$0xf]
  %v4636 = vld [vmem:[%s57 + $0x138] sm:$0xf]
  %v4637 = vld [vmem:[%s57 + $0x13c] sm:$0xf]
  %v4638 = vld [vmem:[%s57 + $0x140] sm:$0xf]
  %v4639 = vld [vmem:[%s57 + $0x144] sm:$0xf]
  %v4640 = vld [vmem:[%s57 + $0x148] sm:$0xf]
  %v4641 = vld [vmem:[%s57 + $0x14c] sm:$0xf]
  %v4642 = vld [vmem:[%s57 + $0x150] sm:$0xf]
  %v4643 = vld [vmem:[%s57 + $0x154] sm:$0xf]
  %v4644 = vld [vmem:[%s57 + $0x158] sm:$0xf]
  %v4645 = vld [vmem:[%s57 + $0x15c] sm:$0xf]
  %v4646 = vld [vmem:[%s57 + $0x160] sm:$0xf]
  %v4647 = vld [vmem:[%s57 + $0x164] sm:$0xf]
  %v4648 = vld [vmem:[%s57 + $0x168] sm:$0xf]
  %v4649 = vld [vmem:[%s57 + $0x16c] sm:$0xf]
  %v4650 = vld [vmem:[%s57 + $0x170] sm:$0xf]
  %v4651 = vld [vmem:[%s57 + $0x174] sm:$0xf]
  %v4652 = vld [vmem:[%s57 + $0x178] sm:$0xf]
  %v4653 = vld [vmem:[%s57 + $0x17c] sm:$0xf]
  %v4654 = vld [vmem:[%s57 + $0x180] sm:$0xf]
  %v4655 = vld [vmem:[%s57 + $0x184] sm:$0xf]
  %v4656 = vld [vmem:[%s57 + $0x188] sm:$0xf]
  %v4657 = vld [vmem:[%s57 + $0x18c] sm:$0xf]
  %v4658 = vld [vmem:[%s57 + $0x190] sm:$0xf]
  %v4659 = vld [vmem:[%s57 + $0x194] sm:$0xf]
  %v4660 = vld [vmem:[%s57 + $0x198] sm:$0xf]
  %v4661 = vld [vmem:[%s57 + $0x19c] sm:$0xf]
  %v4662 = vld [vmem:[%s57 + $0x1a0] sm:$0xf]
  %v4663 = vld [vmem:[%s57 + $0x1a4] sm:$0xf]
  %v4664 = vld [vmem:[%s57 + $0x1a8] sm:$0xf]
  %v4665 = vld [vmem:[%s57 + $0x1ac] sm:$0xf]
  %v4666 = vld [vmem:[%s57 + $0x1b0] sm:$0xf]
  %v4667 = vld [vmem:[%s57 + $0x1b4] sm:$0xf]
  %v4668 = vld [vmem:[%s57 + $0x1b8] sm:$0xf]
  %v4669 = vld [vmem:[%s57 + $0x1bc] sm:$0xf]
  %v4670 = vld [vmem:[%s57 + $0x1c0] sm:$0xf]
  %v4671 = vld [vmem:[%s57 + $0x1c4] sm:$0xf]
  %v4672 = vld [vmem:[%s57 + $0x1c8] sm:$0xf]
  %v4673 = vld [vmem:[%s57 + $0x1cc] sm:$0xf]
  %v4674 = vld [vmem:[%s57 + $0x1d0] sm:$0xf]
  %v4675 = vld [vmem:[%s57 + $0x1d4] sm:$0xf]
  %v4676 = vld [vmem:[%s57 + $0x1d8] sm:$0xf]
  %v4677 = vld [vmem:[%s57 + $0x1dc] sm:$0xf]
  %v4678 = vld [vmem:[%s57 + $0x1e0] sm:$0xf]
  %v4679 = vld [vmem:[%s57 + $0x1e4] sm:$0xf]
  %v4680 = vld [vmem:[%s57 + $0x1e8] sm:$0xf]
  %v4681 = vld [vmem:[%s57 + $0x1ec] sm:$0xf]
  %v4682 = vld [vmem:[%s57 + $0x1f0] sm:$0xf]
  %v4683 = vld [vmem:[%s57 + $0x1f4] sm:$0xf]
  %v4684 = vld [vmem:[%s57 + $0x1f8] sm:$0xf]
  %v4685 = vld [vmem:[%s57 + $0x1fc] sm:$0xf]
  %v4686 = vld [vmem:[%s57 + $0x200] sm:$0xf]
  %v4687 = vld [vmem:[%s57 + $0x204] sm:$0xf]
  %v4688 = vld [vmem:[%s57 + $0x208] sm:$0xf]
  %v4689 = vld [vmem:[%s57 + $0x20c] sm:$0xf]
  %v4690 = vld [vmem:[%s57 + $0x210] sm:$0xf]
  %v4691 = vld [vmem:[%s57 + $0x214] sm:$0xf]
  %v4692 = vld [vmem:[%s57 + $0x218] sm:$0xf]
  %v4693 = vld [vmem:[%s57 + $0x21c] sm:$0xf]
  %v4694 = vld [vmem:[%s57 + $0x220] sm:$0xf]
  %v4695 = vld [vmem:[%s57 + $0x224] sm:$0xf]
  %v4696 = vld [vmem:[%s57 + $0x228] sm:$0xf]
  %v4697 = vld [vmem:[%s57 + $0x22c] sm:$0xf]
  %v4698 = vld [vmem:[%s57 + $0x230] sm:$0xf]
  %v4699 = vld [vmem:[%s57 + $0x234] sm:$0xf]
  %v4700 = vld [vmem:[%s57 + $0x238] sm:$0xf]
  %v4701 = vld [vmem:[%s57 + $0x23c] sm:$0xf]
  %v4702 = vld [vmem:[%s57 + $0x240] sm:$0xf]
  %v4703 = vld [vmem:[%s57 + $0x244] sm:$0xf]
  %v4704 = vld [vmem:[%s57 + $0x248] sm:$0xf]
  %v4705 = vld [vmem:[%s57 + $0x24c] sm:$0xf]
  %v4706 = vld [vmem:[%s57 + $0x250] sm:$0xf]
  %v4707 = vld [vmem:[%s57 + $0x254] sm:$0xf]
  %v4708 = vld [vmem:[%s57 + $0x258] sm:$0xf]
  %v4709 = vld [vmem:[%s57 + $0x25c] sm:$0xf]
  %v4710 = vld [vmem:[%s57 + $0x260] sm:$0xf]
  %v4711 = vld [vmem:[%s57 + $0x264] sm:$0xf]
  %v4712 = vld [vmem:[%s57 + $0x268] sm:$0xf]
  %v4713 = vld [vmem:[%s57 + $0x26c] sm:$0xf]
  %v4714 = vld [vmem:[%s57 + $0x270] sm:$0xf]
  %v4715 = vld [vmem:[%s57 + $0x274] sm:$0xf]
  %v4716 = vld [vmem:[%s57 + $0x278] sm:$0xf]
  %v4717 = vld [vmem:[%s57 + $0x27c] sm:$0xf]
  %v4718 = vld [vmem:[%s57 + $0x280] sm:$0xf]
  %v4719 = vld [vmem:[%s57 + $0x284] sm:$0xf]
  %v4720 = vld [vmem:[%s57 + $0x288] sm:$0xf]
  %v4721 = vld [vmem:[%s57 + $0x28c] sm:$0xf]
  %v4722 = vld [vmem:[%s57 + $0x290] sm:$0xf]
  %v4723 = vld [vmem:[%s57 + $0x294] sm:$0xf]
  %v4724 = vld [vmem:[%s57 + $0x298] sm:$0xf]
  %v4725 = vld [vmem:[%s57 + $0x29c] sm:$0xf]
  %v4726 = vld [vmem:[%s57 + $0x2a0] sm:$0xf]
  %v4727 = vld [vmem:[%s57 + $0x2a4] sm:$0xf]
  %v4728 = vld [vmem:[%s57 + $0x2a8] sm:$0xf]
  %v4729 = vld [vmem:[%s57 + $0x2ac] sm:$0xf]
  %v4730 = vld [vmem:[%s57 + $0x2b0] sm:$0xf]
  %v4731 = vld [vmem:[%s57 + $0x2b4] sm:$0xf]
  %v4732 = vld [vmem:[%s57 + $0x2b8] sm:$0xf]
  %v4733 = vld [vmem:[%s57 + $0x2bc] sm:$0xf]
  %v4734 = vld [vmem:[%s57 + $0x2c0] sm:$0xf]
  %v4735 = vld [vmem:[%s57 + $0x2c4] sm:$0xf]
  %v4736 = vld [vmem:[%s57 + $0x2c8] sm:$0xf]
  %v4737 = vld [vmem:[%s57 + $0x2cc] sm:$0xf]
  %v4738 = vld [vmem:[%s57 + $0x2d0] sm:$0xf]
  %v4739 = vld [vmem:[%s57 + $0x2d4] sm:$0xf]
  %v4740 = vld [vmem:[%s57 + $0x2d8] sm:$0xf]
  %v4741 = vld [vmem:[%s57 + $0x2dc] sm:$0xf]
  %v4742 = vld [vmem:[%s57 + $0x2e0] sm:$0xf]
  %v4743 = vld [vmem:[%s57 + $0x2e4] sm:$0xf]
  %v4744 = vld [vmem:[%s57 + $0x2e8] sm:$0xf]
  %v4745 = vld [vmem:[%s57 + $0x2ec] sm:$0xf]
  %v4746 = vld [vmem:[%s57 + $0x2f0] sm:$0xf]
  %v4747 = vld [vmem:[%s57 + $0x2f4] sm:$0xf]
  %v4748 = vld [vmem:[%s57 + $0x2f8] sm:$0xf]
  %v4749 = vld [vmem:[%s57 + $0x2fc] sm:$0xf]
  %v4750 = vld [vmem:[%s57 + $0x300] sm:$0xf]
  %v4751 = vld [vmem:[%s57 + $0x304] sm:$0xf]
  %v4752 = vld [vmem:[%s57 + $0x308] sm:$0xf]
  %v4753 = vld [vmem:[%s57 + $0x30c] sm:$0xf]
  %v4754 = vld [vmem:[%s57 + $0x310] sm:$0xf]
  %v4755 = vld [vmem:[%s57 + $0x314] sm:$0xf]
  %v4756 = vld [vmem:[%s57 + $0x318] sm:$0xf]
  %v4757 = vld [vmem:[%s57 + $0x31c] sm:$0xf]
  %v4758 = vld [vmem:[%s57 + $0x320] sm:$0xf]
  %v4759 = vld [vmem:[%s57 + $0x324] sm:$0xf]
  %v4760 = vld [vmem:[%s57 + $0x328] sm:$0xf]
  %v4761 = vld [vmem:[%s57 + $0x32c] sm:$0xf]
  %v4762 = vld [vmem:[%s57 + $0x330] sm:$0xf]
  %v4763 = vld [vmem:[%s57 + $0x334] sm:$0xf]
  %v4764 = vld [vmem:[%s57 + $0x338] sm:$0xf]
  %v4765 = vld [vmem:[%s57 + $0x33c] sm:$0xf]
  %v4766 = vld [vmem:[%s57 + $0x340] sm:$0xf]
  %v4767 = vld [vmem:[%s57 + $0x344] sm:$0xf]
  %v4768 = vld [vmem:[%s57 + $0x348] sm:$0xf]
  %v4769 = vld [vmem:[%s57 + $0x34c] sm:$0xf]
  %v4770 = vld [vmem:[%s57 + $0x350] sm:$0xf]
  %v4771 = vld [vmem:[%s57 + $0x354] sm:$0xf]
  %v4772 = vld [vmem:[%s57 + $0x358] sm:$0xf]
  %v4773 = vld [vmem:[%s57 + $0x35c] sm:$0xf]
  %v4774 = vld [vmem:[%s57 + $0x360] sm:$0xf]
  %v4775 = vld [vmem:[%s57 + $0x364] sm:$0xf]
  %v4776 = vld [vmem:[%s57 + $0x368] sm:$0xf]
  %v4777 = vld [vmem:[%s57 + $0x36c] sm:$0xf]
  %v4778 = vld [vmem:[%s57 + $0x370] sm:$0xf]
  %v4779 = vld [vmem:[%s57 + $0x374] sm:$0xf]
  %v4780 = vld [vmem:[%s57 + $0x378] sm:$0xf]
  %v4781 = vld [vmem:[%s57 + $0x37c] sm:$0xf]
  %v4782 = vld [vmem:[%s57 + $0x380] sm:$0xf]
  %v4783 = vld [vmem:[%s57 + $0x384] sm:$0xf]
  %v4784 = vld [vmem:[%s57 + $0x388] sm:$0xf]
  %v4785 = vld [vmem:[%s57 + $0x38c] sm:$0xf]
  %v4786 = vld [vmem:[%s57 + $0x390] sm:$0xf]
  %v4787 = vld [vmem:[%s57 + $0x394] sm:$0xf]
  %v4788 = vld [vmem:[%s57 + $0x398] sm:$0xf]
  %v4789 = vld [vmem:[%s57 + $0x39c] sm:$0xf]
  %v4790 = vld [vmem:[%s57 + $0x3a0] sm:$0xf]
  %v4791 = vld [vmem:[%s57 + $0x3a4] sm:$0xf]
  %v4792 = vld [vmem:[%s57 + $0x3a8] sm:$0xf]
  %v4793 = vld [vmem:[%s57 + $0x3ac] sm:$0xf]
  %v4794 = vld [vmem:[%s57 + $0x3b0] sm:$0xf]
  %v4795 = vld [vmem:[%s57 + $0x3b4] sm:$0xf]
  %v4796 = vld [vmem:[%s57 + $0x3b8] sm:$0xf]
  %v4797 = vld [vmem:[%s57 + $0x3bc] sm:$0xf]
  %v4798 = vld [vmem:[%s57 + $0x3c0] sm:$0xf]
  %v4799 = vld [vmem:[%s57 + $0x3c4] sm:$0xf]
  %v4800 = vld [vmem:[%s57 + $0x3c8] sm:$0xf]
  %v4801 = vld [vmem:[%s57 + $0x3cc] sm:$0xf]
  %v4802 = vld [vmem:[%s57 + $0x3d0] sm:$0xf]
  %v4803 = vld [vmem:[%s57 + $0x3d4] sm:$0xf]
  %v4804 = vld [vmem:[%s57 + $0x3d8] sm:$0xf]
  %v4805 = vld [vmem:[%s57 + $0x3dc] sm:$0xf]
  %v4806 = vld [vmem:[%s57 + $0x3e0] sm:$0xf]
  %v4807 = vld [vmem:[%s57 + $0x3e4] sm:$0xf]
  %v4808 = vld [vmem:[%s57 + $0x3e8] sm:$0xf]
  %v4809 = vld [vmem:[%s57 + $0x3ec] sm:$0xf]
  %v4810 = vld [vmem:[%s57 + $0x3f0] sm:$0xf]
  %v4811 = vld [vmem:[%s57 + $0x3f4] sm:$0xf]
  %v4812 = vld [vmem:[%s57 + $0x3f8] sm:$0xf]
  %v4813 = vld [vmem:[%s57 + $0x3fc] sm:$0xf]
  %v4814 = vld [vmem:[%s59] sm:$0x1]
  %v4816 = vperm.slane %v4814, 0
  %v5074 = vunpack.c.l.b16 %v4558
  %v5075 = vunpack.c.l.b16 %v4559
  %v5076 = vunpack.c.l.b16 %v4560
  %v5077 = vunpack.c.l.b16 %v4561
  %v5078 = vunpack.c.l.b16 %v4562
  %v5079 = vunpack.c.l.b16 %v4563
  %v5080 = vunpack.c.l.b16 %v4564
  %v5081 = vunpack.c.l.b16 %v4565
  %v5082 = vunpack.c.l.b16 %v4566
  %v5083 = vunpack.c.l.b16 %v4567
  %v5084 = vunpack.c.l.b16 %v4568
  %v5085 = vunpack.c.l.b16 %v4569
  %v5086 = vunpack.c.l.b16 %v4570
  %v5087 = vunpack.c.l.b16 %v4571
  %v5088 = vunpack.c.l.b16 %v4572
  %v5089 = vunpack.c.l.b16 %v4573
  %v5090 = vunpack.c.l.b16 %v4574
  %v5091 = vunpack.c.l.b16 %v4575
  %v5092 = vunpack.c.l.b16 %v4576
  %v5093 = vunpack.c.l.b16 %v4577
  %v5094 = vunpack.c.l.b16 %v4578
  %v5095 = vunpack.c.l.b16 %v4579
  %v5096 = vunpack.c.l.b16 %v4580
  %v5097 = vunpack.c.l.b16 %v4581
  %v5098 = vunpack.c.l.b16 %v4582
  %v5099 = vunpack.c.l.b16 %v4583
  %v5100 = vunpack.c.l.b16 %v4584
  %v5101 = vunpack.c.l.b16 %v4585
  %v5102 = vunpack.c.l.b16 %v4586
  %v5103 = vunpack.c.l.b16 %v4587
  %v5104 = vunpack.c.l.b16 %v4588
  %v5105 = vunpack.c.l.b16 %v4589
  %v5106 = vunpack.c.l.b16 %v4590
  %v5107 = vunpack.c.l.b16 %v4591
  %v5108 = vunpack.c.l.b16 %v4592
  %v5109 = vunpack.c.l.b16 %v4593
  %v5110 = vunpack.c.l.b16 %v4594
  %v5111 = vunpack.c.l.b16 %v4595
  %v5112 = vunpack.c.l.b16 %v4596
  %v5113 = vunpack.c.l.b16 %v4597
  %v5114 = vunpack.c.l.b16 %v4598
  %v5115 = vunpack.c.l.b16 %v4599
  %v5116 = vunpack.c.l.b16 %v4600
  %v5117 = vunpack.c.l.b16 %v4601
  %v5118 = vunpack.c.l.b16 %v4602
  %v5119 = vunpack.c.l.b16 %v4603
  %v5120 = vunpack.c.l.b16 %v4604
  %v5121 = vunpack.c.l.b16 %v4605
  %v5122 = vunpack.c.l.b16 %v4606
  %v5123 = vunpack.c.l.b16 %v4607
  %v5124 = vunpack.c.l.b16 %v4608
  %v5125 = vunpack.c.l.b16 %v4609
  %v5126 = vunpack.c.l.b16 %v4610
  %v5127 = vunpack.c.l.b16 %v4611
  %v5128 = vunpack.c.l.b16 %v4612
  %v5129 = vunpack.c.l.b16 %v4613
  %v5130 = vunpack.c.l.b16 %v4614
  %v5131 = vunpack.c.l.b16 %v4615
  %v5132 = vunpack.c.l.b16 %v4616
  %v5133 = vunpack.c.l.b16 %v4617
  %v5134 = vunpack.c.l.b16 %v4618
  %v5135 = vunpack.c.l.b16 %v4619
  %v5136 = vunpack.c.l.b16 %v4620
  %v5137 = vunpack.c.l.b16 %v4621
  %v5138 = vunpack.c.l.b16 %v4622
  %v5139 = vunpack.c.l.b16 %v4623
  %v5140 = vunpack.c.l.b16 %v4624
  %v5141 = vunpack.c.l.b16 %v4625
  %v5142 = vunpack.c.l.b16 %v4626
  %v5143 = vunpack.c.l.b16 %v4627
  %v5144 = vunpack.c.l.b16 %v4628
  %v5145 = vunpack.c.l.b16 %v4629
  %v5146 = vunpack.c.l.b16 %v4630
  %v5147 = vunpack.c.l.b16 %v4631
  %v5148 = vunpack.c.l.b16 %v4632
  %v5149 = vunpack.c.l.b16 %v4633
  %v5150 = vunpack.c.l.b16 %v4634
  %v5151 = vunpack.c.l.b16 %v4635
  %v5152 = vunpack.c.l.b16 %v4636
  %v5153 = vunpack.c.l.b16 %v4637
  %v5154 = vunpack.c.l.b16 %v4638
  %v5155 = vunpack.c.l.b16 %v4639
  %v5156 = vunpack.c.l.b16 %v4640
  %v5157 = vunpack.c.l.b16 %v4641
  %v5158 = vunpack.c.l.b16 %v4642
  %v5159 = vunpack.c.l.b16 %v4643
  %v5160 = vunpack.c.l.b16 %v4644
  %v5161 = vunpack.c.l.b16 %v4645
  %v5162 = vunpack.c.l.b16 %v4646
  %v5163 = vunpack.c.l.b16 %v4647
  %v5164 = vunpack.c.l.b16 %v4648
  %v5165 = vunpack.c.l.b16 %v4649
  %v5166 = vunpack.c.l.b16 %v4650
  %v5167 = vunpack.c.l.b16 %v4651
  %v5168 = vunpack.c.l.b16 %v4652
  %v5169 = vunpack.c.l.b16 %v4653
  %v5170 = vunpack.c.l.b16 %v4654
  %v5171 = vunpack.c.l.b16 %v4655
  %v5172 = vunpack.c.l.b16 %v4656
  %v5173 = vunpack.c.l.b16 %v4657
  %v5174 = vunpack.c.l.b16 %v4658
  %v5175 = vunpack.c.l.b16 %v4659
  %v5176 = vunpack.c.l.b16 %v4660
  %v5177 = vunpack.c.l.b16 %v4661
  %v5178 = vunpack.c.l.b16 %v4662
  %v5179 = vunpack.c.l.b16 %v4663
  %v5180 = vunpack.c.l.b16 %v4664
  %v5181 = vunpack.c.l.b16 %v4665
  %v5182 = vunpack.c.l.b16 %v4666
  %v5183 = vunpack.c.l.b16 %v4667
  %v5184 = vunpack.c.l.b16 %v4668
  %v5185 = vunpack.c.l.b16 %v4669
  %v5186 = vunpack.c.l.b16 %v4670
  %v5187 = vunpack.c.l.b16 %v4671
  %v5188 = vunpack.c.l.b16 %v4672
  %v5189 = vunpack.c.l.b16 %v4673
  %v5190 = vunpack.c.l.b16 %v4674
  %v5191 = vunpack.c.l.b16 %v4675
  %v5192 = vunpack.c.l.b16 %v4676
  %v5193 = vunpack.c.l.b16 %v4677
  %v5194 = vunpack.c.l.b16 %v4678
  %v5195 = vunpack.c.l.b16 %v4679
  %v5196 = vunpack.c.l.b16 %v4680
  %v5197 = vunpack.c.l.b16 %v4681
  %v5198 = vunpack.c.l.b16 %v4682
  %v5199 = vunpack.c.l.b16 %v4683
  %v5200 = vunpack.c.l.b16 %v4684
  %v5201 = vunpack.c.l.b16 %v4685
  %v5202 = vunpack.c.l.b16 %v4686
  %v5203 = vunpack.c.l.b16 %v4687
  %v5204 = vunpack.c.l.b16 %v4688
  %v5205 = vunpack.c.l.b16 %v4689
  %v5206 = vunpack.c.l.b16 %v4690
  %v5207 = vunpack.c.l.b16 %v4691
  %v5208 = vunpack.c.l.b16 %v4692
  %v5209 = vunpack.c.l.b16 %v4693
  %v5210 = vunpack.c.l.b16 %v4694
  %v5211 = vunpack.c.l.b16 %v4695
  %v5212 = vunpack.c.l.b16 %v4696
  %v5213 = vunpack.c.l.b16 %v4697
  %v5214 = vunpack.c.l.b16 %v4698
  %v5215 = vunpack.c.l.b16 %v4699
  %v5216 = vunpack.c.l.b16 %v4700
  %v5217 = vunpack.c.l.b16 %v4701
  %v5218 = vunpack.c.l.b16 %v4702
  %v5219 = vunpack.c.l.b16 %v4703
  %v5220 = vunpack.c.l.b16 %v4704
  %v5221 = vunpack.c.l.b16 %v4705
  %v5222 = vunpack.c.l.b16 %v4706
  %v5223 = vunpack.c.l.b16 %v4707
  %v5224 = vunpack.c.l.b16 %v4708
  %v5225 = vunpack.c.l.b16 %v4709
  %v5226 = vunpack.c.l.b16 %v4710
  %v5227 = vunpack.c.l.b16 %v4711
  %v5228 = vunpack.c.l.b16 %v4712
  %v5229 = vunpack.c.l.b16 %v4713
  %v5230 = vunpack.c.l.b16 %v4714
  %v5231 = vunpack.c.l.b16 %v4715
  %v5232 = vunpack.c.l.b16 %v4716
  %v5233 = vunpack.c.l.b16 %v4717
  %v5234 = vunpack.c.l.b16 %v4718
  %v5235 = vunpack.c.l.b16 %v4719
  %v5236 = vunpack.c.l.b16 %v4720
  %v5237 = vunpack.c.l.b16 %v4721
  %v5238 = vunpack.c.l.b16 %v4722
  %v5239 = vunpack.c.l.b16 %v4723
  %v5240 = vunpack.c.l.b16 %v4724
  %v5241 = vunpack.c.l.b16 %v4725
  %v5242 = vunpack.c.l.b16 %v4726
  %v5243 = vunpack.c.l.b16 %v4727
  %v5244 = vunpack.c.l.b16 %v4728
  %v5245 = vunpack.c.l.b16 %v4729
  %v5246 = vunpack.c.l.b16 %v4730
  %v5247 = vunpack.c.l.b16 %v4731
  %v5248 = vunpack.c.l.b16 %v4732
  %v5249 = vunpack.c.l.b16 %v4733
  %v5250 = vunpack.c.l.b16 %v4734
  %v5251 = vunpack.c.l.b16 %v4735
  %v5252 = vunpack.c.l.b16 %v4736
  %v5253 = vunpack.c.l.b16 %v4737
  %v5254 = vunpack.c.l.b16 %v4738
  %v5255 = vunpack.c.l.b16 %v4739
  %v5256 = vunpack.c.l.b16 %v4740
  %v5257 = vunpack.c.l.b16 %v4741
  %v5258 = vunpack.c.l.b16 %v4742
  %v5259 = vunpack.c.l.b16 %v4743
  %v5260 = vunpack.c.l.b16 %v4744
  %v5261 = vunpack.c.l.b16 %v4745
  %v5262 = vunpack.c.l.b16 %v4746
  %v5263 = vunpack.c.l.b16 %v4747
  %v5264 = vunpack.c.l.b16 %v4748
  %v5265 = vunpack.c.l.b16 %v4749
  %v5266 = vunpack.c.l.b16 %v4750
  %v5267 = vunpack.c.l.b16 %v4751
  %v5268 = vunpack.c.l.b16 %v4752
  %v5269 = vunpack.c.l.b16 %v4753
  %v5270 = vunpack.c.l.b16 %v4754
  %v5271 = vunpack.c.l.b16 %v4755
  %v5272 = vunpack.c.l.b16 %v4756
  %v5273 = vunpack.c.l.b16 %v4757
  %v5274 = vunpack.c.l.b16 %v4758
  %v5275 = vunpack.c.l.b16 %v4759
  %v5276 = vunpack.c.l.b16 %v4760
  %v5277 = vunpack.c.l.b16 %v4761
  %v5278 = vunpack.c.l.b16 %v4762
  %v5279 = vunpack.c.l.b16 %v4763
  %v5280 = vunpack.c.l.b16 %v4764
  %v5281 = vunpack.c.l.b16 %v4765
  %v5282 = vunpack.c.l.b16 %v4766
  %v5283 = vunpack.c.l.b16 %v4767
  %v5284 = vunpack.c.l.b16 %v4768
  %v5285 = vunpack.c.l.b16 %v4769
  %v5286 = vunpack.c.l.b16 %v4770
  %v5287 = vunpack.c.l.b16 %v4771
  %v5288 = vunpack.c.l.b16 %v4772
  %v5289 = vunpack.c.l.b16 %v4773
  %v5290 = vunpack.c.l.b16 %v4774
  %v5291 = vunpack.c.l.b16 %v4775
  %v5292 = vunpack.c.l.b16 %v4776
  %v5293 = vunpack.c.l.b16 %v4777
  %v5294 = vunpack.c.l.b16 %v4778
  %v5295 = vunpack.c.l.b16 %v4779
  %v5296 = vunpack.c.l.b16 %v4780
  %v5297 = vunpack.c.l.b16 %v4781
  %v5298 = vunpack.c.l.b16 %v4782
  %v5299 = vunpack.c.l.b16 %v4783
  %v5300 = vunpack.c.l.b16 %v4784
  %v5301 = vunpack.c.l.b16 %v4785
  %v5302 = vunpack.c.l.b16 %v4786
  %v5303 = vunpack.c.l.b16 %v4787
  %v5304 = vunpack.c.l.b16 %v4788
  %v5305 = vunpack.c.l.b16 %v4789
  %v5306 = vunpack.c.l.b16 %v4790
  %v5307 = vunpack.c.l.b16 %v4791
  %v5308 = vunpack.c.l.b16 %v4792
  %v5309 = vunpack.c.l.b16 %v4793
  %v5310 = vunpack.c.l.b16 %v4794
  %v5311 = vunpack.c.l.b16 %v4795
  %v5312 = vunpack.c.l.b16 %v4796
  %v5313 = vunpack.c.l.b16 %v4797
  %v5314 = vunpack.c.l.b16 %v4798
  %v5315 = vunpack.c.l.b16 %v4799
  %v5316 = vunpack.c.l.b16 %v4800
  %v5317 = vunpack.c.l.b16 %v4801
  %v5318 = vunpack.c.l.b16 %v4802
  %v5319 = vunpack.c.l.b16 %v4803
  %v5320 = vunpack.c.l.b16 %v4804
  %v5321 = vunpack.c.l.b16 %v4805
  %v5322 = vunpack.c.l.b16 %v4806
  %v5323 = vunpack.c.l.b16 %v4807
  %v5324 = vunpack.c.l.b16 %v4808
  %v5325 = vunpack.c.l.b16 %v4809
  %v5326 = vunpack.c.l.b16 %v4810
  %v5327 = vunpack.c.l.b16 %v4811
  %v5328 = vunpack.c.l.b16 %v4812
  %v5329 = vunpack.c.l.b16 %v4813
  %v5330 = vpack.c.b16 %v5075, %v5074
  %v5331 = vpack.c.b16 %v5077, %v5076
  %v5332 = vpack.c.b16 %v5079, %v5078
  %v5333 = vpack.c.b16 %v5081, %v5080
  %v5334 = vpack.c.b16 %v5083, %v5082
  %v5335 = vpack.c.b16 %v5085, %v5084
  %v5336 = vpack.c.b16 %v5087, %v5086
  %v5337 = vpack.c.b16 %v5089, %v5088
  %v5338 = vpack.c.b16 %v5091, %v5090
  %v5339 = vpack.c.b16 %v5093, %v5092
  %v5340 = vpack.c.b16 %v5095, %v5094
  %v5341 = vpack.c.b16 %v5097, %v5096
  %v5342 = vpack.c.b16 %v5099, %v5098
  %v5343 = vpack.c.b16 %v5101, %v5100
  %v5344 = vpack.c.b16 %v5103, %v5102
  %v5345 = vpack.c.b16 %v5105, %v5104
  %v5346 = vpack.c.b16 %v5107, %v5106
  %v5347 = vpack.c.b16 %v5109, %v5108
  %v5348 = vpack.c.b16 %v5111, %v5110
  %v5349 = vpack.c.b16 %v5113, %v5112
  %v5350 = vpack.c.b16 %v5115, %v5114
  %v5351 = vpack.c.b16 %v5117, %v5116
  %v5352 = vpack.c.b16 %v5119, %v5118
  %v5353 = vpack.c.b16 %v5121, %v5120
  %v5354 = vpack.c.b16 %v5123, %v5122
  %v5355 = vpack.c.b16 %v5125, %v5124
  %v5356 = vpack.c.b16 %v5127, %v5126
  %v5357 = vpack.c.b16 %v5129, %v5128
  %v5358 = vpack.c.b16 %v5131, %v5130
  %v5359 = vpack.c.b16 %v5133, %v5132
  %v5360 = vpack.c.b16 %v5135, %v5134
  %v5361 = vpack.c.b16 %v5137, %v5136
  %v5362 = vpack.c.b16 %v5139, %v5138
  %v5363 = vpack.c.b16 %v5141, %v5140
  %v5364 = vpack.c.b16 %v5143, %v5142
  %v5365 = vpack.c.b16 %v5145, %v5144
  %v5366 = vpack.c.b16 %v5147, %v5146
  %v5367 = vpack.c.b16 %v5149, %v5148
  %v5368 = vpack.c.b16 %v5151, %v5150
  %v5369 = vpack.c.b16 %v5153, %v5152
  %v5370 = vpack.c.b16 %v5155, %v5154
  %v5371 = vpack.c.b16 %v5157, %v5156
  %v5372 = vpack.c.b16 %v5159, %v5158
  %v5373 = vpack.c.b16 %v5161, %v5160
  %v5374 = vpack.c.b16 %v5163, %v5162
  %v5375 = vpack.c.b16 %v5165, %v5164
  %v5376 = vpack.c.b16 %v5167, %v5166
  %v5377 = vpack.c.b16 %v5169, %v5168
  %v5378 = vpack.c.b16 %v5171, %v5170
  %v5379 = vpack.c.b16 %v5173, %v5172
  %v5380 = vpack.c.b16 %v5175, %v5174
  %v5381 = vpack.c.b16 %v5177, %v5176
  %v5382 = vpack.c.b16 %v5179, %v5178
  %v5383 = vpack.c.b16 %v5181, %v5180
  %v5384 = vpack.c.b16 %v5183, %v5182
  %v5385 = vpack.c.b16 %v5185, %v5184
  %v5386 = vpack.c.b16 %v5187, %v5186
  %v5387 = vpack.c.b16 %v5189, %v5188
  %v5388 = vpack.c.b16 %v5191, %v5190
  %v5389 = vpack.c.b16 %v5193, %v5192
  %v5390 = vpack.c.b16 %v5195, %v5194
  %v5391 = vpack.c.b16 %v5197, %v5196
  %v5392 = vpack.c.b16 %v5199, %v5198
  %v5393 = vpack.c.b16 %v5201, %v5200
  %v5394 = vpack.c.b16 %v5203, %v5202
  %v5395 = vpack.c.b16 %v5205, %v5204
  %v5396 = vpack.c.b16 %v5207, %v5206
  %v5397 = vpack.c.b16 %v5209, %v5208
  %v5398 = vpack.c.b16 %v5211, %v5210
  %v5399 = vpack.c.b16 %v5213, %v5212
  %v5400 = vpack.c.b16 %v5215, %v5214
  %v5401 = vpack.c.b16 %v5217, %v5216
  %v5402 = vpack.c.b16 %v5219, %v5218
  %v5403 = vpack.c.b16 %v5221, %v5220
  %v5404 = vpack.c.b16 %v5223, %v5222
  %v5405 = vpack.c.b16 %v5225, %v5224
  %v5406 = vpack.c.b16 %v5227, %v5226
  %v5407 = vpack.c.b16 %v5229, %v5228
  %v5408 = vpack.c.b16 %v5231, %v5230
  %v5409 = vpack.c.b16 %v5233, %v5232
  %v5410 = vpack.c.b16 %v5235, %v5234
  %v5411 = vpack.c.b16 %v5237, %v5236
  %v5412 = vpack.c.b16 %v5239, %v5238
  %v5413 = vpack.c.b16 %v5241, %v5240
  %v5414 = vpack.c.b16 %v5243, %v5242
  %v5415 = vpack.c.b16 %v5245, %v5244
  %v5416 = vpack.c.b16 %v5247, %v5246
  %v5417 = vpack.c.b16 %v5249, %v5248
  %v5418 = vpack.c.b16 %v5251, %v5250
  %v5419 = vpack.c.b16 %v5253, %v5252
  %v5420 = vpack.c.b16 %v5255, %v5254
  %v5421 = vpack.c.b16 %v5257, %v5256
  %v5422 = vpack.c.b16 %v5259, %v5258
  %v5423 = vpack.c.b16 %v5261, %v5260
  %v5424 = vpack.c.b16 %v5263, %v5262
  %v5425 = vpack.c.b16 %v5265, %v5264
  %v5426 = vpack.c.b16 %v5267, %v5266
  %v5427 = vpack.c.b16 %v5269, %v5268
  %v5428 = vpack.c.b16 %v5271, %v5270
  %v5429 = vpack.c.b16 %v5273, %v5272
  %v5430 = vpack.c.b16 %v5275, %v5274
  %v5431 = vpack.c.b16 %v5277, %v5276
  %v5432 = vpack.c.b16 %v5279, %v5278
  %v5433 = vpack.c.b16 %v5281, %v5280
  %v5434 = vpack.c.b16 %v5283, %v5282
  %v5435 = vpack.c.b16 %v5285, %v5284
  %v5436 = vpack.c.b16 %v5287, %v5286
  %v5437 = vpack.c.b16 %v5289, %v5288
  %v5438 = vpack.c.b16 %v5291, %v5290
  %v5439 = vpack.c.b16 %v5293, %v5292
  %v5440 = vpack.c.b16 %v5295, %v5294
  %v5441 = vpack.c.b16 %v5297, %v5296
  %v5442 = vpack.c.b16 %v5299, %v5298
  %v5443 = vpack.c.b16 %v5301, %v5300
  %v5444 = vpack.c.b16 %v5303, %v5302
  %v5445 = vpack.c.b16 %v5305, %v5304
  %v5446 = vpack.c.b16 %v5307, %v5306
  %v5447 = vpack.c.b16 %v5309, %v5308
  %v5448 = vpack.c.b16 %v5311, %v5310
  %v5449 = vpack.c.b16 %v5313, %v5312
  %v5450 = vpack.c.b16 %v5315, %v5314
  %v5451 = vpack.c.b16 %v5317, %v5316
  %v5452 = vpack.c.b16 %v5319, %v5318
  %v5453 = vpack.c.b16 %v5321, %v5320
  %v5454 = vpack.c.b16 %v5323, %v5322
  %v5455 = vpack.c.b16 %v5325, %v5324
  %v5456 = vpack.c.b16 %v5327, %v5326
  %v5457 = vpack.c.b16 %v5329, %v5328
  %5586 = vmatpush.bf16.msra.mxu0 %v5337
  %5587 = vmatpush.bf16.msra.mxu0 %v5336
  %5588 = vmatpush.bf16.msra.mxu0 %v5335
  %5589 = vmatpush.bf16.msra.mxu0 %v5334
  %5590 = vmatpush.bf16.msra.mxu0 %v5333
  %5591 = vmatpush.bf16.msra.mxu0 %v5332
  %5592 = vmatpush.bf16.msra.mxu0 %v5331
  %5593 = vmatpush.bf16.msra.mxu0 %v5330
  %5594 = vmatmul.bf16.gmra.mxu0 %v4510
  %v5595 = vpop.f32.mrf.mxu0
  %v5596 = vadd.f32 %v4816, %v5595
  %v5597 = vpop.f32.mrf.mxu0
  %v5598 = vadd.f32 %v4816, %v5597
  %5599 = vmatmul.bf16.gmra.mxu0 %v4526
  %v5600 = vpop.f32.mrf.mxu0
  %v5601 = vadd.f32 %v4816, %v5600
  %v5602 = vpop.f32.mrf.mxu0
  %v5603 = vadd.f32 %v4816, %v5602
  %5604 = vmatmul.bf16.gmra.mxu0 %v4542
  %v5605 = vpop.f32.mrf.mxu0
  %v5606 = vadd.f32 %v4816, %v5605
  %v5607 = vpop.f32.mrf.mxu0
  %v5608 = vadd.f32 %v4816, %v5607
  %5609 = vdwg.mxu0
  %5610 = vmatpush.bf16.msra.mxu0 %v5345
  %5611 = vmatpush.bf16.msra.mxu0 %v5344
  %5612 = vmatpush.bf16.msra.mxu0 %v5343
  %5613 = vmatpush.bf16.msra.mxu0 %v5342
  %5614 = vmatpush.bf16.msra.mxu0 %v5341
  %5615 = vmatpush.bf16.msra.mxu0 %v5340
  %5616 = vmatpush.bf16.msra.mxu0 %v5339
  %5617 = vmatpush.bf16.msra.mxu0 %v5338
  %5618 = vmatmul.bf16.gmra.mxu0 %v4511
  %v5619 = vpop.f32.mrf.mxu0
  %v5620 = vadd.f32 %v5596, %v5619
  %v5621 = vpop.f32.mrf.mxu0
  %v5622 = vadd.f32 %v5598, %v5621
  %5623 = vmatmul.bf16.gmra.mxu0 %v4527
  %v5624 = vpop.f32.mrf.mxu0
  %v5625 = vadd.f32 %v5601, %v5624
  %v5626 = vpop.f32.mrf.mxu0
  %v5627 = vadd.f32 %v5603, %v5626
  %5628 = vmatmul.bf16.gmra.mxu0 %v4543
  %v5629 = vpop.f32.mrf.mxu0
  %v5630 = vadd.f32 %v5606, %v5629
  %v5631 = vpop.f32.mrf.mxu0
  %v5632 = vadd.f32 %v5608, %v5631
  %5633 = vdwg.mxu0
  %5634 = vmatpush.bf16.msra.mxu0 %v5353
  %5635 = vmatpush.bf16.msra.mxu0 %v5352
  %5636 = vmatpush.bf16.msra.mxu0 %v5351
  %5637 = vmatpush.bf16.msra.mxu0 %v5350
  %5638 = vmatpush.bf16.msra.mxu0 %v5349
  %5639 = vmatpush.bf16.msra.mxu0 %v5348
  %5640 = vmatpush.bf16.msra.mxu0 %v5347
  %5641 = vmatpush.bf16.msra.mxu0 %v5346
  %5642 = vmatmul.bf16.gmra.mxu0 %v4512
  %v5643 = vpop.f32.mrf.mxu0
  %v5644 = vadd.f32 %v5620, %v5643
  %v5645 = vpop.f32.mrf.mxu0
  %v5646 = vadd.f32 %v5622, %v5645
  %5647 = vmatmul.bf16.gmra.mxu0 %v4528
  %v5648 = vpop.f32.mrf.mxu0
  %v5649 = vadd.f32 %v5625, %v5648
  %v5650 = vpop.f32.mrf.mxu0
  %v5651 = vadd.f32 %v5627, %v5650
  %5652 = vmatmul.bf16.gmra.mxu0 %v4544
  %v5653 = vpop.f32.mrf.mxu0
  %v5654 = vadd.f32 %v5630, %v5653
  %v5655 = vpop.f32.mrf.mxu0
  %v5656 = vadd.f32 %v5632, %v5655
  %5657 = vdwg.mxu0
  %5658 = vmatpush.bf16.msra.mxu0 %v5361
  %5659 = vmatpush.bf16.msra.mxu0 %v5360
  %5660 = vmatpush.bf16.msra.mxu0 %v5359
  %5661 = vmatpush.bf16.msra.mxu0 %v5358
  %5662 = vmatpush.bf16.msra.mxu0 %v5357
  %5663 = vmatpush.bf16.msra.mxu0 %v5356
  %5664 = vmatpush.bf16.msra.mxu0 %v5355
  %5665 = vmatpush.bf16.msra.mxu0 %v5354
  %5666 = vmatmul.bf16.gmra.mxu0 %v4513
  %v5667 = vpop.f32.mrf.mxu0
  %v5668 = vadd.f32 %v5644, %v5667
  %v5669 = vpop.f32.mrf.mxu0
  %v5670 = vadd.f32 %v5646, %v5669
  %5671 = vmatmul.bf16.gmra.mxu0 %v4529
  %v5672 = vpop.f32.mrf.mxu0
  %v5673 = vadd.f32 %v5649, %v5672
  %v5674 = vpop.f32.mrf.mxu0
  %v5675 = vadd.f32 %v5651, %v5674
  %5676 = vmatmul.bf16.gmra.mxu0 %v4545
  %v5677 = vpop.f32.mrf.mxu0
  %v5678 = vadd.f32 %v5654, %v5677
  %v5679 = vpop.f32.mrf.mxu0
  %v5680 = vadd.f32 %v5656, %v5679
  %5681 = vdwg.mxu0
  %5682 = vmatpush.bf16.msra.mxu0 %v5369
  %5683 = vmatpush.bf16.msra.mxu0 %v5368
  %5684 = vmatpush.bf16.msra.mxu0 %v5367
  %5685 = vmatpush.bf16.msra.mxu0 %v5366
  %5686 = vmatpush.bf16.msra.mxu0 %v5365
  %5687 = vmatpush.bf16.msra.mxu0 %v5364
  %5688 = vmatpush.bf16.msra.mxu0 %v5363
  %5689 = vmatpush.bf16.msra.mxu0 %v5362
  %5690 = vmatmul.bf16.gmra.mxu0 %v4514
  %v5691 = vpop.f32.mrf.mxu0
  %v5692 = vadd.f32 %v5668, %v5691
  %v5693 = vpop.f32.mrf.mxu0
  %v5694 = vadd.f32 %v5670, %v5693
  %5695 = vmatmul.bf16.gmra.mxu0 %v4530
  %v5696 = vpop.f32.mrf.mxu0
  %v5697 = vadd.f32 %v5673, %v5696
  %v5698 = vpop.f32.mrf.mxu0
  %v5699 = vadd.f32 %v5675, %v5698
  %5700 = vmatmul.bf16.gmra.mxu0 %v4546
  %v5701 = vpop.f32.mrf.mxu0
  %v5702 = vadd.f32 %v5678, %v5701
  %v5703 = vpop.f32.mrf.mxu0
  %v5704 = vadd.f32 %v5680, %v5703
  %5705 = vdwg.mxu0
  %5706 = vmatpush.bf16.msra.mxu0 %v5377
  %5707 = vmatpush.bf16.msra.mxu0 %v5376
  %5708 = vmatpush.bf16.msra.mxu0 %v5375
  %5709 = vmatpush.bf16.msra.mxu0 %v5374
  %5710 = vmatpush.bf16.msra.mxu0 %v5373
  %5711 = vmatpush.bf16.msra.mxu0 %v5372
  %5712 = vmatpush.bf16.msra.mxu0 %v5371
  %5713 = vmatpush.bf16.msra.mxu0 %v5370
  %5714 = vmatmul.bf16.gmra.mxu0 %v4515
  %v5715 = vpop.f32.mrf.mxu0
  %v5716 = vadd.f32 %v5692, %v5715
  %v5717 = vpop.f32.mrf.mxu0
  %v5718 = vadd.f32 %v5694, %v5717
  %5719 = vmatmul.bf16.gmra.mxu0 %v4531
  %v5720 = vpop.f32.mrf.mxu0
  %v5721 = vadd.f32 %v5697, %v5720
  %v5722 = vpop.f32.mrf.mxu0
  %v5723 = vadd.f32 %v5699, %v5722
  %5724 = vmatmul.bf16.gmra.mxu0 %v4547
  %v5725 = vpop.f32.mrf.mxu0
  %v5726 = vadd.f32 %v5702, %v5725
  %v5727 = vpop.f32.mrf.mxu0
  %v5728 = vadd.f32 %v5704, %v5727
  %5729 = vdwg.mxu0
  %5730 = vmatpush.bf16.msra.mxu0 %v5385
  %5731 = vmatpush.bf16.msra.mxu0 %v5384
  %5732 = vmatpush.bf16.msra.mxu0 %v5383
  %5733 = vmatpush.bf16.msra.mxu0 %v5382
  %5734 = vmatpush.bf16.msra.mxu0 %v5381
  %5735 = vmatpush.bf16.msra.mxu0 %v5380
  %5736 = vmatpush.bf16.msra.mxu0 %v5379
  %5737 = vmatpush.bf16.msra.mxu0 %v5378
  %5738 = vmatmul.bf16.gmra.mxu0 %v4516
  %v5739 = vpop.f32.mrf.mxu0
  %v5740 = vadd.f32 %v5716, %v5739
  %v5741 = vpop.f32.mrf.mxu0
  %v5742 = vadd.f32 %v5718, %v5741
  %5743 = vmatmul.bf16.gmra.mxu0 %v4532
  %v5744 = vpop.f32.mrf.mxu0
  %v5745 = vadd.f32 %v5721, %v5744
  %v5746 = vpop.f32.mrf.mxu0
  %v5747 = vadd.f32 %v5723, %v5746
  %5748 = vmatmul.bf16.gmra.mxu0 %v4548
  %v5749 = vpop.f32.mrf.mxu0
  %v5750 = vadd.f32 %v5726, %v5749
  %v5751 = vpop.f32.mrf.mxu0
  %v5752 = vadd.f32 %v5728, %v5751
  %5753 = vdwg.mxu0
  %5754 = vmatpush.bf16.msra.mxu0 %v5393
  %5755 = vmatpush.bf16.msra.mxu0 %v5392
  %5756 = vmatpush.bf16.msra.mxu0 %v5391
  %5757 = vmatpush.bf16.msra.mxu0 %v5390
  %5758 = vmatpush.bf16.msra.mxu0 %v5389
  %5759 = vmatpush.bf16.msra.mxu0 %v5388
  %5760 = vmatpush.bf16.msra.mxu0 %v5387
  %5761 = vmatpush.bf16.msra.mxu0 %v5386
  %5762 = vmatmul.bf16.gmra.mxu0 %v4517
  %v5763 = vpop.f32.mrf.mxu0
  %v5764 = vadd.f32 %v5740, %v5763
  %v5765 = vpop.f32.mrf.mxu0
  %v5766 = vadd.f32 %v5742, %v5765
  %5767 = vmatmul.bf16.gmra.mxu0 %v4533
  %v5768 = vpop.f32.mrf.mxu0
  %v5769 = vadd.f32 %v5745, %v5768
  %v5770 = vpop.f32.mrf.mxu0
  %v5771 = vadd.f32 %v5747, %v5770
  %5772 = vmatmul.bf16.gmra.mxu0 %v4549
  %v5773 = vpop.f32.mrf.mxu0
  %v5774 = vadd.f32 %v5750, %v5773
  %v5775 = vpop.f32.mrf.mxu0
  %v5776 = vadd.f32 %v5752, %v5775
  %5777 = vdwg.mxu0
  %5778 = vmatpush.bf16.msra.mxu0 %v5401
  %5779 = vmatpush.bf16.msra.mxu0 %v5400
  %5780 = vmatpush.bf16.msra.mxu0 %v5399
  %5781 = vmatpush.bf16.msra.mxu0 %v5398
  %5782 = vmatpush.bf16.msra.mxu0 %v5397
  %5783 = vmatpush.bf16.msra.mxu0 %v5396
  %5784 = vmatpush.bf16.msra.mxu0 %v5395
  %5785 = vmatpush.bf16.msra.mxu0 %v5394
  %5786 = vmatmul.bf16.gmra.mxu0 %v4518
  %v5787 = vpop.f32.mrf.mxu0
  %v5788 = vadd.f32 %v5764, %v5787
  %v5789 = vpop.f32.mrf.mxu0
  %v5790 = vadd.f32 %v5766, %v5789
  %5791 = vmatmul.bf16.gmra.mxu0 %v4534
  %v5792 = vpop.f32.mrf.mxu0
  %v5793 = vadd.f32 %v5769, %v5792
  %v5794 = vpop.f32.mrf.mxu0
  %v5795 = vadd.f32 %v5771, %v5794
  %5796 = vmatmul.bf16.gmra.mxu0 %v4550
  %v5797 = vpop.f32.mrf.mxu0
  %v5798 = vadd.f32 %v5774, %v5797
  %v5799 = vpop.f32.mrf.mxu0
  %v5800 = vadd.f32 %v5776, %v5799
  %5801 = vdwg.mxu0
  %5802 = vmatpush.bf16.msra.mxu0 %v5409
  %5803 = vmatpush.bf16.msra.mxu0 %v5408
  %5804 = vmatpush.bf16.msra.mxu0 %v5407
  %5805 = vmatpush.bf16.msra.mxu0 %v5406
  %5806 = vmatpush.bf16.msra.mxu0 %v5405
  %5807 = vmatpush.bf16.msra.mxu0 %v5404
  %5808 = vmatpush.bf16.msra.mxu0 %v5403
  %5809 = vmatpush.bf16.msra.mxu0 %v5402
  %5810 = vmatmul.bf16.gmra.mxu0 %v4519
  %v5811 = vpop.f32.mrf.mxu0
  %v5812 = vadd.f32 %v5788, %v5811
  %v5813 = vpop.f32.mrf.mxu0
  %v5814 = vadd.f32 %v5790, %v5813
  %5815 = vmatmul.bf16.gmra.mxu0 %v4535
  %v5816 = vpop.f32.mrf.mxu0
  %v5817 = vadd.f32 %v5793, %v5816
  %v5818 = vpop.f32.mrf.mxu0
  %v5819 = vadd.f32 %v5795, %v5818
  %5820 = vmatmul.bf16.gmra.mxu0 %v4551
  %v5821 = vpop.f32.mrf.mxu0
  %v5822 = vadd.f32 %v5798, %v5821
  %v5823 = vpop.f32.mrf.mxu0
  %v5824 = vadd.f32 %v5800, %v5823
  %5825 = vdwg.mxu0
  %5826 = vmatpush.bf16.msra.mxu0 %v5417
  %5827 = vmatpush.bf16.msra.mxu0 %v5416
  %5828 = vmatpush.bf16.msra.mxu0 %v5415
  %5829 = vmatpush.bf16.msra.mxu0 %v5414
  %5830 = vmatpush.bf16.msra.mxu0 %v5413
  %5831 = vmatpush.bf16.msra.mxu0 %v5412
  %5832 = vmatpush.bf16.msra.mxu0 %v5411
  %5833 = vmatpush.bf16.msra.mxu0 %v5410
  %5834 = vmatmul.bf16.gmra.mxu0 %v4520
  %v5835 = vpop.f32.mrf.mxu0
  %v5836 = vadd.f32 %v5812, %v5835
  %v5837 = vpop.f32.mrf.mxu0
  %v5838 = vadd.f32 %v5814, %v5837
  %5839 = vmatmul.bf16.gmra.mxu0 %v4536
  %v5840 = vpop.f32.mrf.mxu0
  %v5841 = vadd.f32 %v5817, %v5840
  %v5842 = vpop.f32.mrf.mxu0
  %v5843 = vadd.f32 %v5819, %v5842
  %5844 = vmatmul.bf16.gmra.mxu0 %v4552
  %v5845 = vpop.f32.mrf.mxu0
  %v5846 = vadd.f32 %v5822, %v5845
  %v5847 = vpop.f32.mrf.mxu0
  %v5848 = vadd.f32 %v5824, %v5847
  %5849 = vdwg.mxu0
  %5850 = vmatpush.bf16.msra.mxu0 %v5425
  %5851 = vmatpush.bf16.msra.mxu0 %v5424
  %5852 = vmatpush.bf16.msra.mxu0 %v5423
  %5853 = vmatpush.bf16.msra.mxu0 %v5422
  %5854 = vmatpush.bf16.msra.mxu0 %v5421
  %5855 = vmatpush.bf16.msra.mxu0 %v5420
  %5856 = vmatpush.bf16.msra.mxu0 %v5419
  %5857 = vmatpush.bf16.msra.mxu0 %v5418
  %5858 = vmatmul.bf16.gmra.mxu0 %v4521
  %v5859 = vpop.f32.mrf.mxu0
  %v5860 = vadd.f32 %v5836, %v5859
  %v5861 = vpop.f32.mrf.mxu0
  %v5862 = vadd.f32 %v5838, %v5861
  %5863 = vmatmul.bf16.gmra.mxu0 %v4537
  %v5864 = vpop.f32.mrf.mxu0
  %v5865 = vadd.f32 %v5841, %v5864
  %v5866 = vpop.f32.mrf.mxu0
  %v5867 = vadd.f32 %v5843, %v5866
  %5868 = vmatmul.bf16.gmra.mxu0 %v4553
  %v5869 = vpop.f32.mrf.mxu0
  %v5870 = vadd.f32 %v5846, %v5869
  %v5871 = vpop.f32.mrf.mxu0
  %v5872 = vadd.f32 %v5848, %v5871
  %5873 = vdwg.mxu0
  %5874 = vmatpush.bf16.msra.mxu0 %v5433
  %5875 = vmatpush.bf16.msra.mxu0 %v5432
  %5876 = vmatpush.bf16.msra.mxu0 %v5431
  %5877 = vmatpush.bf16.msra.mxu0 %v5430
  %5878 = vmatpush.bf16.msra.mxu0 %v5429
  %5879 = vmatpush.bf16.msra.mxu0 %v5428
  %5880 = vmatpush.bf16.msra.mxu0 %v5427
  %5881 = vmatpush.bf16.msra.mxu0 %v5426
  %5882 = vmatmul.bf16.gmra.mxu0 %v4522
  %v5883 = vpop.f32.mrf.mxu0
  %v5884 = vadd.f32 %v5860, %v5883
  %v5885 = vpop.f32.mrf.mxu0
  %v5886 = vadd.f32 %v5862, %v5885
  %5887 = vmatmul.bf16.gmra.mxu0 %v4538
  %v5888 = vpop.f32.mrf.mxu0
  %v5889 = vadd.f32 %v5865, %v5888
  %v5890 = vpop.f32.mrf.mxu0
  %v5891 = vadd.f32 %v5867, %v5890
  %5892 = vmatmul.bf16.gmra.mxu0 %v4554
  %v5893 = vpop.f32.mrf.mxu0
  %v5894 = vadd.f32 %v5870, %v5893
  %v5895 = vpop.f32.mrf.mxu0
  %v5896 = vadd.f32 %v5872, %v5895
  %5897 = vdwg.mxu0
  %5898 = vmatpush.bf16.msra.mxu0 %v5441
  %5899 = vmatpush.bf16.msra.mxu0 %v5440
  %5900 = vmatpush.bf16.msra.mxu0 %v5439
  %5901 = vmatpush.bf16.msra.mxu0 %v5438
  %5902 = vmatpush.bf16.msra.mxu0 %v5437
  %5903 = vmatpush.bf16.msra.mxu0 %v5436
  %5904 = vmatpush.bf16.msra.mxu0 %v5435
  %5905 = vmatpush.bf16.msra.mxu0 %v5434
  %5906 = vmatmul.bf16.gmra.mxu0 %v4523
  %v5907 = vpop.f32.mrf.mxu0
  %v5908 = vadd.f32 %v5884, %v5907
  %v5909 = vpop.f32.mrf.mxu0
  %v5910 = vadd.f32 %v5886, %v5909
  %5911 = vmatmul.bf16.gmra.mxu0 %v4539
  %v5912 = vpop.f32.mrf.mxu0
  %v5913 = vadd.f32 %v5889, %v5912
  %v5914 = vpop.f32.mrf.mxu0
  %v5915 = vadd.f32 %v5891, %v5914
  %5916 = vmatmul.bf16.gmra.mxu0 %v4555
  %v5917 = vpop.f32.mrf.mxu0
  %v5918 = vadd.f32 %v5894, %v5917
  %v5919 = vpop.f32.mrf.mxu0
  %v5920 = vadd.f32 %v5896, %v5919
  %5921 = vdwg.mxu0
  %5922 = vmatpush.bf16.msra.mxu0 %v5449
  %5923 = vmatpush.bf16.msra.mxu0 %v5448
  %5924 = vmatpush.bf16.msra.mxu0 %v5447
  %5925 = vmatpush.bf16.msra.mxu0 %v5446
  %5926 = vmatpush.bf16.msra.mxu0 %v5445
  %5927 = vmatpush.bf16.msra.mxu0 %v5444
  %5928 = vmatpush.bf16.msra.mxu0 %v5443
  %5929 = vmatpush.bf16.msra.mxu0 %v5442
  %5930 = vmatmul.bf16.gmra.mxu0 %v4524
  %v5931 = vpop.f32.mrf.mxu0
  %v5932 = vadd.f32 %v5908, %v5931
  %v5933 = vpop.f32.mrf.mxu0
  %v5934 = vadd.f32 %v5910, %v5933
  %5935 = vmatmul.bf16.gmra.mxu0 %v4540
  %v5936 = vpop.f32.mrf.mxu0
  %v5937 = vadd.f32 %v5913, %v5936
  %v5938 = vpop.f32.mrf.mxu0
  %v5939 = vadd.f32 %v5915, %v5938
  %5940 = vmatmul.bf16.gmra.mxu0 %v4556
  %v5941 = vpop.f32.mrf.mxu0
  %v5942 = vadd.f32 %v5918, %v5941
  %v5943 = vpop.f32.mrf.mxu0
  %v5944 = vadd.f32 %v5920, %v5943
  %5945 = vdwg.mxu0
  %5946 = vmatpush.bf16.msra.mxu0 %v5457
  %5947 = vmatpush.bf16.msra.mxu0 %v5456
  %5948 = vmatpush.bf16.msra.mxu0 %v5455
  %5949 = vmatpush.bf16.msra.mxu0 %v5454
  %5950 = vmatpush.bf16.msra.mxu0 %v5453
  %5951 = vmatpush.bf16.msra.mxu0 %v5452
  %5952 = vmatpush.bf16.msra.mxu0 %v5451
  %5953 = vmatpush.bf16.msra.mxu0 %v5450
  %5954 = vmatmul.bf16.gmra.mxu0 %v4525
  %v5955 = vpop.f32.mrf.mxu0
  %v5956 = vadd.f32 %v5932, %v5955
  %v5957 = vpop.f32.mrf.mxu0
  %v5958 = vadd.f32 %v5934, %v5957
  %5959 = vmatmul.bf16.gmra.mxu0 %v4541
  %v5960 = vpop.f32.mrf.mxu0
  %v5961 = vadd.f32 %v5937, %v5960
  %v5962 = vpop.f32.mrf.mxu0
  %v5963 = vadd.f32 %v5939, %v5962
  %5964 = vmatmul.bf16.gmra.mxu0 %v4557
  %v5965 = vpop.f32.mrf.mxu0
  %v5966 = vadd.f32 %v5942, %v5965
  %v5967 = vpop.f32.mrf.mxu0
  %v5968 = vadd.f32 %v5944, %v5967
  %5969 = vdwg.mxu0
  %v5970 = vadd.f32 %v3784, %v5956
  %v5971 = vadd.f32 %v3785, %v5958
  %v5972 = vadd.f32 %v3786, %v5961
  %v5973 = vadd.f32 %v3787, %v5963
  %v5974 = vadd.f32 %v3788, %v5966
  %v5975 = vadd.f32 %v3789, %v5968
  %v5976 = vsel %vm188, %v5970, 0.0
  %5977 = vadd.xlane.f32.xlu0 %v5976
  %v5978 = vpop.xlane.xlu0 %5977
  %v5979 = vsel %vm188, %v5971, 0.0
  %5980 = vadd.xlane.f32.xlu0 %v5979
  %v5981 = vpop.xlane.xlu0 %5980
  %v5982 = vsel %vm188, %v5972, 0.0
  %5983 = vadd.xlane.f32.xlu0 %v5982
  %v5984 = vpop.xlane.xlu0 %5983
  %v5985 = vsel %vm188, %v5973, 0.0
  %5986 = vadd.xlane.f32.xlu0 %v5985
  %v5987 = vpop.xlane.xlu0 %5986
  %v5988 = vsel %vm188, %v5974, 0.0
  %5989 = vadd.xlane.f32.xlu0 %v5988
  %v5990 = vpop.xlane.xlu0 %5989
  %v5991 = vsel %vm188, %v5975, 0.0
  %5992 = vadd.xlane.f32.xlu0 %v5991
  %v5993 = vpop.xlane.xlu0 %5992
  %v5994 = vmul.f32 %v5978, %v594
  %v5995 = vmul.f32 %v5981, %v594
  %v5996 = vmul.f32 %v5984, %v594
  %v5997 = vmul.f32 %v5987, %v594
  %v5998 = vmul.f32 %v5990, %v594
  %v5999 = vmul.f32 %v5993, %v594
  %v6000 = vsub.f32 %v5970, %v5994
  %v6001 = vsub.f32 %v5971, %v5995
  %v6002 = vsub.f32 %v5972, %v5996
  %v6003 = vsub.f32 %v5973, %v5997
  %v6004 = vsub.f32 %v5974, %v5998
  %v6005 = vsub.f32 %v5975, %v5999
  %v6006 = vmul.f32 %v6000, %v6000
  %v6007 = vmul.f32 %v6001, %v6001
  %v6008 = vmul.f32 %v6002, %v6002
  %v6009 = vmul.f32 %v6003, %v6003
  %v6010 = vmul.f32 %v6004, %v6004
  %v6011 = vmul.f32 %v6005, %v6005
  %v6012 = vsel %vm188, %v6006, 0.0
  %6013 = vadd.xlane.f32.xlu0 %v6012
  %v6014 = vpop.xlane.xlu0 %6013
  %v6015 = vsel %vm188, %v6007, 0.0
  %6016 = vadd.xlane.f32.xlu0 %v6015
  %v6017 = vpop.xlane.xlu0 %6016
  %v6018 = vsel %vm188, %v6008, 0.0
  %6019 = vadd.xlane.f32.xlu0 %v6018
  %v6020 = vpop.xlane.xlu0 %6019
  %v6021 = vsel %vm188, %v6009, 0.0
  %6022 = vadd.xlane.f32.xlu0 %v6021
  %v6023 = vpop.xlane.xlu0 %6022
  %v6024 = vsel %vm188, %v6010, 0.0
  %6025 = vadd.xlane.f32.xlu0 %v6024
  %v6026 = vpop.xlane.xlu0 %6025
  %v6027 = vsel %vm188, %v6011, 0.0
  %6028 = vadd.xlane.f32.xlu0 %v6027
  %v6029 = vpop.xlane.xlu0 %6028
  %v6030 = vmul.f32 %v6014, %v594
  %v6031 = vmul.f32 %v6017, %v594
  %v6032 = vmul.f32 %v6020, %v594
  %v6033 = vmul.f32 %v6023, %v594
  %v6034 = vmul.f32 %v6026, %v594
  %v6035 = vmul.f32 %v6029, %v594
  %v6036 = vadd.f32 %v6030, 1e-05
  %v6037 = vadd.f32 %v6031, 1e-05
  %v6038 = vadd.f32 %v6032, 1e-05
  %v6039 = vadd.f32 %v6033, 1e-05
  %v6040 = vadd.f32 %v6034, 1e-05
  %v6041 = vadd.f32 %v6035, 1e-05
  %v6042 = vrsqrt.pop %v6036
  %v6043 = vmul.f32 %v6042, %v6036
  %v6044 = vmul.f32 %v6043, %v6042
  %v6045 = vmul.f32 0.5, %v6044
  %v6046 = vsub.f32 1.5, %v6045
  %v6047 = vmul.f32 %v6042, %v6046
  %vm6048 = vweird.f32 %v6036
  %vm6049 = vweird.f32 %v6042
  %vm6050 = vmor %vm6048, %vm6049
  %v6051 = vsel %vm6050, %v6042, %v6047
  %v6052 = vrsqrt.pop %v6037
  %v6053 = vmul.f32 %v6052, %v6037
  %v6054 = vmul.f32 %v6053, %v6052
  %v6055 = vmul.f32 0.5, %v6054
  %v6056 = vsub.f32 1.5, %v6055
  %v6057 = vmul.f32 %v6052, %v6056
  %vm6058 = vweird.f32 %v6037
  %vm6059 = vweird.f32 %v6052
  %vm6060 = vmor %vm6058, %vm6059
  %v6061 = vsel %vm6060, %v6052, %v6057
  %v6062 = vrsqrt.pop %v6038
  %v6063 = vmul.f32 %v6062, %v6038
  %v6064 = vmul.f32 %v6063, %v6062
  %v6065 = vmul.f32 0.5, %v6064
  %v6066 = vsub.f32 1.5, %v6065
  %v6067 = vmul.f32 %v6062, %v6066
  %vm6068 = vweird.f32 %v6038
  %vm6069 = vweird.f32 %v6062
  %vm6070 = vmor %vm6068, %vm6069
  %v6071 = vsel %vm6070, %v6062, %v6067
  %v6072 = vrsqrt.pop %v6039
  %v6073 = vmul.f32 %v6072, %v6039
  %v6074 = vmul.f32 %v6073, %v6072
  %v6075 = vmul.f32 0.5, %v6074
  %v6076 = vsub.f32 1.5, %v6075
  %v6077 = vmul.f32 %v6072, %v6076
  %vm6078 = vweird.f32 %v6039
  %vm6079 = vweird.f32 %v6072
  %vm6080 = vmor %vm6078, %vm6079
  %v6081 = vsel %vm6080, %v6072, %v6077
  %v6082 = vrsqrt.pop %v6040
  %v6083 = vmul.f32 %v6082, %v6040
  %v6084 = vmul.f32 %v6083, %v6082
  %v6085 = vmul.f32 0.5, %v6084
  %v6086 = vsub.f32 1.5, %v6085
  %v6087 = vmul.f32 %v6082, %v6086
  %vm6088 = vweird.f32 %v6040
  %vm6089 = vweird.f32 %v6082
  %vm6090 = vmor %vm6088, %vm6089
  %v6091 = vsel %vm6090, %v6082, %v6087
  %v6092 = vrsqrt.pop %v6041
  %v6093 = vmul.f32 %v6092, %v6041
  %v6094 = vmul.f32 %v6093, %v6092
  %v6095 = vmul.f32 0.5, %v6094
  %v6096 = vsub.f32 1.5, %v6095
  %v6097 = vmul.f32 %v6092, %v6096
  %vm6098 = vweird.f32 %v6041
  %vm6099 = vweird.f32 %v6092
  %vm6100 = vmor %vm6098, %vm6099
  %v6101 = vsel %vm6100, %v6092, %v6097
  %v6102 = vmul.f32 %v6000, %v6051
  %v6103 = vmul.f32 %v6001, %v6061
  %v6104 = vmul.f32 %v6002, %v6071
  %v6105 = vmul.f32 %v6003, %v6081
  %v6106 = vmul.f32 %v6004, %v6091
  %v6107 = vmul.f32 %v6005, %v6101
  %v6108 = vld [vmem:[%s61] sm:$0x1]
  %v6110 = vperm.slane %v6108, 0
  %v6112 = vmul.f32 %v6102, %v6110
  %v6113 = vmul.f32 %v6103, %v6110
  %v6114 = vmul.f32 %v6104, %v6110
  %v6115 = vmul.f32 %v6105, %v6110
  %v6116 = vmul.f32 %v6106, %v6110
  %v6117 = vmul.f32 %v6107, %v6110
  %v6118 = vld [vmem:[%s63] sm:$0x1]
  %v6120 = vperm.slane %v6118, 0
  %v6122 = vadd.f32 %v6112, %v6120
  %v6123 = vadd.f32 %v6113, %v6120
  %v6124 = vadd.f32 %v6114, %v6120
  %v6125 = vadd.f32 %v6115, %v6120
  %v6126 = vadd.f32 %v6116, %v6120
  %v6127 = vadd.f32 %v6117, %v6120
  %6128 = vst.msk [vmem:[%s67] sm:$0xff] %vm188, %v6122
  %6129 = vst.msk [vmem:[%s67 + $0x8] sm:$0xff] %vm188, %v6123
  %6130 = vst.msk [vmem:[%s67 + $0x10] sm:$0xff] %vm188, %v6124
  %6131 = vst.msk [vmem:[%s67 + $0x18] sm:$0xff] %vm188, %v6125
  %6132 = vst.msk [vmem:[%s67 + $0x20] sm:$0xff] %vm188, %v6126
  %6133 = vst.msk [vmem:[%s67 + $0x28] sm:$0xff] %vm188, %v6127
  // Predicated region
  $region130: #{meta_cdw_forward.2} parent=0 // pred_check
    _
  $region131: #{meta_cdw_forward.2} parent=0 // pred_check_branch
    %6135 = sbr.rel (0) target = $region133
  $region132: #{meta_cdw_forward.2} parent=0 // pred_region
    _
  $region133: #{meta_cdw_forward.2} parent=0 // pred_fallthru
    _
  // Predicated region
  $region134: #{meta_cdw_forward.2} parent=0 // pred_check
    _
  $region135: #{meta_cdw_forward.2} parent=0 // pred_check_branch
    %6137 = sbr.rel (0) target = $region137
  $region136: #{meta_cdw_forward.2} parent=0 // pred_region
    _
  $region137: #{meta_cdw_forward.2} parent=0 // pred_fallthru
    _
  // Predicated region
  $region138: #{meta_cdw_forward.2} parent=0 // pred_check
    _
  $region139: #{meta_cdw_forward.2} parent=0 // pred_check_branch
    %6139 = sbr.rel (0) target = $region141
  $region140: #{meta_cdw_forward.2} parent=0 // pred_region
    _
  $region141: #{meta_cdw_forward.2} parent=0 // pred_fallthru
    _
  // Predicated region
  $region142: #{meta_cdw_forward.2} parent=0 // pred_check
    _
  $region143: #{meta_cdw_forward.2} parent=0 // pred_check_branch
    %6141 = sbr.rel (0) target = $region145
  $region144: #{meta_cdw_forward.2} parent=0 // pred_region
    _
  $region145: #{meta_cdw_forward.2} parent=0 // pred_fallthru
    _

</llo_original>
